<compile_context>
chip_gen: v7x
topology: tpu7x:2x2x1
jax: 0.10.0
libtpu: 0.0.40
codegen_flags: <defaults>
</compile_context>

<pallas_src>
import functools

import jax
import jax.numpy as jnp
from jax.experimental import pallas as pl
from jax.experimental.pallas import tpu as pltpu

# Small, deterministic problem sizes consistent with the module's forward.
INPUT_SIZE = 4
HIDDEN = 32
OUTPUT = 4
NUM_LAYERS = 2   # kernel hard-codes the 2-layer structure
BATCH = 2
SEQ = 8

FC_PAD = 128     # lane-dense width for the fc output / weight padding
HIGHEST = jax.lax.Precision.HIGHEST


def lstm_kernel(x_ref, wih0w_ref, bwide_ref, wstk_ref, wfc_ref, bfc_ref,
                out_ref, *, T, B, H):
    """Skewed / fused 2-layer LSTM over time + final Linear, entirely in vregs/VMEM."""
    HH = 2 * H    # packed state width: [layer0 | layer1]

    # ---- Hoist all weight / bias loads out of the time loop. ----
    wstk = wstk_ref[...]                                     # (2H, 8H) stacked + interleaved
    wfc = wfc_ref[...]                                       # (H, FC_PAD)
    bfc = jnp.broadcast_to(bfc_ref[...], (B, wfc.shape[1]))  # broadcast once

    # ---- Hoisted layer-0 projection for ALL timesteps as ONE matmul, kept as a value. ----
    # Row block t: layer-0 lanes = x_t @ W_ih0 + b0, layer-1 lanes = b1.
    # Row block T (zero x rows, appended wrapper-side) is the pure-bias addend consumed by
    # the final skewed iteration.
    pre = (jnp.dot(x_ref[...], wih0w_ref[...], precision=HIGHEST,
                   preferred_element_type=jnp.float32)
           + bwide_ref[...])                                  # ((T+1)*B, 8H) value (~5 vregs)

    # Lane masks, computed once.
    is_g = jax.lax.broadcasted_iota(jnp.int32, (B, 4 * H), 1) < HH   # g half of [g|o] vreg
    is_l0 = jax.lax.broadcasted_iota(jnp.int32, (B, HH), 1) < H      # layer-0 lanes of state

    def activate(gates):
        # gates: (B, 8H) packed [i0|i1|f0|f1 | g0|g1|o0|o1].
        # First 4H lanes are all-sigmoid (one vreg-wide push); of the second 4H lanes the
        # first 2H (g) use tanh, the rest (o) sigmoid — selected by a precomputed mask.
        if_pk = jax.nn.sigmoid(gates[:, :4 * H])
        go = gates[:, 4 * H:]
        go_pk = jnp.where(is_g, jnp.tanh(go), jax.nn.sigmoid(go))
        return if_pk[:, :HH], if_pk[:, HH:], go_pk[:, :HH], go_pk[:, HH:]  # i, f, g, o

    # ---- Prologue: layer-0 at t=0 (zero initial state => its gates are exactly pre[0]). ----
    i_pk, f_pk, g_pk, o_pk = activate(pre[0:B])
    c_pk = jnp.where(is_l0, i_pk * g_pk, 0.0)   # keep c1_{-1} == 0
    h_pk = o_pk * jnp.tanh(c_pk)                # h1 lanes come out 0 for free (tanh(0) == 0)
    # state: h_pk = [h0_0 | h1_{-1}=0], c_pk = [c0_0 | c1_{-1}=0]

    # TODO(synk): nn.LSTM dropout=0.2 between layers is train-time only; eval-mode
    #             (identity) semantics are implemented here.

    # ---- Skewed, fully unrolled time loop: ONE fused matmul per iteration produces
    # layer-0 gates for step s+1 (the *0 gate lanes) and layer-1 gates for step s (the *1
    # lanes); a single packed cell update advances BOTH layers. ----
    for s in range(T):
        gates = (jnp.dot(h_pk, wstk, precision=HIGHEST,
                         preferred_element_type=jnp.float32)
                 + pre[(s + 1) * B:(s + 2) * B])
        i_pk, f_pk, g_pk, o_pk = activate(gates)
        c_pk = f_pk * c_pk + i_pk * g_pk
        h_pk = o_pk * jnp.tanh(c_pk)
        # after iter s: h_pk = [h0_{s+1} | h1_s]  (the phantom h0_T of the last iter is unused)

    # fc applied to the top layer's last hidden state h1_{T-1}; lane-dense (B, 128) store.
    h1_last = h_pk[:, H:HH]
    out_ref[...] = (jnp.dot(h1_last, wfc, precision=HIGHEST,
                            preferred_element_type=jnp.float32) + bfc)


def timeseries_forward(x, packed, output_size=OUTPUT):
    """x: (B, T, input_size) batch_first, float32. Returns (B, output_size)."""
    B, T, I = x.shape
    wih0w, bwide, wstk, wfc_p, bfc_p = packed
    H = wstk.shape[0] // 2

    # Layout plumbing: time-major + flatten to (T*B, I), plus one extra zero time block
    # (the pure-bias addend used by the last skewed iteration).
    x2d = jnp.transpose(x, (1, 0, 2)).reshape(T * B, I)
    x2d = jnp.concatenate([x2d, jnp.zeros((B, I), x2d.dtype)], axis=0)

    def full(shp):
        return pl.BlockSpec(shp, lambda i, _s=len(shp): (0,) * _s)

    # NOTE: at this problem size the kernel is pure serial latency; for real throughput one
    # would grow the batch (M) dimension (~128 rows on v5e, 256 on v6e/v7x per MXU pass) and,
    # on v7x, add a "parallel" grid axis over independent sequences for the second TensorCore.
    # Total footprint ~15 KB, so no pipelining / multi-buffering machinery is used.
    out = pl.pallas_call(
        functools.partial(lstm_kernel, T=T, B=B, H=H),
        out_shape=jax.ShapeDtypeStruct((B, FC_PAD), jnp.float32),
        grid=(1,),
        in_specs=[full(x2d.shape), full(wih0w.shape), full(bwide.shape),
                  full(wstk.shape), full(wfc_p.shape), full(bfc_p.shape)],
        out_specs=full((B, FC_PAD)),
        compiler_params=pltpu.CompilerParams(
            dimension_semantics=("arbitrary",)),
    )(x2d, wih0w, bwide, wstk, wfc_p, bfc_p)
    return out[:, :output_size]


def init_params(key, input_size, hidden, output):
    """PyTorch-style parameter set, uniform(-1/sqrt(H), 1/sqrt(H)) like nn.LSTM/nn.Linear."""
    ks = jax.random.split(key, 10)
    bound = 1.0 / jnp.sqrt(hidden)

    def u(k, shape):
        return jax.random.uniform(k, shape, jnp.float32, -bound, bound)

    return (
        u(ks[0], (4 * hidden, input_size)),   # W_ih0  (gate order [i|f|g|o])
        u(ks[1], (4 * hidden, hidden)),       # W_hh0
        u(ks[2], (4 * hidden,)),              # b_ih0
        u(ks[3], (4 * hidden,)),              # b_hh0
        u(ks[4], (4 * hidden, hidden)),       # W_ih1
        u(ks[5], (4 * hidden, hidden)),       # W_hh1
        u(ks[6], (4 * hidden,)),              # b_ih1
        u(ks[7], (4 * hidden,)),              # b_hh1
        u(ks[8], (output, hidden)),           # W_fc
        u(ks[9], (output,)),                  # b_fc
    )


def pack_params(params):
    """Wrapper-side weight stacking/interleaving for the skewed fused kernel (glue only)."""
    (W_ih0, W_hh0, b_ih0, b_hh0,
     W_ih1, W_hh1, b_ih1, b_hh1, W_fc, b_fc) = params
    H = W_hh0.shape[1]
    I = W_ih0.shape[1]
    O = W_fc.shape[0]

    def interleave(a0, a1):
        # a0, a1: (rows, 4H) in gate order [i|f|g|o] -> (rows, 8H) [i0|i1|f0|f1|g0|g1|o0|o1]
        r = a0.shape[0]
        return jnp.stack([a0.reshape(r, 4, H), a1.reshape(r, 4, H)],
                         axis=2).reshape(r, 8 * H)

    wih0w = interleave(W_ih0.T, jnp.zeros((I, 4 * H), jnp.float32))          # (I, 8H)
    bwide = interleave((b_ih0 + b_hh0)[None, :], (b_ih1 + b_hh1)[None, :])   # (1, 8H)
    wstk = jnp.concatenate(
        [interleave(W_hh0.T, W_ih1.T),                                        # rows 0..H-1
         interleave(jnp.zeros((H, 4 * H), jnp.float32), W_hh1.T)],            # rows H..2H-1
        axis=0)                                                               # (2H, 8H)
    wfc_p = jnp.zeros((H, FC_PAD), jnp.float32).at[:, :O].set(W_fc.T)
    bfc_p = jnp.zeros((1, FC_PAD), jnp.float32).at[:, :O].set(b_fc)
    return (wih0w, bwide, wstk, wfc_p, bfc_p)


def reference_forward(x, params):
    """Pure-JAX reference matching PyTorch nn.LSTM (eval, 2 layers) + nn.Linear."""
    (W_ih0, W_hh0, b_ih0, b_hh0,
     W_ih1, W_hh1, b_ih1, b_hh1, W_fc, b_fc) = params
    B, T, _ = x.shape
    H = W_hh0.shape[1]

    def cell(x_t, h, c, W_ih, W_hh, b_ih, b_hh):
        gates = (jnp.dot(x_t, W_ih.T, precision=HIGHEST)
                 + jnp.dot(h, W_hh.T, precision=HIGHEST) + b_ih + b_hh)
        i = jax.nn.sigmoid(gates[:, 0 * H:1 * H])
        f = jax.nn.sigmoid(gates[:, 1 * H:2 * H])
        g = jnp.tanh(gates[:, 2 * H:3 * H])
        o = jax.nn.sigmoid(gates[:, 3 * H:4 * H])
        c = f * c + i * g
        h = o * jnp.tanh(c)
        return h, c

    h0 = jnp.zeros((B, H), jnp.float32)
    c0 = jnp.zeros((B, H), jnp.float32)
    h1 = jnp.zeros((B, H), jnp.float32)
    c1 = jnp.zeros((B, H), jnp.float32)
    for t in range(T):
        h0, c0 = cell(x[:, t, :], h0, c0, W_ih0, W_hh0, b_ih0, b_hh0)
        # dropout between layers: eval-mode identity
        h1, c1 = cell(h0, h1, c1, W_ih1, W_hh1, b_ih1, b_hh1)
    return jnp.dot(h1, W_fc.T, precision=HIGHEST) + b_fc


if __name__ == "__main__":
    key = jax.random.PRNGKey(0)
    k_param, k_x = jax.random.split(key)
    params = init_params(k_param, INPUT_SIZE, HIDDEN, OUTPUT)
    packed = pack_params(params)
    x = jax.random.normal(k_x, (BATCH, SEQ, INPUT_SIZE), jnp.float32)

    out = timeseries_forward(x, packed, OUTPUT)
    out = jax.block_until_ready(out)

    ref = reference_forward(x, params)
    assert out.shape == (BATCH, OUTPUT)
    assert jnp.allclose(out, ref, atol=1e-5, rtol=1e-5), (out, ref)
    print("KERNEL_OK")
</pallas_src>

<mosaic_0001>
module attributes {stable_mosaic.version = 11 : i64} {
  func.func @lstm_kernel(%arg0: i32, %arg1: memref<18x4xf32, #tpu.memory_space<vmem>>, %arg2: memref<4x256xf32, #tpu.memory_space<vmem>>, %arg3: memref<1x256xf32, #tpu.memory_space<vmem>>, %arg4: memref<64x256xf32, #tpu.memory_space<vmem>>, %arg5: memref<32x128xf32, #tpu.memory_space<vmem>>, %arg6: memref<1x128xf32, #tpu.memory_space<vmem>>, %arg7: memref<2x128xf32, #tpu.memory_space<vmem>>) attributes {dimension_semantics = [#tpu.dimension_semantics<arbitrary>], iteration_bounds = array<i64: 1>, scalar_prefetch = 0 : i64, scratch_operands = 0 : i64, tpu.core_type = #tpu.core_type<tc>, window_params = [{pipeline_mode = #tpu.pipeline_mode<synchronous>, transform_indices = @transform_0, window_bounds = array<i64: 18, 4>}, {pipeline_mode = #tpu.pipeline_mode<synchronous>, transform_indices = @transform_1, window_bounds = array<i64: 4, 256>}, {pipeline_mode = #tpu.pipeline_mode<synchronous>, transform_indices = @transform_2, window_bounds = array<i64: 1, 256>}, {pipeline_mode = #tpu.pipeline_mode<synchronous>, transform_indices = @transform_3, window_bounds = array<i64: 64, 256>}, {pipeline_mode = #tpu.pipeline_mode<synchronous>, transform_indices = @transform_4, window_bounds = array<i64: 32, 128>}, {pipeline_mode = #tpu.pipeline_mode<synchronous>, transform_indices = @transform_5, window_bounds = array<i64: 1, 128>}, {pipeline_mode = #tpu.pipeline_mode<synchronous>, transform_indices = @transform_6, window_bounds = array<i64: 2, 128>}]} {
    %c0 = arith.constant 0 : index
    %c0_0 = arith.constant 0 : index
    %0 = vector.load %arg4[%c0, %c0_0] : memref<64x256xf32, #tpu.memory_space<vmem>>, vector<64x256xf32>
    %c0_1 = arith.constant 0 : index
    %c0_2 = arith.constant 0 : index
    %1 = vector.load %arg5[%c0_1, %c0_2] : memref<32x128xf32, #tpu.memory_space<vmem>>, vector<32x128xf32>
    %c0_3 = arith.constant 0 : index
    %c0_4 = arith.constant 0 : index
    %2 = vector.load %arg6[%c0_3, %c0_4] : memref<1x128xf32, #tpu.memory_space<vmem>>, vector<1x128xf32>
    %3 = vector.shape_cast %2 : vector<1x128xf32> to vector<1x128xf32>
    %4 = vector.broadcast %3 : vector<1x128xf32> to vector<2x128xf32>
    %c0_5 = arith.constant 0 : index
    %c0_6 = arith.constant 0 : index
    %5 = vector.load %arg1[%c0_5, %c0_6] : memref<18x4xf32, #tpu.memory_space<vmem>>, vector<18x4xf32>
    %c0_7 = arith.constant 0 : index
    %c0_8 = arith.constant 0 : index
    %6 = vector.load %arg2[%c0_7, %c0_8] : memref<4x256xf32, #tpu.memory_space<vmem>>, vector<4x256xf32>
    %cst = arith.constant dense<0.000000e+00> : vector<18x256xf32>
    %7 = tpu.matmul %5, %6, %cst {dimension_numbers = #tpu.dot_dimension_numbers<[1], [0], [0], [1], [0, 0, 1, 1], [], []>, precision = #tpu.contract_precision<fp32>} : vector<18x4xf32>, vector<4x256xf32>, vector<18x256xf32> -> vector<18x256xf32>
    %c0_9 = arith.constant 0 : index
    %c0_10 = arith.constant 0 : index
    %8 = vector.load %arg3[%c0_9, %c0_10] : memref<1x256xf32, #tpu.memory_space<vmem>>, vector<1x256xf32>
    %9 = vector.broadcast %8 : vector<1x256xf32> to vector<18x256xf32>
    %10 = arith.addf %7, %9 : vector<18x256xf32>
    %11 = tpu.iota {dimensions = array<i32: 1>} : vector<2x128xi32>
    %c64_i32 = arith.constant 64 : i32
    %12 = vector.broadcast %c64_i32 : i32 to vector<2x128xi32>
    %13 = arith.cmpi slt, %11, %12 : vector<2x128xi32>
    %14 = tpu.iota {dimensions = array<i32: 1>} : vector<2x64xi32>
    %c32_i32 = arith.constant 32 : i32
    %15 = vector.broadcast %c32_i32 : i32 to vector<2x64xi32>
    %16 = arith.cmpi slt, %14, %15 : vector<2x64xi32>
    %17 = vector.extract_strided_slice %10 {offsets = [0, 0], sizes = [2, 256], strides = [1, 1]} : vector<18x256xf32> to vector<2x256xf32>
    %18 = vector.extract_strided_slice %17 {offsets = [0, 0], sizes = [2, 128], strides = [1, 1]} : vector<2x256xf32> to vector<2x128xf32>
    %19 = arith.negf %18 : vector<2x128xf32>
    %20 = math.exp %19 : vector<2x128xf32>
    %cst_11 = arith.constant 1.000000e+00 : f32
    %21 = vector.broadcast %cst_11 : f32 to vector<2x128xf32>
    %22 = arith.addf %21, %20 : vector<2x128xf32>
    %23 = arith.divf %21, %22 : vector<2x128xf32>
    %24 = vector.extract_strided_slice %17 {offsets = [0, 128], sizes = [2, 128], strides = [1, 1]} : vector<2x256xf32> to vector<2x128xf32>
    %25 = math.tanh %24 : vector<2x128xf32>
    %26 = arith.negf %24 : vector<2x128xf32>
    %27 = math.exp %26 : vector<2x128xf32>
    %cst_12 = arith.constant 1.000000e+00 : f32
    %28 = vector.broadcast %cst_12 : f32 to vector<2x128xf32>
    %29 = arith.addf %28, %27 : vector<2x128xf32>
    %30 = arith.divf %28, %29 : vector<2x128xf32>
    %31 = arith.select %13, %25, %30 : vector<2x128xi1>, vector<2x128xf32>
    %32 = vector.extract_strided_slice %23 {offsets = [0, 0], sizes = [2, 64], strides = [1, 1]} : vector<2x128xf32> to vector<2x64xf32>
    %33 = vector.extract_strided_slice %31 {offsets = [0, 0], sizes = [2, 64], strides = [1, 1]} : vector<2x128xf32> to vector<2x64xf32>
    %34 = vector.extract_strided_slice %31 {offsets = [0, 64], sizes = [2, 64], strides = [1, 1]} : vector<2x128xf32> to vector<2x64xf32>
    %35 = arith.mulf %32, %33 : vector<2x64xf32>
    %cst_13 = arith.constant 0.000000e+00 : f32
    %36 = vector.broadcast %cst_13 : f32 to vector<2x64xf32>
    %37 = arith.select %16, %35, %36 : vector<2x64xi1>, vector<2x64xf32>
    %38 = math.tanh %37 : vector<2x64xf32>
    %39 = arith.mulf %34, %38 : vector<2x64xf32>
    %cst_14 = arith.constant dense<0.000000e+00> : vector<2x256xf32>
    %40 = tpu.matmul %39, %0, %cst_14 {dimension_numbers = #tpu.dot_dimension_numbers<[1], [0], [0], [1], [0, 0, 1, 1], [], []>, precision = #tpu.contract_precision<fp32>} : vector<2x64xf32>, vector<64x256xf32>, vector<2x256xf32> -> vector<2x256xf32>
    %41 = vector.extract_strided_slice %10 {offsets = [2, 0], sizes = [2, 256], strides = [1, 1]} : vector<18x256xf32> to vector<2x256xf32>
    %42 = arith.addf %40, %41 : vector<2x256xf32>
    %43 = vector.extract_strided_slice %42 {offsets = [0, 0], sizes = [2, 128], strides = [1, 1]} : vector<2x256xf32> to vector<2x128xf32>
    %44 = arith.negf %43 : vector<2x128xf32>
    %45 = math.exp %44 : vector<2x128xf32>
    %cst_15 = arith.constant 1.000000e+00 : f32
    %46 = vector.broadcast %cst_15 : f32 to vector<2x128xf32>
    %47 = arith.addf %46, %45 : vector<2x128xf32>
    %48 = arith.divf %46, %47 : vector<2x128xf32>
    %49 = vector.extract_strided_slice %42 {offsets = [0, 128], sizes = [2, 128], strides = [1, 1]} : vector<2x256xf32> to vector<2x128xf32>
    %50 = math.tanh %49 : vector<2x128xf32>
    %51 = arith.negf %49 : vector<2x128xf32>
    %52 = math.exp %51 : vector<2x128xf32>
    %cst_16 = arith.constant 1.000000e+00 : f32
    %53 = vector.broadcast %cst_16 : f32 to vector<2x128xf32>
    %54 = arith.addf %53, %52 : vector<2x128xf32>
    %55 = arith.divf %53, %54 : vector<2x128xf32>
    %56 = arith.select %13, %50, %55 : vector<2x128xi1>, vector<2x128xf32>
    %57 = vector.extract_strided_slice %48 {offsets = [0, 0], sizes = [2, 64], strides = [1, 1]} : vector<2x128xf32> to vector<2x64xf32>
    %58 = vector.extract_strided_slice %48 {offsets = [0, 64], sizes = [2, 64], strides = [1, 1]} : vector<2x128xf32> to vector<2x64xf32>
    %59 = vector.extract_strided_slice %56 {offsets = [0, 0], sizes = [2, 64], strides = [1, 1]} : vector<2x128xf32> to vector<2x64xf32>
    %60 = vector.extract_strided_slice %56 {offsets = [0, 64], sizes = [2, 64], strides = [1, 1]} : vector<2x128xf32> to vector<2x64xf32>
    %61 = arith.mulf %58, %37 : vector<2x64xf32>
    %62 = arith.mulf %57, %59 : vector<2x64xf32>
    %63 = arith.addf %61, %62 : vector<2x64xf32>
    %64 = math.tanh %63 : vector<2x64xf32>
    %65 = arith.mulf %60, %64 : vector<2x64xf32>
    %cst_17 = arith.constant dense<0.000000e+00> : vector<2x256xf32>
    %66 = tpu.matmul %65, %0, %cst_17 {dimension_numbers = #tpu.dot_dimension_numbers<[1], [0], [0], [1], [0, 0, 1, 1], [], []>, precision = #tpu.contract_precision<fp32>} : vector<2x64xf32>, vector<64x256xf32>, vector<2x256xf32> -> vector<2x256xf32>
    %67 = vector.extract_strided_slice %10 {offsets = [4, 0], sizes = [2, 256], strides = [1, 1]} : vector<18x256xf32> to vector<2x256xf32>
    %68 = arith.addf %66, %67 : vector<2x256xf32>
    %69 = vector.extract_strided_slice %68 {offsets = [0, 0], sizes = [2, 128], strides = [1, 1]} : vector<2x256xf32> to vector<2x128xf32>
    %70 = arith.negf %69 : vector<2x128xf32>
    %71 = math.exp %70 : vector<2x128xf32>
    %cst_18 = arith.constant 1.000000e+00 : f32
    %72 = vector.broadcast %cst_18 : f32 to vector<2x128xf32>
    %73 = arith.addf %72, %71 : vector<2x128xf32>
    %74 = arith.divf %72, %73 : vector<2x128xf32>
    %75 = vector.extract_strided_slice %68 {offsets = [0, 128], sizes = [2, 128], strides = [1, 1]} : vector<2x256xf32> to vector<2x128xf32>
    %76 = math.tanh %75 : vector<2x128xf32>
    %77 = arith.negf %75 : vector<2x128xf32>
    %78 = math.exp %77 : vector<2x128xf32>
    %cst_19 = arith.constant 1.000000e+00 : f32
    %79 = vector.broadcast %cst_19 : f32 to vector<2x128xf32>
    %80 = arith.addf %79, %78 : vector<2x128xf32>
    %81 = arith.divf %79, %80 : vector<2x128xf32>
    %82 = arith.select %13, %76, %81 : vector<2x128xi1>, vector<2x128xf32>
    %83 = vector.extract_strided_slice %74 {offsets = [0, 0], sizes = [2, 64], strides = [1, 1]} : vector<2x128xf32> to vector<2x64xf32>
    %84 = vector.extract_strided_slice %74 {offsets = [0, 64], sizes = [2, 64], strides = [1, 1]} : vector<2x128xf32> to vector<2x64xf32>
    %85 = vector.extract_strided_slice %82 {offsets = [0, 0], sizes = [2, 64], strides = [1, 1]} : vector<2x128xf32> to vector<2x64xf32>
    %86 = vector.extract_strided_slice %82 {offsets = [0, 64], sizes = [2, 64], strides = [1, 1]} : vector<2x128xf32> to vector<2x64xf32>
    %87 = arith.mulf %84, %63 : vector<2x64xf32>
    %88 = arith.mulf %83, %85 : vector<2x64xf32>
    %89 = arith.addf %87, %88 : vector<2x64xf32>
    %90 = math.tanh %89 : vector<2x64xf32>
    %91 = arith.mulf %86, %90 : vector<2x64xf32>
    %cst_20 = arith.constant dense<0.000000e+00> : vector<2x256xf32>
    %92 = tpu.matmul %91, %0, %cst_20 {dimension_numbers = #tpu.dot_dimension_numbers<[1], [0], [0], [1], [0, 0, 1, 1], [], []>, precision = #tpu.contract_precision<fp32>} : vector<2x64xf32>, vector<64x256xf32>, vector<2x256xf32> -> vector<2x256xf32>
    %93 = vector.extract_strided_slice %10 {offsets = [6, 0], sizes = [2, 256], strides = [1, 1]} : vector<18x256xf32> to vector<2x256xf32>
    %94 = arith.addf %92, %93 : vector<2x256xf32>
    %95 = vector.extract_strided_slice %94 {offsets = [0, 0], sizes = [2, 128], strides = [1, 1]} : vector<2x256xf32> to vector<2x128xf32>
    %96 = arith.negf %95 : vector<2x128xf32>
    %97 = math.exp %96 : vector<2x128xf32>
    %cst_21 = arith.constant 1.000000e+00 : f32
    %98 = vector.broadcast %cst_21 : f32 to vector<2x128xf32>
    %99 = arith.addf %98, %97 : vector<2x128xf32>
    %100 = arith.divf %98, %99 : vector<2x128xf32>
    %101 = vector.extract_strided_slice %94 {offsets = [0, 128], sizes = [2, 128], strides = [1, 1]} : vector<2x256xf32> to vector<2x128xf32>
    %102 = math.tanh %101 : vector<2x128xf32>
    %103 = arith.negf %101 : vector<2x128xf32>
    %104 = math.exp %103 : vector<2x128xf32>
    %cst_22 = arith.constant 1.000000e+00 : f32
    %105 = vector.broadcast %cst_22 : f32 to vector<2x128xf32>
    %106 = arith.addf %105, %104 : vector<2x128xf32>
    %107 = arith.divf %105, %106 : vector<2x128xf32>
    %108 = arith.select %13, %102, %107 : vector<2x128xi1>, vector<2x128xf32>
    %109 = vector.extract_strided_slice %100 {offsets = [0, 0], sizes = [2, 64], strides = [1, 1]} : vector<2x128xf32> to vector<2x64xf32>
    %110 = vector.extract_strided_slice %100 {offsets = [0, 64], sizes = [2, 64], strides = [1, 1]} : vector<2x128xf32> to vector<2x64xf32>
    %111 = vector.extract_strided_slice %108 {offsets = [0, 0], sizes = [2, 64], strides = [1, 1]} : vector<2x128xf32> to vector<2x64xf32>
    %112 = vector.extract_strided_slice %108 {offsets = [0, 64], sizes = [2, 64], strides = [1, 1]} : vector<2x128xf32> to vector<2x64xf32>
    %113 = arith.mulf %110, %89 : vector<2x64xf32>
    %114 = arith.mulf %109, %111 : vector<2x64xf32>
    %115 = arith.addf %113, %114 : vector<2x64xf32>
    %116 = math.tanh %115 : vector<2x64xf32>
    %117 = arith.mulf %112, %116 : vector<2x64xf32>
    %cst_23 = arith.constant dense<0.000000e+00> : vector<2x256xf32>
    %118 = tpu.matmul %117, %0, %cst_23 {dimension_numbers = #tpu.dot_dimension_numbers<[1], [0], [0], [1], [0, 0, 1, 1], [], []>, precision = #tpu.contract_precision<fp32>} : vector<2x64xf32>, vector<64x256xf32>, vector<2x256xf32> -> vector<2x256xf32>
    %119 = vector.extract_strided_slice %10 {offsets = [8, 0], sizes = [2, 256], strides = [1, 1]} : vector<18x256xf32> to vector<2x256xf32>
    %120 = arith.addf %118, %119 : vector<2x256xf32>
    %121 = vector.extract_strided_slice %120 {offsets = [0, 0], sizes = [2, 128], strides = [1, 1]} : vector<2x256xf32> to vector<2x128xf32>
    %122 = arith.negf %121 : vector<2x128xf32>
    %123 = math.exp %122 : vector<2x128xf32>
    %cst_24 = arith.constant 1.000000e+00 : f32
    %124 = vector.broadcast %cst_24 : f32 to vector<2x128xf32>
    %125 = arith.addf %124, %123 : vector<2x128xf32>
    %126 = arith.divf %124, %125 : vector<2x128xf32>
    %127 = vector.extract_strided_slice %120 {offsets = [0, 128], sizes = [2, 128], strides = [1, 1]} : vector<2x256xf32> to vector<2x128xf32>
    %128 = math.tanh %127 : vector<2x128xf32>
    %129 = arith.negf %127 : vector<2x128xf32>
    %130 = math.exp %129 : vector<2x128xf32>
    %cst_25 = arith.constant 1.000000e+00 : f32
    %131 = vector.broadcast %cst_25 : f32 to vector<2x128xf32>
    %132 = arith.addf %131, %130 : vector<2x128xf32>
    %133 = arith.divf %131, %132 : vector<2x128xf32>
    %134 = arith.select %13, %128, %133 : vector<2x128xi1>, vector<2x128xf32>
    %135 = vector.extract_strided_slice %126 {offsets = [0, 0], sizes = [2, 64], strides = [1, 1]} : vector<2x128xf32> to vector<2x64xf32>
    %136 = vector.extract_strided_slice %126 {offsets = [0, 64], sizes = [2, 64], strides = [1, 1]} : vector<2x128xf32> to vector<2x64xf32>
    %137 = vector.extract_strided_slice %134 {offsets = [0, 0], sizes = [2, 64], strides = [1, 1]} : vector<2x128xf32> to vector<2x64xf32>
    %138 = vector.extract_strided_slice %134 {offsets = [0, 64], sizes = [2, 64], strides = [1, 1]} : vector<2x128xf32> to vector<2x64xf32>
    %139 = arith.mulf %136, %115 : vector<2x64xf32>
    %140 = arith.mulf %135, %137 : vector<2x64xf32>
    %141 = arith.addf %139, %140 : vector<2x64xf32>
    %142 = math.tanh %141 : vector<2x64xf32>
    %143 = arith.mulf %138, %142 : vector<2x64xf32>
    %cst_26 = arith.constant dense<0.000000e+00> : vector<2x256xf32>
    %144 = tpu.matmul %143, %0, %cst_26 {dimension_numbers = #tpu.dot_dimension_numbers<[1], [0], [0], [1], [0, 0, 1, 1], [], []>, precision = #tpu.contract_precision<fp32>} : vector<2x64xf32>, vector<64x256xf32>, vector<2x256xf32> -> vector<2x256xf32>
    %145 = vector.extract_strided_slice %10 {offsets = [10, 0], sizes = [2, 256], strides = [1, 1]} : vector<18x256xf32> to vector<2x256xf32>
    %146 = arith.addf %144, %145 : vector<2x256xf32>
    %147 = vector.extract_strided_slice %146 {offsets = [0, 0], sizes = [2, 128], strides = [1, 1]} : vector<2x256xf32> to vector<2x128xf32>
    %148 = arith.negf %147 : vector<2x128xf32>
    %149 = math.exp %148 : vector<2x128xf32>
    %cst_27 = arith.constant 1.000000e+00 : f32
    %150 = vector.broadcast %cst_27 : f32 to vector<2x128xf32>
    %151 = arith.addf %150, %149 : vector<2x128xf32>
    %152 = arith.divf %150, %151 : vector<2x128xf32>
    %153 = vector.extract_strided_slice %146 {offsets = [0, 128], sizes = [2, 128], strides = [1, 1]} : vector<2x256xf32> to vector<2x128xf32>
    %154 = math.tanh %153 : vector<2x128xf32>
    %155 = arith.negf %153 : vector<2x128xf32>
    %156 = math.exp %155 : vector<2x128xf32>
    %cst_28 = arith.constant 1.000000e+00 : f32
    %157 = vector.broadcast %cst_28 : f32 to vector<2x128xf32>
    %158 = arith.addf %157, %156 : vector<2x128xf32>
    %159 = arith.divf %157, %158 : vector<2x128xf32>
    %160 = arith.select %13, %154, %159 : vector<2x128xi1>, vector<2x128xf32>
    %161 = vector.extract_strided_slice %152 {offsets = [0, 0], sizes = [2, 64], strides = [1, 1]} : vector<2x128xf32> to vector<2x64xf32>
    %162 = vector.extract_strided_slice %152 {offsets = [0, 64], sizes = [2, 64], strides = [1, 1]} : vector<2x128xf32> to vector<2x64xf32>
    %163 = vector.extract_strided_slice %160 {offsets = [0, 0], sizes = [2, 64], strides = [1, 1]} : vector<2x128xf32> to vector<2x64xf32>
    %164 = vector.extract_strided_slice %160 {offsets = [0, 64], sizes = [2, 64], strides = [1, 1]} : vector<2x128xf32> to vector<2x64xf32>
    %165 = arith.mulf %162, %141 : vector<2x64xf32>
    %166 = arith.mulf %161, %163 : vector<2x64xf32>
    %167 = arith.addf %165, %166 : vector<2x64xf32>
    %168 = math.tanh %167 : vector<2x64xf32>
    %169 = arith.mulf %164, %168 : vector<2x64xf32>
    %cst_29 = arith.constant dense<0.000000e+00> : vector<2x256xf32>
    %170 = tpu.matmul %169, %0, %cst_29 {dimension_numbers = #tpu.dot_dimension_numbers<[1], [0], [0], [1], [0, 0, 1, 1], [], []>, precision = #tpu.contract_precision<fp32>} : vector<2x64xf32>, vector<64x256xf32>, vector<2x256xf32> -> vector<2x256xf32>
    %171 = vector.extract_strided_slice %10 {offsets = [12, 0], sizes = [2, 256], strides = [1, 1]} : vector<18x256xf32> to vector<2x256xf32>
    %172 = arith.addf %170, %171 : vector<2x256xf32>
    %173 = vector.extract_strided_slice %172 {offsets = [0, 0], sizes = [2, 128], strides = [1, 1]} : vector<2x256xf32> to vector<2x128xf32>
    %174 = arith.negf %173 : vector<2x128xf32>
    %175 = math.exp %174 : vector<2x128xf32>
    %cst_30 = arith.constant 1.000000e+00 : f32
    %176 = vector.broadcast %cst_30 : f32 to vector<2x128xf32>
    %177 = arith.addf %176, %175 : vector<2x128xf32>
    %178 = arith.divf %176, %177 : vector<2x128xf32>
    %179 = vector.extract_strided_slice %172 {offsets = [0, 128], sizes = [2, 128], strides = [1, 1]} : vector<2x256xf32> to vector<2x128xf32>
    %180 = math.tanh %179 : vector<2x128xf32>
    %181 = arith.negf %179 : vector<2x128xf32>
    %182 = math.exp %181 : vector<2x128xf32>
    %cst_31 = arith.constant 1.000000e+00 : f32
    %183 = vector.broadcast %cst_31 : f32 to vector<2x128xf32>
    %184 = arith.addf %183, %182 : vector<2x128xf32>
    %185 = arith.divf %183, %184 : vector<2x128xf32>
    %186 = arith.select %13, %180, %185 : vector<2x128xi1>, vector<2x128xf32>
    %187 = vector.extract_strided_slice %178 {offsets = [0, 0], sizes = [2, 64], strides = [1, 1]} : vector<2x128xf32> to vector<2x64xf32>
    %188 = vector.extract_strided_slice %178 {offsets = [0, 64], sizes = [2, 64], strides = [1, 1]} : vector<2x128xf32> to vector<2x64xf32>
    %189 = vector.extract_strided_slice %186 {offsets = [0, 0], sizes = [2, 64], strides = [1, 1]} : vector<2x128xf32> to vector<2x64xf32>
    %190 = vector.extract_strided_slice %186 {offsets = [0, 64], sizes = [2, 64], strides = [1, 1]} : vector<2x128xf32> to vector<2x64xf32>
    %191 = arith.mulf %188, %167 : vector<2x64xf32>
    %192 = arith.mulf %187, %189 : vector<2x64xf32>
    %193 = arith.addf %191, %192 : vector<2x64xf32>
    %194 = math.tanh %193 : vector<2x64xf32>
    %195 = arith.mulf %190, %194 : vector<2x64xf32>
    %cst_32 = arith.constant dense<0.000000e+00> : vector<2x256xf32>
    %196 = tpu.matmul %195, %0, %cst_32 {dimension_numbers = #tpu.dot_dimension_numbers<[1], [0], [0], [1], [0, 0, 1, 1], [], []>, precision = #tpu.contract_precision<fp32>} : vector<2x64xf32>, vector<64x256xf32>, vector<2x256xf32> -> vector<2x256xf32>
    %197 = vector.extract_strided_slice %10 {offsets = [14, 0], sizes = [2, 256], strides = [1, 1]} : vector<18x256xf32> to vector<2x256xf32>
    %198 = arith.addf %196, %197 : vector<2x256xf32>
    %199 = vector.extract_strided_slice %198 {offsets = [0, 0], sizes = [2, 128], strides = [1, 1]} : vector<2x256xf32> to vector<2x128xf32>
    %200 = arith.negf %199 : vector<2x128xf32>
    %201 = math.exp %200 : vector<2x128xf32>
    %cst_33 = arith.constant 1.000000e+00 : f32
    %202 = vector.broadcast %cst_33 : f32 to vector<2x128xf32>
    %203 = arith.addf %202, %201 : vector<2x128xf32>
    %204 = arith.divf %202, %203 : vector<2x128xf32>
    %205 = vector.extract_strided_slice %198 {offsets = [0, 128], sizes = [2, 128], strides = [1, 1]} : vector<2x256xf32> to vector<2x128xf32>
    %206 = math.tanh %205 : vector<2x128xf32>
    %207 = arith.negf %205 : vector<2x128xf32>
    %208 = math.exp %207 : vector<2x128xf32>
    %cst_34 = arith.constant 1.000000e+00 : f32
    %209 = vector.broadcast %cst_34 : f32 to vector<2x128xf32>
    %210 = arith.addf %209, %208 : vector<2x128xf32>
    %211 = arith.divf %209, %210 : vector<2x128xf32>
    %212 = arith.select %13, %206, %211 : vector<2x128xi1>, vector<2x128xf32>
    %213 = vector.extract_strided_slice %204 {offsets = [0, 0], sizes = [2, 64], strides = [1, 1]} : vector<2x128xf32> to vector<2x64xf32>
    %214 = vector.extract_strided_slice %204 {offsets = [0, 64], sizes = [2, 64], strides = [1, 1]} : vector<2x128xf32> to vector<2x64xf32>
    %215 = vector.extract_strided_slice %212 {offsets = [0, 0], sizes = [2, 64], strides = [1, 1]} : vector<2x128xf32> to vector<2x64xf32>
    %216 = vector.extract_strided_slice %212 {offsets = [0, 64], sizes = [2, 64], strides = [1, 1]} : vector<2x128xf32> to vector<2x64xf32>
    %217 = arith.mulf %214, %193 : vector<2x64xf32>
    %218 = arith.mulf %213, %215 : vector<2x64xf32>
    %219 = arith.addf %217, %218 : vector<2x64xf32>
    %220 = math.tanh %219 : vector<2x64xf32>
    %221 = arith.mulf %216, %220 : vector<2x64xf32>
    %cst_35 = arith.constant dense<0.000000e+00> : vector<2x256xf32>
    %222 = tpu.matmul %221, %0, %cst_35 {dimension_numbers = #tpu.dot_dimension_numbers<[1], [0], [0], [1], [0, 0, 1, 1], [], []>, precision = #tpu.contract_precision<fp32>} : vector<2x64xf32>, vector<64x256xf32>, vector<2x256xf32> -> vector<2x256xf32>
    %223 = vector.extract_strided_slice %10 {offsets = [16, 0], sizes = [2, 256], strides = [1, 1]} : vector<18x256xf32> to vector<2x256xf32>
    %224 = arith.addf %222, %223 : vector<2x256xf32>
    %225 = vector.extract_strided_slice %224 {offsets = [0, 0], sizes = [2, 128], strides = [1, 1]} : vector<2x256xf32> to vector<2x128xf32>
    %226 = arith.negf %225 : vector<2x128xf32>
    %227 = math.exp %226 : vector<2x128xf32>
    %cst_36 = arith.constant 1.000000e+00 : f32
    %228 = vector.broadcast %cst_36 : f32 to vector<2x128xf32>
    %229 = arith.addf %228, %227 : vector<2x128xf32>
    %230 = arith.divf %228, %229 : vector<2x128xf32>
    %231 = vector.extract_strided_slice %224 {offsets = [0, 128], sizes = [2, 128], strides = [1, 1]} : vector<2x256xf32> to vector<2x128xf32>
    %232 = math.tanh %231 : vector<2x128xf32>
    %233 = arith.negf %231 : vector<2x128xf32>
    %234 = math.exp %233 : vector<2x128xf32>
    %cst_37 = arith.constant 1.000000e+00 : f32
    %235 = vector.broadcast %cst_37 : f32 to vector<2x128xf32>
    %236 = arith.addf %235, %234 : vector<2x128xf32>
    %237 = arith.divf %235, %236 : vector<2x128xf32>
    %238 = arith.select %13, %232, %237 : vector<2x128xi1>, vector<2x128xf32>
    %239 = vector.extract_strided_slice %230 {offsets = [0, 0], sizes = [2, 64], strides = [1, 1]} : vector<2x128xf32> to vector<2x64xf32>
    %240 = vector.extract_strided_slice %230 {offsets = [0, 64], sizes = [2, 64], strides = [1, 1]} : vector<2x128xf32> to vector<2x64xf32>
    %241 = vector.extract_strided_slice %238 {offsets = [0, 0], sizes = [2, 64], strides = [1, 1]} : vector<2x128xf32> to vector<2x64xf32>
    %242 = vector.extract_strided_slice %238 {offsets = [0, 64], sizes = [2, 64], strides = [1, 1]} : vector<2x128xf32> to vector<2x64xf32>
    %243 = arith.mulf %240, %219 : vector<2x64xf32>
    %244 = arith.mulf %239, %241 : vector<2x64xf32>
    %245 = arith.addf %243, %244 : vector<2x64xf32>
    %246 = math.tanh %245 : vector<2x64xf32>
    %247 = arith.mulf %242, %246 : vector<2x64xf32>
    %248 = vector.extract_strided_slice %247 {offsets = [0, 32], sizes = [2, 32], strides = [1, 1]} : vector<2x64xf32> to vector<2x32xf32>
    %cst_38 = arith.constant dense<0.000000e+00> : vector<2x128xf32>
    %249 = tpu.matmul %248, %1, %cst_38 {dimension_numbers = #tpu.dot_dimension_numbers<[1], [0], [0], [1], [0, 0, 1, 1], [], []>, precision = #tpu.contract_precision<fp32>} : vector<2x32xf32>, vector<32x128xf32>, vector<2x128xf32> -> vector<2x128xf32>
    %250 = arith.addf %249, %4 : vector<2x128xf32>
    %c0_39 = arith.constant 0 : index
    %c0_40 = arith.constant 0 : index
    %251 = vector.load %arg7[%c0_39, %c0_40] : memref<2x128xf32, #tpu.memory_space<vmem>>, vector<2x128xf32>
    tpu.vector_store %arg7[%c0_39, %c0_40], %250 {strides = array<i32>} : memref<2x128xf32, #tpu.memory_space<vmem>>, vector<2x128xf32>,
    return
  }
  func.func @transform_0(%arg0: i32) -> (i32, i32) {
    %c0_i32 = arith.constant 0 : i32
    %c0_i32_0 = arith.constant 0 : i32
    %c0_i32_1 = arith.constant 0 : i32
    return %c0_i32, %c0_i32_0 : i32, i32
  }
  func.func @transform_1(%arg0: i32) -> (i32, i32) {
    %c0_i32 = arith.constant 0 : i32
    %c0_i32_0 = arith.constant 0 : i32
    %c0_i32_1 = arith.constant 0 : i32
    return %c0_i32, %c0_i32_0 : i32, i32
  }
  func.func @transform_2(%arg0: i32) -> (i32, i32) {
    %c0_i32 = arith.constant 0 : i32
    %c0_i32_0 = arith.constant 0 : i32
    %c0_i32_1 = arith.constant 0 : i32
    return %c0_i32, %c0_i32_0 : i32, i32
  }
  func.func @transform_3(%arg0: i32) -> (i32, i32) {
    %c0_i32 = arith.constant 0 : i32
    %c0_i32_0 = arith.constant 0 : i32
    %c0_i32_1 = arith.constant 0 : i32
    return %c0_i32, %c0_i32_0 : i32, i32
  }
  func.func @transform_4(%arg0: i32) -> (i32, i32) {
    %c0_i32 = arith.constant 0 : i32
    %c0_i32_0 = arith.constant 0 : i32
    %c0_i32_1 = arith.constant 0 : i32
    return %c0_i32, %c0_i32_0 : i32, i32
  }
  func.func @transform_5(%arg0: i32) -> (i32, i32) {
    %c0_i32 = arith.constant 0 : i32
    %c0_i32_0 = arith.constant 0 : i32
    %c0_i32_1 = arith.constant 0 : i32
    return %c0_i32, %c0_i32_0 : i32, i32
  }
  func.func @transform_6(%arg0: i32) -> (i32, i32) {
    %c0_i32 = arith.constant 0 : i32
    %c0_i32_0 = arith.constant 0 : i32
    %c0_i32_1 = arith.constant 0 : i32
    return %c0_i32, %c0_i32_0 : i32, i32
  }
}

</mosaic_0001>

<llo_original>
// kernel: tpu_custom_call.1
$region0: #{tpu_custom_call.1}
  #allocation0 [shape = 'u32[]', space=smem, size = 0x4, offset = 0x4, fixed_abs, tag = 'smem constant byte address 0x4 - core index']
  #allocation1 [shape = 'u32[144,128]{1,0:T(1,128)}', space=vmem, size = 0x12000, scoped, tag = 'internal scratch']
  %s0 = inlined_call_operand.vmem [shape: f32[18,4], index: 0, kind: input, shape index: {}]
  %s1 = inlined_call_operand.vmem [shape: f32[4,256], index: 1, kind: input, shape index: {}]
  %s2 = inlined_call_operand.vmem [shape: f32[1,256], index: 2, kind: input, shape index: {}]
  %s3 = inlined_call_operand.hbm [shape: f32[64,256], index: 3, kind: input, shape index: {}]
  %s4 = inlined_call_operand.vmem [shape: f32[32,128], index: 4, kind: input, shape index: {}]
  %s5 = inlined_call_operand.vmem [shape: f32[1,128], index: 5, kind: input, shape index: {}]
  %s6 = inlined_call_operand.hbm [shape: f32[2,128], index: 6, kind: output, shape index: {}]
  %s7 = sld [smem:[#allocation0]]
  $region38: #{tpu_custom_call.1} parent=0
    _
  %s9 = ssub.s32 1, %s7
  %s10 = scalar_select 0, %s9, %s7
  $region1: #{tpu_custom_call.1} parent=0
    #allocation2 [shape = 'u8[65536]{0}', space=vmem, size = 0x10000, scoped, tag = 'input window, operand 3, single buffered']
    #allocation3 [shape = 's32[1]{0}', space=sflag, size = 0x4, scoped, tag = 'scoped memory for tpu_custom_call.1']
    #allocation4 [shape = 's32[1]{0}', space=sflag, size = 0x4, scoped, tag = 'scoped memory for tpu_custom_call.1']
    #allocation5 [shape = 'u8[1024]{0}', space=vmem, size = 0x400, scoped, tag = 'output window, operand 0, single buffered']
    %11 = vsyncpa [#allocation3], 0
    %12 = vsyncpa [#allocation4], 0
    // Predicated region
    $region2: #{tpu_custom_call.1} parent=1 // pred_check
      _
    $region3: #{tpu_custom_call.1} parent=1 // pred_check_branch
      %14 = sbr.rel (0) target = $region5
    $region4: #{tpu_custom_call.1} parent=1 // pred_region
      _
    $region5: #{tpu_custom_call.1} parent=1 // pred_fallthru
      _
    // Predicated region
    $region6: #{tpu_custom_call.1} parent=1 // pred_check
      _
    $region7: #{tpu_custom_call.1} parent=1 // pred_check_branch
      %16 = sbr.rel (0) target = $region9
    $region8: #{tpu_custom_call.1} parent=1 // pred_region
      _
    $region9: #{tpu_custom_call.1} parent=1 // pred_fallthru
      _
    // Predicated region
    $region10: #{tpu_custom_call.1} parent=1 // pred_check
      _
    $region11: #{tpu_custom_call.1} parent=1 // pred_check_branch
      %18 = sbr.rel (0) target = $region13
    $region12: #{tpu_custom_call.1} parent=1 // pred_region
      _
    $region13: #{tpu_custom_call.1} parent=1 // pred_fallthru
      _
    // Predicated region
    $region14: #{tpu_custom_call.1} parent=1 // pred_check
      _
    $region15: #{tpu_custom_call.1} parent=1 // pred_check_branch
      %20 = sbr.rel (0) target = $region17
    $region16: #{tpu_custom_call.1} parent=1 // pred_region
      %s22 = ssub.s32 2048, 2048
      %23 = vsyncadd [#allocation3], %s22
      %s24 = sshll.u32 [#allocation2], 4
      %s25 = int_to_ptr.vmem [resolvable:$true] %s24
      %30 = dma.hbm_to_vmem [thread:$0]  %s3, 2048, %s25, [#allocation3], 256, 256, 16
    $region17: #{tpu_custom_call.1} parent=1 // pred_fallthru
      _
    // Predicated region
    $region18: #{tpu_custom_call.1} parent=1 // pred_check
      _
    $region19: #{tpu_custom_call.1} parent=1 // pred_check_branch
      %32 = sbr.rel (0) target = $region21
    $region20: #{tpu_custom_call.1} parent=1 // pred_region
      _
    $region21: #{tpu_custom_call.1} parent=1 // pred_fallthru
      _
    // Predicated region
    $region22: #{tpu_custom_call.1} parent=1 // pred_check
      _
    $region23: #{tpu_custom_call.1} parent=1 // pred_check_branch
      %34 = sbr.rel (0) target = $region25
    $region24: #{tpu_custom_call.1} parent=1 // pred_region
      _
    $region25: #{tpu_custom_call.1} parent=1 // pred_fallthru
      _
    // Predicated region
    $region26: #{tpu_custom_call.1} parent=1 // pred_check
      _
    $region27: #{tpu_custom_call.1} parent=1 // pred_check_branch
      %36 = sbr.rel (0) target = $region29
    $region28: #{tpu_custom_call.1} parent=1 // pred_region
      %37 = dma.done [#allocation3], 2048
    $region29: #{tpu_custom_call.1} parent=1 // pred_fallthru
      _
    %v38 = vld [vmem:[#allocation2] sm:$0xff]
    %v39 = vld [vmem:[#allocation2 + $0x8] sm:$0xff]
    %v40 = vld [vmem:[#allocation2 + $0x10] sm:$0xff]
    %v41 = vld [vmem:[#allocation2 + $0x18] sm:$0xff]
    %v42 = vld [vmem:[#allocation2 + $0x20] sm:$0xff]
    %v43 = vld [vmem:[#allocation2 + $0x28] sm:$0xff]
    %v44 = vld [vmem:[#allocation2 + $0x30] sm:$0xff]
    %v45 = vld [vmem:[#allocation2 + $0x38] sm:$0xff]
    %v46 = vld [vmem:[#allocation2 + $0x40] sm:$0xff]
    %v47 = vld [vmem:[#allocation2 + $0x48] sm:$0xff]
    %v48 = vld [vmem:[#allocation2 + $0x50] sm:$0xff]
    %v49 = vld [vmem:[#allocation2 + $0x58] sm:$0xff]
    %v50 = vld [vmem:[#allocation2 + $0x60] sm:$0xff]
    %v51 = vld [vmem:[#allocation2 + $0x68] sm:$0xff]
    %v52 = vld [vmem:[#allocation2 + $0x70] sm:$0xff]
    %v53 = vld [vmem:[#allocation2 + $0x78] sm:$0xff]
    %v54 = vld [vmem:[%s4] sm:$0xff]
    %v55 = vld [vmem:[%s4 + $0x8] sm:$0xff]
    %v56 = vld [vmem:[%s4 + $0x10] sm:$0xff]
    %v57 = vld [vmem:[%s4 + $0x18] sm:$0xff]
    %v58 = vld [vmem:[%s5] sm:$0x1]
    %v60 = vlaneseq
    %v61 = vshrl.u32 %v60, 7
    %v62 = vsub.s32 0, %v61
    %v63 = vrot.slane %v58, %v62
    %v65 = vld [vmem:[%s0] sm:$0xff]
    %v66 = vld [vmem:[%s0 + $0x8] sm:$0xff]
    %v67 = vld [vmem:[%s0 + $0x10] sm:$0x3]
    %v68 = vld [vmem:[%s1] sm:$0xff]
    %v69 = vld [vmem:[%s2] sm:$0x3]
    %v71 = vlaneseq
    %v72 = vshrl.u32 %v71, 7
    %v73 = vsub.s32 0, %v72
    %v74 = vrot.slane %v69, %v73
    %v75 = vlaneseq
    %v76 = vshrl.u32 %v75, 7
    %v77 = vsub.s32 1, %v76
    %v78 = vrot.slane %v69, %v77
    %v82 = vcombine.high %v68, %v68
    %vm83 = vcmask 31744
    %v85 = vsel %vm83, %v65, 0
    %v88 = vsel %vm83, %v66, 0
    %v91 = vsel %vm83, %v67, 0
    %vm93 = vcmask 1043456
    %v94 = vsel %vm93, %v68, 0
    %v96 = vsel %vm93, %v82, 0
    %v98 = vand.u32 %v96, 4294901760
    %99 = vmatprep.subr.mxu0 %v98
    %v100 = vand.u32 %v94, 4294901760
    %101 = vmatpush1.msra.mxu0 %v100
    %102 = vmatprep.subr.mxu0 0.0
    %103 = vmatpush1.msra.mxu0 0.0
    %104 = vmatprep.subr.mxu0 0.0
    %105 = vmatpush1.msra.mxu0 0.0
    %106 = vmatprep.subr.mxu0 0.0
    %107 = vmatpush1.msra.mxu0 0.0
    %108 = vmatprep.subr.mxu0 0.0
    %109 = vmatpush1.msra.mxu0 0.0
    %110 = vmatprep.subr.mxu0 0.0
    %111 = vmatpush1.msra.mxu0 0.0
    %112 = vmatprep.subr.mxu0 0.0
    %113 = vmatpush1.msra.mxu0 0.0
    %114 = vmatprep.subr.mxu0 0.0
    %115 = vmatpush1.msra.mxu0 0.0
    %116 = vmatprep.subr.mxu0 0.0
    %117 = vmatpush1.msra.mxu0 0.0
    %118 = vmatprep.subr.mxu0 0.0
    %119 = vmatpush1.msra.mxu0 0.0
    %120 = vmatprep.subr.mxu0 0.0
    %121 = vmatpush1.msra.mxu0 0.0
    %122 = vmatprep.subr.mxu0 0.0
    %123 = vmatpush1.msra.mxu0 0.0
    %124 = vmatprep.subr.mxu0 0.0
    %125 = vmatpush1.msra.mxu0 0.0
    %126 = vmatprep.subr.mxu0 0.0
    %127 = vmatpush1.msra.mxu0 0.0
    %128 = vmatprep.subr.mxu0 0.0
    %129 = vmatpush1.msra.mxu0 0.0
    %130 = vmatprep.subr.mxu0 0.0
    %131 = vmatpush1.msra.mxu0 0.0
    %132 = vmatprep.subr.mxu0 0.0
    %133 = vmatpush1.msra.mxu0 0.0
    %134 = vmatprep.subr.mxu0 0.0
    %135 = vmatpush1.msra.mxu0 0.0
    %136 = vmatprep.subr.mxu0 0.0
    %137 = vmatpush1.msra.mxu0 0.0
    %138 = vmatprep.subr.mxu0 0.0
    %139 = vmatpush1.msra.mxu0 0.0
    %140 = vmatprep.subr.mxu0 0.0
    %141 = vmatpush1.msra.mxu0 0.0
    %142 = vmatprep.subr.mxu0 0.0
    %143 = vmatpush1.msra.mxu0 0.0
    %144 = vmatprep.subr.mxu0 0.0
    %145 = vmatpush1.msra.mxu0 0.0
    %146 = vmatprep.subr.mxu0 0.0
    %147 = vmatpush1.msra.mxu0 0.0
    %148 = vmatprep.subr.mxu0 0.0
    %149 = vmatpush1.msra.mxu0 0.0
    %150 = vmatprep.subr.mxu0 0.0
    %151 = vmatpush1.msra.mxu0 0.0
    %152 = vmatprep.subr.mxu0 0.0
    %153 = vmatpush1.msra.mxu0 0.0
    %154 = vmatprep.subr.mxu0 0.0
    %155 = vmatpush1.msra.mxu0 0.0
    %156 = vmatprep.subr.mxu0 0.0
    %157 = vmatpush1.msra.mxu0 0.0
    %158 = vmatprep.subr.mxu0 0.0
    %159 = vmatpush1.msra.mxu0 0.0
    %160 = vmatprep.subr.mxu0 0.0
    %161 = vmatpush1.msra.mxu0 0.0
    %162 = vmatprep.subr.mxu0 0.0
    %163 = vmatpush1.msra.mxu0 0.0
    %164 = vmatprep.mubr.f32.mxu0 0.0
    %v165 = vand.u32 %v85, 4294901760
    %v166 = vsub.f32 %v85, %v165
    %v167 = vand.u32 %v166, 4294901760
    %v168 = vsub.f32 %v166, %v167
    %v169 = vand.u32 %v168, 4294901760
    %170 = vmatmul.mubr.f32.gmra.mrb[0].mxu0 %v169
    %v171 = vpop.f32.mrb[0].mxu0
    %v172 = vadd.f32 %v74, %v171
    %v173 = vpop.f32.mrb[0].mxu0
    %v174 = vadd.f32 %v78, %v173
    %175 = vmatprep.mubr.f32.mxu0 0.0
    %v176 = vand.u32 %v88, 4294901760
    %v177 = vsub.f32 %v88, %v176
    %v178 = vand.u32 %v177, 4294901760
    %v179 = vsub.f32 %v177, %v178
    %v180 = vand.u32 %v179, 4294901760
    %181 = vmatmul.mubr.f32.gmra.mrb[0].mxu0 %v180
    %v182 = vpop.f32.mrb[0].mxu0
    %v183 = vadd.f32 %v74, %v182
    %v184 = vpop.f32.mrb[0].mxu0
    %v185 = vadd.f32 %v78, %v184
    %186 = vmatprep.mubr.f32.mxu0 0.0
    %v187 = vand.u32 %v91, 4294901760
    %v188 = vsub.f32 %v91, %v187
    %v189 = vand.u32 %v188, 4294901760
    %v190 = vsub.f32 %v188, %v189
    %v191 = vand.u32 %v190, 4294901760
    %192 = vmatmul.mubr.f32.gmra.mrb[0].mxu0 %v191
    %v193 = vpop.f32.mrb[0].mxu0
    %v194 = vadd.f32 %v74, %v193
    %v195 = vpop.f32.mrb[0].mxu0
    %v196 = vadd.f32 %v78, %v195
    %197 = vdwg.mxu0
    %v198 = vand.u32 %v96, 4294901760
    %v199 = vsub.f32 %v96, %v198
    %v200 = vand.u32 %v199, 4294901760
    %v201 = vsub.f32 %v199, %v200
    %v202 = vand.u32 %v201, 4294901760
    %203 = vmatprep.subr.mxu0 %v202
    %v204 = vand.u32 %v94, 4294901760
    %v205 = vsub.f32 %v94, %v204
    %v206 = vand.u32 %v205, 4294901760
    %v207 = vsub.f32 %v205, %v206
    %v208 = vand.u32 %v207, 4294901760
    %209 = vmatpush1.msra.mxu0 %v208
    %210 = vmatprep.subr.mxu0 0.0
    %211 = vmatpush1.msra.mxu0 0.0
    %212 = vmatprep.subr.mxu0 0.0
    %213 = vmatpush1.msra.mxu0 0.0
    %214 = vmatprep.subr.mxu0 0.0
    %215 = vmatpush1.msra.mxu0 0.0
    %216 = vmatprep.subr.mxu0 0.0
    %217 = vmatpush1.msra.mxu0 0.0
    %218 = vmatprep.subr.mxu0 0.0
    %219 = vmatpush1.msra.mxu0 0.0
    %220 = vmatprep.subr.mxu0 0.0
    %221 = vmatpush1.msra.mxu0 0.0
    %222 = vmatprep.subr.mxu0 0.0
    %223 = vmatpush1.msra.mxu0 0.0
    %224 = vmatprep.subr.mxu0 0.0
    %225 = vmatpush1.msra.mxu0 0.0
    %226 = vmatprep.subr.mxu0 0.0
    %227 = vmatpush1.msra.mxu0 0.0
    %228 = vmatprep.subr.mxu0 0.0
    %229 = vmatpush1.msra.mxu0 0.0
    %230 = vmatprep.subr.mxu0 0.0
    %231 = vmatpush1.msra.mxu0 0.0
    %232 = vmatprep.subr.mxu0 0.0
    %233 = vmatpush1.msra.mxu0 0.0
    %234 = vmatprep.subr.mxu0 0.0
    %235 = vmatpush1.msra.mxu0 0.0
    %236 = vmatprep.subr.mxu0 0.0
    %237 = vmatpush1.msra.mxu0 0.0
    %238 = vmatprep.subr.mxu0 0.0
    %239 = vmatpush1.msra.mxu0 0.0
    %240 = vmatprep.subr.mxu0 0.0
    %241 = vmatpush1.msra.mxu0 0.0
    %242 = vmatprep.subr.mxu0 0.0
    %243 = vmatpush1.msra.mxu0 0.0
    %244 = vmatprep.subr.mxu0 0.0
    %245 = vmatpush1.msra.mxu0 0.0
    %246 = vmatprep.subr.mxu0 0.0
    %247 = vmatpush1.msra.mxu0 0.0
    %248 = vmatprep.subr.mxu0 0.0
    %249 = vmatpush1.msra.mxu0 0.0
    %250 = vmatprep.subr.mxu0 0.0
    %251 = vmatpush1.msra.mxu0 0.0
    %252 = vmatprep.subr.mxu0 0.0
    %253 = vmatpush1.msra.mxu0 0.0
    %254 = vmatprep.subr.mxu0 0.0
    %255 = vmatpush1.msra.mxu0 0.0
    %256 = vmatprep.subr.mxu0 0.0
    %257 = vmatpush1.msra.mxu0 0.0
    %258 = vmatprep.subr.mxu0 0.0
    %259 = vmatpush1.msra.mxu0 0.0
    %260 = vmatprep.subr.mxu0 0.0
    %261 = vmatpush1.msra.mxu0 0.0
    %262 = vmatprep.subr.mxu0 0.0
    %263 = vmatpush1.msra.mxu0 0.0
    %264 = vmatprep.subr.mxu0 0.0
    %265 = vmatpush1.msra.mxu0 0.0
    %266 = vmatprep.subr.mxu0 0.0
    %267 = vmatpush1.msra.mxu0 0.0
    %268 = vmatprep.subr.mxu0 0.0
    %269 = vmatpush1.msra.mxu0 0.0
    %270 = vmatprep.subr.mxu0 0.0
    %271 = vmatpush1.msra.mxu0 0.0
    %272 = vmatprep.mubr.f32.mxu0 0.0
    %v273 = vand.u32 %v85, 4294901760
    %274 = vmatmul.mubr.f32.gmra.mrb[0].mxu0 %v273
    %v275 = vpop.f32.mrb[0].mxu0
    %v276 = vadd.f32 %v172, %v275
    %v277 = vpop.f32.mrb[0].mxu0
    %v278 = vadd.f32 %v174, %v277
    %279 = vmatprep.mubr.f32.mxu0 0.0
    %v280 = vand.u32 %v88, 4294901760
    %281 = vmatmul.mubr.f32.gmra.mrb[0].mxu0 %v280
    %v282 = vpop.f32.mrb[0].mxu0
    %v283 = vadd.f32 %v183, %v282
    %v284 = vpop.f32.mrb[0].mxu0
    %v285 = vadd.f32 %v185, %v284
    %286 = vmatprep.mubr.f32.mxu0 0.0
    %v287 = vand.u32 %v91, 4294901760
    %288 = vmatmul.mubr.f32.gmra.mrb[0].mxu0 %v287
    %v289 = vpop.f32.mrb[0].mxu0
    %v290 = vadd.f32 %v194, %v289
    %v291 = vpop.f32.mrb[0].mxu0
    %v292 = vadd.f32 %v196, %v291
    %293 = vdwg.mxu0
    %v294 = vand.u32 %v96, 4294901760
    %v295 = vsub.f32 %v96, %v294
    %296 = vmatprep.subr.mxu0 %v295
    %v297 = vand.u32 %v94, 4294901760
    %v298 = vsub.f32 %v94, %v297
    %299 = vmatpush1.msra.mxu0 %v298
    %300 = vmatprep.subr.mxu0 0.0
    %301 = vmatpush1.msra.mxu0 0.0
    %302 = vmatprep.subr.mxu0 0.0
    %303 = vmatpush1.msra.mxu0 0.0
    %304 = vmatprep.subr.mxu0 0.0
    %305 = vmatpush1.msra.mxu0 0.0
    %306 = vmatprep.subr.mxu0 0.0
    %307 = vmatpush1.msra.mxu0 0.0
    %308 = vmatprep.subr.mxu0 0.0
    %309 = vmatpush1.msra.mxu0 0.0
    %310 = vmatprep.subr.mxu0 0.0
    %311 = vmatpush1.msra.mxu0 0.0
    %312 = vmatprep.subr.mxu0 0.0
    %313 = vmatpush1.msra.mxu0 0.0
    %314 = vmatprep.subr.mxu0 0.0
    %315 = vmatpush1.msra.mxu0 0.0
    %316 = vmatprep.subr.mxu0 0.0
    %317 = vmatpush1.msra.mxu0 0.0
    %318 = vmatprep.subr.mxu0 0.0
    %319 = vmatpush1.msra.mxu0 0.0
    %320 = vmatprep.subr.mxu0 0.0
    %321 = vmatpush1.msra.mxu0 0.0
    %322 = vmatprep.subr.mxu0 0.0
    %323 = vmatpush1.msra.mxu0 0.0
    %324 = vmatprep.subr.mxu0 0.0
    %325 = vmatpush1.msra.mxu0 0.0
    %326 = vmatprep.subr.mxu0 0.0
    %327 = vmatpush1.msra.mxu0 0.0
    %328 = vmatprep.subr.mxu0 0.0
    %329 = vmatpush1.msra.mxu0 0.0
    %330 = vmatprep.subr.mxu0 0.0
    %331 = vmatpush1.msra.mxu0 0.0
    %332 = vmatprep.subr.mxu0 0.0
    %333 = vmatpush1.msra.mxu0 0.0
    %334 = vmatprep.subr.mxu0 0.0
    %335 = vmatpush1.msra.mxu0 0.0
    %336 = vmatprep.subr.mxu0 0.0
    %337 = vmatpush1.msra.mxu0 0.0
    %338 = vmatprep.subr.mxu0 0.0
    %339 = vmatpush1.msra.mxu0 0.0
    %340 = vmatprep.subr.mxu0 0.0
    %341 = vmatpush1.msra.mxu0 0.0
    %342 = vmatprep.subr.mxu0 0.0
    %343 = vmatpush1.msra.mxu0 0.0
    %344 = vmatprep.subr.mxu0 0.0
    %345 = vmatpush1.msra.mxu0 0.0
    %346 = vmatprep.subr.mxu0 0.0
    %347 = vmatpush1.msra.mxu0 0.0
    %348 = vmatprep.subr.mxu0 0.0
    %349 = vmatpush1.msra.mxu0 0.0
    %350 = vmatprep.subr.mxu0 0.0
    %351 = vmatpush1.msra.mxu0 0.0
    %352 = vmatprep.subr.mxu0 0.0
    %353 = vmatpush1.msra.mxu0 0.0
    %354 = vmatprep.subr.mxu0 0.0
    %355 = vmatpush1.msra.mxu0 0.0
    %356 = vmatprep.subr.mxu0 0.0
    %357 = vmatpush1.msra.mxu0 0.0
    %358 = vmatprep.subr.mxu0 0.0
    %359 = vmatpush1.msra.mxu0 0.0
    %360 = vmatprep.subr.mxu0 0.0
    %361 = vmatpush1.msra.mxu0 0.0
    %362 = vmatprep.mubr.f32.mxu0 0.0
    %v363 = vand.u32 %v85, 4294901760
    %v364 = vsub.f32 %v85, %v363
    %365 = vmatmul.mubr.f32.gmra.mrb[0].mxu0 %v364
    %v366 = vpop.f32.mrb[0].mxu0
    %v367 = vadd.f32 %v276, %v366
    %v368 = vpop.f32.mrb[0].mxu0
    %v369 = vadd.f32 %v278, %v368
    %370 = vmatprep.mubr.f32.mxu0 0.0
    %v371 = vand.u32 %v88, 4294901760
    %v372 = vsub.f32 %v88, %v371
    %373 = vmatmul.mubr.f32.gmra.mrb[0].mxu0 %v372
    %v374 = vpop.f32.mrb[0].mxu0
    %v375 = vadd.f32 %v283, %v374
    %v376 = vpop.f32.mrb[0].mxu0
    %v377 = vadd.f32 %v285, %v376
    %378 = vmatprep.mubr.f32.mxu0 0.0
    %v379 = vand.u32 %v91, 4294901760
    %v380 = vsub.f32 %v91, %v379
    %381 = vmatmul.mubr.f32.gmra.mrb[0].mxu0 %v380
    %v382 = vpop.f32.mrb[0].mxu0
    %v383 = vadd.f32 %v290, %v382
    %v384 = vpop.f32.mrb[0].mxu0
    %v385 = vadd.f32 %v292, %v384
    %386 = vdwg.mxu0
    %v387 = vand.u32 %v96, 4294901760
    %388 = vmatprep.subr.mxu0 %v387
    %v389 = vand.u32 %v94, 4294901760
    %390 = vmatpush1.msra.mxu0 %v389
    %391 = vmatprep.subr.mxu0 0.0
    %392 = vmatpush1.msra.mxu0 0.0
    %393 = vmatprep.subr.mxu0 0.0
    %394 = vmatpush1.msra.mxu0 0.0
    %395 = vmatprep.subr.mxu0 0.0
    %396 = vmatpush1.msra.mxu0 0.0
    %397 = vmatprep.subr.mxu0 0.0
    %398 = vmatpush1.msra.mxu0 0.0
    %399 = vmatprep.subr.mxu0 0.0
    %400 = vmatpush1.msra.mxu0 0.0
    %401 = vmatprep.subr.mxu0 0.0
    %402 = vmatpush1.msra.mxu0 0.0
    %403 = vmatprep.subr.mxu0 0.0
    %404 = vmatpush1.msra.mxu0 0.0
    %405 = vmatprep.subr.mxu0 0.0
    %406 = vmatpush1.msra.mxu0 0.0
    %407 = vmatprep.subr.mxu0 0.0
    %408 = vmatpush1.msra.mxu0 0.0
    %409 = vmatprep.subr.mxu0 0.0
    %410 = vmatpush1.msra.mxu0 0.0
    %411 = vmatprep.subr.mxu0 0.0
    %412 = vmatpush1.msra.mxu0 0.0
    %413 = vmatprep.subr.mxu0 0.0
    %414 = vmatpush1.msra.mxu0 0.0
    %415 = vmatprep.subr.mxu0 0.0
    %416 = vmatpush1.msra.mxu0 0.0
    %417 = vmatprep.subr.mxu0 0.0
    %418 = vmatpush1.msra.mxu0 0.0
    %419 = vmatprep.subr.mxu0 0.0
    %420 = vmatpush1.msra.mxu0 0.0
    %421 = vmatprep.subr.mxu0 0.0
    %422 = vmatpush1.msra.mxu0 0.0
    %423 = vmatprep.subr.mxu0 0.0
    %424 = vmatpush1.msra.mxu0 0.0
    %425 = vmatprep.subr.mxu0 0.0
    %426 = vmatpush1.msra.mxu0 0.0
    %427 = vmatprep.subr.mxu0 0.0
    %428 = vmatpush1.msra.mxu0 0.0
    %429 = vmatprep.subr.mxu0 0.0
    %430 = vmatpush1.msra.mxu0 0.0
    %431 = vmatprep.subr.mxu0 0.0
    %432 = vmatpush1.msra.mxu0 0.0
    %433 = vmatprep.subr.mxu0 0.0
    %434 = vmatpush1.msra.mxu0 0.0
    %435 = vmatprep.subr.mxu0 0.0
    %436 = vmatpush1.msra.mxu0 0.0
    %437 = vmatprep.subr.mxu0 0.0
    %438 = vmatpush1.msra.mxu0 0.0
    %439 = vmatprep.subr.mxu0 0.0
    %440 = vmatpush1.msra.mxu0 0.0
    %441 = vmatprep.subr.mxu0 0.0
    %442 = vmatpush1.msra.mxu0 0.0
    %443 = vmatprep.subr.mxu0 0.0
    %444 = vmatpush1.msra.mxu0 0.0
    %445 = vmatprep.subr.mxu0 0.0
    %446 = vmatpush1.msra.mxu0 0.0
    %447 = vmatprep.subr.mxu0 0.0
    %448 = vmatpush1.msra.mxu0 0.0
    %449 = vmatprep.subr.mxu0 0.0
    %450 = vmatpush1.msra.mxu0 0.0
    %451 = vmatprep.subr.mxu0 0.0
    %452 = vmatpush1.msra.mxu0 0.0
    %453 = vmatprep.mubr.f32.mxu0 0.0
    %v454 = vand.u32 %v85, 4294901760
    %v455 = vsub.f32 %v85, %v454
    %v456 = vand.u32 %v455, 4294901760
    %457 = vmatmul.mubr.f32.gmra.mrb[0].mxu0 %v456
    %v458 = vpop.f32.mrb[0].mxu0
    %v459 = vadd.f32 %v367, %v458
    %v460 = vpop.f32.mrb[0].mxu0
    %v461 = vadd.f32 %v369, %v460
    %462 = vmatprep.mubr.f32.mxu0 0.0
    %v463 = vand.u32 %v88, 4294901760
    %v464 = vsub.f32 %v88, %v463
    %v465 = vand.u32 %v464, 4294901760
    %466 = vmatmul.mubr.f32.gmra.mrb[0].mxu0 %v465
    %v467 = vpop.f32.mrb[0].mxu0
    %v468 = vadd.f32 %v375, %v467
    %v469 = vpop.f32.mrb[0].mxu0
    %v470 = vadd.f32 %v377, %v469
    %471 = vmatprep.mubr.f32.mxu0 0.0
    %v472 = vand.u32 %v91, 4294901760
    %v473 = vsub.f32 %v91, %v472
    %v474 = vand.u32 %v473, 4294901760
    %475 = vmatmul.mubr.f32.gmra.mrb[0].mxu0 %v474
    %v476 = vpop.f32.mrb[0].mxu0
    %v477 = vadd.f32 %v383, %v476
    %v478 = vpop.f32.mrb[0].mxu0
    %v479 = vadd.f32 %v385, %v478
    %480 = vdwg.mxu0
    %v481 = vand.u32 %v96, 4294901760
    %v482 = vsub.f32 %v96, %v481
    %v483 = vand.u32 %v482, 4294901760
    %484 = vmatprep.subr.mxu0 %v483
    %v485 = vand.u32 %v94, 4294901760
    %v486 = vsub.f32 %v94, %v485
    %v487 = vand.u32 %v486, 4294901760
    %488 = vmatpush1.msra.mxu0 %v487
    %489 = vmatprep.subr.mxu0 0.0
    %490 = vmatpush1.msra.mxu0 0.0
    %491 = vmatprep.subr.mxu0 0.0
    %492 = vmatpush1.msra.mxu0 0.0
    %493 = vmatprep.subr.mxu0 0.0
    %494 = vmatpush1.msra.mxu0 0.0
    %495 = vmatprep.subr.mxu0 0.0
    %496 = vmatpush1.msra.mxu0 0.0
    %497 = vmatprep.subr.mxu0 0.0
    %498 = vmatpush1.msra.mxu0 0.0
    %499 = vmatprep.subr.mxu0 0.0
    %500 = vmatpush1.msra.mxu0 0.0
    %501 = vmatprep.subr.mxu0 0.0
    %502 = vmatpush1.msra.mxu0 0.0
    %503 = vmatprep.subr.mxu0 0.0
    %504 = vmatpush1.msra.mxu0 0.0
    %505 = vmatprep.subr.mxu0 0.0
    %506 = vmatpush1.msra.mxu0 0.0
    %507 = vmatprep.subr.mxu0 0.0
    %508 = vmatpush1.msra.mxu0 0.0
    %509 = vmatprep.subr.mxu0 0.0
    %510 = vmatpush1.msra.mxu0 0.0
    %511 = vmatprep.subr.mxu0 0.0
    %512 = vmatpush1.msra.mxu0 0.0
    %513 = vmatprep.subr.mxu0 0.0
    %514 = vmatpush1.msra.mxu0 0.0
    %515 = vmatprep.subr.mxu0 0.0
    %516 = vmatpush1.msra.mxu0 0.0
    %517 = vmatprep.subr.mxu0 0.0
    %518 = vmatpush1.msra.mxu0 0.0
    %519 = vmatprep.subr.mxu0 0.0
    %520 = vmatpush1.msra.mxu0 0.0
    %521 = vmatprep.subr.mxu0 0.0
    %522 = vmatpush1.msra.mxu0 0.0
    %523 = vmatprep.subr.mxu0 0.0
    %524 = vmatpush1.msra.mxu0 0.0
    %525 = vmatprep.subr.mxu0 0.0
    %526 = vmatpush1.msra.mxu0 0.0
    %527 = vmatprep.subr.mxu0 0.0
    %528 = vmatpush1.msra.mxu0 0.0
    %529 = vmatprep.subr.mxu0 0.0
    %530 = vmatpush1.msra.mxu0 0.0
    %531 = vmatprep.subr.mxu0 0.0
    %532 = vmatpush1.msra.mxu0 0.0
    %533 = vmatprep.subr.mxu0 0.0
    %534 = vmatpush1.msra.mxu0 0.0
    %535 = vmatprep.subr.mxu0 0.0
    %536 = vmatpush1.msra.mxu0 0.0
    %537 = vmatprep.subr.mxu0 0.0
    %538 = vmatpush1.msra.mxu0 0.0
    %539 = vmatprep.subr.mxu0 0.0
    %540 = vmatpush1.msra.mxu0 0.0
    %541 = vmatprep.subr.mxu0 0.0
    %542 = vmatpush1.msra.mxu0 0.0
    %543 = vmatprep.subr.mxu0 0.0
    %544 = vmatpush1.msra.mxu0 0.0
    %545 = vmatprep.subr.mxu0 0.0
    %546 = vmatpush1.msra.mxu0 0.0
    %547 = vmatprep.subr.mxu0 0.0
    %548 = vmatpush1.msra.mxu0 0.0
    %549 = vmatprep.subr.mxu0 0.0
    %550 = vmatpush1.msra.mxu0 0.0
    %551 = vmatprep.mubr.f32.mxu0 0.0
    %v552 = vand.u32 %v85, 4294901760
    %553 = vmatmul.mubr.f32.gmra.mrb[0].mxu0 %v552
    %v554 = vpop.f32.mrb[0].mxu0
    %v555 = vadd.f32 %v459, %v554
    %v556 = vpop.f32.mrb[0].mxu0
    %v557 = vadd.f32 %v461, %v556
    %558 = vmatprep.mubr.f32.mxu0 0.0
    %v559 = vand.u32 %v88, 4294901760
    %560 = vmatmul.mubr.f32.gmra.mrb[0].mxu0 %v559
    %v561 = vpop.f32.mrb[0].mxu0
    %v562 = vadd.f32 %v468, %v561
    %v563 = vpop.f32.mrb[0].mxu0
    %v564 = vadd.f32 %v470, %v563
    %565 = vmatprep.mubr.f32.mxu0 0.0
    %v566 = vand.u32 %v91, 4294901760
    %567 = vmatmul.mubr.f32.gmra.mrb[0].mxu0 %v566
    %v568 = vpop.f32.mrb[0].mxu0
    %v569 = vadd.f32 %v477, %v568
    %v570 = vpop.f32.mrb[0].mxu0
    %v571 = vadd.f32 %v479, %v570
    %572 = vdwg.mxu0
    %v573 = vand.u32 %v96, 4294901760
    %574 = vmatprep.subr.mxu0 %v573
    %v575 = vand.u32 %v94, 4294901760
    %576 = vmatpush1.msra.mxu0 %v575
    %577 = vmatprep.subr.mxu0 0.0
    %578 = vmatpush1.msra.mxu0 0.0
    %579 = vmatprep.subr.mxu0 0.0
    %580 = vmatpush1.msra.mxu0 0.0
    %581 = vmatprep.subr.mxu0 0.0
    %582 = vmatpush1.msra.mxu0 0.0
    %583 = vmatprep.subr.mxu0 0.0
    %584 = vmatpush1.msra.mxu0 0.0
    %585 = vmatprep.subr.mxu0 0.0
    %586 = vmatpush1.msra.mxu0 0.0
    %587 = vmatprep.subr.mxu0 0.0
    %588 = vmatpush1.msra.mxu0 0.0
    %589 = vmatprep.subr.mxu0 0.0
    %590 = vmatpush1.msra.mxu0 0.0
    %591 = vmatprep.subr.mxu0 0.0
    %592 = vmatpush1.msra.mxu0 0.0
    %593 = vmatprep.subr.mxu0 0.0
    %594 = vmatpush1.msra.mxu0 0.0
    %595 = vmatprep.subr.mxu0 0.0
    %596 = vmatpush1.msra.mxu0 0.0
    %597 = vmatprep.subr.mxu0 0.0
    %598 = vmatpush1.msra.mxu0 0.0
    %599 = vmatprep.subr.mxu0 0.0
    %600 = vmatpush1.msra.mxu0 0.0
    %601 = vmatprep.subr.mxu0 0.0
    %602 = vmatpush1.msra.mxu0 0.0
    %603 = vmatprep.subr.mxu0 0.0
    %604 = vmatpush1.msra.mxu0 0.0
    %605 = vmatprep.subr.mxu0 0.0
    %606 = vmatpush1.msra.mxu0 0.0
    %607 = vmatprep.subr.mxu0 0.0
    %608 = vmatpush1.msra.mxu0 0.0
    %609 = vmatprep.subr.mxu0 0.0
    %610 = vmatpush1.msra.mxu0 0.0
    %611 = vmatprep.subr.mxu0 0.0
    %612 = vmatpush1.msra.mxu0 0.0
    %613 = vmatprep.subr.mxu0 0.0
    %614 = vmatpush1.msra.mxu0 0.0
    %615 = vmatprep.subr.mxu0 0.0
    %616 = vmatpush1.msra.mxu0 0.0
    %617 = vmatprep.subr.mxu0 0.0
    %618 = vmatpush1.msra.mxu0 0.0
    %619 = vmatprep.subr.mxu0 0.0
    %620 = vmatpush1.msra.mxu0 0.0
    %621 = vmatprep.subr.mxu0 0.0
    %622 = vmatpush1.msra.mxu0 0.0
    %623 = vmatprep.subr.mxu0 0.0
    %624 = vmatpush1.msra.mxu0 0.0
    %625 = vmatprep.subr.mxu0 0.0
    %626 = vmatpush1.msra.mxu0 0.0
    %627 = vmatprep.subr.mxu0 0.0
    %628 = vmatpush1.msra.mxu0 0.0
    %629 = vmatprep.subr.mxu0 0.0
    %630 = vmatpush1.msra.mxu0 0.0
    %631 = vmatprep.subr.mxu0 0.0
    %632 = vmatpush1.msra.mxu0 0.0
    %633 = vmatprep.subr.mxu0 0.0
    %634 = vmatpush1.msra.mxu0 0.0
    %635 = vmatprep.subr.mxu0 0.0
    %636 = vmatpush1.msra.mxu0 0.0
    %637 = vmatprep.subr.mxu0 0.0
    %638 = vmatpush1.msra.mxu0 0.0
    %639 = vmatprep.mubr.f32.mxu0 0.0
    %v640 = vand.u32 %v85, 4294901760
    %641 = vmatmul.mubr.f32.gmra.mrb[0].mxu0 %v640
    %v642 = vpop.f32.mrb[0].mxu0
    %v643 = vadd.f32 %v555, %v642
    %v644 = vpop.f32.mrb[0].mxu0
    %v645 = vadd.f32 %v557, %v644
    %646 = vmatprep.mubr.f32.mxu0 0.0
    %v647 = vand.u32 %v88, 4294901760
    %648 = vmatmul.mubr.f32.gmra.mrb[0].mxu0 %v647
    %v649 = vpop.f32.mrb[0].mxu0
    %v650 = vadd.f32 %v562, %v649
    %v651 = vpop.f32.mrb[0].mxu0
    %v652 = vadd.f32 %v564, %v651
    %653 = vmatprep.mubr.f32.mxu0 0.0
    %v654 = vand.u32 %v91, 4294901760
    %655 = vmatmul.mubr.f32.gmra.mrb[0].mxu0 %v654
    %v656 = vpop.f32.mrb[0].mxu0
    %v657 = vadd.f32 %v569, %v656
    %v658 = vpop.f32.mrb[0].mxu0
    %v659 = vadd.f32 %v571, %v658
    %660 = vdwg.mxu0
    %v661 = vlaneseq
    %v662 = vand.u32 %v661, 127
    %vm663 = vcmp.lt.s32.totalorder %v662, 64
    %vm664 = vcmp.lt.s32.totalorder %v662, 32
    %v665 = vxor.u32 %v643, 2147483648
    %v666 = vmul.f32 %v665, 1.442695
    %v667 = vpow.pop %v666
    %v668 = vadd.f32 %v667, 1.0
    %v669 = vrcp.pop %v668
    %v670 = vmul.f32 1.0, %v669
    %v671 = vtanh.pop %v645
    %v672 = vxor.u32 %v645, 2147483648
    %v673 = vmul.f32 %v672, 1.442695
    %v674 = vpow.pop %v673
    %v675 = vadd.f32 %v674, 1.0
    %v676 = vrcp.pop %v675
    %v677 = vmul.f32 1.0, %v676
    %v678 = vsel %vm663, %v671, %v677
    %v679 = vmul.f32 %v670, %v678
    %v680 = vsel %vm664, %v679, 0.0
    %v681 = vtanh.pop %v680
    %683 = vrot.lane.b32.xlu0 %v681, 64
    %v684 = vpop.permute.xlu0 %683
    %v686 = vmul.f32 %v678, %v684
    %688 = vrot.lane.b32.xlu0 %v686, 64
    %v689 = vpop.permute.xlu0 %688
    %v692 = vrot.slane %v643, 2
    %v693 = vrot.slane %v645, 2
    %vm696 = vcmask 523264
    %v697 = vsel %vm696, %v689, 0
    %v699 = vand.u32 %v39, 4294901760
    %700 = vmatprep.subr.mxu0 %v699
    %v701 = vand.u32 %v38, 4294901760
    %702 = vmatpush1.msra.mxu0 %v701
    %v703 = vand.u32 %v41, 4294901760
    %704 = vmatprep.subr.mxu0 %v703
    %v705 = vand.u32 %v40, 4294901760
    %706 = vmatpush1.msra.mxu0 %v705
    %v707 = vand.u32 %v43, 4294901760
    %708 = vmatprep.subr.mxu0 %v707
    %v709 = vand.u32 %v42, 4294901760
    %710 = vmatpush1.msra.mxu0 %v709
    %v711 = vand.u32 %v45, 4294901760
    %712 = vmatprep.subr.mxu0 %v711
    %v713 = vand.u32 %v44, 4294901760
    %714 = vmatpush1.msra.mxu0 %v713
    %v715 = vand.u32 %v47, 4294901760
    %716 = vmatprep.subr.mxu0 %v715
    %v717 = vand.u32 %v46, 4294901760
    %718 = vmatpush1.msra.mxu0 %v717
    %v719 = vand.u32 %v49, 4294901760
    %720 = vmatprep.subr.mxu0 %v719
    %v721 = vand.u32 %v48, 4294901760
    %722 = vmatpush1.msra.mxu0 %v721
    %v723 = vand.u32 %v51, 4294901760
    %724 = vmatprep.subr.mxu0 %v723
    %v725 = vand.u32 %v50, 4294901760
    %726 = vmatpush1.msra.mxu0 %v725
    %v727 = vand.u32 %v53, 4294901760
    %728 = vmatprep.subr.mxu0 %v727
    %v729 = vand.u32 %v52, 4294901760
    %730 = vmatpush1.msra.mxu0 %v729
    %731 = vmatprep.subr.mxu0 0.0
    %732 = vmatpush1.msra.mxu0 0.0
    %733 = vmatprep.subr.mxu0 0.0
    %734 = vmatpush1.msra.mxu0 0.0
    %735 = vmatprep.subr.mxu0 0.0
    %736 = vmatpush1.msra.mxu0 0.0
    %737 = vmatprep.subr.mxu0 0.0
    %738 = vmatpush1.msra.mxu0 0.0
    %739 = vmatprep.subr.mxu0 0.0
    %740 = vmatpush1.msra.mxu0 0.0
    %741 = vmatprep.subr.mxu0 0.0
    %742 = vmatpush1.msra.mxu0 0.0
    %743 = vmatprep.subr.mxu0 0.0
    %744 = vmatpush1.msra.mxu0 0.0
    %745 = vmatprep.subr.mxu0 0.0
    %746 = vmatpush1.msra.mxu0 0.0
    %747 = vmatprep.subr.mxu0 0.0
    %748 = vmatpush1.msra.mxu0 0.0
    %749 = vmatprep.subr.mxu0 0.0
    %750 = vmatpush1.msra.mxu0 0.0
    %751 = vmatprep.subr.mxu0 0.0
    %752 = vmatpush1.msra.mxu0 0.0
    %753 = vmatprep.subr.mxu0 0.0
    %754 = vmatpush1.msra.mxu0 0.0
    %755 = vmatprep.subr.mxu0 0.0
    %756 = vmatpush1.msra.mxu0 0.0
    %757 = vmatprep.subr.mxu0 0.0
    %758 = vmatpush1.msra.mxu0 0.0
    %759 = vmatprep.subr.mxu0 0.0
    %760 = vmatpush1.msra.mxu0 0.0
    %761 = vmatprep.subr.mxu0 0.0
    %762 = vmatpush1.msra.mxu0 0.0
    %763 = vmatprep.subr.mxu0 0.0
    %764 = vmatpush1.msra.mxu0 0.0
    %765 = vmatprep.subr.mxu0 0.0
    %766 = vmatpush1.msra.mxu0 0.0
    %767 = vmatprep.subr.mxu0 0.0
    %768 = vmatpush1.msra.mxu0 0.0
    %769 = vmatprep.subr.mxu0 0.0
    %770 = vmatpush1.msra.mxu0 0.0
    %771 = vmatprep.subr.mxu0 0.0
    %772 = vmatpush1.msra.mxu0 0.0
    %773 = vmatprep.subr.mxu0 0.0
    %774 = vmatpush1.msra.mxu0 0.0
    %775 = vmatprep.subr.mxu0 0.0
    %776 = vmatpush1.msra.mxu0 0.0
    %777 = vmatprep.subr.mxu0 0.0
    %778 = vmatpush1.msra.mxu0 0.0
    %779 = vmatprep.mubr.f32.mxu0 0.0
    %v780 = vand.u32 %v697, 4294901760
    %v781 = vsub.f32 %v697, %v780
    %v782 = vand.u32 %v781, 4294901760
    %v783 = vsub.f32 %v781, %v782
    %v784 = vand.u32 %v783, 4294901760
    %785 = vmatmul.mubr.f32.gmra.mrb[0].mxu0 %v784
    %v786 = vpop.f32.mrb[0].mxu0
    %v787 = vadd.f32 %v692, %v786
    %v788 = vpop.f32.mrb[0].mxu0
    %v789 = vadd.f32 %v693, %v788
    %790 = vdwg.mxu0
    %v791 = vand.u32 %v39, 4294901760
    %v792 = vsub.f32 %v39, %v791
    %v793 = vand.u32 %v792, 4294901760
    %v794 = vsub.f32 %v792, %v793
    %v795 = vand.u32 %v794, 4294901760
    %796 = vmatprep.subr.mxu0 %v795
    %v797 = vand.u32 %v38, 4294901760
    %v798 = vsub.f32 %v38, %v797
    %v799 = vand.u32 %v798, 4294901760
    %v800 = vsub.f32 %v798, %v799
    %v801 = vand.u32 %v800, 4294901760
    %802 = vmatpush1.msra.mxu0 %v801
    %v803 = vand.u32 %v41, 4294901760
    %v804 = vsub.f32 %v41, %v803
    %v805 = vand.u32 %v804, 4294901760
    %v806 = vsub.f32 %v804, %v805
    %v807 = vand.u32 %v806, 4294901760
    %808 = vmatprep.subr.mxu0 %v807
    %v809 = vand.u32 %v40, 4294901760
    %v810 = vsub.f32 %v40, %v809
    %v811 = vand.u32 %v810, 4294901760
    %v812 = vsub.f32 %v810, %v811
    %v813 = vand.u32 %v812, 4294901760
    %814 = vmatpush1.msra.mxu0 %v813
    %v815 = vand.u32 %v43, 4294901760
    %v816 = vsub.f32 %v43, %v815
    %v817 = vand.u32 %v816, 4294901760
    %v818 = vsub.f32 %v816, %v817
    %v819 = vand.u32 %v818, 4294901760
    %820 = vmatprep.subr.mxu0 %v819
    %v821 = vand.u32 %v42, 4294901760
    %v822 = vsub.f32 %v42, %v821
    %v823 = vand.u32 %v822, 4294901760
    %v824 = vsub.f32 %v822, %v823
    %v825 = vand.u32 %v824, 4294901760
    %826 = vmatpush1.msra.mxu0 %v825
    %v827 = vand.u32 %v45, 4294901760
    %v828 = vsub.f32 %v45, %v827
    %v829 = vand.u32 %v828, 4294901760
    %v830 = vsub.f32 %v828, %v829
    %v831 = vand.u32 %v830, 4294901760
    %832 = vmatprep.subr.mxu0 %v831
    %v833 = vand.u32 %v44, 4294901760
    %v834 = vsub.f32 %v44, %v833
    %v835 = vand.u32 %v834, 4294901760
    %v836 = vsub.f32 %v834, %v835
    %v837 = vand.u32 %v836, 4294901760
    %838 = vmatpush1.msra.mxu0 %v837
    %v839 = vand.u32 %v47, 4294901760
    %v840 = vsub.f32 %v47, %v839
    %v841 = vand.u32 %v840, 4294901760
    %v842 = vsub.f32 %v840, %v841
    %v843 = vand.u32 %v842, 4294901760
    %844 = vmatprep.subr.mxu0 %v843
    %v845 = vand.u32 %v46, 4294901760
    %v846 = vsub.f32 %v46, %v845
    %v847 = vand.u32 %v846, 4294901760
    %v848 = vsub.f32 %v846, %v847
    %v849 = vand.u32 %v848, 4294901760
    %850 = vmatpush1.msra.mxu0 %v849
    %v851 = vand.u32 %v49, 4294901760
    %v852 = vsub.f32 %v49, %v851
    %v853 = vand.u32 %v852, 4294901760
    %v854 = vsub.f32 %v852, %v853
    %v855 = vand.u32 %v854, 4294901760
    %856 = vmatprep.subr.mxu0 %v855
    %v857 = vand.u32 %v48, 4294901760
    %v858 = vsub.f32 %v48, %v857
    %v859 = vand.u32 %v858, 4294901760
    %v860 = vsub.f32 %v858, %v859
    %v861 = vand.u32 %v860, 4294901760
    %862 = vmatpush1.msra.mxu0 %v861
    %v863 = vand.u32 %v51, 4294901760
    %v864 = vsub.f32 %v51, %v863
    %v865 = vand.u32 %v864, 4294901760
    %v866 = vsub.f32 %v864, %v865
    %v867 = vand.u32 %v866, 4294901760
    %868 = vmatprep.subr.mxu0 %v867
    %v869 = vand.u32 %v50, 4294901760
    %v870 = vsub.f32 %v50, %v869
    %v871 = vand.u32 %v870, 4294901760
    %v872 = vsub.f32 %v870, %v871
    %v873 = vand.u32 %v872, 4294901760
    %874 = vmatpush1.msra.mxu0 %v873
    %v875 = vand.u32 %v53, 4294901760
    %v876 = vsub.f32 %v53, %v875
    %v877 = vand.u32 %v876, 4294901760
    %v878 = vsub.f32 %v876, %v877
    %v879 = vand.u32 %v878, 4294901760
    %880 = vmatprep.subr.mxu0 %v879
    %v881 = vand.u32 %v52, 4294901760
    %v882 = vsub.f32 %v52, %v881
    %v883 = vand.u32 %v882, 4294901760
    %v884 = vsub.f32 %v882, %v883
    %v885 = vand.u32 %v884, 4294901760
    %886 = vmatpush1.msra.mxu0 %v885
    %887 = vmatprep.subr.mxu0 0.0
    %888 = vmatpush1.msra.mxu0 0.0
    %889 = vmatprep.subr.mxu0 0.0
    %890 = vmatpush1.msra.mxu0 0.0
    %891 = vmatprep.subr.mxu0 0.0
    %892 = vmatpush1.msra.mxu0 0.0
    %893 = vmatprep.subr.mxu0 0.0
    %894 = vmatpush1.msra.mxu0 0.0
    %895 = vmatprep.subr.mxu0 0.0
    %896 = vmatpush1.msra.mxu0 0.0
    %897 = vmatprep.subr.mxu0 0.0
    %898 = vmatpush1.msra.mxu0 0.0
    %899 = vmatprep.subr.mxu0 0.0
    %900 = vmatpush1.msra.mxu0 0.0
    %901 = vmatprep.subr.mxu0 0.0
    %902 = vmatpush1.msra.mxu0 0.0
    %903 = vmatprep.subr.mxu0 0.0
    %904 = vmatpush1.msra.mxu0 0.0
    %905 = vmatprep.subr.mxu0 0.0
    %906 = vmatpush1.msra.mxu0 0.0
    %907 = vmatprep.subr.mxu0 0.0
    %908 = vmatpush1.msra.mxu0 0.0
    %909 = vmatprep.subr.mxu0 0.0
    %910 = vmatpush1.msra.mxu0 0.0
    %911 = vmatprep.subr.mxu0 0.0
    %912 = vmatpush1.msra.mxu0 0.0
    %913 = vmatprep.subr.mxu0 0.0
    %914 = vmatpush1.msra.mxu0 0.0
    %915 = vmatprep.subr.mxu0 0.0
    %916 = vmatpush1.msra.mxu0 0.0
    %917 = vmatprep.subr.mxu0 0.0
    %918 = vmatpush1.msra.mxu0 0.0
    %919 = vmatprep.subr.mxu0 0.0
    %920 = vmatpush1.msra.mxu0 0.0
    %921 = vmatprep.subr.mxu0 0.0
    %922 = vmatpush1.msra.mxu0 0.0
    %923 = vmatprep.subr.mxu0 0.0
    %924 = vmatpush1.msra.mxu0 0.0
    %925 = vmatprep.subr.mxu0 0.0
    %926 = vmatpush1.msra.mxu0 0.0
    %927 = vmatprep.subr.mxu0 0.0
    %928 = vmatpush1.msra.mxu0 0.0
    %929 = vmatprep.subr.mxu0 0.0
    %930 = vmatpush1.msra.mxu0 0.0
    %931 = vmatprep.subr.mxu0 0.0
    %932 = vmatpush1.msra.mxu0 0.0
    %933 = vmatprep.subr.mxu0 0.0
    %934 = vmatpush1.msra.mxu0 0.0
    %935 = vmatprep.mubr.f32.mxu0 0.0
    %v936 = vand.u32 %v697, 4294901760
    %937 = vmatmul.mubr.f32.gmra.mrb[0].mxu0 %v936
    %v938 = vpop.f32.mrb[0].mxu0
    %v939 = vadd.f32 %v787, %v938
    %v940 = vpop.f32.mrb[0].mxu0
    %v941 = vadd.f32 %v789, %v940
    %942 = vdwg.mxu0
    %v943 = vand.u32 %v39, 4294901760
    %v944 = vsub.f32 %v39, %v943
    %945 = vmatprep.subr.mxu0 %v944
    %v946 = vand.u32 %v38, 4294901760
    %v947 = vsub.f32 %v38, %v946
    %948 = vmatpush1.msra.mxu0 %v947
    %v949 = vand.u32 %v41, 4294901760
    %v950 = vsub.f32 %v41, %v949
    %951 = vmatprep.subr.mxu0 %v950
    %v952 = vand.u32 %v40, 4294901760
    %v953 = vsub.f32 %v40, %v952
    %954 = vmatpush1.msra.mxu0 %v953
    %v955 = vand.u32 %v43, 4294901760
    %v956 = vsub.f32 %v43, %v955
    %957 = vmatprep.subr.mxu0 %v956
    %v958 = vand.u32 %v42, 4294901760
    %v959 = vsub.f32 %v42, %v958
    %960 = vmatpush1.msra.mxu0 %v959
    %v961 = vand.u32 %v45, 4294901760
    %v962 = vsub.f32 %v45, %v961
    %963 = vmatprep.subr.mxu0 %v962
    %v964 = vand.u32 %v44, 4294901760
    %v965 = vsub.f32 %v44, %v964
    %966 = vmatpush1.msra.mxu0 %v965
    %v967 = vand.u32 %v47, 4294901760
    %v968 = vsub.f32 %v47, %v967
    %969 = vmatprep.subr.mxu0 %v968
    %v970 = vand.u32 %v46, 4294901760
    %v971 = vsub.f32 %v46, %v970
    %972 = vmatpush1.msra.mxu0 %v971
    %v973 = vand.u32 %v49, 4294901760
    %v974 = vsub.f32 %v49, %v973
    %975 = vmatprep.subr.mxu0 %v974
    %v976 = vand.u32 %v48, 4294901760
    %v977 = vsub.f32 %v48, %v976
    %978 = vmatpush1.msra.mxu0 %v977
    %v979 = vand.u32 %v51, 4294901760
    %v980 = vsub.f32 %v51, %v979
    %981 = vmatprep.subr.mxu0 %v980
    %v982 = vand.u32 %v50, 4294901760
    %v983 = vsub.f32 %v50, %v982
    %984 = vmatpush1.msra.mxu0 %v983
    %v985 = vand.u32 %v53, 4294901760
    %v986 = vsub.f32 %v53, %v985
    %987 = vmatprep.subr.mxu0 %v986
    %v988 = vand.u32 %v52, 4294901760
    %v989 = vsub.f32 %v52, %v988
    %990 = vmatpush1.msra.mxu0 %v989
    %991 = vmatprep.subr.mxu0 0.0
    %992 = vmatpush1.msra.mxu0 0.0
    %993 = vmatprep.subr.mxu0 0.0
    %994 = vmatpush1.msra.mxu0 0.0
    %995 = vmatprep.subr.mxu0 0.0
    %996 = vmatpush1.msra.mxu0 0.0
    %997 = vmatprep.subr.mxu0 0.0
    %998 = vmatpush1.msra.mxu0 0.0
    %999 = vmatprep.subr.mxu0 0.0
    %1000 = vmatpush1.msra.mxu0 0.0
    %1001 = vmatprep.subr.mxu0 0.0
    %1002 = vmatpush1.msra.mxu0 0.0
    %1003 = vmatprep.subr.mxu0 0.0
    %1004 = vmatpush1.msra.mxu0 0.0
    %1005 = vmatprep.subr.mxu0 0.0
    %1006 = vmatpush1.msra.mxu0 0.0
    %1007 = vmatprep.subr.mxu0 0.0
    %1008 = vmatpush1.msra.mxu0 0.0
    %1009 = vmatprep.subr.mxu0 0.0
    %1010 = vmatpush1.msra.mxu0 0.0
    %1011 = vmatprep.subr.mxu0 0.0
    %1012 = vmatpush1.msra.mxu0 0.0
    %1013 = vmatprep.subr.mxu0 0.0
    %1014 = vmatpush1.msra.mxu0 0.0
    %1015 = vmatprep.subr.mxu0 0.0
    %1016 = vmatpush1.msra.mxu0 0.0
    %1017 = vmatprep.subr.mxu0 0.0
    %1018 = vmatpush1.msra.mxu0 0.0
    %1019 = vmatprep.subr.mxu0 0.0
    %1020 = vmatpush1.msra.mxu0 0.0
    %1021 = vmatprep.subr.mxu0 0.0
    %1022 = vmatpush1.msra.mxu0 0.0
    %1023 = vmatprep.subr.mxu0 0.0
    %1024 = vmatpush1.msra.mxu0 0.0
    %1025 = vmatprep.subr.mxu0 0.0
    %1026 = vmatpush1.msra.mxu0 0.0
    %1027 = vmatprep.subr.mxu0 0.0
    %1028 = vmatpush1.msra.mxu0 0.0
    %1029 = vmatprep.subr.mxu0 0.0
    %1030 = vmatpush1.msra.mxu0 0.0
    %1031 = vmatprep.subr.mxu0 0.0
    %1032 = vmatpush1.msra.mxu0 0.0
    %1033 = vmatprep.subr.mxu0 0.0
    %1034 = vmatpush1.msra.mxu0 0.0
    %1035 = vmatprep.subr.mxu0 0.0
    %1036 = vmatpush1.msra.mxu0 0.0
    %1037 = vmatprep.subr.mxu0 0.0
    %1038 = vmatpush1.msra.mxu0 0.0
    %1039 = vmatprep.mubr.f32.mxu0 0.0
    %v1040 = vand.u32 %v697, 4294901760
    %v1041 = vsub.f32 %v697, %v1040
    %1042 = vmatmul.mubr.f32.gmra.mrb[0].mxu0 %v1041
    %v1043 = vpop.f32.mrb[0].mxu0
    %v1044 = vadd.f32 %v939, %v1043
    %v1045 = vpop.f32.mrb[0].mxu0
    %v1046 = vadd.f32 %v941, %v1045
    %1047 = vdwg.mxu0
    %v1048 = vand.u32 %v39, 4294901760
    %1049 = vmatprep.subr.mxu0 %v1048
    %v1050 = vand.u32 %v38, 4294901760
    %1051 = vmatpush1.msra.mxu0 %v1050
    %v1052 = vand.u32 %v41, 4294901760
    %1053 = vmatprep.subr.mxu0 %v1052
    %v1054 = vand.u32 %v40, 4294901760
    %1055 = vmatpush1.msra.mxu0 %v1054
    %v1056 = vand.u32 %v43, 4294901760
    %1057 = vmatprep.subr.mxu0 %v1056
    %v1058 = vand.u32 %v42, 4294901760
    %1059 = vmatpush1.msra.mxu0 %v1058
    %v1060 = vand.u32 %v45, 4294901760
    %1061 = vmatprep.subr.mxu0 %v1060
    %v1062 = vand.u32 %v44, 4294901760
    %1063 = vmatpush1.msra.mxu0 %v1062
    %v1064 = vand.u32 %v47, 4294901760
    %1065 = vmatprep.subr.mxu0 %v1064
    %v1066 = vand.u32 %v46, 4294901760
    %1067 = vmatpush1.msra.mxu0 %v1066
    %v1068 = vand.u32 %v49, 4294901760
    %1069 = vmatprep.subr.mxu0 %v1068
    %v1070 = vand.u32 %v48, 4294901760
    %1071 = vmatpush1.msra.mxu0 %v1070
    %v1072 = vand.u32 %v51, 4294901760
    %1073 = vmatprep.subr.mxu0 %v1072
    %v1074 = vand.u32 %v50, 4294901760
    %1075 = vmatpush1.msra.mxu0 %v1074
    %v1076 = vand.u32 %v53, 4294901760
    %1077 = vmatprep.subr.mxu0 %v1076
    %v1078 = vand.u32 %v52, 4294901760
    %1079 = vmatpush1.msra.mxu0 %v1078
    %1080 = vmatprep.subr.mxu0 0.0
    %1081 = vmatpush1.msra.mxu0 0.0
    %1082 = vmatprep.subr.mxu0 0.0
    %1083 = vmatpush1.msra.mxu0 0.0
    %1084 = vmatprep.subr.mxu0 0.0
    %1085 = vmatpush1.msra.mxu0 0.0
    %1086 = vmatprep.subr.mxu0 0.0
    %1087 = vmatpush1.msra.mxu0 0.0
    %1088 = vmatprep.subr.mxu0 0.0
    %1089 = vmatpush1.msra.mxu0 0.0
    %1090 = vmatprep.subr.mxu0 0.0
    %1091 = vmatpush1.msra.mxu0 0.0
    %1092 = vmatprep.subr.mxu0 0.0
    %1093 = vmatpush1.msra.mxu0 0.0
    %1094 = vmatprep.subr.mxu0 0.0
    %1095 = vmatpush1.msra.mxu0 0.0
    %1096 = vmatprep.subr.mxu0 0.0
    %1097 = vmatpush1.msra.mxu0 0.0
    %1098 = vmatprep.subr.mxu0 0.0
    %1099 = vmatpush1.msra.mxu0 0.0
    %1100 = vmatprep.subr.mxu0 0.0
    %1101 = vmatpush1.msra.mxu0 0.0
    %1102 = vmatprep.subr.mxu0 0.0
    %1103 = vmatpush1.msra.mxu0 0.0
    %1104 = vmatprep.subr.mxu0 0.0
    %1105 = vmatpush1.msra.mxu0 0.0
    %1106 = vmatprep.subr.mxu0 0.0
    %1107 = vmatpush1.msra.mxu0 0.0
    %1108 = vmatprep.subr.mxu0 0.0
    %1109 = vmatpush1.msra.mxu0 0.0
    %1110 = vmatprep.subr.mxu0 0.0
    %1111 = vmatpush1.msra.mxu0 0.0
    %1112 = vmatprep.subr.mxu0 0.0
    %1113 = vmatpush1.msra.mxu0 0.0
    %1114 = vmatprep.subr.mxu0 0.0
    %1115 = vmatpush1.msra.mxu0 0.0
    %1116 = vmatprep.subr.mxu0 0.0
    %1117 = vmatpush1.msra.mxu0 0.0
    %1118 = vmatprep.subr.mxu0 0.0
    %1119 = vmatpush1.msra.mxu0 0.0
    %1120 = vmatprep.subr.mxu0 0.0
    %1121 = vmatpush1.msra.mxu0 0.0
    %1122 = vmatprep.subr.mxu0 0.0
    %1123 = vmatpush1.msra.mxu0 0.0
    %1124 = vmatprep.subr.mxu0 0.0
    %1125 = vmatpush1.msra.mxu0 0.0
    %1126 = vmatprep.subr.mxu0 0.0
    %1127 = vmatpush1.msra.mxu0 0.0
    %1128 = vmatprep.mubr.f32.mxu0 0.0
    %v1129 = vand.u32 %v697, 4294901760
    %v1130 = vsub.f32 %v697, %v1129
    %v1131 = vand.u32 %v1130, 4294901760
    %1132 = vmatmul.mubr.f32.gmra.mrb[0].mxu0 %v1131
    %v1133 = vpop.f32.mrb[0].mxu0
    %v1134 = vadd.f32 %v1044, %v1133
    %v1135 = vpop.f32.mrb[0].mxu0
    %v1136 = vadd.f32 %v1046, %v1135
    %1137 = vdwg.mxu0
    %v1138 = vand.u32 %v39, 4294901760
    %v1139 = vsub.f32 %v39, %v1138
    %v1140 = vand.u32 %v1139, 4294901760
    %1141 = vmatprep.subr.mxu0 %v1140
    %v1142 = vand.u32 %v38, 4294901760
    %v1143 = vsub.f32 %v38, %v1142
    %v1144 = vand.u32 %v1143, 4294901760
    %1145 = vmatpush1.msra.mxu0 %v1144
    %v1146 = vand.u32 %v41, 4294901760
    %v1147 = vsub.f32 %v41, %v1146
    %v1148 = vand.u32 %v1147, 4294901760
    %1149 = vmatprep.subr.mxu0 %v1148
    %v1150 = vand.u32 %v40, 4294901760
    %v1151 = vsub.f32 %v40, %v1150
    %v1152 = vand.u32 %v1151, 4294901760
    %1153 = vmatpush1.msra.mxu0 %v1152
    %v1154 = vand.u32 %v43, 4294901760
    %v1155 = vsub.f32 %v43, %v1154
    %v1156 = vand.u32 %v1155, 4294901760
    %1157 = vmatprep.subr.mxu0 %v1156
    %v1158 = vand.u32 %v42, 4294901760
    %v1159 = vsub.f32 %v42, %v1158
    %v1160 = vand.u32 %v1159, 4294901760
    %1161 = vmatpush1.msra.mxu0 %v1160
    %v1162 = vand.u32 %v45, 4294901760
    %v1163 = vsub.f32 %v45, %v1162
    %v1164 = vand.u32 %v1163, 4294901760
    %1165 = vmatprep.subr.mxu0 %v1164
    %v1166 = vand.u32 %v44, 4294901760
    %v1167 = vsub.f32 %v44, %v1166
    %v1168 = vand.u32 %v1167, 4294901760
    %1169 = vmatpush1.msra.mxu0 %v1168
    %v1170 = vand.u32 %v47, 4294901760
    %v1171 = vsub.f32 %v47, %v1170
    %v1172 = vand.u32 %v1171, 4294901760
    %1173 = vmatprep.subr.mxu0 %v1172
    %v1174 = vand.u32 %v46, 4294901760
    %v1175 = vsub.f32 %v46, %v1174
    %v1176 = vand.u32 %v1175, 4294901760
    %1177 = vmatpush1.msra.mxu0 %v1176
    %v1178 = vand.u32 %v49, 4294901760
    %v1179 = vsub.f32 %v49, %v1178
    %v1180 = vand.u32 %v1179, 4294901760
    %1181 = vmatprep.subr.mxu0 %v1180
    %v1182 = vand.u32 %v48, 4294901760
    %v1183 = vsub.f32 %v48, %v1182
    %v1184 = vand.u32 %v1183, 4294901760
    %1185 = vmatpush1.msra.mxu0 %v1184
    %v1186 = vand.u32 %v51, 4294901760
    %v1187 = vsub.f32 %v51, %v1186
    %v1188 = vand.u32 %v1187, 4294901760
    %1189 = vmatprep.subr.mxu0 %v1188
    %v1190 = vand.u32 %v50, 4294901760
    %v1191 = vsub.f32 %v50, %v1190
    %v1192 = vand.u32 %v1191, 4294901760
    %1193 = vmatpush1.msra.mxu0 %v1192
    %v1194 = vand.u32 %v53, 4294901760
    %v1195 = vsub.f32 %v53, %v1194
    %v1196 = vand.u32 %v1195, 4294901760
    %1197 = vmatprep.subr.mxu0 %v1196
    %v1198 = vand.u32 %v52, 4294901760
    %v1199 = vsub.f32 %v52, %v1198
    %v1200 = vand.u32 %v1199, 4294901760
    %1201 = vmatpush1.msra.mxu0 %v1200
    %1202 = vmatprep.subr.mxu0 0.0
    %1203 = vmatpush1.msra.mxu0 0.0
    %1204 = vmatprep.subr.mxu0 0.0
    %1205 = vmatpush1.msra.mxu0 0.0
    %1206 = vmatprep.subr.mxu0 0.0
    %1207 = vmatpush1.msra.mxu0 0.0
    %1208 = vmatprep.subr.mxu0 0.0
    %1209 = vmatpush1.msra.mxu0 0.0
    %1210 = vmatprep.subr.mxu0 0.0
    %1211 = vmatpush1.msra.mxu0 0.0
    %1212 = vmatprep.subr.mxu0 0.0
    %1213 = vmatpush1.msra.mxu0 0.0
    %1214 = vmatprep.subr.mxu0 0.0
    %1215 = vmatpush1.msra.mxu0 0.0
    %1216 = vmatprep.subr.mxu0 0.0
    %1217 = vmatpush1.msra.mxu0 0.0
    %1218 = vmatprep.subr.mxu0 0.0
    %1219 = vmatpush1.msra.mxu0 0.0
    %1220 = vmatprep.subr.mxu0 0.0
    %1221 = vmatpush1.msra.mxu0 0.0
    %1222 = vmatprep.subr.mxu0 0.0
    %1223 = vmatpush1.msra.mxu0 0.0
    %1224 = vmatprep.subr.mxu0 0.0
    %1225 = vmatpush1.msra.mxu0 0.0
    %1226 = vmatprep.subr.mxu0 0.0
    %1227 = vmatpush1.msra.mxu0 0.0
    %1228 = vmatprep.subr.mxu0 0.0
    %1229 = vmatpush1.msra.mxu0 0.0
    %1230 = vmatprep.subr.mxu0 0.0
    %1231 = vmatpush1.msra.mxu0 0.0
    %1232 = vmatprep.subr.mxu0 0.0
    %1233 = vmatpush1.msra.mxu0 0.0
    %1234 = vmatprep.subr.mxu0 0.0
    %1235 = vmatpush1.msra.mxu0 0.0
    %1236 = vmatprep.subr.mxu0 0.0
    %1237 = vmatpush1.msra.mxu0 0.0
    %1238 = vmatprep.subr.mxu0 0.0
    %1239 = vmatpush1.msra.mxu0 0.0
    %1240 = vmatprep.subr.mxu0 0.0
    %1241 = vmatpush1.msra.mxu0 0.0
    %1242 = vmatprep.subr.mxu0 0.0
    %1243 = vmatpush1.msra.mxu0 0.0
    %1244 = vmatprep.subr.mxu0 0.0
    %1245 = vmatpush1.msra.mxu0 0.0
    %1246 = vmatprep.subr.mxu0 0.0
    %1247 = vmatpush1.msra.mxu0 0.0
    %1248 = vmatprep.subr.mxu0 0.0
    %1249 = vmatpush1.msra.mxu0 0.0
    %1250 = vmatprep.mubr.f32.mxu0 0.0
    %v1251 = vand.u32 %v697, 4294901760
    %1252 = vmatmul.mubr.f32.gmra.mrb[0].mxu0 %v1251
    %v1253 = vpop.f32.mrb[0].mxu0
    %v1254 = vadd.f32 %v1134, %v1253
    %v1255 = vpop.f32.mrb[0].mxu0
    %v1256 = vadd.f32 %v1136, %v1255
    %1257 = vdwg.mxu0
    %v1258 = vand.u32 %v39, 4294901760
    %1259 = vmatprep.subr.mxu0 %v1258
    %v1260 = vand.u32 %v38, 4294901760
    %1261 = vmatpush1.msra.mxu0 %v1260
    %v1262 = vand.u32 %v41, 4294901760
    %1263 = vmatprep.subr.mxu0 %v1262
    %v1264 = vand.u32 %v40, 4294901760
    %1265 = vmatpush1.msra.mxu0 %v1264
    %v1266 = vand.u32 %v43, 4294901760
    %1267 = vmatprep.subr.mxu0 %v1266
    %v1268 = vand.u32 %v42, 4294901760
    %1269 = vmatpush1.msra.mxu0 %v1268
    %v1270 = vand.u32 %v45, 4294901760
    %1271 = vmatprep.subr.mxu0 %v1270
    %v1272 = vand.u32 %v44, 4294901760
    %1273 = vmatpush1.msra.mxu0 %v1272
    %v1274 = vand.u32 %v47, 4294901760
    %1275 = vmatprep.subr.mxu0 %v1274
    %v1276 = vand.u32 %v46, 4294901760
    %1277 = vmatpush1.msra.mxu0 %v1276
    %v1278 = vand.u32 %v49, 4294901760
    %1279 = vmatprep.subr.mxu0 %v1278
    %v1280 = vand.u32 %v48, 4294901760
    %1281 = vmatpush1.msra.mxu0 %v1280
    %v1282 = vand.u32 %v51, 4294901760
    %1283 = vmatprep.subr.mxu0 %v1282
    %v1284 = vand.u32 %v50, 4294901760
    %1285 = vmatpush1.msra.mxu0 %v1284
    %v1286 = vand.u32 %v53, 4294901760
    %1287 = vmatprep.subr.mxu0 %v1286
    %v1288 = vand.u32 %v52, 4294901760
    %1289 = vmatpush1.msra.mxu0 %v1288
    %1290 = vmatprep.subr.mxu0 0.0
    %1291 = vmatpush1.msra.mxu0 0.0
    %1292 = vmatprep.subr.mxu0 0.0
    %1293 = vmatpush1.msra.mxu0 0.0
    %1294 = vmatprep.subr.mxu0 0.0
    %1295 = vmatpush1.msra.mxu0 0.0
    %1296 = vmatprep.subr.mxu0 0.0
    %1297 = vmatpush1.msra.mxu0 0.0
    %1298 = vmatprep.subr.mxu0 0.0
    %1299 = vmatpush1.msra.mxu0 0.0
    %1300 = vmatprep.subr.mxu0 0.0
    %1301 = vmatpush1.msra.mxu0 0.0
    %1302 = vmatprep.subr.mxu0 0.0
    %1303 = vmatpush1.msra.mxu0 0.0
    %1304 = vmatprep.subr.mxu0 0.0
    %1305 = vmatpush1.msra.mxu0 0.0
    %1306 = vmatprep.subr.mxu0 0.0
    %1307 = vmatpush1.msra.mxu0 0.0
    %1308 = vmatprep.subr.mxu0 0.0
    %1309 = vmatpush1.msra.mxu0 0.0
    %1310 = vmatprep.subr.mxu0 0.0
    %1311 = vmatpush1.msra.mxu0 0.0
    %1312 = vmatprep.subr.mxu0 0.0
    %1313 = vmatpush1.msra.mxu0 0.0
    %1314 = vmatprep.subr.mxu0 0.0
    %1315 = vmatpush1.msra.mxu0 0.0
    %1316 = vmatprep.subr.mxu0 0.0
    %1317 = vmatpush1.msra.mxu0 0.0
    %1318 = vmatprep.subr.mxu0 0.0
    %1319 = vmatpush1.msra.mxu0 0.0
    %1320 = vmatprep.subr.mxu0 0.0
    %1321 = vmatpush1.msra.mxu0 0.0
    %1322 = vmatprep.subr.mxu0 0.0
    %1323 = vmatpush1.msra.mxu0 0.0
    %1324 = vmatprep.subr.mxu0 0.0
    %1325 = vmatpush1.msra.mxu0 0.0
    %1326 = vmatprep.subr.mxu0 0.0
    %1327 = vmatpush1.msra.mxu0 0.0
    %1328 = vmatprep.subr.mxu0 0.0
    %1329 = vmatpush1.msra.mxu0 0.0
    %1330 = vmatprep.subr.mxu0 0.0
    %1331 = vmatpush1.msra.mxu0 0.0
    %1332 = vmatprep.subr.mxu0 0.0
    %1333 = vmatpush1.msra.mxu0 0.0
    %1334 = vmatprep.subr.mxu0 0.0
    %1335 = vmatpush1.msra.mxu0 0.0
    %1336 = vmatprep.subr.mxu0 0.0
    %1337 = vmatpush1.msra.mxu0 0.0
    %1338 = vmatprep.mubr.f32.mxu0 0.0
    %v1339 = vand.u32 %v697, 4294901760
    %1340 = vmatmul.mubr.f32.gmra.mrb[0].mxu0 %v1339
    %v1341 = vpop.f32.mrb[0].mxu0
    %v1342 = vadd.f32 %v1254, %v1341
    %v1343 = vpop.f32.mrb[0].mxu0
    %v1344 = vadd.f32 %v1256, %v1343
    %1345 = vdwg.mxu0
    %v1346 = vxor.u32 %v1342, 2147483648
    %v1347 = vmul.f32 %v1346, 1.442695
    %v1348 = vpow.pop %v1347
    %v1349 = vadd.f32 %v1348, 1.0
    %v1350 = vrcp.pop %v1349
    %v1351 = vmul.f32 1.0, %v1350
    %v1352 = vtanh.pop %v1344
    %v1353 = vxor.u32 %v1344, 2147483648
    %v1354 = vmul.f32 %v1353, 1.442695
    %v1355 = vpow.pop %v1354
    %v1356 = vadd.f32 %v1355, 1.0
    %v1357 = vrcp.pop %v1356
    %v1358 = vmul.f32 1.0, %v1357
    %v1359 = vsel %vm663, %v1352, %v1358
    %1361 = vrot.lane.b32.xlu0 %v680, 64
    %v1362 = vpop.permute.xlu0 %1361
    %v1364 = vmul.f32 %v1351, %v1362
    %v1365 = vmul.f32 %v1351, %v1359
    %1367 = vrot.lane.b32.xlu0 %v1365, 64
    %v1368 = vpop.permute.xlu0 %1367
    %v1370 = vadd.f32 %v1364, %v1368
    %v1371 = vtanh.pop %v1370
    %v1372 = vmul.f32 %v1359, %v1371
    %1374 = vrot.lane.b32.xlu0 %v1372, 64
    %v1375 = vpop.permute.xlu0 %1374
    %v1376 = vrot.slane %v643, 4
    %v1377 = vrot.slane %v645, 4
    %v1380 = vsel %vm696, %v1375, 0
    %v1382 = vand.u32 %v39, 4294901760
    %1383 = vmatprep.subr.mxu0 %v1382
    %v1384 = vand.u32 %v38, 4294901760
    %1385 = vmatpush1.msra.mxu0 %v1384
    %v1386 = vand.u32 %v41, 4294901760
    %1387 = vmatprep.subr.mxu0 %v1386
    %v1388 = vand.u32 %v40, 4294901760
    %1389 = vmatpush1.msra.mxu0 %v1388
    %v1390 = vand.u32 %v43, 4294901760
    %1391 = vmatprep.subr.mxu0 %v1390
    %v1392 = vand.u32 %v42, 4294901760
    %1393 = vmatpush1.msra.mxu0 %v1392
    %v1394 = vand.u32 %v45, 4294901760
    %1395 = vmatprep.subr.mxu0 %v1394
    %v1396 = vand.u32 %v44, 4294901760
    %1397 = vmatpush1.msra.mxu0 %v1396
    %v1398 = vand.u32 %v47, 4294901760
    %1399 = vmatprep.subr.mxu0 %v1398
    %v1400 = vand.u32 %v46, 4294901760
    %1401 = vmatpush1.msra.mxu0 %v1400
    %v1402 = vand.u32 %v49, 4294901760
    %1403 = vmatprep.subr.mxu0 %v1402
    %v1404 = vand.u32 %v48, 4294901760
    %1405 = vmatpush1.msra.mxu0 %v1404
    %v1406 = vand.u32 %v51, 4294901760
    %1407 = vmatprep.subr.mxu0 %v1406
    %v1408 = vand.u32 %v50, 4294901760
    %1409 = vmatpush1.msra.mxu0 %v1408
    %v1410 = vand.u32 %v53, 4294901760
    %1411 = vmatprep.subr.mxu0 %v1410
    %v1412 = vand.u32 %v52, 4294901760
    %1413 = vmatpush1.msra.mxu0 %v1412
    %1414 = vmatprep.subr.mxu0 0.0
    %1415 = vmatpush1.msra.mxu0 0.0
    %1416 = vmatprep.subr.mxu0 0.0
    %1417 = vmatpush1.msra.mxu0 0.0
    %1418 = vmatprep.subr.mxu0 0.0
    %1419 = vmatpush1.msra.mxu0 0.0
    %1420 = vmatprep.subr.mxu0 0.0
    %1421 = vmatpush1.msra.mxu0 0.0
    %1422 = vmatprep.subr.mxu0 0.0
    %1423 = vmatpush1.msra.mxu0 0.0
    %1424 = vmatprep.subr.mxu0 0.0
    %1425 = vmatpush1.msra.mxu0 0.0
    %1426 = vmatprep.subr.mxu0 0.0
    %1427 = vmatpush1.msra.mxu0 0.0
    %1428 = vmatprep.subr.mxu0 0.0
    %1429 = vmatpush1.msra.mxu0 0.0
    %1430 = vmatprep.subr.mxu0 0.0
    %1431 = vmatpush1.msra.mxu0 0.0
    %1432 = vmatprep.subr.mxu0 0.0
    %1433 = vmatpush1.msra.mxu0 0.0
    %1434 = vmatprep.subr.mxu0 0.0
    %1435 = vmatpush1.msra.mxu0 0.0
    %1436 = vmatprep.subr.mxu0 0.0
    %1437 = vmatpush1.msra.mxu0 0.0
    %1438 = vmatprep.subr.mxu0 0.0
    %1439 = vmatpush1.msra.mxu0 0.0
    %1440 = vmatprep.subr.mxu0 0.0
    %1441 = vmatpush1.msra.mxu0 0.0
    %1442 = vmatprep.subr.mxu0 0.0
    %1443 = vmatpush1.msra.mxu0 0.0
    %1444 = vmatprep.subr.mxu0 0.0
    %1445 = vmatpush1.msra.mxu0 0.0
    %1446 = vmatprep.subr.mxu0 0.0
    %1447 = vmatpush1.msra.mxu0 0.0
    %1448 = vmatprep.subr.mxu0 0.0
    %1449 = vmatpush1.msra.mxu0 0.0
    %1450 = vmatprep.subr.mxu0 0.0
    %1451 = vmatpush1.msra.mxu0 0.0
    %1452 = vmatprep.subr.mxu0 0.0
    %1453 = vmatpush1.msra.mxu0 0.0
    %1454 = vmatprep.subr.mxu0 0.0
    %1455 = vmatpush1.msra.mxu0 0.0
    %1456 = vmatprep.subr.mxu0 0.0
    %1457 = vmatpush1.msra.mxu0 0.0
    %1458 = vmatprep.subr.mxu0 0.0
    %1459 = vmatpush1.msra.mxu0 0.0
    %1460 = vmatprep.subr.mxu0 0.0
    %1461 = vmatpush1.msra.mxu0 0.0
    %1462 = vmatprep.mubr.f32.mxu0 0.0
    %v1463 = vand.u32 %v1380, 4294901760
    %v1464 = vsub.f32 %v1380, %v1463
    %v1465 = vand.u32 %v1464, 4294901760
    %v1466 = vsub.f32 %v1464, %v1465
    %v1467 = vand.u32 %v1466, 4294901760
    %1468 = vmatmul.mubr.f32.gmra.mrb[0].mxu0 %v1467
    %v1469 = vpop.f32.mrb[0].mxu0
    %v1470 = vadd.f32 %v1376, %v1469
    %v1471 = vpop.f32.mrb[0].mxu0
    %v1472 = vadd.f32 %v1377, %v1471
    %1473 = vdwg.mxu0
    %v1474 = vand.u32 %v39, 4294901760
    %v1475 = vsub.f32 %v39, %v1474
    %v1476 = vand.u32 %v1475, 4294901760
    %v1477 = vsub.f32 %v1475, %v1476
    %v1478 = vand.u32 %v1477, 4294901760
    %1479 = vmatprep.subr.mxu0 %v1478
    %v1480 = vand.u32 %v38, 4294901760
    %v1481 = vsub.f32 %v38, %v1480
    %v1482 = vand.u32 %v1481, 4294901760
    %v1483 = vsub.f32 %v1481, %v1482
    %v1484 = vand.u32 %v1483, 4294901760
    %1485 = vmatpush1.msra.mxu0 %v1484
    %v1486 = vand.u32 %v41, 4294901760
    %v1487 = vsub.f32 %v41, %v1486
    %v1488 = vand.u32 %v1487, 4294901760
    %v1489 = vsub.f32 %v1487, %v1488
    %v1490 = vand.u32 %v1489, 4294901760
    %1491 = vmatprep.subr.mxu0 %v1490
    %v1492 = vand.u32 %v40, 4294901760
    %v1493 = vsub.f32 %v40, %v1492
    %v1494 = vand.u32 %v1493, 4294901760
    %v1495 = vsub.f32 %v1493, %v1494
    %v1496 = vand.u32 %v1495, 4294901760
    %1497 = vmatpush1.msra.mxu0 %v1496
    %v1498 = vand.u32 %v43, 4294901760
    %v1499 = vsub.f32 %v43, %v1498
    %v1500 = vand.u32 %v1499, 4294901760
    %v1501 = vsub.f32 %v1499, %v1500
    %v1502 = vand.u32 %v1501, 4294901760
    %1503 = vmatprep.subr.mxu0 %v1502
    %v1504 = vand.u32 %v42, 4294901760
    %v1505 = vsub.f32 %v42, %v1504
    %v1506 = vand.u32 %v1505, 4294901760
    %v1507 = vsub.f32 %v1505, %v1506
    %v1508 = vand.u32 %v1507, 4294901760
    %1509 = vmatpush1.msra.mxu0 %v1508
    %v1510 = vand.u32 %v45, 4294901760
    %v1511 = vsub.f32 %v45, %v1510
    %v1512 = vand.u32 %v1511, 4294901760
    %v1513 = vsub.f32 %v1511, %v1512
    %v1514 = vand.u32 %v1513, 4294901760
    %1515 = vmatprep.subr.mxu0 %v1514
    %v1516 = vand.u32 %v44, 4294901760
    %v1517 = vsub.f32 %v44, %v1516
    %v1518 = vand.u32 %v1517, 4294901760
    %v1519 = vsub.f32 %v1517, %v1518
    %v1520 = vand.u32 %v1519, 4294901760
    %1521 = vmatpush1.msra.mxu0 %v1520
    %v1522 = vand.u32 %v47, 4294901760
    %v1523 = vsub.f32 %v47, %v1522
    %v1524 = vand.u32 %v1523, 4294901760
    %v1525 = vsub.f32 %v1523, %v1524
    %v1526 = vand.u32 %v1525, 4294901760
    %1527 = vmatprep.subr.mxu0 %v1526
    %v1528 = vand.u32 %v46, 4294901760
    %v1529 = vsub.f32 %v46, %v1528
    %v1530 = vand.u32 %v1529, 4294901760
    %v1531 = vsub.f32 %v1529, %v1530
    %v1532 = vand.u32 %v1531, 4294901760
    %1533 = vmatpush1.msra.mxu0 %v1532
    %v1534 = vand.u32 %v49, 4294901760
    %v1535 = vsub.f32 %v49, %v1534
    %v1536 = vand.u32 %v1535, 4294901760
    %v1537 = vsub.f32 %v1535, %v1536
    %v1538 = vand.u32 %v1537, 4294901760
    %1539 = vmatprep.subr.mxu0 %v1538
    %v1540 = vand.u32 %v48, 4294901760
    %v1541 = vsub.f32 %v48, %v1540
    %v1542 = vand.u32 %v1541, 4294901760
    %v1543 = vsub.f32 %v1541, %v1542
    %v1544 = vand.u32 %v1543, 4294901760
    %1545 = vmatpush1.msra.mxu0 %v1544
    %v1546 = vand.u32 %v51, 4294901760
    %v1547 = vsub.f32 %v51, %v1546
    %v1548 = vand.u32 %v1547, 4294901760
    %v1549 = vsub.f32 %v1547, %v1548
    %v1550 = vand.u32 %v1549, 4294901760
    %1551 = vmatprep.subr.mxu0 %v1550
    %v1552 = vand.u32 %v50, 4294901760
    %v1553 = vsub.f32 %v50, %v1552
    %v1554 = vand.u32 %v1553, 4294901760
    %v1555 = vsub.f32 %v1553, %v1554
    %v1556 = vand.u32 %v1555, 4294901760
    %1557 = vmatpush1.msra.mxu0 %v1556
    %v1558 = vand.u32 %v53, 4294901760
    %v1559 = vsub.f32 %v53, %v1558
    %v1560 = vand.u32 %v1559, 4294901760
    %v1561 = vsub.f32 %v1559, %v1560
    %v1562 = vand.u32 %v1561, 4294901760
    %1563 = vmatprep.subr.mxu0 %v1562
    %v1564 = vand.u32 %v52, 4294901760
    %v1565 = vsub.f32 %v52, %v1564
    %v1566 = vand.u32 %v1565, 4294901760
    %v1567 = vsub.f32 %v1565, %v1566
    %v1568 = vand.u32 %v1567, 4294901760
    %1569 = vmatpush1.msra.mxu0 %v1568
    %1570 = vmatprep.subr.mxu0 0.0
    %1571 = vmatpush1.msra.mxu0 0.0
    %1572 = vmatprep.subr.mxu0 0.0
    %1573 = vmatpush1.msra.mxu0 0.0
    %1574 = vmatprep.subr.mxu0 0.0
    %1575 = vmatpush1.msra.mxu0 0.0
    %1576 = vmatprep.subr.mxu0 0.0
    %1577 = vmatpush1.msra.mxu0 0.0
    %1578 = vmatprep.subr.mxu0 0.0
    %1579 = vmatpush1.msra.mxu0 0.0
    %1580 = vmatprep.subr.mxu0 0.0
    %1581 = vmatpush1.msra.mxu0 0.0
    %1582 = vmatprep.subr.mxu0 0.0
    %1583 = vmatpush1.msra.mxu0 0.0
    %1584 = vmatprep.subr.mxu0 0.0
    %1585 = vmatpush1.msra.mxu0 0.0
    %1586 = vmatprep.subr.mxu0 0.0
    %1587 = vmatpush1.msra.mxu0 0.0
    %1588 = vmatprep.subr.mxu0 0.0
    %1589 = vmatpush1.msra.mxu0 0.0
    %1590 = vmatprep.subr.mxu0 0.0
    %1591 = vmatpush1.msra.mxu0 0.0
    %1592 = vmatprep.subr.mxu0 0.0
    %1593 = vmatpush1.msra.mxu0 0.0
    %1594 = vmatprep.subr.mxu0 0.0
    %1595 = vmatpush1.msra.mxu0 0.0
    %1596 = vmatprep.subr.mxu0 0.0
    %1597 = vmatpush1.msra.mxu0 0.0
    %1598 = vmatprep.subr.mxu0 0.0
    %1599 = vmatpush1.msra.mxu0 0.0
    %1600 = vmatprep.subr.mxu0 0.0
    %1601 = vmatpush1.msra.mxu0 0.0
    %1602 = vmatprep.subr.mxu0 0.0
    %1603 = vmatpush1.msra.mxu0 0.0
    %1604 = vmatprep.subr.mxu0 0.0
    %1605 = vmatpush1.msra.mxu0 0.0
    %1606 = vmatprep.subr.mxu0 0.0
    %1607 = vmatpush1.msra.mxu0 0.0
    %1608 = vmatprep.subr.mxu0 0.0
    %1609 = vmatpush1.msra.mxu0 0.0
    %1610 = vmatprep.subr.mxu0 0.0
    %1611 = vmatpush1.msra.mxu0 0.0
    %1612 = vmatprep.subr.mxu0 0.0
    %1613 = vmatpush1.msra.mxu0 0.0
    %1614 = vmatprep.subr.mxu0 0.0
    %1615 = vmatpush1.msra.mxu0 0.0
    %1616 = vmatprep.subr.mxu0 0.0
    %1617 = vmatpush1.msra.mxu0 0.0
    %1618 = vmatprep.mubr.f32.mxu0 0.0
    %v1619 = vand.u32 %v1380, 4294901760
    %1620 = vmatmul.mubr.f32.gmra.mrb[0].mxu0 %v1619
    %v1621 = vpop.f32.mrb[0].mxu0
    %v1622 = vadd.f32 %v1470, %v1621
    %v1623 = vpop.f32.mrb[0].mxu0
    %v1624 = vadd.f32 %v1472, %v1623
    %1625 = vdwg.mxu0
    %v1626 = vand.u32 %v39, 4294901760
    %v1627 = vsub.f32 %v39, %v1626
    %1628 = vmatprep.subr.mxu0 %v1627
    %v1629 = vand.u32 %v38, 4294901760
    %v1630 = vsub.f32 %v38, %v1629
    %1631 = vmatpush1.msra.mxu0 %v1630
    %v1632 = vand.u32 %v41, 4294901760
    %v1633 = vsub.f32 %v41, %v1632
    %1634 = vmatprep.subr.mxu0 %v1633
    %v1635 = vand.u32 %v40, 4294901760
    %v1636 = vsub.f32 %v40, %v1635
    %1637 = vmatpush1.msra.mxu0 %v1636
    %v1638 = vand.u32 %v43, 4294901760
    %v1639 = vsub.f32 %v43, %v1638
    %1640 = vmatprep.subr.mxu0 %v1639
    %v1641 = vand.u32 %v42, 4294901760
    %v1642 = vsub.f32 %v42, %v1641
    %1643 = vmatpush1.msra.mxu0 %v1642
    %v1644 = vand.u32 %v45, 4294901760
    %v1645 = vsub.f32 %v45, %v1644
    %1646 = vmatprep.subr.mxu0 %v1645
    %v1647 = vand.u32 %v44, 4294901760
    %v1648 = vsub.f32 %v44, %v1647
    %1649 = vmatpush1.msra.mxu0 %v1648
    %v1650 = vand.u32 %v47, 4294901760
    %v1651 = vsub.f32 %v47, %v1650
    %1652 = vmatprep.subr.mxu0 %v1651
    %v1653 = vand.u32 %v46, 4294901760
    %v1654 = vsub.f32 %v46, %v1653
    %1655 = vmatpush1.msra.mxu0 %v1654
    %v1656 = vand.u32 %v49, 4294901760
    %v1657 = vsub.f32 %v49, %v1656
    %1658 = vmatprep.subr.mxu0 %v1657
    %v1659 = vand.u32 %v48, 4294901760
    %v1660 = vsub.f32 %v48, %v1659
    %1661 = vmatpush1.msra.mxu0 %v1660
    %v1662 = vand.u32 %v51, 4294901760
    %v1663 = vsub.f32 %v51, %v1662
    %1664 = vmatprep.subr.mxu0 %v1663
    %v1665 = vand.u32 %v50, 4294901760
    %v1666 = vsub.f32 %v50, %v1665
    %1667 = vmatpush1.msra.mxu0 %v1666
    %v1668 = vand.u32 %v53, 4294901760
    %v1669 = vsub.f32 %v53, %v1668
    %1670 = vmatprep.subr.mxu0 %v1669
    %v1671 = vand.u32 %v52, 4294901760
    %v1672 = vsub.f32 %v52, %v1671
    %1673 = vmatpush1.msra.mxu0 %v1672
    %1674 = vmatprep.subr.mxu0 0.0
    %1675 = vmatpush1.msra.mxu0 0.0
    %1676 = vmatprep.subr.mxu0 0.0
    %1677 = vmatpush1.msra.mxu0 0.0
    %1678 = vmatprep.subr.mxu0 0.0
    %1679 = vmatpush1.msra.mxu0 0.0
    %1680 = vmatprep.subr.mxu0 0.0
    %1681 = vmatpush1.msra.mxu0 0.0
    %1682 = vmatprep.subr.mxu0 0.0
    %1683 = vmatpush1.msra.mxu0 0.0
    %1684 = vmatprep.subr.mxu0 0.0
    %1685 = vmatpush1.msra.mxu0 0.0
    %1686 = vmatprep.subr.mxu0 0.0
    %1687 = vmatpush1.msra.mxu0 0.0
    %1688 = vmatprep.subr.mxu0 0.0
    %1689 = vmatpush1.msra.mxu0 0.0
    %1690 = vmatprep.subr.mxu0 0.0
    %1691 = vmatpush1.msra.mxu0 0.0
    %1692 = vmatprep.subr.mxu0 0.0
    %1693 = vmatpush1.msra.mxu0 0.0
    %1694 = vmatprep.subr.mxu0 0.0
    %1695 = vmatpush1.msra.mxu0 0.0
    %1696 = vmatprep.subr.mxu0 0.0
    %1697 = vmatpush1.msra.mxu0 0.0
    %1698 = vmatprep.subr.mxu0 0.0
    %1699 = vmatpush1.msra.mxu0 0.0
    %1700 = vmatprep.subr.mxu0 0.0
    %1701 = vmatpush1.msra.mxu0 0.0
    %1702 = vmatprep.subr.mxu0 0.0
    %1703 = vmatpush1.msra.mxu0 0.0
    %1704 = vmatprep.subr.mxu0 0.0
    %1705 = vmatpush1.msra.mxu0 0.0
    %1706 = vmatprep.subr.mxu0 0.0
    %1707 = vmatpush1.msra.mxu0 0.0
    %1708 = vmatprep.subr.mxu0 0.0
    %1709 = vmatpush1.msra.mxu0 0.0
    %1710 = vmatprep.subr.mxu0 0.0
    %1711 = vmatpush1.msra.mxu0 0.0
    %1712 = vmatprep.subr.mxu0 0.0
    %1713 = vmatpush1.msra.mxu0 0.0
    %1714 = vmatprep.subr.mxu0 0.0
    %1715 = vmatpush1.msra.mxu0 0.0
    %1716 = vmatprep.subr.mxu0 0.0
    %1717 = vmatpush1.msra.mxu0 0.0
    %1718 = vmatprep.subr.mxu0 0.0
    %1719 = vmatpush1.msra.mxu0 0.0
    %1720 = vmatprep.subr.mxu0 0.0
    %1721 = vmatpush1.msra.mxu0 0.0
    %1722 = vmatprep.mubr.f32.mxu0 0.0
    %v1723 = vand.u32 %v1380, 4294901760
    %v1724 = vsub.f32 %v1380, %v1723
    %1725 = vmatmul.mubr.f32.gmra.mrb[0].mxu0 %v1724
    %v1726 = vpop.f32.mrb[0].mxu0
    %v1727 = vadd.f32 %v1622, %v1726
    %v1728 = vpop.f32.mrb[0].mxu0
    %v1729 = vadd.f32 %v1624, %v1728
    %1730 = vdwg.mxu0
    %v1731 = vand.u32 %v39, 4294901760
    %1732 = vmatprep.subr.mxu0 %v1731
    %v1733 = vand.u32 %v38, 4294901760
    %1734 = vmatpush1.msra.mxu0 %v1733
    %v1735 = vand.u32 %v41, 4294901760
    %1736 = vmatprep.subr.mxu0 %v1735
    %v1737 = vand.u32 %v40, 4294901760
    %1738 = vmatpush1.msra.mxu0 %v1737
    %v1739 = vand.u32 %v43, 4294901760
    %1740 = vmatprep.subr.mxu0 %v1739
    %v1741 = vand.u32 %v42, 4294901760
    %1742 = vmatpush1.msra.mxu0 %v1741
    %v1743 = vand.u32 %v45, 4294901760
    %1744 = vmatprep.subr.mxu0 %v1743
    %v1745 = vand.u32 %v44, 4294901760
    %1746 = vmatpush1.msra.mxu0 %v1745
    %v1747 = vand.u32 %v47, 4294901760
    %1748 = vmatprep.subr.mxu0 %v1747
    %v1749 = vand.u32 %v46, 4294901760
    %1750 = vmatpush1.msra.mxu0 %v1749
    %v1751 = vand.u32 %v49, 4294901760
    %1752 = vmatprep.subr.mxu0 %v1751
    %v1753 = vand.u32 %v48, 4294901760
    %1754 = vmatpush1.msra.mxu0 %v1753
    %v1755 = vand.u32 %v51, 4294901760
    %1756 = vmatprep.subr.mxu0 %v1755
    %v1757 = vand.u32 %v50, 4294901760
    %1758 = vmatpush1.msra.mxu0 %v1757
    %v1759 = vand.u32 %v53, 4294901760
    %1760 = vmatprep.subr.mxu0 %v1759
    %v1761 = vand.u32 %v52, 4294901760
    %1762 = vmatpush1.msra.mxu0 %v1761
    %1763 = vmatprep.subr.mxu0 0.0
    %1764 = vmatpush1.msra.mxu0 0.0
    %1765 = vmatprep.subr.mxu0 0.0
    %1766 = vmatpush1.msra.mxu0 0.0
    %1767 = vmatprep.subr.mxu0 0.0
    %1768 = vmatpush1.msra.mxu0 0.0
    %1769 = vmatprep.subr.mxu0 0.0
    %1770 = vmatpush1.msra.mxu0 0.0
    %1771 = vmatprep.subr.mxu0 0.0
    %1772 = vmatpush1.msra.mxu0 0.0
    %1773 = vmatprep.subr.mxu0 0.0
    %1774 = vmatpush1.msra.mxu0 0.0
    %1775 = vmatprep.subr.mxu0 0.0
    %1776 = vmatpush1.msra.mxu0 0.0
    %1777 = vmatprep.subr.mxu0 0.0
    %1778 = vmatpush1.msra.mxu0 0.0
    %1779 = vmatprep.subr.mxu0 0.0
    %1780 = vmatpush1.msra.mxu0 0.0
    %1781 = vmatprep.subr.mxu0 0.0
    %1782 = vmatpush1.msra.mxu0 0.0
    %1783 = vmatprep.subr.mxu0 0.0
    %1784 = vmatpush1.msra.mxu0 0.0
    %1785 = vmatprep.subr.mxu0 0.0
    %1786 = vmatpush1.msra.mxu0 0.0
    %1787 = vmatprep.subr.mxu0 0.0
    %1788 = vmatpush1.msra.mxu0 0.0
    %1789 = vmatprep.subr.mxu0 0.0
    %1790 = vmatpush1.msra.mxu0 0.0
    %1791 = vmatprep.subr.mxu0 0.0
    %1792 = vmatpush1.msra.mxu0 0.0
    %1793 = vmatprep.subr.mxu0 0.0
    %1794 = vmatpush1.msra.mxu0 0.0
    %1795 = vmatprep.subr.mxu0 0.0
    %1796 = vmatpush1.msra.mxu0 0.0
    %1797 = vmatprep.subr.mxu0 0.0
    %1798 = vmatpush1.msra.mxu0 0.0
    %1799 = vmatprep.subr.mxu0 0.0
    %1800 = vmatpush1.msra.mxu0 0.0
    %1801 = vmatprep.subr.mxu0 0.0
    %1802 = vmatpush1.msra.mxu0 0.0
    %1803 = vmatprep.subr.mxu0 0.0
    %1804 = vmatpush1.msra.mxu0 0.0
    %1805 = vmatprep.subr.mxu0 0.0
    %1806 = vmatpush1.msra.mxu0 0.0
    %1807 = vmatprep.subr.mxu0 0.0
    %1808 = vmatpush1.msra.mxu0 0.0
    %1809 = vmatprep.subr.mxu0 0.0
    %1810 = vmatpush1.msra.mxu0 0.0
    %1811 = vmatprep.mubr.f32.mxu0 0.0
    %v1812 = vand.u32 %v1380, 4294901760
    %v1813 = vsub.f32 %v1380, %v1812
    %v1814 = vand.u32 %v1813, 4294901760
    %1815 = vmatmul.mubr.f32.gmra.mrb[0].mxu0 %v1814
    %v1816 = vpop.f32.mrb[0].mxu0
    %v1817 = vadd.f32 %v1727, %v1816
    %v1818 = vpop.f32.mrb[0].mxu0
    %v1819 = vadd.f32 %v1729, %v1818
    %1820 = vdwg.mxu0
    %v1821 = vand.u32 %v39, 4294901760
    %v1822 = vsub.f32 %v39, %v1821
    %v1823 = vand.u32 %v1822, 4294901760
    %1824 = vmatprep.subr.mxu0 %v1823
    %v1825 = vand.u32 %v38, 4294901760
    %v1826 = vsub.f32 %v38, %v1825
    %v1827 = vand.u32 %v1826, 4294901760
    %1828 = vmatpush1.msra.mxu0 %v1827
    %v1829 = vand.u32 %v41, 4294901760
    %v1830 = vsub.f32 %v41, %v1829
    %v1831 = vand.u32 %v1830, 4294901760
    %1832 = vmatprep.subr.mxu0 %v1831
    %v1833 = vand.u32 %v40, 4294901760
    %v1834 = vsub.f32 %v40, %v1833
    %v1835 = vand.u32 %v1834, 4294901760
    %1836 = vmatpush1.msra.mxu0 %v1835
    %v1837 = vand.u32 %v43, 4294901760
    %v1838 = vsub.f32 %v43, %v1837
    %v1839 = vand.u32 %v1838, 4294901760
    %1840 = vmatprep.subr.mxu0 %v1839
    %v1841 = vand.u32 %v42, 4294901760
    %v1842 = vsub.f32 %v42, %v1841
    %v1843 = vand.u32 %v1842, 4294901760
    %1844 = vmatpush1.msra.mxu0 %v1843
    %v1845 = vand.u32 %v45, 4294901760
    %v1846 = vsub.f32 %v45, %v1845
    %v1847 = vand.u32 %v1846, 4294901760
    %1848 = vmatprep.subr.mxu0 %v1847
    %v1849 = vand.u32 %v44, 4294901760
    %v1850 = vsub.f32 %v44, %v1849
    %v1851 = vand.u32 %v1850, 4294901760
    %1852 = vmatpush1.msra.mxu0 %v1851
    %v1853 = vand.u32 %v47, 4294901760
    %v1854 = vsub.f32 %v47, %v1853
    %v1855 = vand.u32 %v1854, 4294901760
    %1856 = vmatprep.subr.mxu0 %v1855
    %v1857 = vand.u32 %v46, 4294901760
    %v1858 = vsub.f32 %v46, %v1857
    %v1859 = vand.u32 %v1858, 4294901760
    %1860 = vmatpush1.msra.mxu0 %v1859
    %v1861 = vand.u32 %v49, 4294901760
    %v1862 = vsub.f32 %v49, %v1861
    %v1863 = vand.u32 %v1862, 4294901760
    %1864 = vmatprep.subr.mxu0 %v1863
    %v1865 = vand.u32 %v48, 4294901760
    %v1866 = vsub.f32 %v48, %v1865
    %v1867 = vand.u32 %v1866, 4294901760
    %1868 = vmatpush1.msra.mxu0 %v1867
    %v1869 = vand.u32 %v51, 4294901760
    %v1870 = vsub.f32 %v51, %v1869
    %v1871 = vand.u32 %v1870, 4294901760
    %1872 = vmatprep.subr.mxu0 %v1871
    %v1873 = vand.u32 %v50, 4294901760
    %v1874 = vsub.f32 %v50, %v1873
    %v1875 = vand.u32 %v1874, 4294901760
    %1876 = vmatpush1.msra.mxu0 %v1875
    %v1877 = vand.u32 %v53, 4294901760
    %v1878 = vsub.f32 %v53, %v1877
    %v1879 = vand.u32 %v1878, 4294901760
    %1880 = vmatprep.subr.mxu0 %v1879
    %v1881 = vand.u32 %v52, 4294901760
    %v1882 = vsub.f32 %v52, %v1881
    %v1883 = vand.u32 %v1882, 4294901760
    %1884 = vmatpush1.msra.mxu0 %v1883
    %1885 = vmatprep.subr.mxu0 0.0
    %1886 = vmatpush1.msra.mxu0 0.0
    %1887 = vmatprep.subr.mxu0 0.0
    %1888 = vmatpush1.msra.mxu0 0.0
    %1889 = vmatprep.subr.mxu0 0.0
    %1890 = vmatpush1.msra.mxu0 0.0
    %1891 = vmatprep.subr.mxu0 0.0
    %1892 = vmatpush1.msra.mxu0 0.0
    %1893 = vmatprep.subr.mxu0 0.0
    %1894 = vmatpush1.msra.mxu0 0.0
    %1895 = vmatprep.subr.mxu0 0.0
    %1896 = vmatpush1.msra.mxu0 0.0
    %1897 = vmatprep.subr.mxu0 0.0
    %1898 = vmatpush1.msra.mxu0 0.0
    %1899 = vmatprep.subr.mxu0 0.0
    %1900 = vmatpush1.msra.mxu0 0.0
    %1901 = vmatprep.subr.mxu0 0.0
    %1902 = vmatpush1.msra.mxu0 0.0
    %1903 = vmatprep.subr.mxu0 0.0
    %1904 = vmatpush1.msra.mxu0 0.0
    %1905 = vmatprep.subr.mxu0 0.0
    %1906 = vmatpush1.msra.mxu0 0.0
    %1907 = vmatprep.subr.mxu0 0.0
    %1908 = vmatpush1.msra.mxu0 0.0
    %1909 = vmatprep.subr.mxu0 0.0
    %1910 = vmatpush1.msra.mxu0 0.0
    %1911 = vmatprep.subr.mxu0 0.0
    %1912 = vmatpush1.msra.mxu0 0.0
    %1913 = vmatprep.subr.mxu0 0.0
    %1914 = vmatpush1.msra.mxu0 0.0
    %1915 = vmatprep.subr.mxu0 0.0
    %1916 = vmatpush1.msra.mxu0 0.0
    %1917 = vmatprep.subr.mxu0 0.0
    %1918 = vmatpush1.msra.mxu0 0.0
    %1919 = vmatprep.subr.mxu0 0.0
    %1920 = vmatpush1.msra.mxu0 0.0
    %1921 = vmatprep.subr.mxu0 0.0
    %1922 = vmatpush1.msra.mxu0 0.0
    %1923 = vmatprep.subr.mxu0 0.0
    %1924 = vmatpush1.msra.mxu0 0.0
    %1925 = vmatprep.subr.mxu0 0.0
    %1926 = vmatpush1.msra.mxu0 0.0
    %1927 = vmatprep.subr.mxu0 0.0
    %1928 = vmatpush1.msra.mxu0 0.0
    %1929 = vmatprep.subr.mxu0 0.0
    %1930 = vmatpush1.msra.mxu0 0.0
    %1931 = vmatprep.subr.mxu0 0.0
    %1932 = vmatpush1.msra.mxu0 0.0
    %1933 = vmatprep.mubr.f32.mxu0 0.0
    %v1934 = vand.u32 %v1380, 4294901760
    %1935 = vmatmul.mubr.f32.gmra.mrb[0].mxu0 %v1934
    %v1936 = vpop.f32.mrb[0].mxu0
    %v1937 = vadd.f32 %v1817, %v1936
    %v1938 = vpop.f32.mrb[0].mxu0
    %v1939 = vadd.f32 %v1819, %v1938
    %1940 = vdwg.mxu0
    %v1941 = vand.u32 %v39, 4294901760
    %1942 = vmatprep.subr.mxu0 %v1941
    %v1943 = vand.u32 %v38, 4294901760
    %1944 = vmatpush1.msra.mxu0 %v1943
    %v1945 = vand.u32 %v41, 4294901760
    %1946 = vmatprep.subr.mxu0 %v1945
    %v1947 = vand.u32 %v40, 4294901760
    %1948 = vmatpush1.msra.mxu0 %v1947
    %v1949 = vand.u32 %v43, 4294901760
    %1950 = vmatprep.subr.mxu0 %v1949
    %v1951 = vand.u32 %v42, 4294901760
    %1952 = vmatpush1.msra.mxu0 %v1951
    %v1953 = vand.u32 %v45, 4294901760
    %1954 = vmatprep.subr.mxu0 %v1953
    %v1955 = vand.u32 %v44, 4294901760
    %1956 = vmatpush1.msra.mxu0 %v1955
    %v1957 = vand.u32 %v47, 4294901760
    %1958 = vmatprep.subr.mxu0 %v1957
    %v1959 = vand.u32 %v46, 4294901760
    %1960 = vmatpush1.msra.mxu0 %v1959
    %v1961 = vand.u32 %v49, 4294901760
    %1962 = vmatprep.subr.mxu0 %v1961
    %v1963 = vand.u32 %v48, 4294901760
    %1964 = vmatpush1.msra.mxu0 %v1963
    %v1965 = vand.u32 %v51, 4294901760
    %1966 = vmatprep.subr.mxu0 %v1965
    %v1967 = vand.u32 %v50, 4294901760
    %1968 = vmatpush1.msra.mxu0 %v1967
    %v1969 = vand.u32 %v53, 4294901760
    %1970 = vmatprep.subr.mxu0 %v1969
    %v1971 = vand.u32 %v52, 4294901760
    %1972 = vmatpush1.msra.mxu0 %v1971
    %1973 = vmatprep.subr.mxu0 0.0
    %1974 = vmatpush1.msra.mxu0 0.0
    %1975 = vmatprep.subr.mxu0 0.0
    %1976 = vmatpush1.msra.mxu0 0.0
    %1977 = vmatprep.subr.mxu0 0.0
    %1978 = vmatpush1.msra.mxu0 0.0
    %1979 = vmatprep.subr.mxu0 0.0
    %1980 = vmatpush1.msra.mxu0 0.0
    %1981 = vmatprep.subr.mxu0 0.0
    %1982 = vmatpush1.msra.mxu0 0.0
    %1983 = vmatprep.subr.mxu0 0.0
    %1984 = vmatpush1.msra.mxu0 0.0
    %1985 = vmatprep.subr.mxu0 0.0
    %1986 = vmatpush1.msra.mxu0 0.0
    %1987 = vmatprep.subr.mxu0 0.0
    %1988 = vmatpush1.msra.mxu0 0.0
    %1989 = vmatprep.subr.mxu0 0.0
    %1990 = vmatpush1.msra.mxu0 0.0
    %1991 = vmatprep.subr.mxu0 0.0
    %1992 = vmatpush1.msra.mxu0 0.0
    %1993 = vmatprep.subr.mxu0 0.0
    %1994 = vmatpush1.msra.mxu0 0.0
    %1995 = vmatprep.subr.mxu0 0.0
    %1996 = vmatpush1.msra.mxu0 0.0
    %1997 = vmatprep.subr.mxu0 0.0
    %1998 = vmatpush1.msra.mxu0 0.0
    %1999 = vmatprep.subr.mxu0 0.0
    %2000 = vmatpush1.msra.mxu0 0.0
    %2001 = vmatprep.subr.mxu0 0.0
    %2002 = vmatpush1.msra.mxu0 0.0
    %2003 = vmatprep.subr.mxu0 0.0
    %2004 = vmatpush1.msra.mxu0 0.0
    %2005 = vmatprep.subr.mxu0 0.0
    %2006 = vmatpush1.msra.mxu0 0.0
    %2007 = vmatprep.subr.mxu0 0.0
    %2008 = vmatpush1.msra.mxu0 0.0
    %2009 = vmatprep.subr.mxu0 0.0
    %2010 = vmatpush1.msra.mxu0 0.0
    %2011 = vmatprep.subr.mxu0 0.0
    %2012 = vmatpush1.msra.mxu0 0.0
    %2013 = vmatprep.subr.mxu0 0.0
    %2014 = vmatpush1.msra.mxu0 0.0
    %2015 = vmatprep.subr.mxu0 0.0
    %2016 = vmatpush1.msra.mxu0 0.0
    %2017 = vmatprep.subr.mxu0 0.0
    %2018 = vmatpush1.msra.mxu0 0.0
    %2019 = vmatprep.subr.mxu0 0.0
    %2020 = vmatpush1.msra.mxu0 0.0
    %2021 = vmatprep.mubr.f32.mxu0 0.0
    %v2022 = vand.u32 %v1380, 4294901760
    %2023 = vmatmul.mubr.f32.gmra.mrb[0].mxu0 %v2022
    %v2024 = vpop.f32.mrb[0].mxu0
    %v2025 = vadd.f32 %v1937, %v2024
    %v2026 = vpop.f32.mrb[0].mxu0
    %v2027 = vadd.f32 %v1939, %v2026
    %2028 = vdwg.mxu0
    %v2029 = vxor.u32 %v2025, 2147483648
    %v2030 = vmul.f32 %v2029, 1.442695
    %v2031 = vpow.pop %v2030
    %v2032 = vadd.f32 %v2031, 1.0
    %v2033 = vrcp.pop %v2032
    %v2034 = vmul.f32 1.0, %v2033
    %v2035 = vtanh.pop %v2027
    %v2036 = vxor.u32 %v2027, 2147483648
    %v2037 = vmul.f32 %v2036, 1.442695
    %v2038 = vpow.pop %v2037
    %v2039 = vadd.f32 %v2038, 1.0
    %v2040 = vrcp.pop %v2039
    %v2041 = vmul.f32 1.0, %v2040
    %v2042 = vsel %vm663, %v2035, %v2041
    %v2043 = vmul.f32 %v2034, %v1370
    %v2044 = vmul.f32 %v2034, %v2042
    %2046 = vrot.lane.b32.xlu0 %v2044, 64
    %v2047 = vpop.permute.xlu0 %2046
    %v2049 = vadd.f32 %v2043, %v2047
    %v2050 = vtanh.pop %v2049
    %v2051 = vmul.f32 %v2042, %v2050
    %2053 = vrot.lane.b32.xlu0 %v2051, 64
    %v2054 = vpop.permute.xlu0 %2053
    %v2055 = vrot.slane %v643, 6
    %v2056 = vrot.slane %v645, 6
    %v2059 = vsel %vm696, %v2054, 0
    %v2061 = vand.u32 %v39, 4294901760
    %2062 = vmatprep.subr.mxu0 %v2061
    %v2063 = vand.u32 %v38, 4294901760
    %2064 = vmatpush1.msra.mxu0 %v2063
    %v2065 = vand.u32 %v41, 4294901760
    %2066 = vmatprep.subr.mxu0 %v2065
    %v2067 = vand.u32 %v40, 4294901760
    %2068 = vmatpush1.msra.mxu0 %v2067
    %v2069 = vand.u32 %v43, 4294901760
    %2070 = vmatprep.subr.mxu0 %v2069
    %v2071 = vand.u32 %v42, 4294901760
    %2072 = vmatpush1.msra.mxu0 %v2071
    %v2073 = vand.u32 %v45, 4294901760
    %2074 = vmatprep.subr.mxu0 %v2073
    %v2075 = vand.u32 %v44, 4294901760
    %2076 = vmatpush1.msra.mxu0 %v2075
    %v2077 = vand.u32 %v47, 4294901760
    %2078 = vmatprep.subr.mxu0 %v2077
    %v2079 = vand.u32 %v46, 4294901760
    %2080 = vmatpush1.msra.mxu0 %v2079
    %v2081 = vand.u32 %v49, 4294901760
    %2082 = vmatprep.subr.mxu0 %v2081
    %v2083 = vand.u32 %v48, 4294901760
    %2084 = vmatpush1.msra.mxu0 %v2083
    %v2085 = vand.u32 %v51, 4294901760
    %2086 = vmatprep.subr.mxu0 %v2085
    %v2087 = vand.u32 %v50, 4294901760
    %2088 = vmatpush1.msra.mxu0 %v2087
    %v2089 = vand.u32 %v53, 4294901760
    %2090 = vmatprep.subr.mxu0 %v2089
    %v2091 = vand.u32 %v52, 4294901760
    %2092 = vmatpush1.msra.mxu0 %v2091
    %2093 = vmatprep.subr.mxu0 0.0
    %2094 = vmatpush1.msra.mxu0 0.0
    %2095 = vmatprep.subr.mxu0 0.0
    %2096 = vmatpush1.msra.mxu0 0.0
    %2097 = vmatprep.subr.mxu0 0.0
    %2098 = vmatpush1.msra.mxu0 0.0
    %2099 = vmatprep.subr.mxu0 0.0
    %2100 = vmatpush1.msra.mxu0 0.0
    %2101 = vmatprep.subr.mxu0 0.0
    %2102 = vmatpush1.msra.mxu0 0.0
    %2103 = vmatprep.subr.mxu0 0.0
    %2104 = vmatpush1.msra.mxu0 0.0
    %2105 = vmatprep.subr.mxu0 0.0
    %2106 = vmatpush1.msra.mxu0 0.0
    %2107 = vmatprep.subr.mxu0 0.0
    %2108 = vmatpush1.msra.mxu0 0.0
    %2109 = vmatprep.subr.mxu0 0.0
    %2110 = vmatpush1.msra.mxu0 0.0
    %2111 = vmatprep.subr.mxu0 0.0
    %2112 = vmatpush1.msra.mxu0 0.0
    %2113 = vmatprep.subr.mxu0 0.0
    %2114 = vmatpush1.msra.mxu0 0.0
    %2115 = vmatprep.subr.mxu0 0.0
    %2116 = vmatpush1.msra.mxu0 0.0
    %2117 = vmatprep.subr.mxu0 0.0
    %2118 = vmatpush1.msra.mxu0 0.0
    %2119 = vmatprep.subr.mxu0 0.0
    %2120 = vmatpush1.msra.mxu0 0.0
    %2121 = vmatprep.subr.mxu0 0.0
    %2122 = vmatpush1.msra.mxu0 0.0
    %2123 = vmatprep.subr.mxu0 0.0
    %2124 = vmatpush1.msra.mxu0 0.0
    %2125 = vmatprep.subr.mxu0 0.0
    %2126 = vmatpush1.msra.mxu0 0.0
    %2127 = vmatprep.subr.mxu0 0.0
    %2128 = vmatpush1.msra.mxu0 0.0
    %2129 = vmatprep.subr.mxu0 0.0
    %2130 = vmatpush1.msra.mxu0 0.0
    %2131 = vmatprep.subr.mxu0 0.0
    %2132 = vmatpush1.msra.mxu0 0.0
    %2133 = vmatprep.subr.mxu0 0.0
    %2134 = vmatpush1.msra.mxu0 0.0
    %2135 = vmatprep.subr.mxu0 0.0
    %2136 = vmatpush1.msra.mxu0 0.0
    %2137 = vmatprep.subr.mxu0 0.0
    %2138 = vmatpush1.msra.mxu0 0.0
    %2139 = vmatprep.subr.mxu0 0.0
    %2140 = vmatpush1.msra.mxu0 0.0
    %2141 = vmatprep.mubr.f32.mxu0 0.0
    %v2142 = vand.u32 %v2059, 4294901760
    %v2143 = vsub.f32 %v2059, %v2142
    %v2144 = vand.u32 %v2143, 4294901760
    %v2145 = vsub.f32 %v2143, %v2144
    %v2146 = vand.u32 %v2145, 4294901760
    %2147 = vmatmul.mubr.f32.gmra.mrb[0].mxu0 %v2146
    %v2148 = vpop.f32.mrb[0].mxu0
    %v2149 = vadd.f32 %v2055, %v2148
    %v2150 = vpop.f32.mrb[0].mxu0
    %v2151 = vadd.f32 %v2056, %v2150
    %2152 = vdwg.mxu0
    %v2153 = vand.u32 %v39, 4294901760
    %v2154 = vsub.f32 %v39, %v2153
    %v2155 = vand.u32 %v2154, 4294901760
    %v2156 = vsub.f32 %v2154, %v2155
    %v2157 = vand.u32 %v2156, 4294901760
    %2158 = vmatprep.subr.mxu0 %v2157
    %v2159 = vand.u32 %v38, 4294901760
    %v2160 = vsub.f32 %v38, %v2159
    %v2161 = vand.u32 %v2160, 4294901760
    %v2162 = vsub.f32 %v2160, %v2161
    %v2163 = vand.u32 %v2162, 4294901760
    %2164 = vmatpush1.msra.mxu0 %v2163
    %v2165 = vand.u32 %v41, 4294901760
    %v2166 = vsub.f32 %v41, %v2165
    %v2167 = vand.u32 %v2166, 4294901760
    %v2168 = vsub.f32 %v2166, %v2167
    %v2169 = vand.u32 %v2168, 4294901760
    %2170 = vmatprep.subr.mxu0 %v2169
    %v2171 = vand.u32 %v40, 4294901760
    %v2172 = vsub.f32 %v40, %v2171
    %v2173 = vand.u32 %v2172, 4294901760
    %v2174 = vsub.f32 %v2172, %v2173
    %v2175 = vand.u32 %v2174, 4294901760
    %2176 = vmatpush1.msra.mxu0 %v2175
    %v2177 = vand.u32 %v43, 4294901760
    %v2178 = vsub.f32 %v43, %v2177
    %v2179 = vand.u32 %v2178, 4294901760
    %v2180 = vsub.f32 %v2178, %v2179
    %v2181 = vand.u32 %v2180, 4294901760
    %2182 = vmatprep.subr.mxu0 %v2181
    %v2183 = vand.u32 %v42, 4294901760
    %v2184 = vsub.f32 %v42, %v2183
    %v2185 = vand.u32 %v2184, 4294901760
    %v2186 = vsub.f32 %v2184, %v2185
    %v2187 = vand.u32 %v2186, 4294901760
    %2188 = vmatpush1.msra.mxu0 %v2187
    %v2189 = vand.u32 %v45, 4294901760
    %v2190 = vsub.f32 %v45, %v2189
    %v2191 = vand.u32 %v2190, 4294901760
    %v2192 = vsub.f32 %v2190, %v2191
    %v2193 = vand.u32 %v2192, 4294901760
    %2194 = vmatprep.subr.mxu0 %v2193
    %v2195 = vand.u32 %v44, 4294901760
    %v2196 = vsub.f32 %v44, %v2195
    %v2197 = vand.u32 %v2196, 4294901760
    %v2198 = vsub.f32 %v2196, %v2197
    %v2199 = vand.u32 %v2198, 4294901760
    %2200 = vmatpush1.msra.mxu0 %v2199
    %v2201 = vand.u32 %v47, 4294901760
    %v2202 = vsub.f32 %v47, %v2201
    %v2203 = vand.u32 %v2202, 4294901760
    %v2204 = vsub.f32 %v2202, %v2203
    %v2205 = vand.u32 %v2204, 4294901760
    %2206 = vmatprep.subr.mxu0 %v2205
    %v2207 = vand.u32 %v46, 4294901760
    %v2208 = vsub.f32 %v46, %v2207
    %v2209 = vand.u32 %v2208, 4294901760
    %v2210 = vsub.f32 %v2208, %v2209
    %v2211 = vand.u32 %v2210, 4294901760
    %2212 = vmatpush1.msra.mxu0 %v2211
    %v2213 = vand.u32 %v49, 4294901760
    %v2214 = vsub.f32 %v49, %v2213
    %v2215 = vand.u32 %v2214, 4294901760
    %v2216 = vsub.f32 %v2214, %v2215
    %v2217 = vand.u32 %v2216, 4294901760
    %2218 = vmatprep.subr.mxu0 %v2217
    %v2219 = vand.u32 %v48, 4294901760
    %v2220 = vsub.f32 %v48, %v2219
    %v2221 = vand.u32 %v2220, 4294901760
    %v2222 = vsub.f32 %v2220, %v2221
    %v2223 = vand.u32 %v2222, 4294901760
    %2224 = vmatpush1.msra.mxu0 %v2223
    %v2225 = vand.u32 %v51, 4294901760
    %v2226 = vsub.f32 %v51, %v2225
    %v2227 = vand.u32 %v2226, 4294901760
    %v2228 = vsub.f32 %v2226, %v2227
    %v2229 = vand.u32 %v2228, 4294901760
    %2230 = vmatprep.subr.mxu0 %v2229
    %v2231 = vand.u32 %v50, 4294901760
    %v2232 = vsub.f32 %v50, %v2231
    %v2233 = vand.u32 %v2232, 4294901760
    %v2234 = vsub.f32 %v2232, %v2233
    %v2235 = vand.u32 %v2234, 4294901760
    %2236 = vmatpush1.msra.mxu0 %v2235
    %v2237 = vand.u32 %v53, 4294901760
    %v2238 = vsub.f32 %v53, %v2237
    %v2239 = vand.u32 %v2238, 4294901760
    %v2240 = vsub.f32 %v2238, %v2239
    %v2241 = vand.u32 %v2240, 4294901760
    %2242 = vmatprep.subr.mxu0 %v2241
    %v2243 = vand.u32 %v52, 4294901760
    %v2244 = vsub.f32 %v52, %v2243
    %v2245 = vand.u32 %v2244, 4294901760
    %v2246 = vsub.f32 %v2244, %v2245
    %v2247 = vand.u32 %v2246, 4294901760
    %2248 = vmatpush1.msra.mxu0 %v2247
    %2249 = vmatprep.subr.mxu0 0.0
    %2250 = vmatpush1.msra.mxu0 0.0
    %2251 = vmatprep.subr.mxu0 0.0
    %2252 = vmatpush1.msra.mxu0 0.0
    %2253 = vmatprep.subr.mxu0 0.0
    %2254 = vmatpush1.msra.mxu0 0.0
    %2255 = vmatprep.subr.mxu0 0.0
    %2256 = vmatpush1.msra.mxu0 0.0
    %2257 = vmatprep.subr.mxu0 0.0
    %2258 = vmatpush1.msra.mxu0 0.0
    %2259 = vmatprep.subr.mxu0 0.0
    %2260 = vmatpush1.msra.mxu0 0.0
    %2261 = vmatprep.subr.mxu0 0.0
    %2262 = vmatpush1.msra.mxu0 0.0
    %2263 = vmatprep.subr.mxu0 0.0
    %2264 = vmatpush1.msra.mxu0 0.0
    %2265 = vmatprep.subr.mxu0 0.0
    %2266 = vmatpush1.msra.mxu0 0.0
    %2267 = vmatprep.subr.mxu0 0.0
    %2268 = vmatpush1.msra.mxu0 0.0
    %2269 = vmatprep.subr.mxu0 0.0
    %2270 = vmatpush1.msra.mxu0 0.0
    %2271 = vmatprep.subr.mxu0 0.0
    %2272 = vmatpush1.msra.mxu0 0.0
    %2273 = vmatprep.subr.mxu0 0.0
    %2274 = vmatpush1.msra.mxu0 0.0
    %2275 = vmatprep.subr.mxu0 0.0
    %2276 = vmatpush1.msra.mxu0 0.0
    %2277 = vmatprep.subr.mxu0 0.0
    %2278 = vmatpush1.msra.mxu0 0.0
    %2279 = vmatprep.subr.mxu0 0.0
    %2280 = vmatpush1.msra.mxu0 0.0
    %2281 = vmatprep.subr.mxu0 0.0
    %2282 = vmatpush1.msra.mxu0 0.0
    %2283 = vmatprep.subr.mxu0 0.0
    %2284 = vmatpush1.msra.mxu0 0.0
    %2285 = vmatprep.subr.mxu0 0.0
    %2286 = vmatpush1.msra.mxu0 0.0
    %2287 = vmatprep.subr.mxu0 0.0
    %2288 = vmatpush1.msra.mxu0 0.0
    %2289 = vmatprep.subr.mxu0 0.0
    %2290 = vmatpush1.msra.mxu0 0.0
    %2291 = vmatprep.subr.mxu0 0.0
    %2292 = vmatpush1.msra.mxu0 0.0
    %2293 = vmatprep.subr.mxu0 0.0
    %2294 = vmatpush1.msra.mxu0 0.0
    %2295 = vmatprep.subr.mxu0 0.0
    %2296 = vmatpush1.msra.mxu0 0.0
    %2297 = vmatprep.mubr.f32.mxu0 0.0
    %v2298 = vand.u32 %v2059, 4294901760
    %2299 = vmatmul.mubr.f32.gmra.mrb[0].mxu0 %v2298
    %v2300 = vpop.f32.mrb[0].mxu0
    %v2301 = vadd.f32 %v2149, %v2300
    %v2302 = vpop.f32.mrb[0].mxu0
    %v2303 = vadd.f32 %v2151, %v2302
    %2304 = vdwg.mxu0
    %v2305 = vand.u32 %v39, 4294901760
    %v2306 = vsub.f32 %v39, %v2305
    %2307 = vmatprep.subr.mxu0 %v2306
    %v2308 = vand.u32 %v38, 4294901760
    %v2309 = vsub.f32 %v38, %v2308
    %2310 = vmatpush1.msra.mxu0 %v2309
    %v2311 = vand.u32 %v41, 4294901760
    %v2312 = vsub.f32 %v41, %v2311
    %2313 = vmatprep.subr.mxu0 %v2312
    %v2314 = vand.u32 %v40, 4294901760
    %v2315 = vsub.f32 %v40, %v2314
    %2316 = vmatpush1.msra.mxu0 %v2315
    %v2317 = vand.u32 %v43, 4294901760
    %v2318 = vsub.f32 %v43, %v2317
    %2319 = vmatprep.subr.mxu0 %v2318
    %v2320 = vand.u32 %v42, 4294901760
    %v2321 = vsub.f32 %v42, %v2320
    %2322 = vmatpush1.msra.mxu0 %v2321
    %v2323 = vand.u32 %v45, 4294901760
    %v2324 = vsub.f32 %v45, %v2323
    %2325 = vmatprep.subr.mxu0 %v2324
    %v2326 = vand.u32 %v44, 4294901760
    %v2327 = vsub.f32 %v44, %v2326
    %2328 = vmatpush1.msra.mxu0 %v2327
    %v2329 = vand.u32 %v47, 4294901760
    %v2330 = vsub.f32 %v47, %v2329
    %2331 = vmatprep.subr.mxu0 %v2330
    %v2332 = vand.u32 %v46, 4294901760
    %v2333 = vsub.f32 %v46, %v2332
    %2334 = vmatpush1.msra.mxu0 %v2333
    %v2335 = vand.u32 %v49, 4294901760
    %v2336 = vsub.f32 %v49, %v2335
    %2337 = vmatprep.subr.mxu0 %v2336
    %v2338 = vand.u32 %v48, 4294901760
    %v2339 = vsub.f32 %v48, %v2338
    %2340 = vmatpush1.msra.mxu0 %v2339
    %v2341 = vand.u32 %v51, 4294901760
    %v2342 = vsub.f32 %v51, %v2341
    %2343 = vmatprep.subr.mxu0 %v2342
    %v2344 = vand.u32 %v50, 4294901760
    %v2345 = vsub.f32 %v50, %v2344
    %2346 = vmatpush1.msra.mxu0 %v2345
    %v2347 = vand.u32 %v53, 4294901760
    %v2348 = vsub.f32 %v53, %v2347
    %2349 = vmatprep.subr.mxu0 %v2348
    %v2350 = vand.u32 %v52, 4294901760
    %v2351 = vsub.f32 %v52, %v2350
    %2352 = vmatpush1.msra.mxu0 %v2351
    %2353 = vmatprep.subr.mxu0 0.0
    %2354 = vmatpush1.msra.mxu0 0.0
    %2355 = vmatprep.subr.mxu0 0.0
    %2356 = vmatpush1.msra.mxu0 0.0
    %2357 = vmatprep.subr.mxu0 0.0
    %2358 = vmatpush1.msra.mxu0 0.0
    %2359 = vmatprep.subr.mxu0 0.0
    %2360 = vmatpush1.msra.mxu0 0.0
    %2361 = vmatprep.subr.mxu0 0.0
    %2362 = vmatpush1.msra.mxu0 0.0
    %2363 = vmatprep.subr.mxu0 0.0
    %2364 = vmatpush1.msra.mxu0 0.0
    %2365 = vmatprep.subr.mxu0 0.0
    %2366 = vmatpush1.msra.mxu0 0.0
    %2367 = vmatprep.subr.mxu0 0.0
    %2368 = vmatpush1.msra.mxu0 0.0
    %2369 = vmatprep.subr.mxu0 0.0
    %2370 = vmatpush1.msra.mxu0 0.0
    %2371 = vmatprep.subr.mxu0 0.0
    %2372 = vmatpush1.msra.mxu0 0.0
    %2373 = vmatprep.subr.mxu0 0.0
    %2374 = vmatpush1.msra.mxu0 0.0
    %2375 = vmatprep.subr.mxu0 0.0
    %2376 = vmatpush1.msra.mxu0 0.0
    %2377 = vmatprep.subr.mxu0 0.0
    %2378 = vmatpush1.msra.mxu0 0.0
    %2379 = vmatprep.subr.mxu0 0.0
    %2380 = vmatpush1.msra.mxu0 0.0
    %2381 = vmatprep.subr.mxu0 0.0
    %2382 = vmatpush1.msra.mxu0 0.0
    %2383 = vmatprep.subr.mxu0 0.0
    %2384 = vmatpush1.msra.mxu0 0.0
    %2385 = vmatprep.subr.mxu0 0.0
    %2386 = vmatpush1.msra.mxu0 0.0
    %2387 = vmatprep.subr.mxu0 0.0
    %2388 = vmatpush1.msra.mxu0 0.0
    %2389 = vmatprep.subr.mxu0 0.0
    %2390 = vmatpush1.msra.mxu0 0.0
    %2391 = vmatprep.subr.mxu0 0.0
    %2392 = vmatpush1.msra.mxu0 0.0
    %2393 = vmatprep.subr.mxu0 0.0
    %2394 = vmatpush1.msra.mxu0 0.0
    %2395 = vmatprep.subr.mxu0 0.0
    %2396 = vmatpush1.msra.mxu0 0.0
    %2397 = vmatprep.subr.mxu0 0.0
    %2398 = vmatpush1.msra.mxu0 0.0
    %2399 = vmatprep.subr.mxu0 0.0
    %2400 = vmatpush1.msra.mxu0 0.0
    %2401 = vmatprep.mubr.f32.mxu0 0.0
    %v2402 = vand.u32 %v2059, 4294901760
    %v2403 = vsub.f32 %v2059, %v2402
    %2404 = vmatmul.mubr.f32.gmra.mrb[0].mxu0 %v2403
    %v2405 = vpop.f32.mrb[0].mxu0
    %v2406 = vadd.f32 %v2301, %v2405
    %v2407 = vpop.f32.mrb[0].mxu0
    %v2408 = vadd.f32 %v2303, %v2407
    %2409 = vdwg.mxu0
    %v2410 = vand.u32 %v39, 4294901760
    %2411 = vmatprep.subr.mxu0 %v2410
    %v2412 = vand.u32 %v38, 4294901760
    %2413 = vmatpush1.msra.mxu0 %v2412
    %v2414 = vand.u32 %v41, 4294901760
    %2415 = vmatprep.subr.mxu0 %v2414
    %v2416 = vand.u32 %v40, 4294901760
    %2417 = vmatpush1.msra.mxu0 %v2416
    %v2418 = vand.u32 %v43, 4294901760
    %2419 = vmatprep.subr.mxu0 %v2418
    %v2420 = vand.u32 %v42, 4294901760
    %2421 = vmatpush1.msra.mxu0 %v2420
    %v2422 = vand.u32 %v45, 4294901760
    %2423 = vmatprep.subr.mxu0 %v2422
    %v2424 = vand.u32 %v44, 4294901760
    %2425 = vmatpush1.msra.mxu0 %v2424
    %v2426 = vand.u32 %v47, 4294901760
    %2427 = vmatprep.subr.mxu0 %v2426
    %v2428 = vand.u32 %v46, 4294901760
    %2429 = vmatpush1.msra.mxu0 %v2428
    %v2430 = vand.u32 %v49, 4294901760
    %2431 = vmatprep.subr.mxu0 %v2430
    %v2432 = vand.u32 %v48, 4294901760
    %2433 = vmatpush1.msra.mxu0 %v2432
    %v2434 = vand.u32 %v51, 4294901760
    %2435 = vmatprep.subr.mxu0 %v2434
    %v2436 = vand.u32 %v50, 4294901760
    %2437 = vmatpush1.msra.mxu0 %v2436
    %v2438 = vand.u32 %v53, 4294901760
    %2439 = vmatprep.subr.mxu0 %v2438
    %v2440 = vand.u32 %v52, 4294901760
    %2441 = vmatpush1.msra.mxu0 %v2440
    %2442 = vmatprep.subr.mxu0 0.0
    %2443 = vmatpush1.msra.mxu0 0.0
    %2444 = vmatprep.subr.mxu0 0.0
    %2445 = vmatpush1.msra.mxu0 0.0
    %2446 = vmatprep.subr.mxu0 0.0
    %2447 = vmatpush1.msra.mxu0 0.0
    %2448 = vmatprep.subr.mxu0 0.0
    %2449 = vmatpush1.msra.mxu0 0.0
    %2450 = vmatprep.subr.mxu0 0.0
    %2451 = vmatpush1.msra.mxu0 0.0
    %2452 = vmatprep.subr.mxu0 0.0
    %2453 = vmatpush1.msra.mxu0 0.0
    %2454 = vmatprep.subr.mxu0 0.0
    %2455 = vmatpush1.msra.mxu0 0.0
    %2456 = vmatprep.subr.mxu0 0.0
    %2457 = vmatpush1.msra.mxu0 0.0
    %2458 = vmatprep.subr.mxu0 0.0
    %2459 = vmatpush1.msra.mxu0 0.0
    %2460 = vmatprep.subr.mxu0 0.0
    %2461 = vmatpush1.msra.mxu0 0.0
    %2462 = vmatprep.subr.mxu0 0.0
    %2463 = vmatpush1.msra.mxu0 0.0
    %2464 = vmatprep.subr.mxu0 0.0
    %2465 = vmatpush1.msra.mxu0 0.0
    %2466 = vmatprep.subr.mxu0 0.0
    %2467 = vmatpush1.msra.mxu0 0.0
    %2468 = vmatprep.subr.mxu0 0.0
    %2469 = vmatpush1.msra.mxu0 0.0
    %2470 = vmatprep.subr.mxu0 0.0
    %2471 = vmatpush1.msra.mxu0 0.0
    %2472 = vmatprep.subr.mxu0 0.0
    %2473 = vmatpush1.msra.mxu0 0.0
    %2474 = vmatprep.subr.mxu0 0.0
    %2475 = vmatpush1.msra.mxu0 0.0
    %2476 = vmatprep.subr.mxu0 0.0
    %2477 = vmatpush1.msra.mxu0 0.0
    %2478 = vmatprep.subr.mxu0 0.0
    %2479 = vmatpush1.msra.mxu0 0.0
    %2480 = vmatprep.subr.mxu0 0.0
    %2481 = vmatpush1.msra.mxu0 0.0
    %2482 = vmatprep.subr.mxu0 0.0
    %2483 = vmatpush1.msra.mxu0 0.0
    %2484 = vmatprep.subr.mxu0 0.0
    %2485 = vmatpush1.msra.mxu0 0.0
    %2486 = vmatprep.subr.mxu0 0.0
    %2487 = vmatpush1.msra.mxu0 0.0
    %2488 = vmatprep.subr.mxu0 0.0
    %2489 = vmatpush1.msra.mxu0 0.0
    %2490 = vmatprep.mubr.f32.mxu0 0.0
    %v2491 = vand.u32 %v2059, 4294901760
    %v2492 = vsub.f32 %v2059, %v2491
    %v2493 = vand.u32 %v2492, 4294901760
    %2494 = vmatmul.mubr.f32.gmra.mrb[0].mxu0 %v2493
    %v2495 = vpop.f32.mrb[0].mxu0
    %v2496 = vadd.f32 %v2406, %v2495
    %v2497 = vpop.f32.mrb[0].mxu0
    %v2498 = vadd.f32 %v2408, %v2497
    %2499 = vdwg.mxu0
    %v2500 = vand.u32 %v39, 4294901760
    %v2501 = vsub.f32 %v39, %v2500
    %v2502 = vand.u32 %v2501, 4294901760
    %2503 = vmatprep.subr.mxu0 %v2502
    %v2504 = vand.u32 %v38, 4294901760
    %v2505 = vsub.f32 %v38, %v2504
    %v2506 = vand.u32 %v2505, 4294901760
    %2507 = vmatpush1.msra.mxu0 %v2506
    %v2508 = vand.u32 %v41, 4294901760
    %v2509 = vsub.f32 %v41, %v2508
    %v2510 = vand.u32 %v2509, 4294901760
    %2511 = vmatprep.subr.mxu0 %v2510
    %v2512 = vand.u32 %v40, 4294901760
    %v2513 = vsub.f32 %v40, %v2512
    %v2514 = vand.u32 %v2513, 4294901760
    %2515 = vmatpush1.msra.mxu0 %v2514
    %v2516 = vand.u32 %v43, 4294901760
    %v2517 = vsub.f32 %v43, %v2516
    %v2518 = vand.u32 %v2517, 4294901760
    %2519 = vmatprep.subr.mxu0 %v2518
    %v2520 = vand.u32 %v42, 4294901760
    %v2521 = vsub.f32 %v42, %v2520
    %v2522 = vand.u32 %v2521, 4294901760
    %2523 = vmatpush1.msra.mxu0 %v2522
    %v2524 = vand.u32 %v45, 4294901760
    %v2525 = vsub.f32 %v45, %v2524
    %v2526 = vand.u32 %v2525, 4294901760
    %2527 = vmatprep.subr.mxu0 %v2526
    %v2528 = vand.u32 %v44, 4294901760
    %v2529 = vsub.f32 %v44, %v2528
    %v2530 = vand.u32 %v2529, 4294901760
    %2531 = vmatpush1.msra.mxu0 %v2530
    %v2532 = vand.u32 %v47, 4294901760
    %v2533 = vsub.f32 %v47, %v2532
    %v2534 = vand.u32 %v2533, 4294901760
    %2535 = vmatprep.subr.mxu0 %v2534
    %v2536 = vand.u32 %v46, 4294901760
    %v2537 = vsub.f32 %v46, %v2536
    %v2538 = vand.u32 %v2537, 4294901760
    %2539 = vmatpush1.msra.mxu0 %v2538
    %v2540 = vand.u32 %v49, 4294901760
    %v2541 = vsub.f32 %v49, %v2540
    %v2542 = vand.u32 %v2541, 4294901760
    %2543 = vmatprep.subr.mxu0 %v2542
    %v2544 = vand.u32 %v48, 4294901760
    %v2545 = vsub.f32 %v48, %v2544
    %v2546 = vand.u32 %v2545, 4294901760
    %2547 = vmatpush1.msra.mxu0 %v2546
    %v2548 = vand.u32 %v51, 4294901760
    %v2549 = vsub.f32 %v51, %v2548
    %v2550 = vand.u32 %v2549, 4294901760
    %2551 = vmatprep.subr.mxu0 %v2550
    %v2552 = vand.u32 %v50, 4294901760
    %v2553 = vsub.f32 %v50, %v2552
    %v2554 = vand.u32 %v2553, 4294901760
    %2555 = vmatpush1.msra.mxu0 %v2554
    %v2556 = vand.u32 %v53, 4294901760
    %v2557 = vsub.f32 %v53, %v2556
    %v2558 = vand.u32 %v2557, 4294901760
    %2559 = vmatprep.subr.mxu0 %v2558
    %v2560 = vand.u32 %v52, 4294901760
    %v2561 = vsub.f32 %v52, %v2560
    %v2562 = vand.u32 %v2561, 4294901760
    %2563 = vmatpush1.msra.mxu0 %v2562
    %2564 = vmatprep.subr.mxu0 0.0
    %2565 = vmatpush1.msra.mxu0 0.0
    %2566 = vmatprep.subr.mxu0 0.0
    %2567 = vmatpush1.msra.mxu0 0.0
    %2568 = vmatprep.subr.mxu0 0.0
    %2569 = vmatpush1.msra.mxu0 0.0
    %2570 = vmatprep.subr.mxu0 0.0
    %2571 = vmatpush1.msra.mxu0 0.0
    %2572 = vmatprep.subr.mxu0 0.0
    %2573 = vmatpush1.msra.mxu0 0.0
    %2574 = vmatprep.subr.mxu0 0.0
    %2575 = vmatpush1.msra.mxu0 0.0
    %2576 = vmatprep.subr.mxu0 0.0
    %2577 = vmatpush1.msra.mxu0 0.0
    %2578 = vmatprep.subr.mxu0 0.0
    %2579 = vmatpush1.msra.mxu0 0.0
    %2580 = vmatprep.subr.mxu0 0.0
    %2581 = vmatpush1.msra.mxu0 0.0
    %2582 = vmatprep.subr.mxu0 0.0
    %2583 = vmatpush1.msra.mxu0 0.0
    %2584 = vmatprep.subr.mxu0 0.0
    %2585 = vmatpush1.msra.mxu0 0.0
    %2586 = vmatprep.subr.mxu0 0.0
    %2587 = vmatpush1.msra.mxu0 0.0
    %2588 = vmatprep.subr.mxu0 0.0
    %2589 = vmatpush1.msra.mxu0 0.0
    %2590 = vmatprep.subr.mxu0 0.0
    %2591 = vmatpush1.msra.mxu0 0.0
    %2592 = vmatprep.subr.mxu0 0.0
    %2593 = vmatpush1.msra.mxu0 0.0
    %2594 = vmatprep.subr.mxu0 0.0
    %2595 = vmatpush1.msra.mxu0 0.0
    %2596 = vmatprep.subr.mxu0 0.0
    %2597 = vmatpush1.msra.mxu0 0.0
    %2598 = vmatprep.subr.mxu0 0.0
    %2599 = vmatpush1.msra.mxu0 0.0
    %2600 = vmatprep.subr.mxu0 0.0
    %2601 = vmatpush1.msra.mxu0 0.0
    %2602 = vmatprep.subr.mxu0 0.0
    %2603 = vmatpush1.msra.mxu0 0.0
    %2604 = vmatprep.subr.mxu0 0.0
    %2605 = vmatpush1.msra.mxu0 0.0
    %2606 = vmatprep.subr.mxu0 0.0
    %2607 = vmatpush1.msra.mxu0 0.0
    %2608 = vmatprep.subr.mxu0 0.0
    %2609 = vmatpush1.msra.mxu0 0.0
    %2610 = vmatprep.subr.mxu0 0.0
    %2611 = vmatpush1.msra.mxu0 0.0
    %2612 = vmatprep.mubr.f32.mxu0 0.0
    %v2613 = vand.u32 %v2059, 4294901760
    %2614 = vmatmul.mubr.f32.gmra.mrb[0].mxu0 %v2613
    %v2615 = vpop.f32.mrb[0].mxu0
    %v2616 = vadd.f32 %v2496, %v2615
    %v2617 = vpop.f32.mrb[0].mxu0
    %v2618 = vadd.f32 %v2498, %v2617
    %2619 = vdwg.mxu0
    %v2620 = vand.u32 %v39, 4294901760
    %2621 = vmatprep.subr.mxu0 %v2620
    %v2622 = vand.u32 %v38, 4294901760
    %2623 = vmatpush1.msra.mxu0 %v2622
    %v2624 = vand.u32 %v41, 4294901760
    %2625 = vmatprep.subr.mxu0 %v2624
    %v2626 = vand.u32 %v40, 4294901760
    %2627 = vmatpush1.msra.mxu0 %v2626
    %v2628 = vand.u32 %v43, 4294901760
    %2629 = vmatprep.subr.mxu0 %v2628
    %v2630 = vand.u32 %v42, 4294901760
    %2631 = vmatpush1.msra.mxu0 %v2630
    %v2632 = vand.u32 %v45, 4294901760
    %2633 = vmatprep.subr.mxu0 %v2632
    %v2634 = vand.u32 %v44, 4294901760
    %2635 = vmatpush1.msra.mxu0 %v2634
    %v2636 = vand.u32 %v47, 4294901760
    %2637 = vmatprep.subr.mxu0 %v2636
    %v2638 = vand.u32 %v46, 4294901760
    %2639 = vmatpush1.msra.mxu0 %v2638
    %v2640 = vand.u32 %v49, 4294901760
    %2641 = vmatprep.subr.mxu0 %v2640
    %v2642 = vand.u32 %v48, 4294901760
    %2643 = vmatpush1.msra.mxu0 %v2642
    %v2644 = vand.u32 %v51, 4294901760
    %2645 = vmatprep.subr.mxu0 %v2644
    %v2646 = vand.u32 %v50, 4294901760
    %2647 = vmatpush1.msra.mxu0 %v2646
    %v2648 = vand.u32 %v53, 4294901760
    %2649 = vmatprep.subr.mxu0 %v2648
    %v2650 = vand.u32 %v52, 4294901760
    %2651 = vmatpush1.msra.mxu0 %v2650
    %2652 = vmatprep.subr.mxu0 0.0
    %2653 = vmatpush1.msra.mxu0 0.0
    %2654 = vmatprep.subr.mxu0 0.0
    %2655 = vmatpush1.msra.mxu0 0.0
    %2656 = vmatprep.subr.mxu0 0.0
    %2657 = vmatpush1.msra.mxu0 0.0
    %2658 = vmatprep.subr.mxu0 0.0
    %2659 = vmatpush1.msra.mxu0 0.0
    %2660 = vmatprep.subr.mxu0 0.0
    %2661 = vmatpush1.msra.mxu0 0.0
    %2662 = vmatprep.subr.mxu0 0.0
    %2663 = vmatpush1.msra.mxu0 0.0
    %2664 = vmatprep.subr.mxu0 0.0
    %2665 = vmatpush1.msra.mxu0 0.0
    %2666 = vmatprep.subr.mxu0 0.0
    %2667 = vmatpush1.msra.mxu0 0.0
    %2668 = vmatprep.subr.mxu0 0.0
    %2669 = vmatpush1.msra.mxu0 0.0
    %2670 = vmatprep.subr.mxu0 0.0
    %2671 = vmatpush1.msra.mxu0 0.0
    %2672 = vmatprep.subr.mxu0 0.0
    %2673 = vmatpush1.msra.mxu0 0.0
    %2674 = vmatprep.subr.mxu0 0.0
    %2675 = vmatpush1.msra.mxu0 0.0
    %2676 = vmatprep.subr.mxu0 0.0
    %2677 = vmatpush1.msra.mxu0 0.0
    %2678 = vmatprep.subr.mxu0 0.0
    %2679 = vmatpush1.msra.mxu0 0.0
    %2680 = vmatprep.subr.mxu0 0.0
    %2681 = vmatpush1.msra.mxu0 0.0
    %2682 = vmatprep.subr.mxu0 0.0
    %2683 = vmatpush1.msra.mxu0 0.0
    %2684 = vmatprep.subr.mxu0 0.0
    %2685 = vmatpush1.msra.mxu0 0.0
    %2686 = vmatprep.subr.mxu0 0.0
    %2687 = vmatpush1.msra.mxu0 0.0
    %2688 = vmatprep.subr.mxu0 0.0
    %2689 = vmatpush1.msra.mxu0 0.0
    %2690 = vmatprep.subr.mxu0 0.0
    %2691 = vmatpush1.msra.mxu0 0.0
    %2692 = vmatprep.subr.mxu0 0.0
    %2693 = vmatpush1.msra.mxu0 0.0
    %2694 = vmatprep.subr.mxu0 0.0
    %2695 = vmatpush1.msra.mxu0 0.0
    %2696 = vmatprep.subr.mxu0 0.0
    %2697 = vmatpush1.msra.mxu0 0.0
    %2698 = vmatprep.subr.mxu0 0.0
    %2699 = vmatpush1.msra.mxu0 0.0
    %2700 = vmatprep.mubr.f32.mxu0 0.0
    %v2701 = vand.u32 %v2059, 4294901760
    %2702 = vmatmul.mubr.f32.gmra.mrb[0].mxu0 %v2701
    %v2703 = vpop.f32.mrb[0].mxu0
    %v2704 = vadd.f32 %v2616, %v2703
    %v2705 = vpop.f32.mrb[0].mxu0
    %v2706 = vadd.f32 %v2618, %v2705
    %2707 = vdwg.mxu0
    %v2708 = vxor.u32 %v2704, 2147483648
    %v2709 = vmul.f32 %v2708, 1.442695
    %v2710 = vpow.pop %v2709
    %v2711 = vadd.f32 %v2710, 1.0
    %v2712 = vrcp.pop %v2711
    %v2713 = vmul.f32 1.0, %v2712
    %v2714 = vtanh.pop %v2706
    %v2715 = vxor.u32 %v2706, 2147483648
    %v2716 = vmul.f32 %v2715, 1.442695
    %v2717 = vpow.pop %v2716
    %v2718 = vadd.f32 %v2717, 1.0
    %v2719 = vrcp.pop %v2718
    %v2720 = vmul.f32 1.0, %v2719
    %v2721 = vsel %vm663, %v2714, %v2720
    %v2722 = vmul.f32 %v2713, %v2049
    %v2723 = vmul.f32 %v2713, %v2721
    %2725 = vrot.lane.b32.xlu0 %v2723, 64
    %v2726 = vpop.permute.xlu0 %2725
    %v2728 = vadd.f32 %v2722, %v2726
    %v2729 = vtanh.pop %v2728
    %v2730 = vmul.f32 %v2721, %v2729
    %2732 = vrot.lane.b32.xlu0 %v2730, 64
    %v2733 = vpop.permute.xlu0 %2732
    %v2734 = vsel %vm696, %v2733, 0
    %v2736 = vand.u32 %v39, 4294901760
    %2737 = vmatprep.subr.mxu0 %v2736
    %v2738 = vand.u32 %v38, 4294901760
    %2739 = vmatpush1.msra.mxu0 %v2738
    %v2740 = vand.u32 %v41, 4294901760
    %2741 = vmatprep.subr.mxu0 %v2740
    %v2742 = vand.u32 %v40, 4294901760
    %2743 = vmatpush1.msra.mxu0 %v2742
    %v2744 = vand.u32 %v43, 4294901760
    %2745 = vmatprep.subr.mxu0 %v2744
    %v2746 = vand.u32 %v42, 4294901760
    %2747 = vmatpush1.msra.mxu0 %v2746
    %v2748 = vand.u32 %v45, 4294901760
    %2749 = vmatprep.subr.mxu0 %v2748
    %v2750 = vand.u32 %v44, 4294901760
    %2751 = vmatpush1.msra.mxu0 %v2750
    %v2752 = vand.u32 %v47, 4294901760
    %2753 = vmatprep.subr.mxu0 %v2752
    %v2754 = vand.u32 %v46, 4294901760
    %2755 = vmatpush1.msra.mxu0 %v2754
    %v2756 = vand.u32 %v49, 4294901760
    %2757 = vmatprep.subr.mxu0 %v2756
    %v2758 = vand.u32 %v48, 4294901760
    %2759 = vmatpush1.msra.mxu0 %v2758
    %v2760 = vand.u32 %v51, 4294901760
    %2761 = vmatprep.subr.mxu0 %v2760
    %v2762 = vand.u32 %v50, 4294901760
    %2763 = vmatpush1.msra.mxu0 %v2762
    %v2764 = vand.u32 %v53, 4294901760
    %2765 = vmatprep.subr.mxu0 %v2764
    %v2766 = vand.u32 %v52, 4294901760
    %2767 = vmatpush1.msra.mxu0 %v2766
    %2768 = vmatprep.subr.mxu0 0.0
    %2769 = vmatpush1.msra.mxu0 0.0
    %2770 = vmatprep.subr.mxu0 0.0
    %2771 = vmatpush1.msra.mxu0 0.0
    %2772 = vmatprep.subr.mxu0 0.0
    %2773 = vmatpush1.msra.mxu0 0.0
    %2774 = vmatprep.subr.mxu0 0.0
    %2775 = vmatpush1.msra.mxu0 0.0
    %2776 = vmatprep.subr.mxu0 0.0
    %2777 = vmatpush1.msra.mxu0 0.0
    %2778 = vmatprep.subr.mxu0 0.0
    %2779 = vmatpush1.msra.mxu0 0.0
    %2780 = vmatprep.subr.mxu0 0.0
    %2781 = vmatpush1.msra.mxu0 0.0
    %2782 = vmatprep.subr.mxu0 0.0
    %2783 = vmatpush1.msra.mxu0 0.0
    %2784 = vmatprep.subr.mxu0 0.0
    %2785 = vmatpush1.msra.mxu0 0.0
    %2786 = vmatprep.subr.mxu0 0.0
    %2787 = vmatpush1.msra.mxu0 0.0
    %2788 = vmatprep.subr.mxu0 0.0
    %2789 = vmatpush1.msra.mxu0 0.0
    %2790 = vmatprep.subr.mxu0 0.0
    %2791 = vmatpush1.msra.mxu0 0.0
    %2792 = vmatprep.subr.mxu0 0.0
    %2793 = vmatpush1.msra.mxu0 0.0
    %2794 = vmatprep.subr.mxu0 0.0
    %2795 = vmatpush1.msra.mxu0 0.0
    %2796 = vmatprep.subr.mxu0 0.0
    %2797 = vmatpush1.msra.mxu0 0.0
    %2798 = vmatprep.subr.mxu0 0.0
    %2799 = vmatpush1.msra.mxu0 0.0
    %2800 = vmatprep.subr.mxu0 0.0
    %2801 = vmatpush1.msra.mxu0 0.0
    %2802 = vmatprep.subr.mxu0 0.0
    %2803 = vmatpush1.msra.mxu0 0.0
    %2804 = vmatprep.subr.mxu0 0.0
    %2805 = vmatpush1.msra.mxu0 0.0
    %2806 = vmatprep.subr.mxu0 0.0
    %2807 = vmatpush1.msra.mxu0 0.0
    %2808 = vmatprep.subr.mxu0 0.0
    %2809 = vmatpush1.msra.mxu0 0.0
    %2810 = vmatprep.subr.mxu0 0.0
    %2811 = vmatpush1.msra.mxu0 0.0
    %2812 = vmatprep.subr.mxu0 0.0
    %2813 = vmatpush1.msra.mxu0 0.0
    %2814 = vmatprep.subr.mxu0 0.0
    %2815 = vmatpush1.msra.mxu0 0.0
    %2816 = vmatprep.mubr.f32.mxu0 0.0
    %v2817 = vand.u32 %v2734, 4294901760
    %v2818 = vsub.f32 %v2734, %v2817
    %v2819 = vand.u32 %v2818, 4294901760
    %v2820 = vsub.f32 %v2818, %v2819
    %v2821 = vand.u32 %v2820, 4294901760
    %2822 = vmatmul.mubr.f32.gmra.mrb[0].mxu0 %v2821
    %v2823 = vpop.f32.mrb[0].mxu0
    %v2824 = vadd.f32 %v650, %v2823
    %v2825 = vpop.f32.mrb[0].mxu0
    %v2826 = vadd.f32 %v652, %v2825
    %2827 = vdwg.mxu0
    %v2828 = vand.u32 %v39, 4294901760
    %v2829 = vsub.f32 %v39, %v2828
    %v2830 = vand.u32 %v2829, 4294901760
    %v2831 = vsub.f32 %v2829, %v2830
    %v2832 = vand.u32 %v2831, 4294901760
    %2833 = vmatprep.subr.mxu0 %v2832
    %v2834 = vand.u32 %v38, 4294901760
    %v2835 = vsub.f32 %v38, %v2834
    %v2836 = vand.u32 %v2835, 4294901760
    %v2837 = vsub.f32 %v2835, %v2836
    %v2838 = vand.u32 %v2837, 4294901760
    %2839 = vmatpush1.msra.mxu0 %v2838
    %v2840 = vand.u32 %v41, 4294901760
    %v2841 = vsub.f32 %v41, %v2840
    %v2842 = vand.u32 %v2841, 4294901760
    %v2843 = vsub.f32 %v2841, %v2842
    %v2844 = vand.u32 %v2843, 4294901760
    %2845 = vmatprep.subr.mxu0 %v2844
    %v2846 = vand.u32 %v40, 4294901760
    %v2847 = vsub.f32 %v40, %v2846
    %v2848 = vand.u32 %v2847, 4294901760
    %v2849 = vsub.f32 %v2847, %v2848
    %v2850 = vand.u32 %v2849, 4294901760
    %2851 = vmatpush1.msra.mxu0 %v2850
    %v2852 = vand.u32 %v43, 4294901760
    %v2853 = vsub.f32 %v43, %v2852
    %v2854 = vand.u32 %v2853, 4294901760
    %v2855 = vsub.f32 %v2853, %v2854
    %v2856 = vand.u32 %v2855, 4294901760
    %2857 = vmatprep.subr.mxu0 %v2856
    %v2858 = vand.u32 %v42, 4294901760
    %v2859 = vsub.f32 %v42, %v2858
    %v2860 = vand.u32 %v2859, 4294901760
    %v2861 = vsub.f32 %v2859, %v2860
    %v2862 = vand.u32 %v2861, 4294901760
    %2863 = vmatpush1.msra.mxu0 %v2862
    %v2864 = vand.u32 %v45, 4294901760
    %v2865 = vsub.f32 %v45, %v2864
    %v2866 = vand.u32 %v2865, 4294901760
    %v2867 = vsub.f32 %v2865, %v2866
    %v2868 = vand.u32 %v2867, 4294901760
    %2869 = vmatprep.subr.mxu0 %v2868
    %v2870 = vand.u32 %v44, 4294901760
    %v2871 = vsub.f32 %v44, %v2870
    %v2872 = vand.u32 %v2871, 4294901760
    %v2873 = vsub.f32 %v2871, %v2872
    %v2874 = vand.u32 %v2873, 4294901760
    %2875 = vmatpush1.msra.mxu0 %v2874
    %v2876 = vand.u32 %v47, 4294901760
    %v2877 = vsub.f32 %v47, %v2876
    %v2878 = vand.u32 %v2877, 4294901760
    %v2879 = vsub.f32 %v2877, %v2878
    %v2880 = vand.u32 %v2879, 4294901760
    %2881 = vmatprep.subr.mxu0 %v2880
    %v2882 = vand.u32 %v46, 4294901760
    %v2883 = vsub.f32 %v46, %v2882
    %v2884 = vand.u32 %v2883, 4294901760
    %v2885 = vsub.f32 %v2883, %v2884
    %v2886 = vand.u32 %v2885, 4294901760
    %2887 = vmatpush1.msra.mxu0 %v2886
    %v2888 = vand.u32 %v49, 4294901760
    %v2889 = vsub.f32 %v49, %v2888
    %v2890 = vand.u32 %v2889, 4294901760
    %v2891 = vsub.f32 %v2889, %v2890
    %v2892 = vand.u32 %v2891, 4294901760
    %2893 = vmatprep.subr.mxu0 %v2892
    %v2894 = vand.u32 %v48, 4294901760
    %v2895 = vsub.f32 %v48, %v2894
    %v2896 = vand.u32 %v2895, 4294901760
    %v2897 = vsub.f32 %v2895, %v2896
    %v2898 = vand.u32 %v2897, 4294901760
    %2899 = vmatpush1.msra.mxu0 %v2898
    %v2900 = vand.u32 %v51, 4294901760
    %v2901 = vsub.f32 %v51, %v2900
    %v2902 = vand.u32 %v2901, 4294901760
    %v2903 = vsub.f32 %v2901, %v2902
    %v2904 = vand.u32 %v2903, 4294901760
    %2905 = vmatprep.subr.mxu0 %v2904
    %v2906 = vand.u32 %v50, 4294901760
    %v2907 = vsub.f32 %v50, %v2906
    %v2908 = vand.u32 %v2907, 4294901760
    %v2909 = vsub.f32 %v2907, %v2908
    %v2910 = vand.u32 %v2909, 4294901760
    %2911 = vmatpush1.msra.mxu0 %v2910
    %v2912 = vand.u32 %v53, 4294901760
    %v2913 = vsub.f32 %v53, %v2912
    %v2914 = vand.u32 %v2913, 4294901760
    %v2915 = vsub.f32 %v2913, %v2914
    %v2916 = vand.u32 %v2915, 4294901760
    %2917 = vmatprep.subr.mxu0 %v2916
    %v2918 = vand.u32 %v52, 4294901760
    %v2919 = vsub.f32 %v52, %v2918
    %v2920 = vand.u32 %v2919, 4294901760
    %v2921 = vsub.f32 %v2919, %v2920
    %v2922 = vand.u32 %v2921, 4294901760
    %2923 = vmatpush1.msra.mxu0 %v2922
    %2924 = vmatprep.subr.mxu0 0.0
    %2925 = vmatpush1.msra.mxu0 0.0
    %2926 = vmatprep.subr.mxu0 0.0
    %2927 = vmatpush1.msra.mxu0 0.0
    %2928 = vmatprep.subr.mxu0 0.0
    %2929 = vmatpush1.msra.mxu0 0.0
    %2930 = vmatprep.subr.mxu0 0.0
    %2931 = vmatpush1.msra.mxu0 0.0
    %2932 = vmatprep.subr.mxu0 0.0
    %2933 = vmatpush1.msra.mxu0 0.0
    %2934 = vmatprep.subr.mxu0 0.0
    %2935 = vmatpush1.msra.mxu0 0.0
    %2936 = vmatprep.subr.mxu0 0.0
    %2937 = vmatpush1.msra.mxu0 0.0
    %2938 = vmatprep.subr.mxu0 0.0
    %2939 = vmatpush1.msra.mxu0 0.0
    %2940 = vmatprep.subr.mxu0 0.0
    %2941 = vmatpush1.msra.mxu0 0.0
    %2942 = vmatprep.subr.mxu0 0.0
    %2943 = vmatpush1.msra.mxu0 0.0
    %2944 = vmatprep.subr.mxu0 0.0
    %2945 = vmatpush1.msra.mxu0 0.0
    %2946 = vmatprep.subr.mxu0 0.0
    %2947 = vmatpush1.msra.mxu0 0.0
    %2948 = vmatprep.subr.mxu0 0.0
    %2949 = vmatpush1.msra.mxu0 0.0
    %2950 = vmatprep.subr.mxu0 0.0
    %2951 = vmatpush1.msra.mxu0 0.0
    %2952 = vmatprep.subr.mxu0 0.0
    %2953 = vmatpush1.msra.mxu0 0.0
    %2954 = vmatprep.subr.mxu0 0.0
    %2955 = vmatpush1.msra.mxu0 0.0
    %2956 = vmatprep.subr.mxu0 0.0
    %2957 = vmatpush1.msra.mxu0 0.0
    %2958 = vmatprep.subr.mxu0 0.0
    %2959 = vmatpush1.msra.mxu0 0.0
    %2960 = vmatprep.subr.mxu0 0.0
    %2961 = vmatpush1.msra.mxu0 0.0
    %2962 = vmatprep.subr.mxu0 0.0
    %2963 = vmatpush1.msra.mxu0 0.0
    %2964 = vmatprep.subr.mxu0 0.0
    %2965 = vmatpush1.msra.mxu0 0.0
    %2966 = vmatprep.subr.mxu0 0.0
    %2967 = vmatpush1.msra.mxu0 0.0
    %2968 = vmatprep.subr.mxu0 0.0
    %2969 = vmatpush1.msra.mxu0 0.0
    %2970 = vmatprep.subr.mxu0 0.0
    %2971 = vmatpush1.msra.mxu0 0.0
    %2972 = vmatprep.mubr.f32.mxu0 0.0
    %v2973 = vand.u32 %v2734, 4294901760
    %2974 = vmatmul.mubr.f32.gmra.mrb[0].mxu0 %v2973
    %v2975 = vpop.f32.mrb[0].mxu0
    %v2976 = vadd.f32 %v2824, %v2975
    %v2977 = vpop.f32.mrb[0].mxu0
    %v2978 = vadd.f32 %v2826, %v2977
    %2979 = vdwg.mxu0
    %v2980 = vand.u32 %v39, 4294901760
    %v2981 = vsub.f32 %v39, %v2980
    %2982 = vmatprep.subr.mxu0 %v2981
    %v2983 = vand.u32 %v38, 4294901760
    %v2984 = vsub.f32 %v38, %v2983
    %2985 = vmatpush1.msra.mxu0 %v2984
    %v2986 = vand.u32 %v41, 4294901760
    %v2987 = vsub.f32 %v41, %v2986
    %2988 = vmatprep.subr.mxu0 %v2987
    %v2989 = vand.u32 %v40, 4294901760
    %v2990 = vsub.f32 %v40, %v2989
    %2991 = vmatpush1.msra.mxu0 %v2990
    %v2992 = vand.u32 %v43, 4294901760
    %v2993 = vsub.f32 %v43, %v2992
    %2994 = vmatprep.subr.mxu0 %v2993
    %v2995 = vand.u32 %v42, 4294901760
    %v2996 = vsub.f32 %v42, %v2995
    %2997 = vmatpush1.msra.mxu0 %v2996
    %v2998 = vand.u32 %v45, 4294901760
    %v2999 = vsub.f32 %v45, %v2998
    %3000 = vmatprep.subr.mxu0 %v2999
    %v3001 = vand.u32 %v44, 4294901760
    %v3002 = vsub.f32 %v44, %v3001
    %3003 = vmatpush1.msra.mxu0 %v3002
    %v3004 = vand.u32 %v47, 4294901760
    %v3005 = vsub.f32 %v47, %v3004
    %3006 = vmatprep.subr.mxu0 %v3005
    %v3007 = vand.u32 %v46, 4294901760
    %v3008 = vsub.f32 %v46, %v3007
    %3009 = vmatpush1.msra.mxu0 %v3008
    %v3010 = vand.u32 %v49, 4294901760
    %v3011 = vsub.f32 %v49, %v3010
    %3012 = vmatprep.subr.mxu0 %v3011
    %v3013 = vand.u32 %v48, 4294901760
    %v3014 = vsub.f32 %v48, %v3013
    %3015 = vmatpush1.msra.mxu0 %v3014
    %v3016 = vand.u32 %v51, 4294901760
    %v3017 = vsub.f32 %v51, %v3016
    %3018 = vmatprep.subr.mxu0 %v3017
    %v3019 = vand.u32 %v50, 4294901760
    %v3020 = vsub.f32 %v50, %v3019
    %3021 = vmatpush1.msra.mxu0 %v3020
    %v3022 = vand.u32 %v53, 4294901760
    %v3023 = vsub.f32 %v53, %v3022
    %3024 = vmatprep.subr.mxu0 %v3023
    %v3025 = vand.u32 %v52, 4294901760
    %v3026 = vsub.f32 %v52, %v3025
    %3027 = vmatpush1.msra.mxu0 %v3026
    %3028 = vmatprep.subr.mxu0 0.0
    %3029 = vmatpush1.msra.mxu0 0.0
    %3030 = vmatprep.subr.mxu0 0.0
    %3031 = vmatpush1.msra.mxu0 0.0
    %3032 = vmatprep.subr.mxu0 0.0
    %3033 = vmatpush1.msra.mxu0 0.0
    %3034 = vmatprep.subr.mxu0 0.0
    %3035 = vmatpush1.msra.mxu0 0.0
    %3036 = vmatprep.subr.mxu0 0.0
    %3037 = vmatpush1.msra.mxu0 0.0
    %3038 = vmatprep.subr.mxu0 0.0
    %3039 = vmatpush1.msra.mxu0 0.0
    %3040 = vmatprep.subr.mxu0 0.0
    %3041 = vmatpush1.msra.mxu0 0.0
    %3042 = vmatprep.subr.mxu0 0.0
    %3043 = vmatpush1.msra.mxu0 0.0
    %3044 = vmatprep.subr.mxu0 0.0
    %3045 = vmatpush1.msra.mxu0 0.0
    %3046 = vmatprep.subr.mxu0 0.0
    %3047 = vmatpush1.msra.mxu0 0.0
    %3048 = vmatprep.subr.mxu0 0.0
    %3049 = vmatpush1.msra.mxu0 0.0
    %3050 = vmatprep.subr.mxu0 0.0
    %3051 = vmatpush1.msra.mxu0 0.0
    %3052 = vmatprep.subr.mxu0 0.0
    %3053 = vmatpush1.msra.mxu0 0.0
    %3054 = vmatprep.subr.mxu0 0.0
    %3055 = vmatpush1.msra.mxu0 0.0
    %3056 = vmatprep.subr.mxu0 0.0
    %3057 = vmatpush1.msra.mxu0 0.0
    %3058 = vmatprep.subr.mxu0 0.0
    %3059 = vmatpush1.msra.mxu0 0.0
    %3060 = vmatprep.subr.mxu0 0.0
    %3061 = vmatpush1.msra.mxu0 0.0
    %3062 = vmatprep.subr.mxu0 0.0
    %3063 = vmatpush1.msra.mxu0 0.0
    %3064 = vmatprep.subr.mxu0 0.0
    %3065 = vmatpush1.msra.mxu0 0.0
    %3066 = vmatprep.subr.mxu0 0.0
    %3067 = vmatpush1.msra.mxu0 0.0
    %3068 = vmatprep.subr.mxu0 0.0
    %3069 = vmatpush1.msra.mxu0 0.0
    %3070 = vmatprep.subr.mxu0 0.0
    %3071 = vmatpush1.msra.mxu0 0.0
    %3072 = vmatprep.subr.mxu0 0.0
    %3073 = vmatpush1.msra.mxu0 0.0
    %3074 = vmatprep.subr.mxu0 0.0
    %3075 = vmatpush1.msra.mxu0 0.0
    %3076 = vmatprep.mubr.f32.mxu0 0.0
    %v3077 = vand.u32 %v2734, 4294901760
    %v3078 = vsub.f32 %v2734, %v3077
    %3079 = vmatmul.mubr.f32.gmra.mrb[0].mxu0 %v3078
    %v3080 = vpop.f32.mrb[0].mxu0
    %v3081 = vadd.f32 %v2976, %v3080
    %v3082 = vpop.f32.mrb[0].mxu0
    %v3083 = vadd.f32 %v2978, %v3082
    %3084 = vdwg.mxu0
    %v3085 = vand.u32 %v39, 4294901760
    %3086 = vmatprep.subr.mxu0 %v3085
    %v3087 = vand.u32 %v38, 4294901760
    %3088 = vmatpush1.msra.mxu0 %v3087
    %v3089 = vand.u32 %v41, 4294901760
    %3090 = vmatprep.subr.mxu0 %v3089
    %v3091 = vand.u32 %v40, 4294901760
    %3092 = vmatpush1.msra.mxu0 %v3091
    %v3093 = vand.u32 %v43, 4294901760
    %3094 = vmatprep.subr.mxu0 %v3093
    %v3095 = vand.u32 %v42, 4294901760
    %3096 = vmatpush1.msra.mxu0 %v3095
    %v3097 = vand.u32 %v45, 4294901760
    %3098 = vmatprep.subr.mxu0 %v3097
    %v3099 = vand.u32 %v44, 4294901760
    %3100 = vmatpush1.msra.mxu0 %v3099
    %v3101 = vand.u32 %v47, 4294901760
    %3102 = vmatprep.subr.mxu0 %v3101
    %v3103 = vand.u32 %v46, 4294901760
    %3104 = vmatpush1.msra.mxu0 %v3103
    %v3105 = vand.u32 %v49, 4294901760
    %3106 = vmatprep.subr.mxu0 %v3105
    %v3107 = vand.u32 %v48, 4294901760
    %3108 = vmatpush1.msra.mxu0 %v3107
    %v3109 = vand.u32 %v51, 4294901760
    %3110 = vmatprep.subr.mxu0 %v3109
    %v3111 = vand.u32 %v50, 4294901760
    %3112 = vmatpush1.msra.mxu0 %v3111
    %v3113 = vand.u32 %v53, 4294901760
    %3114 = vmatprep.subr.mxu0 %v3113
    %v3115 = vand.u32 %v52, 4294901760
    %3116 = vmatpush1.msra.mxu0 %v3115
    %3117 = vmatprep.subr.mxu0 0.0
    %3118 = vmatpush1.msra.mxu0 0.0
    %3119 = vmatprep.subr.mxu0 0.0
    %3120 = vmatpush1.msra.mxu0 0.0
    %3121 = vmatprep.subr.mxu0 0.0
    %3122 = vmatpush1.msra.mxu0 0.0
    %3123 = vmatprep.subr.mxu0 0.0
    %3124 = vmatpush1.msra.mxu0 0.0
    %3125 = vmatprep.subr.mxu0 0.0
    %3126 = vmatpush1.msra.mxu0 0.0
    %3127 = vmatprep.subr.mxu0 0.0
    %3128 = vmatpush1.msra.mxu0 0.0
    %3129 = vmatprep.subr.mxu0 0.0
    %3130 = vmatpush1.msra.mxu0 0.0
    %3131 = vmatprep.subr.mxu0 0.0
    %3132 = vmatpush1.msra.mxu0 0.0
    %3133 = vmatprep.subr.mxu0 0.0
    %3134 = vmatpush1.msra.mxu0 0.0
    %3135 = vmatprep.subr.mxu0 0.0
    %3136 = vmatpush1.msra.mxu0 0.0
    %3137 = vmatprep.subr.mxu0 0.0
    %3138 = vmatpush1.msra.mxu0 0.0
    %3139 = vmatprep.subr.mxu0 0.0
    %3140 = vmatpush1.msra.mxu0 0.0
    %3141 = vmatprep.subr.mxu0 0.0
    %3142 = vmatpush1.msra.mxu0 0.0
    %3143 = vmatprep.subr.mxu0 0.0
    %3144 = vmatpush1.msra.mxu0 0.0
    %3145 = vmatprep.subr.mxu0 0.0
    %3146 = vmatpush1.msra.mxu0 0.0
    %3147 = vmatprep.subr.mxu0 0.0
    %3148 = vmatpush1.msra.mxu0 0.0
    %3149 = vmatprep.subr.mxu0 0.0
    %3150 = vmatpush1.msra.mxu0 0.0
    %3151 = vmatprep.subr.mxu0 0.0
    %3152 = vmatpush1.msra.mxu0 0.0
    %3153 = vmatprep.subr.mxu0 0.0
    %3154 = vmatpush1.msra.mxu0 0.0
    %3155 = vmatprep.subr.mxu0 0.0
    %3156 = vmatpush1.msra.mxu0 0.0
    %3157 = vmatprep.subr.mxu0 0.0
    %3158 = vmatpush1.msra.mxu0 0.0
    %3159 = vmatprep.subr.mxu0 0.0
    %3160 = vmatpush1.msra.mxu0 0.0
    %3161 = vmatprep.subr.mxu0 0.0
    %3162 = vmatpush1.msra.mxu0 0.0
    %3163 = vmatprep.subr.mxu0 0.0
    %3164 = vmatpush1.msra.mxu0 0.0
    %3165 = vmatprep.mubr.f32.mxu0 0.0
    %v3166 = vand.u32 %v2734, 4294901760
    %v3167 = vsub.f32 %v2734, %v3166
    %v3168 = vand.u32 %v3167, 4294901760
    %3169 = vmatmul.mubr.f32.gmra.mrb[0].mxu0 %v3168
    %v3170 = vpop.f32.mrb[0].mxu0
    %v3171 = vadd.f32 %v3081, %v3170
    %v3172 = vpop.f32.mrb[0].mxu0
    %v3173 = vadd.f32 %v3083, %v3172
    %3174 = vdwg.mxu0
    %v3175 = vand.u32 %v39, 4294901760
    %v3176 = vsub.f32 %v39, %v3175
    %v3177 = vand.u32 %v3176, 4294901760
    %3178 = vmatprep.subr.mxu0 %v3177
    %v3179 = vand.u32 %v38, 4294901760
    %v3180 = vsub.f32 %v38, %v3179
    %v3181 = vand.u32 %v3180, 4294901760
    %3182 = vmatpush1.msra.mxu0 %v3181
    %v3183 = vand.u32 %v41, 4294901760
    %v3184 = vsub.f32 %v41, %v3183
    %v3185 = vand.u32 %v3184, 4294901760
    %3186 = vmatprep.subr.mxu0 %v3185
    %v3187 = vand.u32 %v40, 4294901760
    %v3188 = vsub.f32 %v40, %v3187
    %v3189 = vand.u32 %v3188, 4294901760
    %3190 = vmatpush1.msra.mxu0 %v3189
    %v3191 = vand.u32 %v43, 4294901760
    %v3192 = vsub.f32 %v43, %v3191
    %v3193 = vand.u32 %v3192, 4294901760
    %3194 = vmatprep.subr.mxu0 %v3193
    %v3195 = vand.u32 %v42, 4294901760
    %v3196 = vsub.f32 %v42, %v3195
    %v3197 = vand.u32 %v3196, 4294901760
    %3198 = vmatpush1.msra.mxu0 %v3197
    %v3199 = vand.u32 %v45, 4294901760
    %v3200 = vsub.f32 %v45, %v3199
    %v3201 = vand.u32 %v3200, 4294901760
    %3202 = vmatprep.subr.mxu0 %v3201
    %v3203 = vand.u32 %v44, 4294901760
    %v3204 = vsub.f32 %v44, %v3203
    %v3205 = vand.u32 %v3204, 4294901760
    %3206 = vmatpush1.msra.mxu0 %v3205
    %v3207 = vand.u32 %v47, 4294901760
    %v3208 = vsub.f32 %v47, %v3207
    %v3209 = vand.u32 %v3208, 4294901760
    %3210 = vmatprep.subr.mxu0 %v3209
    %v3211 = vand.u32 %v46, 4294901760
    %v3212 = vsub.f32 %v46, %v3211
    %v3213 = vand.u32 %v3212, 4294901760
    %3214 = vmatpush1.msra.mxu0 %v3213
    %v3215 = vand.u32 %v49, 4294901760
    %v3216 = vsub.f32 %v49, %v3215
    %v3217 = vand.u32 %v3216, 4294901760
    %3218 = vmatprep.subr.mxu0 %v3217
    %v3219 = vand.u32 %v48, 4294901760
    %v3220 = vsub.f32 %v48, %v3219
    %v3221 = vand.u32 %v3220, 4294901760
    %3222 = vmatpush1.msra.mxu0 %v3221
    %v3223 = vand.u32 %v51, 4294901760
    %v3224 = vsub.f32 %v51, %v3223
    %v3225 = vand.u32 %v3224, 4294901760
    %3226 = vmatprep.subr.mxu0 %v3225
    %v3227 = vand.u32 %v50, 4294901760
    %v3228 = vsub.f32 %v50, %v3227
    %v3229 = vand.u32 %v3228, 4294901760
    %3230 = vmatpush1.msra.mxu0 %v3229
    %v3231 = vand.u32 %v53, 4294901760
    %v3232 = vsub.f32 %v53, %v3231
    %v3233 = vand.u32 %v3232, 4294901760
    %3234 = vmatprep.subr.mxu0 %v3233
    %v3235 = vand.u32 %v52, 4294901760
    %v3236 = vsub.f32 %v52, %v3235
    %v3237 = vand.u32 %v3236, 4294901760
    %3238 = vmatpush1.msra.mxu0 %v3237
    %3239 = vmatprep.subr.mxu0 0.0
    %3240 = vmatpush1.msra.mxu0 0.0
    %3241 = vmatprep.subr.mxu0 0.0
    %3242 = vmatpush1.msra.mxu0 0.0
    %3243 = vmatprep.subr.mxu0 0.0
    %3244 = vmatpush1.msra.mxu0 0.0
    %3245 = vmatprep.subr.mxu0 0.0
    %3246 = vmatpush1.msra.mxu0 0.0
    %3247 = vmatprep.subr.mxu0 0.0
    %3248 = vmatpush1.msra.mxu0 0.0
    %3249 = vmatprep.subr.mxu0 0.0
    %3250 = vmatpush1.msra.mxu0 0.0
    %3251 = vmatprep.subr.mxu0 0.0
    %3252 = vmatpush1.msra.mxu0 0.0
    %3253 = vmatprep.subr.mxu0 0.0
    %3254 = vmatpush1.msra.mxu0 0.0
    %3255 = vmatprep.subr.mxu0 0.0
    %3256 = vmatpush1.msra.mxu0 0.0
    %3257 = vmatprep.subr.mxu0 0.0
    %3258 = vmatpush1.msra.mxu0 0.0
    %3259 = vmatprep.subr.mxu0 0.0
    %3260 = vmatpush1.msra.mxu0 0.0
    %3261 = vmatprep.subr.mxu0 0.0
    %3262 = vmatpush1.msra.mxu0 0.0
    %3263 = vmatprep.subr.mxu0 0.0
    %3264 = vmatpush1.msra.mxu0 0.0
    %3265 = vmatprep.subr.mxu0 0.0
    %3266 = vmatpush1.msra.mxu0 0.0
    %3267 = vmatprep.subr.mxu0 0.0
    %3268 = vmatpush1.msra.mxu0 0.0
    %3269 = vmatprep.subr.mxu0 0.0
    %3270 = vmatpush1.msra.mxu0 0.0
    %3271 = vmatprep.subr.mxu0 0.0
    %3272 = vmatpush1.msra.mxu0 0.0
    %3273 = vmatprep.subr.mxu0 0.0
    %3274 = vmatpush1.msra.mxu0 0.0
    %3275 = vmatprep.subr.mxu0 0.0
    %3276 = vmatpush1.msra.mxu0 0.0
    %3277 = vmatprep.subr.mxu0 0.0
    %3278 = vmatpush1.msra.mxu0 0.0
    %3279 = vmatprep.subr.mxu0 0.0
    %3280 = vmatpush1.msra.mxu0 0.0
    %3281 = vmatprep.subr.mxu0 0.0
    %3282 = vmatpush1.msra.mxu0 0.0
    %3283 = vmatprep.subr.mxu0 0.0
    %3284 = vmatpush1.msra.mxu0 0.0
    %3285 = vmatprep.subr.mxu0 0.0
    %3286 = vmatpush1.msra.mxu0 0.0
    %3287 = vmatprep.mubr.f32.mxu0 0.0
    %v3288 = vand.u32 %v2734, 4294901760
    %3289 = vmatmul.mubr.f32.gmra.mrb[0].mxu0 %v3288
    %v3290 = vpop.f32.mrb[0].mxu0
    %v3291 = vadd.f32 %v3171, %v3290
    %v3292 = vpop.f32.mrb[0].mxu0
    %v3293 = vadd.f32 %v3173, %v3292
    %3294 = vdwg.mxu0
    %v3295 = vand.u32 %v39, 4294901760
    %3296 = vmatprep.subr.mxu0 %v3295
    %v3297 = vand.u32 %v38, 4294901760
    %3298 = vmatpush1.msra.mxu0 %v3297
    %v3299 = vand.u32 %v41, 4294901760
    %3300 = vmatprep.subr.mxu0 %v3299
    %v3301 = vand.u32 %v40, 4294901760
    %3302 = vmatpush1.msra.mxu0 %v3301
    %v3303 = vand.u32 %v43, 4294901760
    %3304 = vmatprep.subr.mxu0 %v3303
    %v3305 = vand.u32 %v42, 4294901760
    %3306 = vmatpush1.msra.mxu0 %v3305
    %v3307 = vand.u32 %v45, 4294901760
    %3308 = vmatprep.subr.mxu0 %v3307
    %v3309 = vand.u32 %v44, 4294901760
    %3310 = vmatpush1.msra.mxu0 %v3309
    %v3311 = vand.u32 %v47, 4294901760
    %3312 = vmatprep.subr.mxu0 %v3311
    %v3313 = vand.u32 %v46, 4294901760
    %3314 = vmatpush1.msra.mxu0 %v3313
    %v3315 = vand.u32 %v49, 4294901760
    %3316 = vmatprep.subr.mxu0 %v3315
    %v3317 = vand.u32 %v48, 4294901760
    %3318 = vmatpush1.msra.mxu0 %v3317
    %v3319 = vand.u32 %v51, 4294901760
    %3320 = vmatprep.subr.mxu0 %v3319
    %v3321 = vand.u32 %v50, 4294901760
    %3322 = vmatpush1.msra.mxu0 %v3321
    %v3323 = vand.u32 %v53, 4294901760
    %3324 = vmatprep.subr.mxu0 %v3323
    %v3325 = vand.u32 %v52, 4294901760
    %3326 = vmatpush1.msra.mxu0 %v3325
    %3327 = vmatprep.subr.mxu0 0.0
    %3328 = vmatpush1.msra.mxu0 0.0
    %3329 = vmatprep.subr.mxu0 0.0
    %3330 = vmatpush1.msra.mxu0 0.0
    %3331 = vmatprep.subr.mxu0 0.0
    %3332 = vmatpush1.msra.mxu0 0.0
    %3333 = vmatprep.subr.mxu0 0.0
    %3334 = vmatpush1.msra.mxu0 0.0
    %3335 = vmatprep.subr.mxu0 0.0
    %3336 = vmatpush1.msra.mxu0 0.0
    %3337 = vmatprep.subr.mxu0 0.0
    %3338 = vmatpush1.msra.mxu0 0.0
    %3339 = vmatprep.subr.mxu0 0.0
    %3340 = vmatpush1.msra.mxu0 0.0
    %3341 = vmatprep.subr.mxu0 0.0
    %3342 = vmatpush1.msra.mxu0 0.0
    %3343 = vmatprep.subr.mxu0 0.0
    %3344 = vmatpush1.msra.mxu0 0.0
    %3345 = vmatprep.subr.mxu0 0.0
    %3346 = vmatpush1.msra.mxu0 0.0
    %3347 = vmatprep.subr.mxu0 0.0
    %3348 = vmatpush1.msra.mxu0 0.0
    %3349 = vmatprep.subr.mxu0 0.0
    %3350 = vmatpush1.msra.mxu0 0.0
    %3351 = vmatprep.subr.mxu0 0.0
    %3352 = vmatpush1.msra.mxu0 0.0
    %3353 = vmatprep.subr.mxu0 0.0
    %3354 = vmatpush1.msra.mxu0 0.0
    %3355 = vmatprep.subr.mxu0 0.0
    %3356 = vmatpush1.msra.mxu0 0.0
    %3357 = vmatprep.subr.mxu0 0.0
    %3358 = vmatpush1.msra.mxu0 0.0
    %3359 = vmatprep.subr.mxu0 0.0
    %3360 = vmatpush1.msra.mxu0 0.0
    %3361 = vmatprep.subr.mxu0 0.0
    %3362 = vmatpush1.msra.mxu0 0.0
    %3363 = vmatprep.subr.mxu0 0.0
    %3364 = vmatpush1.msra.mxu0 0.0
    %3365 = vmatprep.subr.mxu0 0.0
    %3366 = vmatpush1.msra.mxu0 0.0
    %3367 = vmatprep.subr.mxu0 0.0
    %3368 = vmatpush1.msra.mxu0 0.0
    %3369 = vmatprep.subr.mxu0 0.0
    %3370 = vmatpush1.msra.mxu0 0.0
    %3371 = vmatprep.subr.mxu0 0.0
    %3372 = vmatpush1.msra.mxu0 0.0
    %3373 = vmatprep.subr.mxu0 0.0
    %3374 = vmatpush1.msra.mxu0 0.0
    %3375 = vmatprep.mubr.f32.mxu0 0.0
    %v3376 = vand.u32 %v2734, 4294901760
    %3377 = vmatmul.mubr.f32.gmra.mrb[0].mxu0 %v3376
    %v3378 = vpop.f32.mrb[0].mxu0
    %v3379 = vadd.f32 %v3291, %v3378
    %v3380 = vpop.f32.mrb[0].mxu0
    %v3381 = vadd.f32 %v3293, %v3380
    %3382 = vdwg.mxu0
    %v3383 = vxor.u32 %v3379, 2147483648
    %v3384 = vmul.f32 %v3383, 1.442695
    %v3385 = vpow.pop %v3384
    %v3386 = vadd.f32 %v3385, 1.0
    %v3387 = vrcp.pop %v3386
    %v3388 = vmul.f32 1.0, %v3387
    %v3389 = vtanh.pop %v3381
    %v3390 = vxor.u32 %v3381, 2147483648
    %v3391 = vmul.f32 %v3390, 1.442695
    %v3392 = vpow.pop %v3391
    %v3393 = vadd.f32 %v3392, 1.0
    %v3394 = vrcp.pop %v3393
    %v3395 = vmul.f32 1.0, %v3394
    %v3396 = vsel %vm663, %v3389, %v3395
    %v3397 = vmul.f32 %v3388, %v2728
    %v3398 = vmul.f32 %v3388, %v3396
    %3400 = vrot.lane.b32.xlu0 %v3398, 64
    %v3401 = vpop.permute.xlu0 %3400
    %v3403 = vadd.f32 %v3397, %v3401
    %v3404 = vtanh.pop %v3403
    %v3405 = vmul.f32 %v3396, %v3404
    %3407 = vrot.lane.b32.xlu0 %v3405, 64
    %v3408 = vpop.permute.xlu0 %3407
    %v3411 = vrot.slane %v650, 2
    %v3412 = vrot.slane %v652, 2
    %v3415 = vsel %vm696, %v3408, 0
    %v3417 = vand.u32 %v39, 4294901760
    %3418 = vmatprep.subr.mxu0 %v3417
    %v3419 = vand.u32 %v38, 4294901760
    %3420 = vmatpush1.msra.mxu0 %v3419
    %v3421 = vand.u32 %v41, 4294901760
    %3422 = vmatprep.subr.mxu0 %v3421
    %v3423 = vand.u32 %v40, 4294901760
    %3424 = vmatpush1.msra.mxu0 %v3423
    %v3425 = vand.u32 %v43, 4294901760
    %3426 = vmatprep.subr.mxu0 %v3425
    %v3427 = vand.u32 %v42, 4294901760
    %3428 = vmatpush1.msra.mxu0 %v3427
    %v3429 = vand.u32 %v45, 4294901760
    %3430 = vmatprep.subr.mxu0 %v3429
    %v3431 = vand.u32 %v44, 4294901760
    %3432 = vmatpush1.msra.mxu0 %v3431
    %v3433 = vand.u32 %v47, 4294901760
    %3434 = vmatprep.subr.mxu0 %v3433
    %v3435 = vand.u32 %v46, 4294901760
    %3436 = vmatpush1.msra.mxu0 %v3435
    %v3437 = vand.u32 %v49, 4294901760
    %3438 = vmatprep.subr.mxu0 %v3437
    %v3439 = vand.u32 %v48, 4294901760
    %3440 = vmatpush1.msra.mxu0 %v3439
    %v3441 = vand.u32 %v51, 4294901760
    %3442 = vmatprep.subr.mxu0 %v3441
    %v3443 = vand.u32 %v50, 4294901760
    %3444 = vmatpush1.msra.mxu0 %v3443
    %v3445 = vand.u32 %v53, 4294901760
    %3446 = vmatprep.subr.mxu0 %v3445
    %v3447 = vand.u32 %v52, 4294901760
    %3448 = vmatpush1.msra.mxu0 %v3447
    %3449 = vmatprep.subr.mxu0 0.0
    %3450 = vmatpush1.msra.mxu0 0.0
    %3451 = vmatprep.subr.mxu0 0.0
    %3452 = vmatpush1.msra.mxu0 0.0
    %3453 = vmatprep.subr.mxu0 0.0
    %3454 = vmatpush1.msra.mxu0 0.0
    %3455 = vmatprep.subr.mxu0 0.0
    %3456 = vmatpush1.msra.mxu0 0.0
    %3457 = vmatprep.subr.mxu0 0.0
    %3458 = vmatpush1.msra.mxu0 0.0
    %3459 = vmatprep.subr.mxu0 0.0
    %3460 = vmatpush1.msra.mxu0 0.0
    %3461 = vmatprep.subr.mxu0 0.0
    %3462 = vmatpush1.msra.mxu0 0.0
    %3463 = vmatprep.subr.mxu0 0.0
    %3464 = vmatpush1.msra.mxu0 0.0
    %3465 = vmatprep.subr.mxu0 0.0
    %3466 = vmatpush1.msra.mxu0 0.0
    %3467 = vmatprep.subr.mxu0 0.0
    %3468 = vmatpush1.msra.mxu0 0.0
    %3469 = vmatprep.subr.mxu0 0.0
    %3470 = vmatpush1.msra.mxu0 0.0
    %3471 = vmatprep.subr.mxu0 0.0
    %3472 = vmatpush1.msra.mxu0 0.0
    %3473 = vmatprep.subr.mxu0 0.0
    %3474 = vmatpush1.msra.mxu0 0.0
    %3475 = vmatprep.subr.mxu0 0.0
    %3476 = vmatpush1.msra.mxu0 0.0
    %3477 = vmatprep.subr.mxu0 0.0
    %3478 = vmatpush1.msra.mxu0 0.0
    %3479 = vmatprep.subr.mxu0 0.0
    %3480 = vmatpush1.msra.mxu0 0.0
    %3481 = vmatprep.subr.mxu0 0.0
    %3482 = vmatpush1.msra.mxu0 0.0
    %3483 = vmatprep.subr.mxu0 0.0
    %3484 = vmatpush1.msra.mxu0 0.0
    %3485 = vmatprep.subr.mxu0 0.0
    %3486 = vmatpush1.msra.mxu0 0.0
    %3487 = vmatprep.subr.mxu0 0.0
    %3488 = vmatpush1.msra.mxu0 0.0
    %3489 = vmatprep.subr.mxu0 0.0
    %3490 = vmatpush1.msra.mxu0 0.0
    %3491 = vmatprep.subr.mxu0 0.0
    %3492 = vmatpush1.msra.mxu0 0.0
    %3493 = vmatprep.subr.mxu0 0.0
    %3494 = vmatpush1.msra.mxu0 0.0
    %3495 = vmatprep.subr.mxu0 0.0
    %3496 = vmatpush1.msra.mxu0 0.0
    %3497 = vmatprep.mubr.f32.mxu0 0.0
    %v3498 = vand.u32 %v3415, 4294901760
    %v3499 = vsub.f32 %v3415, %v3498
    %v3500 = vand.u32 %v3499, 4294901760
    %v3501 = vsub.f32 %v3499, %v3500
    %v3502 = vand.u32 %v3501, 4294901760
    %3503 = vmatmul.mubr.f32.gmra.mrb[0].mxu0 %v3502
    %v3504 = vpop.f32.mrb[0].mxu0
    %v3505 = vadd.f32 %v3411, %v3504
    %v3506 = vpop.f32.mrb[0].mxu0
    %v3507 = vadd.f32 %v3412, %v3506
    %3508 = vdwg.mxu0
    %v3509 = vand.u32 %v39, 4294901760
    %v3510 = vsub.f32 %v39, %v3509
    %v3511 = vand.u32 %v3510, 4294901760
    %v3512 = vsub.f32 %v3510, %v3511
    %v3513 = vand.u32 %v3512, 4294901760
    %3514 = vmatprep.subr.mxu0 %v3513
    %v3515 = vand.u32 %v38, 4294901760
    %v3516 = vsub.f32 %v38, %v3515
    %v3517 = vand.u32 %v3516, 4294901760
    %v3518 = vsub.f32 %v3516, %v3517
    %v3519 = vand.u32 %v3518, 4294901760
    %3520 = vmatpush1.msra.mxu0 %v3519
    %v3521 = vand.u32 %v41, 4294901760
    %v3522 = vsub.f32 %v41, %v3521
    %v3523 = vand.u32 %v3522, 4294901760
    %v3524 = vsub.f32 %v3522, %v3523
    %v3525 = vand.u32 %v3524, 4294901760
    %3526 = vmatprep.subr.mxu0 %v3525
    %v3527 = vand.u32 %v40, 4294901760
    %v3528 = vsub.f32 %v40, %v3527
    %v3529 = vand.u32 %v3528, 4294901760
    %v3530 = vsub.f32 %v3528, %v3529
    %v3531 = vand.u32 %v3530, 4294901760
    %3532 = vmatpush1.msra.mxu0 %v3531
    %v3533 = vand.u32 %v43, 4294901760
    %v3534 = vsub.f32 %v43, %v3533
    %v3535 = vand.u32 %v3534, 4294901760
    %v3536 = vsub.f32 %v3534, %v3535
    %v3537 = vand.u32 %v3536, 4294901760
    %3538 = vmatprep.subr.mxu0 %v3537
    %v3539 = vand.u32 %v42, 4294901760
    %v3540 = vsub.f32 %v42, %v3539
    %v3541 = vand.u32 %v3540, 4294901760
    %v3542 = vsub.f32 %v3540, %v3541
    %v3543 = vand.u32 %v3542, 4294901760
    %3544 = vmatpush1.msra.mxu0 %v3543
    %v3545 = vand.u32 %v45, 4294901760
    %v3546 = vsub.f32 %v45, %v3545
    %v3547 = vand.u32 %v3546, 4294901760
    %v3548 = vsub.f32 %v3546, %v3547
    %v3549 = vand.u32 %v3548, 4294901760
    %3550 = vmatprep.subr.mxu0 %v3549
    %v3551 = vand.u32 %v44, 4294901760
    %v3552 = vsub.f32 %v44, %v3551
    %v3553 = vand.u32 %v3552, 4294901760
    %v3554 = vsub.f32 %v3552, %v3553
    %v3555 = vand.u32 %v3554, 4294901760
    %3556 = vmatpush1.msra.mxu0 %v3555
    %v3557 = vand.u32 %v47, 4294901760
    %v3558 = vsub.f32 %v47, %v3557
    %v3559 = vand.u32 %v3558, 4294901760
    %v3560 = vsub.f32 %v3558, %v3559
    %v3561 = vand.u32 %v3560, 4294901760
    %3562 = vmatprep.subr.mxu0 %v3561
    %v3563 = vand.u32 %v46, 4294901760
    %v3564 = vsub.f32 %v46, %v3563
    %v3565 = vand.u32 %v3564, 4294901760
    %v3566 = vsub.f32 %v3564, %v3565
    %v3567 = vand.u32 %v3566, 4294901760
    %3568 = vmatpush1.msra.mxu0 %v3567
    %v3569 = vand.u32 %v49, 4294901760
    %v3570 = vsub.f32 %v49, %v3569
    %v3571 = vand.u32 %v3570, 4294901760
    %v3572 = vsub.f32 %v3570, %v3571
    %v3573 = vand.u32 %v3572, 4294901760
    %3574 = vmatprep.subr.mxu0 %v3573
    %v3575 = vand.u32 %v48, 4294901760
    %v3576 = vsub.f32 %v48, %v3575
    %v3577 = vand.u32 %v3576, 4294901760
    %v3578 = vsub.f32 %v3576, %v3577
    %v3579 = vand.u32 %v3578, 4294901760
    %3580 = vmatpush1.msra.mxu0 %v3579
    %v3581 = vand.u32 %v51, 4294901760
    %v3582 = vsub.f32 %v51, %v3581
    %v3583 = vand.u32 %v3582, 4294901760
    %v3584 = vsub.f32 %v3582, %v3583
    %v3585 = vand.u32 %v3584, 4294901760
    %3586 = vmatprep.subr.mxu0 %v3585
    %v3587 = vand.u32 %v50, 4294901760
    %v3588 = vsub.f32 %v50, %v3587
    %v3589 = vand.u32 %v3588, 4294901760
    %v3590 = vsub.f32 %v3588, %v3589
    %v3591 = vand.u32 %v3590, 4294901760
    %3592 = vmatpush1.msra.mxu0 %v3591
    %v3593 = vand.u32 %v53, 4294901760
    %v3594 = vsub.f32 %v53, %v3593
    %v3595 = vand.u32 %v3594, 4294901760
    %v3596 = vsub.f32 %v3594, %v3595
    %v3597 = vand.u32 %v3596, 4294901760
    %3598 = vmatprep.subr.mxu0 %v3597
    %v3599 = vand.u32 %v52, 4294901760
    %v3600 = vsub.f32 %v52, %v3599
    %v3601 = vand.u32 %v3600, 4294901760
    %v3602 = vsub.f32 %v3600, %v3601
    %v3603 = vand.u32 %v3602, 4294901760
    %3604 = vmatpush1.msra.mxu0 %v3603
    %3605 = vmatprep.subr.mxu0 0.0
    %3606 = vmatpush1.msra.mxu0 0.0
    %3607 = vmatprep.subr.mxu0 0.0
    %3608 = vmatpush1.msra.mxu0 0.0
    %3609 = vmatprep.subr.mxu0 0.0
    %3610 = vmatpush1.msra.mxu0 0.0
    %3611 = vmatprep.subr.mxu0 0.0
    %3612 = vmatpush1.msra.mxu0 0.0
    %3613 = vmatprep.subr.mxu0 0.0
    %3614 = vmatpush1.msra.mxu0 0.0
    %3615 = vmatprep.subr.mxu0 0.0
    %3616 = vmatpush1.msra.mxu0 0.0
    %3617 = vmatprep.subr.mxu0 0.0
    %3618 = vmatpush1.msra.mxu0 0.0
    %3619 = vmatprep.subr.mxu0 0.0
    %3620 = vmatpush1.msra.mxu0 0.0
    %3621 = vmatprep.subr.mxu0 0.0
    %3622 = vmatpush1.msra.mxu0 0.0
    %3623 = vmatprep.subr.mxu0 0.0
    %3624 = vmatpush1.msra.mxu0 0.0
    %3625 = vmatprep.subr.mxu0 0.0
    %3626 = vmatpush1.msra.mxu0 0.0
    %3627 = vmatprep.subr.mxu0 0.0
    %3628 = vmatpush1.msra.mxu0 0.0
    %3629 = vmatprep.subr.mxu0 0.0
    %3630 = vmatpush1.msra.mxu0 0.0
    %3631 = vmatprep.subr.mxu0 0.0
    %3632 = vmatpush1.msra.mxu0 0.0
    %3633 = vmatprep.subr.mxu0 0.0
    %3634 = vmatpush1.msra.mxu0 0.0
    %3635 = vmatprep.subr.mxu0 0.0
    %3636 = vmatpush1.msra.mxu0 0.0
    %3637 = vmatprep.subr.mxu0 0.0
    %3638 = vmatpush1.msra.mxu0 0.0
    %3639 = vmatprep.subr.mxu0 0.0
    %3640 = vmatpush1.msra.mxu0 0.0
    %3641 = vmatprep.subr.mxu0 0.0
    %3642 = vmatpush1.msra.mxu0 0.0
    %3643 = vmatprep.subr.mxu0 0.0
    %3644 = vmatpush1.msra.mxu0 0.0
    %3645 = vmatprep.subr.mxu0 0.0
    %3646 = vmatpush1.msra.mxu0 0.0
    %3647 = vmatprep.subr.mxu0 0.0
    %3648 = vmatpush1.msra.mxu0 0.0
    %3649 = vmatprep.subr.mxu0 0.0
    %3650 = vmatpush1.msra.mxu0 0.0
    %3651 = vmatprep.subr.mxu0 0.0
    %3652 = vmatpush1.msra.mxu0 0.0
    %3653 = vmatprep.mubr.f32.mxu0 0.0
    %v3654 = vand.u32 %v3415, 4294901760
    %3655 = vmatmul.mubr.f32.gmra.mrb[0].mxu0 %v3654
    %v3656 = vpop.f32.mrb[0].mxu0
    %v3657 = vadd.f32 %v3505, %v3656
    %v3658 = vpop.f32.mrb[0].mxu0
    %v3659 = vadd.f32 %v3507, %v3658
    %3660 = vdwg.mxu0
    %v3661 = vand.u32 %v39, 4294901760
    %v3662 = vsub.f32 %v39, %v3661
    %3663 = vmatprep.subr.mxu0 %v3662
    %v3664 = vand.u32 %v38, 4294901760
    %v3665 = vsub.f32 %v38, %v3664
    %3666 = vmatpush1.msra.mxu0 %v3665
    %v3667 = vand.u32 %v41, 4294901760
    %v3668 = vsub.f32 %v41, %v3667
    %3669 = vmatprep.subr.mxu0 %v3668
    %v3670 = vand.u32 %v40, 4294901760
    %v3671 = vsub.f32 %v40, %v3670
    %3672 = vmatpush1.msra.mxu0 %v3671
    %v3673 = vand.u32 %v43, 4294901760
    %v3674 = vsub.f32 %v43, %v3673
    %3675 = vmatprep.subr.mxu0 %v3674
    %v3676 = vand.u32 %v42, 4294901760
    %v3677 = vsub.f32 %v42, %v3676
    %3678 = vmatpush1.msra.mxu0 %v3677
    %v3679 = vand.u32 %v45, 4294901760
    %v3680 = vsub.f32 %v45, %v3679
    %3681 = vmatprep.subr.mxu0 %v3680
    %v3682 = vand.u32 %v44, 4294901760
    %v3683 = vsub.f32 %v44, %v3682
    %3684 = vmatpush1.msra.mxu0 %v3683
    %v3685 = vand.u32 %v47, 4294901760
    %v3686 = vsub.f32 %v47, %v3685
    %3687 = vmatprep.subr.mxu0 %v3686
    %v3688 = vand.u32 %v46, 4294901760
    %v3689 = vsub.f32 %v46, %v3688
    %3690 = vmatpush1.msra.mxu0 %v3689
    %v3691 = vand.u32 %v49, 4294901760
    %v3692 = vsub.f32 %v49, %v3691
    %3693 = vmatprep.subr.mxu0 %v3692
    %v3694 = vand.u32 %v48, 4294901760
    %v3695 = vsub.f32 %v48, %v3694
    %3696 = vmatpush1.msra.mxu0 %v3695
    %v3697 = vand.u32 %v51, 4294901760
    %v3698 = vsub.f32 %v51, %v3697
    %3699 = vmatprep.subr.mxu0 %v3698
    %v3700 = vand.u32 %v50, 4294901760
    %v3701 = vsub.f32 %v50, %v3700
    %3702 = vmatpush1.msra.mxu0 %v3701
    %v3703 = vand.u32 %v53, 4294901760
    %v3704 = vsub.f32 %v53, %v3703
    %3705 = vmatprep.subr.mxu0 %v3704
    %v3706 = vand.u32 %v52, 4294901760
    %v3707 = vsub.f32 %v52, %v3706
    %3708 = vmatpush1.msra.mxu0 %v3707
    %3709 = vmatprep.subr.mxu0 0.0
    %3710 = vmatpush1.msra.mxu0 0.0
    %3711 = vmatprep.subr.mxu0 0.0
    %3712 = vmatpush1.msra.mxu0 0.0
    %3713 = vmatprep.subr.mxu0 0.0
    %3714 = vmatpush1.msra.mxu0 0.0
    %3715 = vmatprep.subr.mxu0 0.0
    %3716 = vmatpush1.msra.mxu0 0.0
    %3717 = vmatprep.subr.mxu0 0.0
    %3718 = vmatpush1.msra.mxu0 0.0
    %3719 = vmatprep.subr.mxu0 0.0
    %3720 = vmatpush1.msra.mxu0 0.0
    %3721 = vmatprep.subr.mxu0 0.0
    %3722 = vmatpush1.msra.mxu0 0.0
    %3723 = vmatprep.subr.mxu0 0.0
    %3724 = vmatpush1.msra.mxu0 0.0
    %3725 = vmatprep.subr.mxu0 0.0
    %3726 = vmatpush1.msra.mxu0 0.0
    %3727 = vmatprep.subr.mxu0 0.0
    %3728 = vmatpush1.msra.mxu0 0.0
    %3729 = vmatprep.subr.mxu0 0.0
    %3730 = vmatpush1.msra.mxu0 0.0
    %3731 = vmatprep.subr.mxu0 0.0
    %3732 = vmatpush1.msra.mxu0 0.0
    %3733 = vmatprep.subr.mxu0 0.0
    %3734 = vmatpush1.msra.mxu0 0.0
    %3735 = vmatprep.subr.mxu0 0.0
    %3736 = vmatpush1.msra.mxu0 0.0
    %3737 = vmatprep.subr.mxu0 0.0
    %3738 = vmatpush1.msra.mxu0 0.0
    %3739 = vmatprep.subr.mxu0 0.0
    %3740 = vmatpush1.msra.mxu0 0.0
    %3741 = vmatprep.subr.mxu0 0.0
    %3742 = vmatpush1.msra.mxu0 0.0
    %3743 = vmatprep.subr.mxu0 0.0
    %3744 = vmatpush1.msra.mxu0 0.0
    %3745 = vmatprep.subr.mxu0 0.0
    %3746 = vmatpush1.msra.mxu0 0.0
    %3747 = vmatprep.subr.mxu0 0.0
    %3748 = vmatpush1.msra.mxu0 0.0
    %3749 = vmatprep.subr.mxu0 0.0
    %3750 = vmatpush1.msra.mxu0 0.0
    %3751 = vmatprep.subr.mxu0 0.0
    %3752 = vmatpush1.msra.mxu0 0.0
    %3753 = vmatprep.subr.mxu0 0.0
    %3754 = vmatpush1.msra.mxu0 0.0
    %3755 = vmatprep.subr.mxu0 0.0
    %3756 = vmatpush1.msra.mxu0 0.0
    %3757 = vmatprep.mubr.f32.mxu0 0.0
    %v3758 = vand.u32 %v3415, 4294901760
    %v3759 = vsub.f32 %v3415, %v3758
    %3760 = vmatmul.mubr.f32.gmra.mrb[0].mxu0 %v3759
    %v3761 = vpop.f32.mrb[0].mxu0
    %v3762 = vadd.f32 %v3657, %v3761
    %v3763 = vpop.f32.mrb[0].mxu0
    %v3764 = vadd.f32 %v3659, %v3763
    %3765 = vdwg.mxu0
    %v3766 = vand.u32 %v39, 4294901760
    %3767 = vmatprep.subr.mxu0 %v3766
    %v3768 = vand.u32 %v38, 4294901760
    %3769 = vmatpush1.msra.mxu0 %v3768
    %v3770 = vand.u32 %v41, 4294901760
    %3771 = vmatprep.subr.mxu0 %v3770
    %v3772 = vand.u32 %v40, 4294901760
    %3773 = vmatpush1.msra.mxu0 %v3772
    %v3774 = vand.u32 %v43, 4294901760
    %3775 = vmatprep.subr.mxu0 %v3774
    %v3776 = vand.u32 %v42, 4294901760
    %3777 = vmatpush1.msra.mxu0 %v3776
    %v3778 = vand.u32 %v45, 4294901760
    %3779 = vmatprep.subr.mxu0 %v3778
    %v3780 = vand.u32 %v44, 4294901760
    %3781 = vmatpush1.msra.mxu0 %v3780
    %v3782 = vand.u32 %v47, 4294901760
    %3783 = vmatprep.subr.mxu0 %v3782
    %v3784 = vand.u32 %v46, 4294901760
    %3785 = vmatpush1.msra.mxu0 %v3784
    %v3786 = vand.u32 %v49, 4294901760
    %3787 = vmatprep.subr.mxu0 %v3786
    %v3788 = vand.u32 %v48, 4294901760
    %3789 = vmatpush1.msra.mxu0 %v3788
    %v3790 = vand.u32 %v51, 4294901760
    %3791 = vmatprep.subr.mxu0 %v3790
    %v3792 = vand.u32 %v50, 4294901760
    %3793 = vmatpush1.msra.mxu0 %v3792
    %v3794 = vand.u32 %v53, 4294901760
    %3795 = vmatprep.subr.mxu0 %v3794
    %v3796 = vand.u32 %v52, 4294901760
    %3797 = vmatpush1.msra.mxu0 %v3796
    %3798 = vmatprep.subr.mxu0 0.0
    %3799 = vmatpush1.msra.mxu0 0.0
    %3800 = vmatprep.subr.mxu0 0.0
    %3801 = vmatpush1.msra.mxu0 0.0
    %3802 = vmatprep.subr.mxu0 0.0
    %3803 = vmatpush1.msra.mxu0 0.0
    %3804 = vmatprep.subr.mxu0 0.0
    %3805 = vmatpush1.msra.mxu0 0.0
    %3806 = vmatprep.subr.mxu0 0.0
    %3807 = vmatpush1.msra.mxu0 0.0
    %3808 = vmatprep.subr.mxu0 0.0
    %3809 = vmatpush1.msra.mxu0 0.0
    %3810 = vmatprep.subr.mxu0 0.0
    %3811 = vmatpush1.msra.mxu0 0.0
    %3812 = vmatprep.subr.mxu0 0.0
    %3813 = vmatpush1.msra.mxu0 0.0
    %3814 = vmatprep.subr.mxu0 0.0
    %3815 = vmatpush1.msra.mxu0 0.0
    %3816 = vmatprep.subr.mxu0 0.0
    %3817 = vmatpush1.msra.mxu0 0.0
    %3818 = vmatprep.subr.mxu0 0.0
    %3819 = vmatpush1.msra.mxu0 0.0
    %3820 = vmatprep.subr.mxu0 0.0
    %3821 = vmatpush1.msra.mxu0 0.0
    %3822 = vmatprep.subr.mxu0 0.0
    %3823 = vmatpush1.msra.mxu0 0.0
    %3824 = vmatprep.subr.mxu0 0.0
    %3825 = vmatpush1.msra.mxu0 0.0
    %3826 = vmatprep.subr.mxu0 0.0
    %3827 = vmatpush1.msra.mxu0 0.0
    %3828 = vmatprep.subr.mxu0 0.0
    %3829 = vmatpush1.msra.mxu0 0.0
    %3830 = vmatprep.subr.mxu0 0.0
    %3831 = vmatpush1.msra.mxu0 0.0
    %3832 = vmatprep.subr.mxu0 0.0
    %3833 = vmatpush1.msra.mxu0 0.0
    %3834 = vmatprep.subr.mxu0 0.0
    %3835 = vmatpush1.msra.mxu0 0.0
    %3836 = vmatprep.subr.mxu0 0.0
    %3837 = vmatpush1.msra.mxu0 0.0
    %3838 = vmatprep.subr.mxu0 0.0
    %3839 = vmatpush1.msra.mxu0 0.0
    %3840 = vmatprep.subr.mxu0 0.0
    %3841 = vmatpush1.msra.mxu0 0.0
    %3842 = vmatprep.subr.mxu0 0.0
    %3843 = vmatpush1.msra.mxu0 0.0
    %3844 = vmatprep.subr.mxu0 0.0
    %3845 = vmatpush1.msra.mxu0 0.0
    %3846 = vmatprep.mubr.f32.mxu0 0.0
    %v3847 = vand.u32 %v3415, 4294901760
    %v3848 = vsub.f32 %v3415, %v3847
    %v3849 = vand.u32 %v3848, 4294901760
    %3850 = vmatmul.mubr.f32.gmra.mrb[0].mxu0 %v3849
    %v3851 = vpop.f32.mrb[0].mxu0
    %v3852 = vadd.f32 %v3762, %v3851
    %v3853 = vpop.f32.mrb[0].mxu0
    %v3854 = vadd.f32 %v3764, %v3853
    %3855 = vdwg.mxu0
    %v3856 = vand.u32 %v39, 4294901760
    %v3857 = vsub.f32 %v39, %v3856
    %v3858 = vand.u32 %v3857, 4294901760
    %3859 = vmatprep.subr.mxu0 %v3858
    %v3860 = vand.u32 %v38, 4294901760
    %v3861 = vsub.f32 %v38, %v3860
    %v3862 = vand.u32 %v3861, 4294901760
    %3863 = vmatpush1.msra.mxu0 %v3862
    %v3864 = vand.u32 %v41, 4294901760
    %v3865 = vsub.f32 %v41, %v3864
    %v3866 = vand.u32 %v3865, 4294901760
    %3867 = vmatprep.subr.mxu0 %v3866
    %v3868 = vand.u32 %v40, 4294901760
    %v3869 = vsub.f32 %v40, %v3868
    %v3870 = vand.u32 %v3869, 4294901760
    %3871 = vmatpush1.msra.mxu0 %v3870
    %v3872 = vand.u32 %v43, 4294901760
    %v3873 = vsub.f32 %v43, %v3872
    %v3874 = vand.u32 %v3873, 4294901760
    %3875 = vmatprep.subr.mxu0 %v3874
    %v3876 = vand.u32 %v42, 4294901760
    %v3877 = vsub.f32 %v42, %v3876
    %v3878 = vand.u32 %v3877, 4294901760
    %3879 = vmatpush1.msra.mxu0 %v3878
    %v3880 = vand.u32 %v45, 4294901760
    %v3881 = vsub.f32 %v45, %v3880
    %v3882 = vand.u32 %v3881, 4294901760
    %3883 = vmatprep.subr.mxu0 %v3882
    %v3884 = vand.u32 %v44, 4294901760
    %v3885 = vsub.f32 %v44, %v3884
    %v3886 = vand.u32 %v3885, 4294901760
    %3887 = vmatpush1.msra.mxu0 %v3886
    %v3888 = vand.u32 %v47, 4294901760
    %v3889 = vsub.f32 %v47, %v3888
    %v3890 = vand.u32 %v3889, 4294901760
    %3891 = vmatprep.subr.mxu0 %v3890
    %v3892 = vand.u32 %v46, 4294901760
    %v3893 = vsub.f32 %v46, %v3892
    %v3894 = vand.u32 %v3893, 4294901760
    %3895 = vmatpush1.msra.mxu0 %v3894
    %v3896 = vand.u32 %v49, 4294901760
    %v3897 = vsub.f32 %v49, %v3896
    %v3898 = vand.u32 %v3897, 4294901760
    %3899 = vmatprep.subr.mxu0 %v3898
    %v3900 = vand.u32 %v48, 4294901760
    %v3901 = vsub.f32 %v48, %v3900
    %v3902 = vand.u32 %v3901, 4294901760
    %3903 = vmatpush1.msra.mxu0 %v3902
    %v3904 = vand.u32 %v51, 4294901760
    %v3905 = vsub.f32 %v51, %v3904
    %v3906 = vand.u32 %v3905, 4294901760
    %3907 = vmatprep.subr.mxu0 %v3906
    %v3908 = vand.u32 %v50, 4294901760
    %v3909 = vsub.f32 %v50, %v3908
    %v3910 = vand.u32 %v3909, 4294901760
    %3911 = vmatpush1.msra.mxu0 %v3910
    %v3912 = vand.u32 %v53, 4294901760
    %v3913 = vsub.f32 %v53, %v3912
    %v3914 = vand.u32 %v3913, 4294901760
    %3915 = vmatprep.subr.mxu0 %v3914
    %v3916 = vand.u32 %v52, 4294901760
    %v3917 = vsub.f32 %v52, %v3916
    %v3918 = vand.u32 %v3917, 4294901760
    %3919 = vmatpush1.msra.mxu0 %v3918
    %3920 = vmatprep.subr.mxu0 0.0
    %3921 = vmatpush1.msra.mxu0 0.0
    %3922 = vmatprep.subr.mxu0 0.0
    %3923 = vmatpush1.msra.mxu0 0.0
    %3924 = vmatprep.subr.mxu0 0.0
    %3925 = vmatpush1.msra.mxu0 0.0
    %3926 = vmatprep.subr.mxu0 0.0
    %3927 = vmatpush1.msra.mxu0 0.0
    %3928 = vmatprep.subr.mxu0 0.0
    %3929 = vmatpush1.msra.mxu0 0.0
    %3930 = vmatprep.subr.mxu0 0.0
    %3931 = vmatpush1.msra.mxu0 0.0
    %3932 = vmatprep.subr.mxu0 0.0
    %3933 = vmatpush1.msra.mxu0 0.0
    %3934 = vmatprep.subr.mxu0 0.0
    %3935 = vmatpush1.msra.mxu0 0.0
    %3936 = vmatprep.subr.mxu0 0.0
    %3937 = vmatpush1.msra.mxu0 0.0
    %3938 = vmatprep.subr.mxu0 0.0
    %3939 = vmatpush1.msra.mxu0 0.0
    %3940 = vmatprep.subr.mxu0 0.0
    %3941 = vmatpush1.msra.mxu0 0.0
    %3942 = vmatprep.subr.mxu0 0.0
    %3943 = vmatpush1.msra.mxu0 0.0
    %3944 = vmatprep.subr.mxu0 0.0
    %3945 = vmatpush1.msra.mxu0 0.0
    %3946 = vmatprep.subr.mxu0 0.0
    %3947 = vmatpush1.msra.mxu0 0.0
    %3948 = vmatprep.subr.mxu0 0.0
    %3949 = vmatpush1.msra.mxu0 0.0
    %3950 = vmatprep.subr.mxu0 0.0
    %3951 = vmatpush1.msra.mxu0 0.0
    %3952 = vmatprep.subr.mxu0 0.0
    %3953 = vmatpush1.msra.mxu0 0.0
    %3954 = vmatprep.subr.mxu0 0.0
    %3955 = vmatpush1.msra.mxu0 0.0
    %3956 = vmatprep.subr.mxu0 0.0
    %3957 = vmatpush1.msra.mxu0 0.0
    %3958 = vmatprep.subr.mxu0 0.0
    %3959 = vmatpush1.msra.mxu0 0.0
    %3960 = vmatprep.subr.mxu0 0.0
    %3961 = vmatpush1.msra.mxu0 0.0
    %3962 = vmatprep.subr.mxu0 0.0
    %3963 = vmatpush1.msra.mxu0 0.0
    %3964 = vmatprep.subr.mxu0 0.0
    %3965 = vmatpush1.msra.mxu0 0.0
    %3966 = vmatprep.subr.mxu0 0.0
    %3967 = vmatpush1.msra.mxu0 0.0
    %3968 = vmatprep.mubr.f32.mxu0 0.0
    %v3969 = vand.u32 %v3415, 4294901760
    %3970 = vmatmul.mubr.f32.gmra.mrb[0].mxu0 %v3969
    %v3971 = vpop.f32.mrb[0].mxu0
    %v3972 = vadd.f32 %v3852, %v3971
    %v3973 = vpop.f32.mrb[0].mxu0
    %v3974 = vadd.f32 %v3854, %v3973
    %3975 = vdwg.mxu0
    %v3976 = vand.u32 %v39, 4294901760
    %3977 = vmatprep.subr.mxu0 %v3976
    %v3978 = vand.u32 %v38, 4294901760
    %3979 = vmatpush1.msra.mxu0 %v3978
    %v3980 = vand.u32 %v41, 4294901760
    %3981 = vmatprep.subr.mxu0 %v3980
    %v3982 = vand.u32 %v40, 4294901760
    %3983 = vmatpush1.msra.mxu0 %v3982
    %v3984 = vand.u32 %v43, 4294901760
    %3985 = vmatprep.subr.mxu0 %v3984
    %v3986 = vand.u32 %v42, 4294901760
    %3987 = vmatpush1.msra.mxu0 %v3986
    %v3988 = vand.u32 %v45, 4294901760
    %3989 = vmatprep.subr.mxu0 %v3988
    %v3990 = vand.u32 %v44, 4294901760
    %3991 = vmatpush1.msra.mxu0 %v3990
    %v3992 = vand.u32 %v47, 4294901760
    %3993 = vmatprep.subr.mxu0 %v3992
    %v3994 = vand.u32 %v46, 4294901760
    %3995 = vmatpush1.msra.mxu0 %v3994
    %v3996 = vand.u32 %v49, 4294901760
    %3997 = vmatprep.subr.mxu0 %v3996
    %v3998 = vand.u32 %v48, 4294901760
    %3999 = vmatpush1.msra.mxu0 %v3998
    %v4000 = vand.u32 %v51, 4294901760
    %4001 = vmatprep.subr.mxu0 %v4000
    %v4002 = vand.u32 %v50, 4294901760
    %4003 = vmatpush1.msra.mxu0 %v4002
    %v4004 = vand.u32 %v53, 4294901760
    %4005 = vmatprep.subr.mxu0 %v4004
    %v4006 = vand.u32 %v52, 4294901760
    %4007 = vmatpush1.msra.mxu0 %v4006
    %4008 = vmatprep.subr.mxu0 0.0
    %4009 = vmatpush1.msra.mxu0 0.0
    %4010 = vmatprep.subr.mxu0 0.0
    %4011 = vmatpush1.msra.mxu0 0.0
    %4012 = vmatprep.subr.mxu0 0.0
    %4013 = vmatpush1.msra.mxu0 0.0
    %4014 = vmatprep.subr.mxu0 0.0
    %4015 = vmatpush1.msra.mxu0 0.0
    %4016 = vmatprep.subr.mxu0 0.0
    %4017 = vmatpush1.msra.mxu0 0.0
    %4018 = vmatprep.subr.mxu0 0.0
    %4019 = vmatpush1.msra.mxu0 0.0
    %4020 = vmatprep.subr.mxu0 0.0
    %4021 = vmatpush1.msra.mxu0 0.0
    %4022 = vmatprep.subr.mxu0 0.0
    %4023 = vmatpush1.msra.mxu0 0.0
    %4024 = vmatprep.subr.mxu0 0.0
    %4025 = vmatpush1.msra.mxu0 0.0
    %4026 = vmatprep.subr.mxu0 0.0
    %4027 = vmatpush1.msra.mxu0 0.0
    %4028 = vmatprep.subr.mxu0 0.0
    %4029 = vmatpush1.msra.mxu0 0.0
    %4030 = vmatprep.subr.mxu0 0.0
    %4031 = vmatpush1.msra.mxu0 0.0
    %4032 = vmatprep.subr.mxu0 0.0
    %4033 = vmatpush1.msra.mxu0 0.0
    %4034 = vmatprep.subr.mxu0 0.0
    %4035 = vmatpush1.msra.mxu0 0.0
    %4036 = vmatprep.subr.mxu0 0.0
    %4037 = vmatpush1.msra.mxu0 0.0
    %4038 = vmatprep.subr.mxu0 0.0
    %4039 = vmatpush1.msra.mxu0 0.0
    %4040 = vmatprep.subr.mxu0 0.0
    %4041 = vmatpush1.msra.mxu0 0.0
    %4042 = vmatprep.subr.mxu0 0.0
    %4043 = vmatpush1.msra.mxu0 0.0
    %4044 = vmatprep.subr.mxu0 0.0
    %4045 = vmatpush1.msra.mxu0 0.0
    %4046 = vmatprep.subr.mxu0 0.0
    %4047 = vmatpush1.msra.mxu0 0.0
    %4048 = vmatprep.subr.mxu0 0.0
    %4049 = vmatpush1.msra.mxu0 0.0
    %4050 = vmatprep.subr.mxu0 0.0
    %4051 = vmatpush1.msra.mxu0 0.0
    %4052 = vmatprep.subr.mxu0 0.0
    %4053 = vmatpush1.msra.mxu0 0.0
    %4054 = vmatprep.subr.mxu0 0.0
    %4055 = vmatpush1.msra.mxu0 0.0
    %4056 = vmatprep.mubr.f32.mxu0 0.0
    %v4057 = vand.u32 %v3415, 4294901760
    %4058 = vmatmul.mubr.f32.gmra.mrb[0].mxu0 %v4057
    %v4059 = vpop.f32.mrb[0].mxu0
    %v4060 = vadd.f32 %v3972, %v4059
    %v4061 = vpop.f32.mrb[0].mxu0
    %v4062 = vadd.f32 %v3974, %v4061
    %4063 = vdwg.mxu0
    %v4064 = vxor.u32 %v4060, 2147483648
    %v4065 = vmul.f32 %v4064, 1.442695
    %v4066 = vpow.pop %v4065
    %v4067 = vadd.f32 %v4066, 1.0
    %v4068 = vrcp.pop %v4067
    %v4069 = vmul.f32 1.0, %v4068
    %v4070 = vtanh.pop %v4062
    %v4071 = vxor.u32 %v4062, 2147483648
    %v4072 = vmul.f32 %v4071, 1.442695
    %v4073 = vpow.pop %v4072
    %v4074 = vadd.f32 %v4073, 1.0
    %v4075 = vrcp.pop %v4074
    %v4076 = vmul.f32 1.0, %v4075
    %v4077 = vsel %vm663, %v4070, %v4076
    %v4078 = vmul.f32 %v4069, %v3403
    %v4079 = vmul.f32 %v4069, %v4077
    %4081 = vrot.lane.b32.xlu0 %v4079, 64
    %v4082 = vpop.permute.xlu0 %4081
    %v4084 = vadd.f32 %v4078, %v4082
    %v4085 = vtanh.pop %v4084
    %v4086 = vmul.f32 %v4077, %v4085
    %4088 = vrot.lane.b32.xlu0 %v4086, 64
    %v4089 = vpop.permute.xlu0 %4088
    %v4090 = vrot.slane %v650, 4
    %v4091 = vrot.slane %v652, 4
    %v4094 = vsel %vm696, %v4089, 0
    %v4096 = vand.u32 %v39, 4294901760
    %4097 = vmatprep.subr.mxu0 %v4096
    %v4098 = vand.u32 %v38, 4294901760
    %4099 = vmatpush1.msra.mxu0 %v4098
    %v4100 = vand.u32 %v41, 4294901760
    %4101 = vmatprep.subr.mxu0 %v4100
    %v4102 = vand.u32 %v40, 4294901760
    %4103 = vmatpush1.msra.mxu0 %v4102
    %v4104 = vand.u32 %v43, 4294901760
    %4105 = vmatprep.subr.mxu0 %v4104
    %v4106 = vand.u32 %v42, 4294901760
    %4107 = vmatpush1.msra.mxu0 %v4106
    %v4108 = vand.u32 %v45, 4294901760
    %4109 = vmatprep.subr.mxu0 %v4108
    %v4110 = vand.u32 %v44, 4294901760
    %4111 = vmatpush1.msra.mxu0 %v4110
    %v4112 = vand.u32 %v47, 4294901760
    %4113 = vmatprep.subr.mxu0 %v4112
    %v4114 = vand.u32 %v46, 4294901760
    %4115 = vmatpush1.msra.mxu0 %v4114
    %v4116 = vand.u32 %v49, 4294901760
    %4117 = vmatprep.subr.mxu0 %v4116
    %v4118 = vand.u32 %v48, 4294901760
    %4119 = vmatpush1.msra.mxu0 %v4118
    %v4120 = vand.u32 %v51, 4294901760
    %4121 = vmatprep.subr.mxu0 %v4120
    %v4122 = vand.u32 %v50, 4294901760
    %4123 = vmatpush1.msra.mxu0 %v4122
    %v4124 = vand.u32 %v53, 4294901760
    %4125 = vmatprep.subr.mxu0 %v4124
    %v4126 = vand.u32 %v52, 4294901760
    %4127 = vmatpush1.msra.mxu0 %v4126
    %4128 = vmatprep.subr.mxu0 0.0
    %4129 = vmatpush1.msra.mxu0 0.0
    %4130 = vmatprep.subr.mxu0 0.0
    %4131 = vmatpush1.msra.mxu0 0.0
    %4132 = vmatprep.subr.mxu0 0.0
    %4133 = vmatpush1.msra.mxu0 0.0
    %4134 = vmatprep.subr.mxu0 0.0
    %4135 = vmatpush1.msra.mxu0 0.0
    %4136 = vmatprep.subr.mxu0 0.0
    %4137 = vmatpush1.msra.mxu0 0.0
    %4138 = vmatprep.subr.mxu0 0.0
    %4139 = vmatpush1.msra.mxu0 0.0
    %4140 = vmatprep.subr.mxu0 0.0
    %4141 = vmatpush1.msra.mxu0 0.0
    %4142 = vmatprep.subr.mxu0 0.0
    %4143 = vmatpush1.msra.mxu0 0.0
    %4144 = vmatprep.subr.mxu0 0.0
    %4145 = vmatpush1.msra.mxu0 0.0
    %4146 = vmatprep.subr.mxu0 0.0
    %4147 = vmatpush1.msra.mxu0 0.0
    %4148 = vmatprep.subr.mxu0 0.0
    %4149 = vmatpush1.msra.mxu0 0.0
    %4150 = vmatprep.subr.mxu0 0.0
    %4151 = vmatpush1.msra.mxu0 0.0
    %4152 = vmatprep.subr.mxu0 0.0
    %4153 = vmatpush1.msra.mxu0 0.0
    %4154 = vmatprep.subr.mxu0 0.0
    %4155 = vmatpush1.msra.mxu0 0.0
    %4156 = vmatprep.subr.mxu0 0.0
    %4157 = vmatpush1.msra.mxu0 0.0
    %4158 = vmatprep.subr.mxu0 0.0
    %4159 = vmatpush1.msra.mxu0 0.0
    %4160 = vmatprep.subr.mxu0 0.0
    %4161 = vmatpush1.msra.mxu0 0.0
    %4162 = vmatprep.subr.mxu0 0.0
    %4163 = vmatpush1.msra.mxu0 0.0
    %4164 = vmatprep.subr.mxu0 0.0
    %4165 = vmatpush1.msra.mxu0 0.0
    %4166 = vmatprep.subr.mxu0 0.0
    %4167 = vmatpush1.msra.mxu0 0.0
    %4168 = vmatprep.subr.mxu0 0.0
    %4169 = vmatpush1.msra.mxu0 0.0
    %4170 = vmatprep.subr.mxu0 0.0
    %4171 = vmatpush1.msra.mxu0 0.0
    %4172 = vmatprep.subr.mxu0 0.0
    %4173 = vmatpush1.msra.mxu0 0.0
    %4174 = vmatprep.subr.mxu0 0.0
    %4175 = vmatpush1.msra.mxu0 0.0
    %4176 = vmatprep.mubr.f32.mxu0 0.0
    %v4177 = vand.u32 %v4094, 4294901760
    %v4178 = vsub.f32 %v4094, %v4177
    %v4179 = vand.u32 %v4178, 4294901760
    %v4180 = vsub.f32 %v4178, %v4179
    %v4181 = vand.u32 %v4180, 4294901760
    %4182 = vmatmul.mubr.f32.gmra.mrb[0].mxu0 %v4181
    %v4183 = vpop.f32.mrb[0].mxu0
    %v4184 = vadd.f32 %v4090, %v4183
    %v4185 = vpop.f32.mrb[0].mxu0
    %v4186 = vadd.f32 %v4091, %v4185
    %4187 = vdwg.mxu0
    %v4188 = vand.u32 %v39, 4294901760
    %v4189 = vsub.f32 %v39, %v4188
    %v4190 = vand.u32 %v4189, 4294901760
    %v4191 = vsub.f32 %v4189, %v4190
    %v4192 = vand.u32 %v4191, 4294901760
    %4193 = vmatprep.subr.mxu0 %v4192
    %v4194 = vand.u32 %v38, 4294901760
    %v4195 = vsub.f32 %v38, %v4194
    %v4196 = vand.u32 %v4195, 4294901760
    %v4197 = vsub.f32 %v4195, %v4196
    %v4198 = vand.u32 %v4197, 4294901760
    %4199 = vmatpush1.msra.mxu0 %v4198
    %v4200 = vand.u32 %v41, 4294901760
    %v4201 = vsub.f32 %v41, %v4200
    %v4202 = vand.u32 %v4201, 4294901760
    %v4203 = vsub.f32 %v4201, %v4202
    %v4204 = vand.u32 %v4203, 4294901760
    %4205 = vmatprep.subr.mxu0 %v4204
    %v4206 = vand.u32 %v40, 4294901760
    %v4207 = vsub.f32 %v40, %v4206
    %v4208 = vand.u32 %v4207, 4294901760
    %v4209 = vsub.f32 %v4207, %v4208
    %v4210 = vand.u32 %v4209, 4294901760
    %4211 = vmatpush1.msra.mxu0 %v4210
    %v4212 = vand.u32 %v43, 4294901760
    %v4213 = vsub.f32 %v43, %v4212
    %v4214 = vand.u32 %v4213, 4294901760
    %v4215 = vsub.f32 %v4213, %v4214
    %v4216 = vand.u32 %v4215, 4294901760
    %4217 = vmatprep.subr.mxu0 %v4216
    %v4218 = vand.u32 %v42, 4294901760
    %v4219 = vsub.f32 %v42, %v4218
    %v4220 = vand.u32 %v4219, 4294901760
    %v4221 = vsub.f32 %v4219, %v4220
    %v4222 = vand.u32 %v4221, 4294901760
    %4223 = vmatpush1.msra.mxu0 %v4222
    %v4224 = vand.u32 %v45, 4294901760
    %v4225 = vsub.f32 %v45, %v4224
    %v4226 = vand.u32 %v4225, 4294901760
    %v4227 = vsub.f32 %v4225, %v4226
    %v4228 = vand.u32 %v4227, 4294901760
    %4229 = vmatprep.subr.mxu0 %v4228
    %v4230 = vand.u32 %v44, 4294901760
    %v4231 = vsub.f32 %v44, %v4230
    %v4232 = vand.u32 %v4231, 4294901760
    %v4233 = vsub.f32 %v4231, %v4232
    %v4234 = vand.u32 %v4233, 4294901760
    %4235 = vmatpush1.msra.mxu0 %v4234
    %v4236 = vand.u32 %v47, 4294901760
    %v4237 = vsub.f32 %v47, %v4236
    %v4238 = vand.u32 %v4237, 4294901760
    %v4239 = vsub.f32 %v4237, %v4238
    %v4240 = vand.u32 %v4239, 4294901760
    %4241 = vmatprep.subr.mxu0 %v4240
    %v4242 = vand.u32 %v46, 4294901760
    %v4243 = vsub.f32 %v46, %v4242
    %v4244 = vand.u32 %v4243, 4294901760
    %v4245 = vsub.f32 %v4243, %v4244
    %v4246 = vand.u32 %v4245, 4294901760
    %4247 = vmatpush1.msra.mxu0 %v4246
    %v4248 = vand.u32 %v49, 4294901760
    %v4249 = vsub.f32 %v49, %v4248
    %v4250 = vand.u32 %v4249, 4294901760
    %v4251 = vsub.f32 %v4249, %v4250
    %v4252 = vand.u32 %v4251, 4294901760
    %4253 = vmatprep.subr.mxu0 %v4252
    %v4254 = vand.u32 %v48, 4294901760
    %v4255 = vsub.f32 %v48, %v4254
    %v4256 = vand.u32 %v4255, 4294901760
    %v4257 = vsub.f32 %v4255, %v4256
    %v4258 = vand.u32 %v4257, 4294901760
    %4259 = vmatpush1.msra.mxu0 %v4258
    %v4260 = vand.u32 %v51, 4294901760
    %v4261 = vsub.f32 %v51, %v4260
    %v4262 = vand.u32 %v4261, 4294901760
    %v4263 = vsub.f32 %v4261, %v4262
    %v4264 = vand.u32 %v4263, 4294901760
    %4265 = vmatprep.subr.mxu0 %v4264
    %v4266 = vand.u32 %v50, 4294901760
    %v4267 = vsub.f32 %v50, %v4266
    %v4268 = vand.u32 %v4267, 4294901760
    %v4269 = vsub.f32 %v4267, %v4268
    %v4270 = vand.u32 %v4269, 4294901760
    %4271 = vmatpush1.msra.mxu0 %v4270
    %v4272 = vand.u32 %v53, 4294901760
    %v4273 = vsub.f32 %v53, %v4272
    %v4274 = vand.u32 %v4273, 4294901760
    %v4275 = vsub.f32 %v4273, %v4274
    %v4276 = vand.u32 %v4275, 4294901760
    %4277 = vmatprep.subr.mxu0 %v4276
    %v4278 = vand.u32 %v52, 4294901760
    %v4279 = vsub.f32 %v52, %v4278
    %v4280 = vand.u32 %v4279, 4294901760
    %v4281 = vsub.f32 %v4279, %v4280
    %v4282 = vand.u32 %v4281, 4294901760
    %4283 = vmatpush1.msra.mxu0 %v4282
    %4284 = vmatprep.subr.mxu0 0.0
    %4285 = vmatpush1.msra.mxu0 0.0
    %4286 = vmatprep.subr.mxu0 0.0
    %4287 = vmatpush1.msra.mxu0 0.0
    %4288 = vmatprep.subr.mxu0 0.0
    %4289 = vmatpush1.msra.mxu0 0.0
    %4290 = vmatprep.subr.mxu0 0.0
    %4291 = vmatpush1.msra.mxu0 0.0
    %4292 = vmatprep.subr.mxu0 0.0
    %4293 = vmatpush1.msra.mxu0 0.0
    %4294 = vmatprep.subr.mxu0 0.0
    %4295 = vmatpush1.msra.mxu0 0.0
    %4296 = vmatprep.subr.mxu0 0.0
    %4297 = vmatpush1.msra.mxu0 0.0
    %4298 = vmatprep.subr.mxu0 0.0
    %4299 = vmatpush1.msra.mxu0 0.0
    %4300 = vmatprep.subr.mxu0 0.0
    %4301 = vmatpush1.msra.mxu0 0.0
    %4302 = vmatprep.subr.mxu0 0.0
    %4303 = vmatpush1.msra.mxu0 0.0
    %4304 = vmatprep.subr.mxu0 0.0
    %4305 = vmatpush1.msra.mxu0 0.0
    %4306 = vmatprep.subr.mxu0 0.0
    %4307 = vmatpush1.msra.mxu0 0.0
    %4308 = vmatprep.subr.mxu0 0.0
    %4309 = vmatpush1.msra.mxu0 0.0
    %4310 = vmatprep.subr.mxu0 0.0
    %4311 = vmatpush1.msra.mxu0 0.0
    %4312 = vmatprep.subr.mxu0 0.0
    %4313 = vmatpush1.msra.mxu0 0.0
    %4314 = vmatprep.subr.mxu0 0.0
    %4315 = vmatpush1.msra.mxu0 0.0
    %4316 = vmatprep.subr.mxu0 0.0
    %4317 = vmatpush1.msra.mxu0 0.0
    %4318 = vmatprep.subr.mxu0 0.0
    %4319 = vmatpush1.msra.mxu0 0.0
    %4320 = vmatprep.subr.mxu0 0.0
    %4321 = vmatpush1.msra.mxu0 0.0
    %4322 = vmatprep.subr.mxu0 0.0
    %4323 = vmatpush1.msra.mxu0 0.0
    %4324 = vmatprep.subr.mxu0 0.0
    %4325 = vmatpush1.msra.mxu0 0.0
    %4326 = vmatprep.subr.mxu0 0.0
    %4327 = vmatpush1.msra.mxu0 0.0
    %4328 = vmatprep.subr.mxu0 0.0
    %4329 = vmatpush1.msra.mxu0 0.0
    %4330 = vmatprep.subr.mxu0 0.0
    %4331 = vmatpush1.msra.mxu0 0.0
    %4332 = vmatprep.mubr.f32.mxu0 0.0
    %v4333 = vand.u32 %v4094, 4294901760
    %4334 = vmatmul.mubr.f32.gmra.mrb[0].mxu0 %v4333
    %v4335 = vpop.f32.mrb[0].mxu0
    %v4336 = vadd.f32 %v4184, %v4335
    %v4337 = vpop.f32.mrb[0].mxu0
    %v4338 = vadd.f32 %v4186, %v4337
    %4339 = vdwg.mxu0
    %v4340 = vand.u32 %v39, 4294901760
    %v4341 = vsub.f32 %v39, %v4340
    %4342 = vmatprep.subr.mxu0 %v4341
    %v4343 = vand.u32 %v38, 4294901760
    %v4344 = vsub.f32 %v38, %v4343
    %4345 = vmatpush1.msra.mxu0 %v4344
    %v4346 = vand.u32 %v41, 4294901760
    %v4347 = vsub.f32 %v41, %v4346
    %4348 = vmatprep.subr.mxu0 %v4347
    %v4349 = vand.u32 %v40, 4294901760
    %v4350 = vsub.f32 %v40, %v4349
    %4351 = vmatpush1.msra.mxu0 %v4350
    %v4352 = vand.u32 %v43, 4294901760
    %v4353 = vsub.f32 %v43, %v4352
    %4354 = vmatprep.subr.mxu0 %v4353
    %v4355 = vand.u32 %v42, 4294901760
    %v4356 = vsub.f32 %v42, %v4355
    %4357 = vmatpush1.msra.mxu0 %v4356
    %v4358 = vand.u32 %v45, 4294901760
    %v4359 = vsub.f32 %v45, %v4358
    %4360 = vmatprep.subr.mxu0 %v4359
    %v4361 = vand.u32 %v44, 4294901760
    %v4362 = vsub.f32 %v44, %v4361
    %4363 = vmatpush1.msra.mxu0 %v4362
    %v4364 = vand.u32 %v47, 4294901760
    %v4365 = vsub.f32 %v47, %v4364
    %4366 = vmatprep.subr.mxu0 %v4365
    %v4367 = vand.u32 %v46, 4294901760
    %v4368 = vsub.f32 %v46, %v4367
    %4369 = vmatpush1.msra.mxu0 %v4368
    %v4370 = vand.u32 %v49, 4294901760
    %v4371 = vsub.f32 %v49, %v4370
    %4372 = vmatprep.subr.mxu0 %v4371
    %v4373 = vand.u32 %v48, 4294901760
    %v4374 = vsub.f32 %v48, %v4373
    %4375 = vmatpush1.msra.mxu0 %v4374
    %v4376 = vand.u32 %v51, 4294901760
    %v4377 = vsub.f32 %v51, %v4376
    %4378 = vmatprep.subr.mxu0 %v4377
    %v4379 = vand.u32 %v50, 4294901760
    %v4380 = vsub.f32 %v50, %v4379
    %4381 = vmatpush1.msra.mxu0 %v4380
    %v4382 = vand.u32 %v53, 4294901760
    %v4383 = vsub.f32 %v53, %v4382
    %4384 = vmatprep.subr.mxu0 %v4383
    %v4385 = vand.u32 %v52, 4294901760
    %v4386 = vsub.f32 %v52, %v4385
    %4387 = vmatpush1.msra.mxu0 %v4386
    %4388 = vmatprep.subr.mxu0 0.0
    %4389 = vmatpush1.msra.mxu0 0.0
    %4390 = vmatprep.subr.mxu0 0.0
    %4391 = vmatpush1.msra.mxu0 0.0
    %4392 = vmatprep.subr.mxu0 0.0
    %4393 = vmatpush1.msra.mxu0 0.0
    %4394 = vmatprep.subr.mxu0 0.0
    %4395 = vmatpush1.msra.mxu0 0.0
    %4396 = vmatprep.subr.mxu0 0.0
    %4397 = vmatpush1.msra.mxu0 0.0
    %4398 = vmatprep.subr.mxu0 0.0
    %4399 = vmatpush1.msra.mxu0 0.0
    %4400 = vmatprep.subr.mxu0 0.0
    %4401 = vmatpush1.msra.mxu0 0.0
    %4402 = vmatprep.subr.mxu0 0.0
    %4403 = vmatpush1.msra.mxu0 0.0
    %4404 = vmatprep.subr.mxu0 0.0
    %4405 = vmatpush1.msra.mxu0 0.0
    %4406 = vmatprep.subr.mxu0 0.0
    %4407 = vmatpush1.msra.mxu0 0.0
    %4408 = vmatprep.subr.mxu0 0.0
    %4409 = vmatpush1.msra.mxu0 0.0
    %4410 = vmatprep.subr.mxu0 0.0
    %4411 = vmatpush1.msra.mxu0 0.0
    %4412 = vmatprep.subr.mxu0 0.0
    %4413 = vmatpush1.msra.mxu0 0.0
    %4414 = vmatprep.subr.mxu0 0.0
    %4415 = vmatpush1.msra.mxu0 0.0
    %4416 = vmatprep.subr.mxu0 0.0
    %4417 = vmatpush1.msra.mxu0 0.0
    %4418 = vmatprep.subr.mxu0 0.0
    %4419 = vmatpush1.msra.mxu0 0.0
    %4420 = vmatprep.subr.mxu0 0.0
    %4421 = vmatpush1.msra.mxu0 0.0
    %4422 = vmatprep.subr.mxu0 0.0
    %4423 = vmatpush1.msra.mxu0 0.0
    %4424 = vmatprep.subr.mxu0 0.0
    %4425 = vmatpush1.msra.mxu0 0.0
    %4426 = vmatprep.subr.mxu0 0.0
    %4427 = vmatpush1.msra.mxu0 0.0
    %4428 = vmatprep.subr.mxu0 0.0
    %4429 = vmatpush1.msra.mxu0 0.0
    %4430 = vmatprep.subr.mxu0 0.0
    %4431 = vmatpush1.msra.mxu0 0.0
    %4432 = vmatprep.subr.mxu0 0.0
    %4433 = vmatpush1.msra.mxu0 0.0
    %4434 = vmatprep.subr.mxu0 0.0
    %4435 = vmatpush1.msra.mxu0 0.0
    %4436 = vmatprep.mubr.f32.mxu0 0.0
    %v4437 = vand.u32 %v4094, 4294901760
    %v4438 = vsub.f32 %v4094, %v4437
    %4439 = vmatmul.mubr.f32.gmra.mrb[0].mxu0 %v4438
    %v4440 = vpop.f32.mrb[0].mxu0
    %v4441 = vadd.f32 %v4336, %v4440
    %v4442 = vpop.f32.mrb[0].mxu0
    %v4443 = vadd.f32 %v4338, %v4442
    %4444 = vdwg.mxu0
    %v4445 = vand.u32 %v39, 4294901760
    %4446 = vmatprep.subr.mxu0 %v4445
    %v4447 = vand.u32 %v38, 4294901760
    %4448 = vmatpush1.msra.mxu0 %v4447
    %v4449 = vand.u32 %v41, 4294901760
    %4450 = vmatprep.subr.mxu0 %v4449
    %v4451 = vand.u32 %v40, 4294901760
    %4452 = vmatpush1.msra.mxu0 %v4451
    %v4453 = vand.u32 %v43, 4294901760
    %4454 = vmatprep.subr.mxu0 %v4453
    %v4455 = vand.u32 %v42, 4294901760
    %4456 = vmatpush1.msra.mxu0 %v4455
    %v4457 = vand.u32 %v45, 4294901760
    %4458 = vmatprep.subr.mxu0 %v4457
    %v4459 = vand.u32 %v44, 4294901760
    %4460 = vmatpush1.msra.mxu0 %v4459
    %v4461 = vand.u32 %v47, 4294901760
    %4462 = vmatprep.subr.mxu0 %v4461
    %v4463 = vand.u32 %v46, 4294901760
    %4464 = vmatpush1.msra.mxu0 %v4463
    %v4465 = vand.u32 %v49, 4294901760
    %4466 = vmatprep.subr.mxu0 %v4465
    %v4467 = vand.u32 %v48, 4294901760
    %4468 = vmatpush1.msra.mxu0 %v4467
    %v4469 = vand.u32 %v51, 4294901760
    %4470 = vmatprep.subr.mxu0 %v4469
    %v4471 = vand.u32 %v50, 4294901760
    %4472 = vmatpush1.msra.mxu0 %v4471
    %v4473 = vand.u32 %v53, 4294901760
    %4474 = vmatprep.subr.mxu0 %v4473
    %v4475 = vand.u32 %v52, 4294901760
    %4476 = vmatpush1.msra.mxu0 %v4475
    %4477 = vmatprep.subr.mxu0 0.0
    %4478 = vmatpush1.msra.mxu0 0.0
    %4479 = vmatprep.subr.mxu0 0.0
    %4480 = vmatpush1.msra.mxu0 0.0
    %4481 = vmatprep.subr.mxu0 0.0
    %4482 = vmatpush1.msra.mxu0 0.0
    %4483 = vmatprep.subr.mxu0 0.0
    %4484 = vmatpush1.msra.mxu0 0.0
    %4485 = vmatprep.subr.mxu0 0.0
    %4486 = vmatpush1.msra.mxu0 0.0
    %4487 = vmatprep.subr.mxu0 0.0
    %4488 = vmatpush1.msra.mxu0 0.0
    %4489 = vmatprep.subr.mxu0 0.0
    %4490 = vmatpush1.msra.mxu0 0.0
    %4491 = vmatprep.subr.mxu0 0.0
    %4492 = vmatpush1.msra.mxu0 0.0
    %4493 = vmatprep.subr.mxu0 0.0
    %4494 = vmatpush1.msra.mxu0 0.0
    %4495 = vmatprep.subr.mxu0 0.0
    %4496 = vmatpush1.msra.mxu0 0.0
    %4497 = vmatprep.subr.mxu0 0.0
    %4498 = vmatpush1.msra.mxu0 0.0
    %4499 = vmatprep.subr.mxu0 0.0
    %4500 = vmatpush1.msra.mxu0 0.0
    %4501 = vmatprep.subr.mxu0 0.0
    %4502 = vmatpush1.msra.mxu0 0.0
    %4503 = vmatprep.subr.mxu0 0.0
    %4504 = vmatpush1.msra.mxu0 0.0
    %4505 = vmatprep.subr.mxu0 0.0
    %4506 = vmatpush1.msra.mxu0 0.0
    %4507 = vmatprep.subr.mxu0 0.0
    %4508 = vmatpush1.msra.mxu0 0.0
    %4509 = vmatprep.subr.mxu0 0.0
    %4510 = vmatpush1.msra.mxu0 0.0
    %4511 = vmatprep.subr.mxu0 0.0
    %4512 = vmatpush1.msra.mxu0 0.0
    %4513 = vmatprep.subr.mxu0 0.0
    %4514 = vmatpush1.msra.mxu0 0.0
    %4515 = vmatprep.subr.mxu0 0.0
    %4516 = vmatpush1.msra.mxu0 0.0
    %4517 = vmatprep.subr.mxu0 0.0
    %4518 = vmatpush1.msra.mxu0 0.0
    %4519 = vmatprep.subr.mxu0 0.0
    %4520 = vmatpush1.msra.mxu0 0.0
    %4521 = vmatprep.subr.mxu0 0.0
    %4522 = vmatpush1.msra.mxu0 0.0
    %4523 = vmatprep.subr.mxu0 0.0
    %4524 = vmatpush1.msra.mxu0 0.0
    %4525 = vmatprep.mubr.f32.mxu0 0.0
    %v4526 = vand.u32 %v4094, 4294901760
    %v4527 = vsub.f32 %v4094, %v4526
    %v4528 = vand.u32 %v4527, 4294901760
    %4529 = vmatmul.mubr.f32.gmra.mrb[0].mxu0 %v4528
    %v4530 = vpop.f32.mrb[0].mxu0
    %v4531 = vadd.f32 %v4441, %v4530
    %v4532 = vpop.f32.mrb[0].mxu0
    %v4533 = vadd.f32 %v4443, %v4532
    %4534 = vdwg.mxu0
    %v4535 = vand.u32 %v39, 4294901760
    %v4536 = vsub.f32 %v39, %v4535
    %v4537 = vand.u32 %v4536, 4294901760
    %4538 = vmatprep.subr.mxu0 %v4537
    %v4539 = vand.u32 %v38, 4294901760
    %v4540 = vsub.f32 %v38, %v4539
    %v4541 = vand.u32 %v4540, 4294901760
    %4542 = vmatpush1.msra.mxu0 %v4541
    %v4543 = vand.u32 %v41, 4294901760
    %v4544 = vsub.f32 %v41, %v4543
    %v4545 = vand.u32 %v4544, 4294901760
    %4546 = vmatprep.subr.mxu0 %v4545
    %v4547 = vand.u32 %v40, 4294901760
    %v4548 = vsub.f32 %v40, %v4547
    %v4549 = vand.u32 %v4548, 4294901760
    %4550 = vmatpush1.msra.mxu0 %v4549
    %v4551 = vand.u32 %v43, 4294901760
    %v4552 = vsub.f32 %v43, %v4551
    %v4553 = vand.u32 %v4552, 4294901760
    %4554 = vmatprep.subr.mxu0 %v4553
    %v4555 = vand.u32 %v42, 4294901760
    %v4556 = vsub.f32 %v42, %v4555
    %v4557 = vand.u32 %v4556, 4294901760
    %4558 = vmatpush1.msra.mxu0 %v4557
    %v4559 = vand.u32 %v45, 4294901760
    %v4560 = vsub.f32 %v45, %v4559
    %v4561 = vand.u32 %v4560, 4294901760
    %4562 = vmatprep.subr.mxu0 %v4561
    %v4563 = vand.u32 %v44, 4294901760
    %v4564 = vsub.f32 %v44, %v4563
    %v4565 = vand.u32 %v4564, 4294901760
    %4566 = vmatpush1.msra.mxu0 %v4565
    %v4567 = vand.u32 %v47, 4294901760
    %v4568 = vsub.f32 %v47, %v4567
    %v4569 = vand.u32 %v4568, 4294901760
    %4570 = vmatprep.subr.mxu0 %v4569
    %v4571 = vand.u32 %v46, 4294901760
    %v4572 = vsub.f32 %v46, %v4571
    %v4573 = vand.u32 %v4572, 4294901760
    %4574 = vmatpush1.msra.mxu0 %v4573
    %v4575 = vand.u32 %v49, 4294901760
    %v4576 = vsub.f32 %v49, %v4575
    %v4577 = vand.u32 %v4576, 4294901760
    %4578 = vmatprep.subr.mxu0 %v4577
    %v4579 = vand.u32 %v48, 4294901760
    %v4580 = vsub.f32 %v48, %v4579
    %v4581 = vand.u32 %v4580, 4294901760
    %4582 = vmatpush1.msra.mxu0 %v4581
    %v4583 = vand.u32 %v51, 4294901760
    %v4584 = vsub.f32 %v51, %v4583
    %v4585 = vand.u32 %v4584, 4294901760
    %4586 = vmatprep.subr.mxu0 %v4585
    %v4587 = vand.u32 %v50, 4294901760
    %v4588 = vsub.f32 %v50, %v4587
    %v4589 = vand.u32 %v4588, 4294901760
    %4590 = vmatpush1.msra.mxu0 %v4589
    %v4591 = vand.u32 %v53, 4294901760
    %v4592 = vsub.f32 %v53, %v4591
    %v4593 = vand.u32 %v4592, 4294901760
    %4594 = vmatprep.subr.mxu0 %v4593
    %v4595 = vand.u32 %v52, 4294901760
    %v4596 = vsub.f32 %v52, %v4595
    %v4597 = vand.u32 %v4596, 4294901760
    %4598 = vmatpush1.msra.mxu0 %v4597
    %4599 = vmatprep.subr.mxu0 0.0
    %4600 = vmatpush1.msra.mxu0 0.0
    %4601 = vmatprep.subr.mxu0 0.0
    %4602 = vmatpush1.msra.mxu0 0.0
    %4603 = vmatprep.subr.mxu0 0.0
    %4604 = vmatpush1.msra.mxu0 0.0
    %4605 = vmatprep.subr.mxu0 0.0
    %4606 = vmatpush1.msra.mxu0 0.0
    %4607 = vmatprep.subr.mxu0 0.0
    %4608 = vmatpush1.msra.mxu0 0.0
    %4609 = vmatprep.subr.mxu0 0.0
    %4610 = vmatpush1.msra.mxu0 0.0
    %4611 = vmatprep.subr.mxu0 0.0
    %4612 = vmatpush1.msra.mxu0 0.0
    %4613 = vmatprep.subr.mxu0 0.0
    %4614 = vmatpush1.msra.mxu0 0.0
    %4615 = vmatprep.subr.mxu0 0.0
    %4616 = vmatpush1.msra.mxu0 0.0
    %4617 = vmatprep.subr.mxu0 0.0
    %4618 = vmatpush1.msra.mxu0 0.0
    %4619 = vmatprep.subr.mxu0 0.0
    %4620 = vmatpush1.msra.mxu0 0.0
    %4621 = vmatprep.subr.mxu0 0.0
    %4622 = vmatpush1.msra.mxu0 0.0
    %4623 = vmatprep.subr.mxu0 0.0
    %4624 = vmatpush1.msra.mxu0 0.0
    %4625 = vmatprep.subr.mxu0 0.0
    %4626 = vmatpush1.msra.mxu0 0.0
    %4627 = vmatprep.subr.mxu0 0.0
    %4628 = vmatpush1.msra.mxu0 0.0
    %4629 = vmatprep.subr.mxu0 0.0
    %4630 = vmatpush1.msra.mxu0 0.0
    %4631 = vmatprep.subr.mxu0 0.0
    %4632 = vmatpush1.msra.mxu0 0.0
    %4633 = vmatprep.subr.mxu0 0.0
    %4634 = vmatpush1.msra.mxu0 0.0
    %4635 = vmatprep.subr.mxu0 0.0
    %4636 = vmatpush1.msra.mxu0 0.0
    %4637 = vmatprep.subr.mxu0 0.0
    %4638 = vmatpush1.msra.mxu0 0.0
    %4639 = vmatprep.subr.mxu0 0.0
    %4640 = vmatpush1.msra.mxu0 0.0
    %4641 = vmatprep.subr.mxu0 0.0
    %4642 = vmatpush1.msra.mxu0 0.0
    %4643 = vmatprep.subr.mxu0 0.0
    %4644 = vmatpush1.msra.mxu0 0.0
    %4645 = vmatprep.subr.mxu0 0.0
    %4646 = vmatpush1.msra.mxu0 0.0
    %4647 = vmatprep.mubr.f32.mxu0 0.0
    %v4648 = vand.u32 %v4094, 4294901760
    %4649 = vmatmul.mubr.f32.gmra.mrb[0].mxu0 %v4648
    %v4650 = vpop.f32.mrb[0].mxu0
    %v4651 = vadd.f32 %v4531, %v4650
    %v4652 = vpop.f32.mrb[0].mxu0
    %v4653 = vadd.f32 %v4533, %v4652
    %4654 = vdwg.mxu0
    %v4655 = vand.u32 %v39, 4294901760
    %4656 = vmatprep.subr.mxu0 %v4655
    %v4657 = vand.u32 %v38, 4294901760
    %4658 = vmatpush1.msra.mxu0 %v4657
    %v4659 = vand.u32 %v41, 4294901760
    %4660 = vmatprep.subr.mxu0 %v4659
    %v4661 = vand.u32 %v40, 4294901760
    %4662 = vmatpush1.msra.mxu0 %v4661
    %v4663 = vand.u32 %v43, 4294901760
    %4664 = vmatprep.subr.mxu0 %v4663
    %v4665 = vand.u32 %v42, 4294901760
    %4666 = vmatpush1.msra.mxu0 %v4665
    %v4667 = vand.u32 %v45, 4294901760
    %4668 = vmatprep.subr.mxu0 %v4667
    %v4669 = vand.u32 %v44, 4294901760
    %4670 = vmatpush1.msra.mxu0 %v4669
    %v4671 = vand.u32 %v47, 4294901760
    %4672 = vmatprep.subr.mxu0 %v4671
    %v4673 = vand.u32 %v46, 4294901760
    %4674 = vmatpush1.msra.mxu0 %v4673
    %v4675 = vand.u32 %v49, 4294901760
    %4676 = vmatprep.subr.mxu0 %v4675
    %v4677 = vand.u32 %v48, 4294901760
    %4678 = vmatpush1.msra.mxu0 %v4677
    %v4679 = vand.u32 %v51, 4294901760
    %4680 = vmatprep.subr.mxu0 %v4679
    %v4681 = vand.u32 %v50, 4294901760
    %4682 = vmatpush1.msra.mxu0 %v4681
    %v4683 = vand.u32 %v53, 4294901760
    %4684 = vmatprep.subr.mxu0 %v4683
    %v4685 = vand.u32 %v52, 4294901760
    %4686 = vmatpush1.msra.mxu0 %v4685
    %4687 = vmatprep.subr.mxu0 0.0
    %4688 = vmatpush1.msra.mxu0 0.0
    %4689 = vmatprep.subr.mxu0 0.0
    %4690 = vmatpush1.msra.mxu0 0.0
    %4691 = vmatprep.subr.mxu0 0.0
    %4692 = vmatpush1.msra.mxu0 0.0
    %4693 = vmatprep.subr.mxu0 0.0
    %4694 = vmatpush1.msra.mxu0 0.0
    %4695 = vmatprep.subr.mxu0 0.0
    %4696 = vmatpush1.msra.mxu0 0.0
    %4697 = vmatprep.subr.mxu0 0.0
    %4698 = vmatpush1.msra.mxu0 0.0
    %4699 = vmatprep.subr.mxu0 0.0
    %4700 = vmatpush1.msra.mxu0 0.0
    %4701 = vmatprep.subr.mxu0 0.0
    %4702 = vmatpush1.msra.mxu0 0.0
    %4703 = vmatprep.subr.mxu0 0.0
    %4704 = vmatpush1.msra.mxu0 0.0
    %4705 = vmatprep.subr.mxu0 0.0
    %4706 = vmatpush1.msra.mxu0 0.0
    %4707 = vmatprep.subr.mxu0 0.0
    %4708 = vmatpush1.msra.mxu0 0.0
    %4709 = vmatprep.subr.mxu0 0.0
    %4710 = vmatpush1.msra.mxu0 0.0
    %4711 = vmatprep.subr.mxu0 0.0
    %4712 = vmatpush1.msra.mxu0 0.0
    %4713 = vmatprep.subr.mxu0 0.0
    %4714 = vmatpush1.msra.mxu0 0.0
    %4715 = vmatprep.subr.mxu0 0.0
    %4716 = vmatpush1.msra.mxu0 0.0
    %4717 = vmatprep.subr.mxu0 0.0
    %4718 = vmatpush1.msra.mxu0 0.0
    %4719 = vmatprep.subr.mxu0 0.0
    %4720 = vmatpush1.msra.mxu0 0.0
    %4721 = vmatprep.subr.mxu0 0.0
    %4722 = vmatpush1.msra.mxu0 0.0
    %4723 = vmatprep.subr.mxu0 0.0
    %4724 = vmatpush1.msra.mxu0 0.0
    %4725 = vmatprep.subr.mxu0 0.0
    %4726 = vmatpush1.msra.mxu0 0.0
    %4727 = vmatprep.subr.mxu0 0.0
    %4728 = vmatpush1.msra.mxu0 0.0
    %4729 = vmatprep.subr.mxu0 0.0
    %4730 = vmatpush1.msra.mxu0 0.0
    %4731 = vmatprep.subr.mxu0 0.0
    %4732 = vmatpush1.msra.mxu0 0.0
    %4733 = vmatprep.subr.mxu0 0.0
    %4734 = vmatpush1.msra.mxu0 0.0
    %4735 = vmatprep.mubr.f32.mxu0 0.0
    %v4736 = vand.u32 %v4094, 4294901760
    %4737 = vmatmul.mubr.f32.gmra.mrb[0].mxu0 %v4736
    %v4738 = vpop.f32.mrb[0].mxu0
    %v4739 = vadd.f32 %v4651, %v4738
    %v4740 = vpop.f32.mrb[0].mxu0
    %v4741 = vadd.f32 %v4653, %v4740
    %4742 = vdwg.mxu0
    %v4743 = vxor.u32 %v4739, 2147483648
    %v4744 = vmul.f32 %v4743, 1.442695
    %v4745 = vpow.pop %v4744
    %v4746 = vadd.f32 %v4745, 1.0
    %v4747 = vrcp.pop %v4746
    %v4748 = vmul.f32 1.0, %v4747
    %v4749 = vtanh.pop %v4741
    %v4750 = vxor.u32 %v4741, 2147483648
    %v4751 = vmul.f32 %v4750, 1.442695
    %v4752 = vpow.pop %v4751
    %v4753 = vadd.f32 %v4752, 1.0
    %v4754 = vrcp.pop %v4753
    %v4755 = vmul.f32 1.0, %v4754
    %v4756 = vsel %vm663, %v4749, %v4755
    %v4757 = vmul.f32 %v4748, %v4084
    %v4758 = vmul.f32 %v4748, %v4756
    %4760 = vrot.lane.b32.xlu0 %v4758, 64
    %v4761 = vpop.permute.xlu0 %4760
    %v4763 = vadd.f32 %v4757, %v4761
    %v4764 = vtanh.pop %v4763
    %v4765 = vmul.f32 %v4756, %v4764
    %4767 = vrot.lane.b32.xlu0 %v4765, 64
    %v4768 = vpop.permute.xlu0 %4767
    %v4769 = vrot.slane %v650, 6
    %v4770 = vrot.slane %v652, 6
    %v4773 = vsel %vm696, %v4768, 0
    %v4775 = vand.u32 %v39, 4294901760
    %4776 = vmatprep.subr.mxu0 %v4775
    %v4777 = vand.u32 %v38, 4294901760
    %4778 = vmatpush1.msra.mxu0 %v4777
    %v4779 = vand.u32 %v41, 4294901760
    %4780 = vmatprep.subr.mxu0 %v4779
    %v4781 = vand.u32 %v40, 4294901760
    %4782 = vmatpush1.msra.mxu0 %v4781
    %v4783 = vand.u32 %v43, 4294901760
    %4784 = vmatprep.subr.mxu0 %v4783
    %v4785 = vand.u32 %v42, 4294901760
    %4786 = vmatpush1.msra.mxu0 %v4785
    %v4787 = vand.u32 %v45, 4294901760
    %4788 = vmatprep.subr.mxu0 %v4787
    %v4789 = vand.u32 %v44, 4294901760
    %4790 = vmatpush1.msra.mxu0 %v4789
    %v4791 = vand.u32 %v47, 4294901760
    %4792 = vmatprep.subr.mxu0 %v4791
    %v4793 = vand.u32 %v46, 4294901760
    %4794 = vmatpush1.msra.mxu0 %v4793
    %v4795 = vand.u32 %v49, 4294901760
    %4796 = vmatprep.subr.mxu0 %v4795
    %v4797 = vand.u32 %v48, 4294901760
    %4798 = vmatpush1.msra.mxu0 %v4797
    %v4799 = vand.u32 %v51, 4294901760
    %4800 = vmatprep.subr.mxu0 %v4799
    %v4801 = vand.u32 %v50, 4294901760
    %4802 = vmatpush1.msra.mxu0 %v4801
    %v4803 = vand.u32 %v53, 4294901760
    %4804 = vmatprep.subr.mxu0 %v4803
    %v4805 = vand.u32 %v52, 4294901760
    %4806 = vmatpush1.msra.mxu0 %v4805
    %4807 = vmatprep.subr.mxu0 0.0
    %4808 = vmatpush1.msra.mxu0 0.0
    %4809 = vmatprep.subr.mxu0 0.0
    %4810 = vmatpush1.msra.mxu0 0.0
    %4811 = vmatprep.subr.mxu0 0.0
    %4812 = vmatpush1.msra.mxu0 0.0
    %4813 = vmatprep.subr.mxu0 0.0
    %4814 = vmatpush1.msra.mxu0 0.0
    %4815 = vmatprep.subr.mxu0 0.0
    %4816 = vmatpush1.msra.mxu0 0.0
    %4817 = vmatprep.subr.mxu0 0.0
    %4818 = vmatpush1.msra.mxu0 0.0
    %4819 = vmatprep.subr.mxu0 0.0
    %4820 = vmatpush1.msra.mxu0 0.0
    %4821 = vmatprep.subr.mxu0 0.0
    %4822 = vmatpush1.msra.mxu0 0.0
    %4823 = vmatprep.subr.mxu0 0.0
    %4824 = vmatpush1.msra.mxu0 0.0
    %4825 = vmatprep.subr.mxu0 0.0
    %4826 = vmatpush1.msra.mxu0 0.0
    %4827 = vmatprep.subr.mxu0 0.0
    %4828 = vmatpush1.msra.mxu0 0.0
    %4829 = vmatprep.subr.mxu0 0.0
    %4830 = vmatpush1.msra.mxu0 0.0
    %4831 = vmatprep.subr.mxu0 0.0
    %4832 = vmatpush1.msra.mxu0 0.0
    %4833 = vmatprep.subr.mxu0 0.0
    %4834 = vmatpush1.msra.mxu0 0.0
    %4835 = vmatprep.subr.mxu0 0.0
    %4836 = vmatpush1.msra.mxu0 0.0
    %4837 = vmatprep.subr.mxu0 0.0
    %4838 = vmatpush1.msra.mxu0 0.0
    %4839 = vmatprep.subr.mxu0 0.0
    %4840 = vmatpush1.msra.mxu0 0.0
    %4841 = vmatprep.subr.mxu0 0.0
    %4842 = vmatpush1.msra.mxu0 0.0
    %4843 = vmatprep.subr.mxu0 0.0
    %4844 = vmatpush1.msra.mxu0 0.0
    %4845 = vmatprep.subr.mxu0 0.0
    %4846 = vmatpush1.msra.mxu0 0.0
    %4847 = vmatprep.subr.mxu0 0.0
    %4848 = vmatpush1.msra.mxu0 0.0
    %4849 = vmatprep.subr.mxu0 0.0
    %4850 = vmatpush1.msra.mxu0 0.0
    %4851 = vmatprep.subr.mxu0 0.0
    %4852 = vmatpush1.msra.mxu0 0.0
    %4853 = vmatprep.subr.mxu0 0.0
    %4854 = vmatpush1.msra.mxu0 0.0
    %4855 = vmatprep.mubr.f32.mxu0 0.0
    %v4856 = vand.u32 %v4773, 4294901760
    %v4857 = vsub.f32 %v4773, %v4856
    %v4858 = vand.u32 %v4857, 4294901760
    %v4859 = vsub.f32 %v4857, %v4858
    %v4860 = vand.u32 %v4859, 4294901760
    %4861 = vmatmul.mubr.f32.gmra.mrb[0].mxu0 %v4860
    %v4862 = vpop.f32.mrb[0].mxu0
    %v4863 = vadd.f32 %v4769, %v4862
    %v4864 = vpop.f32.mrb[0].mxu0
    %v4865 = vadd.f32 %v4770, %v4864
    %4866 = vdwg.mxu0
    %v4867 = vand.u32 %v39, 4294901760
    %v4868 = vsub.f32 %v39, %v4867
    %v4869 = vand.u32 %v4868, 4294901760
    %v4870 = vsub.f32 %v4868, %v4869
    %v4871 = vand.u32 %v4870, 4294901760
    %4872 = vmatprep.subr.mxu0 %v4871
    %v4873 = vand.u32 %v38, 4294901760
    %v4874 = vsub.f32 %v38, %v4873
    %v4875 = vand.u32 %v4874, 4294901760
    %v4876 = vsub.f32 %v4874, %v4875
    %v4877 = vand.u32 %v4876, 4294901760
    %4878 = vmatpush1.msra.mxu0 %v4877
    %v4879 = vand.u32 %v41, 4294901760
    %v4880 = vsub.f32 %v41, %v4879
    %v4881 = vand.u32 %v4880, 4294901760
    %v4882 = vsub.f32 %v4880, %v4881
    %v4883 = vand.u32 %v4882, 4294901760
    %4884 = vmatprep.subr.mxu0 %v4883
    %v4885 = vand.u32 %v40, 4294901760
    %v4886 = vsub.f32 %v40, %v4885
    %v4887 = vand.u32 %v4886, 4294901760
    %v4888 = vsub.f32 %v4886, %v4887
    %v4889 = vand.u32 %v4888, 4294901760
    %4890 = vmatpush1.msra.mxu0 %v4889
    %v4891 = vand.u32 %v43, 4294901760
    %v4892 = vsub.f32 %v43, %v4891
    %v4893 = vand.u32 %v4892, 4294901760
    %v4894 = vsub.f32 %v4892, %v4893
    %v4895 = vand.u32 %v4894, 4294901760
    %4896 = vmatprep.subr.mxu0 %v4895
    %v4897 = vand.u32 %v42, 4294901760
    %v4898 = vsub.f32 %v42, %v4897
    %v4899 = vand.u32 %v4898, 4294901760
    %v4900 = vsub.f32 %v4898, %v4899
    %v4901 = vand.u32 %v4900, 4294901760
    %4902 = vmatpush1.msra.mxu0 %v4901
    %v4903 = vand.u32 %v45, 4294901760
    %v4904 = vsub.f32 %v45, %v4903
    %v4905 = vand.u32 %v4904, 4294901760
    %v4906 = vsub.f32 %v4904, %v4905
    %v4907 = vand.u32 %v4906, 4294901760
    %4908 = vmatprep.subr.mxu0 %v4907
    %v4909 = vand.u32 %v44, 4294901760
    %v4910 = vsub.f32 %v44, %v4909
    %v4911 = vand.u32 %v4910, 4294901760
    %v4912 = vsub.f32 %v4910, %v4911
    %v4913 = vand.u32 %v4912, 4294901760
    %4914 = vmatpush1.msra.mxu0 %v4913
    %v4915 = vand.u32 %v47, 4294901760
    %v4916 = vsub.f32 %v47, %v4915
    %v4917 = vand.u32 %v4916, 4294901760
    %v4918 = vsub.f32 %v4916, %v4917
    %v4919 = vand.u32 %v4918, 4294901760
    %4920 = vmatprep.subr.mxu0 %v4919
    %v4921 = vand.u32 %v46, 4294901760
    %v4922 = vsub.f32 %v46, %v4921
    %v4923 = vand.u32 %v4922, 4294901760
    %v4924 = vsub.f32 %v4922, %v4923
    %v4925 = vand.u32 %v4924, 4294901760
    %4926 = vmatpush1.msra.mxu0 %v4925
    %v4927 = vand.u32 %v49, 4294901760
    %v4928 = vsub.f32 %v49, %v4927
    %v4929 = vand.u32 %v4928, 4294901760
    %v4930 = vsub.f32 %v4928, %v4929
    %v4931 = vand.u32 %v4930, 4294901760
    %4932 = vmatprep.subr.mxu0 %v4931
    %v4933 = vand.u32 %v48, 4294901760
    %v4934 = vsub.f32 %v48, %v4933
    %v4935 = vand.u32 %v4934, 4294901760
    %v4936 = vsub.f32 %v4934, %v4935
    %v4937 = vand.u32 %v4936, 4294901760
    %4938 = vmatpush1.msra.mxu0 %v4937
    %v4939 = vand.u32 %v51, 4294901760
    %v4940 = vsub.f32 %v51, %v4939
    %v4941 = vand.u32 %v4940, 4294901760
    %v4942 = vsub.f32 %v4940, %v4941
    %v4943 = vand.u32 %v4942, 4294901760
    %4944 = vmatprep.subr.mxu0 %v4943
    %v4945 = vand.u32 %v50, 4294901760
    %v4946 = vsub.f32 %v50, %v4945
    %v4947 = vand.u32 %v4946, 4294901760
    %v4948 = vsub.f32 %v4946, %v4947
    %v4949 = vand.u32 %v4948, 4294901760
    %4950 = vmatpush1.msra.mxu0 %v4949
    %v4951 = vand.u32 %v53, 4294901760
    %v4952 = vsub.f32 %v53, %v4951
    %v4953 = vand.u32 %v4952, 4294901760
    %v4954 = vsub.f32 %v4952, %v4953
    %v4955 = vand.u32 %v4954, 4294901760
    %4956 = vmatprep.subr.mxu0 %v4955
    %v4957 = vand.u32 %v52, 4294901760
    %v4958 = vsub.f32 %v52, %v4957
    %v4959 = vand.u32 %v4958, 4294901760
    %v4960 = vsub.f32 %v4958, %v4959
    %v4961 = vand.u32 %v4960, 4294901760
    %4962 = vmatpush1.msra.mxu0 %v4961
    %4963 = vmatprep.subr.mxu0 0.0
    %4964 = vmatpush1.msra.mxu0 0.0
    %4965 = vmatprep.subr.mxu0 0.0
    %4966 = vmatpush1.msra.mxu0 0.0
    %4967 = vmatprep.subr.mxu0 0.0
    %4968 = vmatpush1.msra.mxu0 0.0
    %4969 = vmatprep.subr.mxu0 0.0
    %4970 = vmatpush1.msra.mxu0 0.0
    %4971 = vmatprep.subr.mxu0 0.0
    %4972 = vmatpush1.msra.mxu0 0.0
    %4973 = vmatprep.subr.mxu0 0.0
    %4974 = vmatpush1.msra.mxu0 0.0
    %4975 = vmatprep.subr.mxu0 0.0
    %4976 = vmatpush1.msra.mxu0 0.0
    %4977 = vmatprep.subr.mxu0 0.0
    %4978 = vmatpush1.msra.mxu0 0.0
    %4979 = vmatprep.subr.mxu0 0.0
    %4980 = vmatpush1.msra.mxu0 0.0
    %4981 = vmatprep.subr.mxu0 0.0
    %4982 = vmatpush1.msra.mxu0 0.0
    %4983 = vmatprep.subr.mxu0 0.0
    %4984 = vmatpush1.msra.mxu0 0.0
    %4985 = vmatprep.subr.mxu0 0.0
    %4986 = vmatpush1.msra.mxu0 0.0
    %4987 = vmatprep.subr.mxu0 0.0
    %4988 = vmatpush1.msra.mxu0 0.0
    %4989 = vmatprep.subr.mxu0 0.0
    %4990 = vmatpush1.msra.mxu0 0.0
    %4991 = vmatprep.subr.mxu0 0.0
    %4992 = vmatpush1.msra.mxu0 0.0
    %4993 = vmatprep.subr.mxu0 0.0
    %4994 = vmatpush1.msra.mxu0 0.0
    %4995 = vmatprep.subr.mxu0 0.0
    %4996 = vmatpush1.msra.mxu0 0.0
    %4997 = vmatprep.subr.mxu0 0.0
    %4998 = vmatpush1.msra.mxu0 0.0
    %4999 = vmatprep.subr.mxu0 0.0
    %5000 = vmatpush1.msra.mxu0 0.0
    %5001 = vmatprep.subr.mxu0 0.0
    %5002 = vmatpush1.msra.mxu0 0.0
    %5003 = vmatprep.subr.mxu0 0.0
    %5004 = vmatpush1.msra.mxu0 0.0
    %5005 = vmatprep.subr.mxu0 0.0
    %5006 = vmatpush1.msra.mxu0 0.0
    %5007 = vmatprep.subr.mxu0 0.0
    %5008 = vmatpush1.msra.mxu0 0.0
    %5009 = vmatprep.subr.mxu0 0.0
    %5010 = vmatpush1.msra.mxu0 0.0
    %5011 = vmatprep.mubr.f32.mxu0 0.0
    %v5012 = vand.u32 %v4773, 4294901760
    %5013 = vmatmul.mubr.f32.gmra.mrb[0].mxu0 %v5012
    %v5014 = vpop.f32.mrb[0].mxu0
    %v5015 = vadd.f32 %v4863, %v5014
    %v5016 = vpop.f32.mrb[0].mxu0
    %v5017 = vadd.f32 %v4865, %v5016
    %5018 = vdwg.mxu0
    %v5019 = vand.u32 %v39, 4294901760
    %v5020 = vsub.f32 %v39, %v5019
    %5021 = vmatprep.subr.mxu0 %v5020
    %v5022 = vand.u32 %v38, 4294901760
    %v5023 = vsub.f32 %v38, %v5022
    %5024 = vmatpush1.msra.mxu0 %v5023
    %v5025 = vand.u32 %v41, 4294901760
    %v5026 = vsub.f32 %v41, %v5025
    %5027 = vmatprep.subr.mxu0 %v5026
    %v5028 = vand.u32 %v40, 4294901760
    %v5029 = vsub.f32 %v40, %v5028
    %5030 = vmatpush1.msra.mxu0 %v5029
    %v5031 = vand.u32 %v43, 4294901760
    %v5032 = vsub.f32 %v43, %v5031
    %5033 = vmatprep.subr.mxu0 %v5032
    %v5034 = vand.u32 %v42, 4294901760
    %v5035 = vsub.f32 %v42, %v5034
    %5036 = vmatpush1.msra.mxu0 %v5035
    %v5037 = vand.u32 %v45, 4294901760
    %v5038 = vsub.f32 %v45, %v5037
    %5039 = vmatprep.subr.mxu0 %v5038
    %v5040 = vand.u32 %v44, 4294901760
    %v5041 = vsub.f32 %v44, %v5040
    %5042 = vmatpush1.msra.mxu0 %v5041
    %v5043 = vand.u32 %v47, 4294901760
    %v5044 = vsub.f32 %v47, %v5043
    %5045 = vmatprep.subr.mxu0 %v5044
    %v5046 = vand.u32 %v46, 4294901760
    %v5047 = vsub.f32 %v46, %v5046
    %5048 = vmatpush1.msra.mxu0 %v5047
    %v5049 = vand.u32 %v49, 4294901760
    %v5050 = vsub.f32 %v49, %v5049
    %5051 = vmatprep.subr.mxu0 %v5050
    %v5052 = vand.u32 %v48, 4294901760
    %v5053 = vsub.f32 %v48, %v5052
    %5054 = vmatpush1.msra.mxu0 %v5053
    %v5055 = vand.u32 %v51, 4294901760
    %v5056 = vsub.f32 %v51, %v5055
    %5057 = vmatprep.subr.mxu0 %v5056
    %v5058 = vand.u32 %v50, 4294901760
    %v5059 = vsub.f32 %v50, %v5058
    %5060 = vmatpush1.msra.mxu0 %v5059
    %v5061 = vand.u32 %v53, 4294901760
    %v5062 = vsub.f32 %v53, %v5061
    %5063 = vmatprep.subr.mxu0 %v5062
    %v5064 = vand.u32 %v52, 4294901760
    %v5065 = vsub.f32 %v52, %v5064
    %5066 = vmatpush1.msra.mxu0 %v5065
    %5067 = vmatprep.subr.mxu0 0.0
    %5068 = vmatpush1.msra.mxu0 0.0
    %5069 = vmatprep.subr.mxu0 0.0
    %5070 = vmatpush1.msra.mxu0 0.0
    %5071 = vmatprep.subr.mxu0 0.0
    %5072 = vmatpush1.msra.mxu0 0.0
    %5073 = vmatprep.subr.mxu0 0.0
    %5074 = vmatpush1.msra.mxu0 0.0
    %5075 = vmatprep.subr.mxu0 0.0
    %5076 = vmatpush1.msra.mxu0 0.0
    %5077 = vmatprep.subr.mxu0 0.0
    %5078 = vmatpush1.msra.mxu0 0.0
    %5079 = vmatprep.subr.mxu0 0.0
    %5080 = vmatpush1.msra.mxu0 0.0
    %5081 = vmatprep.subr.mxu0 0.0
    %5082 = vmatpush1.msra.mxu0 0.0
    %5083 = vmatprep.subr.mxu0 0.0
    %5084 = vmatpush1.msra.mxu0 0.0
    %5085 = vmatprep.subr.mxu0 0.0
    %5086 = vmatpush1.msra.mxu0 0.0
    %5087 = vmatprep.subr.mxu0 0.0
    %5088 = vmatpush1.msra.mxu0 0.0
    %5089 = vmatprep.subr.mxu0 0.0
    %5090 = vmatpush1.msra.mxu0 0.0
    %5091 = vmatprep.subr.mxu0 0.0
    %5092 = vmatpush1.msra.mxu0 0.0
    %5093 = vmatprep.subr.mxu0 0.0
    %5094 = vmatpush1.msra.mxu0 0.0
    %5095 = vmatprep.subr.mxu0 0.0
    %5096 = vmatpush1.msra.mxu0 0.0
    %5097 = vmatprep.subr.mxu0 0.0
    %5098 = vmatpush1.msra.mxu0 0.0
    %5099 = vmatprep.subr.mxu0 0.0
    %5100 = vmatpush1.msra.mxu0 0.0
    %5101 = vmatprep.subr.mxu0 0.0
    %5102 = vmatpush1.msra.mxu0 0.0
    %5103 = vmatprep.subr.mxu0 0.0
    %5104 = vmatpush1.msra.mxu0 0.0
    %5105 = vmatprep.subr.mxu0 0.0
    %5106 = vmatpush1.msra.mxu0 0.0
    %5107 = vmatprep.subr.mxu0 0.0
    %5108 = vmatpush1.msra.mxu0 0.0
    %5109 = vmatprep.subr.mxu0 0.0
    %5110 = vmatpush1.msra.mxu0 0.0
    %5111 = vmatprep.subr.mxu0 0.0
    %5112 = vmatpush1.msra.mxu0 0.0
    %5113 = vmatprep.subr.mxu0 0.0
    %5114 = vmatpush1.msra.mxu0 0.0
    %5115 = vmatprep.mubr.f32.mxu0 0.0
    %v5116 = vand.u32 %v4773, 4294901760
    %v5117 = vsub.f32 %v4773, %v5116
    %5118 = vmatmul.mubr.f32.gmra.mrb[0].mxu0 %v5117
    %v5119 = vpop.f32.mrb[0].mxu0
    %v5120 = vadd.f32 %v5015, %v5119
    %v5121 = vpop.f32.mrb[0].mxu0
    %v5122 = vadd.f32 %v5017, %v5121
    %5123 = vdwg.mxu0
    %v5124 = vand.u32 %v39, 4294901760
    %5125 = vmatprep.subr.mxu0 %v5124
    %v5126 = vand.u32 %v38, 4294901760
    %5127 = vmatpush1.msra.mxu0 %v5126
    %v5128 = vand.u32 %v41, 4294901760
    %5129 = vmatprep.subr.mxu0 %v5128
    %v5130 = vand.u32 %v40, 4294901760
    %5131 = vmatpush1.msra.mxu0 %v5130
    %v5132 = vand.u32 %v43, 4294901760
    %5133 = vmatprep.subr.mxu0 %v5132
    %v5134 = vand.u32 %v42, 4294901760
    %5135 = vmatpush1.msra.mxu0 %v5134
    %v5136 = vand.u32 %v45, 4294901760
    %5137 = vmatprep.subr.mxu0 %v5136
    %v5138 = vand.u32 %v44, 4294901760
    %5139 = vmatpush1.msra.mxu0 %v5138
    %v5140 = vand.u32 %v47, 4294901760
    %5141 = vmatprep.subr.mxu0 %v5140
    %v5142 = vand.u32 %v46, 4294901760
    %5143 = vmatpush1.msra.mxu0 %v5142
    %v5144 = vand.u32 %v49, 4294901760
    %5145 = vmatprep.subr.mxu0 %v5144
    %v5146 = vand.u32 %v48, 4294901760
    %5147 = vmatpush1.msra.mxu0 %v5146
    %v5148 = vand.u32 %v51, 4294901760
    %5149 = vmatprep.subr.mxu0 %v5148
    %v5150 = vand.u32 %v50, 4294901760
    %5151 = vmatpush1.msra.mxu0 %v5150
    %v5152 = vand.u32 %v53, 4294901760
    %5153 = vmatprep.subr.mxu0 %v5152
    %v5154 = vand.u32 %v52, 4294901760
    %5155 = vmatpush1.msra.mxu0 %v5154
    %5156 = vmatprep.subr.mxu0 0.0
    %5157 = vmatpush1.msra.mxu0 0.0
    %5158 = vmatprep.subr.mxu0 0.0
    %5159 = vmatpush1.msra.mxu0 0.0
    %5160 = vmatprep.subr.mxu0 0.0
    %5161 = vmatpush1.msra.mxu0 0.0
    %5162 = vmatprep.subr.mxu0 0.0
    %5163 = vmatpush1.msra.mxu0 0.0
    %5164 = vmatprep.subr.mxu0 0.0
    %5165 = vmatpush1.msra.mxu0 0.0
    %5166 = vmatprep.subr.mxu0 0.0
    %5167 = vmatpush1.msra.mxu0 0.0
    %5168 = vmatprep.subr.mxu0 0.0
    %5169 = vmatpush1.msra.mxu0 0.0
    %5170 = vmatprep.subr.mxu0 0.0
    %5171 = vmatpush1.msra.mxu0 0.0
    %5172 = vmatprep.subr.mxu0 0.0
    %5173 = vmatpush1.msra.mxu0 0.0
    %5174 = vmatprep.subr.mxu0 0.0
    %5175 = vmatpush1.msra.mxu0 0.0
    %5176 = vmatprep.subr.mxu0 0.0
    %5177 = vmatpush1.msra.mxu0 0.0
    %5178 = vmatprep.subr.mxu0 0.0
    %5179 = vmatpush1.msra.mxu0 0.0
    %5180 = vmatprep.subr.mxu0 0.0
    %5181 = vmatpush1.msra.mxu0 0.0
    %5182 = vmatprep.subr.mxu0 0.0
    %5183 = vmatpush1.msra.mxu0 0.0
    %5184 = vmatprep.subr.mxu0 0.0
    %5185 = vmatpush1.msra.mxu0 0.0
    %5186 = vmatprep.subr.mxu0 0.0
    %5187 = vmatpush1.msra.mxu0 0.0
    %5188 = vmatprep.subr.mxu0 0.0
    %5189 = vmatpush1.msra.mxu0 0.0
    %5190 = vmatprep.subr.mxu0 0.0
    %5191 = vmatpush1.msra.mxu0 0.0
    %5192 = vmatprep.subr.mxu0 0.0
    %5193 = vmatpush1.msra.mxu0 0.0
    %5194 = vmatprep.subr.mxu0 0.0
    %5195 = vmatpush1.msra.mxu0 0.0
    %5196 = vmatprep.subr.mxu0 0.0
    %5197 = vmatpush1.msra.mxu0 0.0
    %5198 = vmatprep.subr.mxu0 0.0
    %5199 = vmatpush1.msra.mxu0 0.0
    %5200 = vmatprep.subr.mxu0 0.0
    %5201 = vmatpush1.msra.mxu0 0.0
    %5202 = vmatprep.subr.mxu0 0.0
    %5203 = vmatpush1.msra.mxu0 0.0
    %5204 = vmatprep.mubr.f32.mxu0 0.0
    %v5205 = vand.u32 %v4773, 4294901760
    %v5206 = vsub.f32 %v4773, %v5205
    %v5207 = vand.u32 %v5206, 4294901760
    %5208 = vmatmul.mubr.f32.gmra.mrb[0].mxu0 %v5207
    %v5209 = vpop.f32.mrb[0].mxu0
    %v5210 = vadd.f32 %v5120, %v5209
    %v5211 = vpop.f32.mrb[0].mxu0
    %v5212 = vadd.f32 %v5122, %v5211
    %5213 = vdwg.mxu0
    %v5214 = vand.u32 %v39, 4294901760
    %v5215 = vsub.f32 %v39, %v5214
    %v5216 = vand.u32 %v5215, 4294901760
    %5217 = vmatprep.subr.mxu0 %v5216
    %v5218 = vand.u32 %v38, 4294901760
    %v5219 = vsub.f32 %v38, %v5218
    %v5220 = vand.u32 %v5219, 4294901760
    %5221 = vmatpush1.msra.mxu0 %v5220
    %v5222 = vand.u32 %v41, 4294901760
    %v5223 = vsub.f32 %v41, %v5222
    %v5224 = vand.u32 %v5223, 4294901760
    %5225 = vmatprep.subr.mxu0 %v5224
    %v5226 = vand.u32 %v40, 4294901760
    %v5227 = vsub.f32 %v40, %v5226
    %v5228 = vand.u32 %v5227, 4294901760
    %5229 = vmatpush1.msra.mxu0 %v5228
    %v5230 = vand.u32 %v43, 4294901760
    %v5231 = vsub.f32 %v43, %v5230
    %v5232 = vand.u32 %v5231, 4294901760
    %5233 = vmatprep.subr.mxu0 %v5232
    %v5234 = vand.u32 %v42, 4294901760
    %v5235 = vsub.f32 %v42, %v5234
    %v5236 = vand.u32 %v5235, 4294901760
    %5237 = vmatpush1.msra.mxu0 %v5236
    %v5238 = vand.u32 %v45, 4294901760
    %v5239 = vsub.f32 %v45, %v5238
    %v5240 = vand.u32 %v5239, 4294901760
    %5241 = vmatprep.subr.mxu0 %v5240
    %v5242 = vand.u32 %v44, 4294901760
    %v5243 = vsub.f32 %v44, %v5242
    %v5244 = vand.u32 %v5243, 4294901760
    %5245 = vmatpush1.msra.mxu0 %v5244
    %v5246 = vand.u32 %v47, 4294901760
    %v5247 = vsub.f32 %v47, %v5246
    %v5248 = vand.u32 %v5247, 4294901760
    %5249 = vmatprep.subr.mxu0 %v5248
    %v5250 = vand.u32 %v46, 4294901760
    %v5251 = vsub.f32 %v46, %v5250
    %v5252 = vand.u32 %v5251, 4294901760
    %5253 = vmatpush1.msra.mxu0 %v5252
    %v5254 = vand.u32 %v49, 4294901760
    %v5255 = vsub.f32 %v49, %v5254
    %v5256 = vand.u32 %v5255, 4294901760
    %5257 = vmatprep.subr.mxu0 %v5256
    %v5258 = vand.u32 %v48, 4294901760
    %v5259 = vsub.f32 %v48, %v5258
    %v5260 = vand.u32 %v5259, 4294901760
    %5261 = vmatpush1.msra.mxu0 %v5260
    %v5262 = vand.u32 %v51, 4294901760
    %v5263 = vsub.f32 %v51, %v5262
    %v5264 = vand.u32 %v5263, 4294901760
    %5265 = vmatprep.subr.mxu0 %v5264
    %v5266 = vand.u32 %v50, 4294901760
    %v5267 = vsub.f32 %v50, %v5266
    %v5268 = vand.u32 %v5267, 4294901760
    %5269 = vmatpush1.msra.mxu0 %v5268
    %v5270 = vand.u32 %v53, 4294901760
    %v5271 = vsub.f32 %v53, %v5270
    %v5272 = vand.u32 %v5271, 4294901760
    %5273 = vmatprep.subr.mxu0 %v5272
    %v5274 = vand.u32 %v52, 4294901760
    %v5275 = vsub.f32 %v52, %v5274
    %v5276 = vand.u32 %v5275, 4294901760
    %5277 = vmatpush1.msra.mxu0 %v5276
    %5278 = vmatprep.subr.mxu0 0.0
    %5279 = vmatpush1.msra.mxu0 0.0
    %5280 = vmatprep.subr.mxu0 0.0
    %5281 = vmatpush1.msra.mxu0 0.0
    %5282 = vmatprep.subr.mxu0 0.0
    %5283 = vmatpush1.msra.mxu0 0.0
    %5284 = vmatprep.subr.mxu0 0.0
    %5285 = vmatpush1.msra.mxu0 0.0
    %5286 = vmatprep.subr.mxu0 0.0
    %5287 = vmatpush1.msra.mxu0 0.0
    %5288 = vmatprep.subr.mxu0 0.0
    %5289 = vmatpush1.msra.mxu0 0.0
    %5290 = vmatprep.subr.mxu0 0.0
    %5291 = vmatpush1.msra.mxu0 0.0
    %5292 = vmatprep.subr.mxu0 0.0
    %5293 = vmatpush1.msra.mxu0 0.0
    %5294 = vmatprep.subr.mxu0 0.0
    %5295 = vmatpush1.msra.mxu0 0.0
    %5296 = vmatprep.subr.mxu0 0.0
    %5297 = vmatpush1.msra.mxu0 0.0
    %5298 = vmatprep.subr.mxu0 0.0
    %5299 = vmatpush1.msra.mxu0 0.0
    %5300 = vmatprep.subr.mxu0 0.0
    %5301 = vmatpush1.msra.mxu0 0.0
    %5302 = vmatprep.subr.mxu0 0.0
    %5303 = vmatpush1.msra.mxu0 0.0
    %5304 = vmatprep.subr.mxu0 0.0
    %5305 = vmatpush1.msra.mxu0 0.0
    %5306 = vmatprep.subr.mxu0 0.0
    %5307 = vmatpush1.msra.mxu0 0.0
    %5308 = vmatprep.subr.mxu0 0.0
    %5309 = vmatpush1.msra.mxu0 0.0
    %5310 = vmatprep.subr.mxu0 0.0
    %5311 = vmatpush1.msra.mxu0 0.0
    %5312 = vmatprep.subr.mxu0 0.0
    %5313 = vmatpush1.msra.mxu0 0.0
    %5314 = vmatprep.subr.mxu0 0.0
    %5315 = vmatpush1.msra.mxu0 0.0
    %5316 = vmatprep.subr.mxu0 0.0
    %5317 = vmatpush1.msra.mxu0 0.0
    %5318 = vmatprep.subr.mxu0 0.0
    %5319 = vmatpush1.msra.mxu0 0.0
    %5320 = vmatprep.subr.mxu0 0.0
    %5321 = vmatpush1.msra.mxu0 0.0
    %5322 = vmatprep.subr.mxu0 0.0
    %5323 = vmatpush1.msra.mxu0 0.0
    %5324 = vmatprep.subr.mxu0 0.0
    %5325 = vmatpush1.msra.mxu0 0.0
    %5326 = vmatprep.mubr.f32.mxu0 0.0
    %v5327 = vand.u32 %v4773, 4294901760
    %5328 = vmatmul.mubr.f32.gmra.mrb[0].mxu0 %v5327
    %v5329 = vpop.f32.mrb[0].mxu0
    %v5330 = vadd.f32 %v5210, %v5329
    %v5331 = vpop.f32.mrb[0].mxu0
    %v5332 = vadd.f32 %v5212, %v5331
    %5333 = vdwg.mxu0
    %v5334 = vand.u32 %v39, 4294901760
    %5335 = vmatprep.subr.mxu0 %v5334
    %v5336 = vand.u32 %v38, 4294901760
    %5337 = vmatpush1.msra.mxu0 %v5336
    %v5338 = vand.u32 %v41, 4294901760
    %5339 = vmatprep.subr.mxu0 %v5338
    %v5340 = vand.u32 %v40, 4294901760
    %5341 = vmatpush1.msra.mxu0 %v5340
    %v5342 = vand.u32 %v43, 4294901760
    %5343 = vmatprep.subr.mxu0 %v5342
    %v5344 = vand.u32 %v42, 4294901760
    %5345 = vmatpush1.msra.mxu0 %v5344
    %v5346 = vand.u32 %v45, 4294901760
    %5347 = vmatprep.subr.mxu0 %v5346
    %v5348 = vand.u32 %v44, 4294901760
    %5349 = vmatpush1.msra.mxu0 %v5348
    %v5350 = vand.u32 %v47, 4294901760
    %5351 = vmatprep.subr.mxu0 %v5350
    %v5352 = vand.u32 %v46, 4294901760
    %5353 = vmatpush1.msra.mxu0 %v5352
    %v5354 = vand.u32 %v49, 4294901760
    %5355 = vmatprep.subr.mxu0 %v5354
    %v5356 = vand.u32 %v48, 4294901760
    %5357 = vmatpush1.msra.mxu0 %v5356
    %v5358 = vand.u32 %v51, 4294901760
    %5359 = vmatprep.subr.mxu0 %v5358
    %v5360 = vand.u32 %v50, 4294901760
    %5361 = vmatpush1.msra.mxu0 %v5360
    %v5362 = vand.u32 %v53, 4294901760
    %5363 = vmatprep.subr.mxu0 %v5362
    %v5364 = vand.u32 %v52, 4294901760
    %5365 = vmatpush1.msra.mxu0 %v5364
    %5366 = vmatprep.subr.mxu0 0.0
    %5367 = vmatpush1.msra.mxu0 0.0
    %5368 = vmatprep.subr.mxu0 0.0
    %5369 = vmatpush1.msra.mxu0 0.0
    %5370 = vmatprep.subr.mxu0 0.0
    %5371 = vmatpush1.msra.mxu0 0.0
    %5372 = vmatprep.subr.mxu0 0.0
    %5373 = vmatpush1.msra.mxu0 0.0
    %5374 = vmatprep.subr.mxu0 0.0
    %5375 = vmatpush1.msra.mxu0 0.0
    %5376 = vmatprep.subr.mxu0 0.0
    %5377 = vmatpush1.msra.mxu0 0.0
    %5378 = vmatprep.subr.mxu0 0.0
    %5379 = vmatpush1.msra.mxu0 0.0
    %5380 = vmatprep.subr.mxu0 0.0
    %5381 = vmatpush1.msra.mxu0 0.0
    %5382 = vmatprep.subr.mxu0 0.0
    %5383 = vmatpush1.msra.mxu0 0.0
    %5384 = vmatprep.subr.mxu0 0.0
    %5385 = vmatpush1.msra.mxu0 0.0
    %5386 = vmatprep.subr.mxu0 0.0
    %5387 = vmatpush1.msra.mxu0 0.0
    %5388 = vmatprep.subr.mxu0 0.0
    %5389 = vmatpush1.msra.mxu0 0.0
    %5390 = vmatprep.subr.mxu0 0.0
    %5391 = vmatpush1.msra.mxu0 0.0
    %5392 = vmatprep.subr.mxu0 0.0
    %5393 = vmatpush1.msra.mxu0 0.0
    %5394 = vmatprep.subr.mxu0 0.0
    %5395 = vmatpush1.msra.mxu0 0.0
    %5396 = vmatprep.subr.mxu0 0.0
    %5397 = vmatpush1.msra.mxu0 0.0
    %5398 = vmatprep.subr.mxu0 0.0
    %5399 = vmatpush1.msra.mxu0 0.0
    %5400 = vmatprep.subr.mxu0 0.0
    %5401 = vmatpush1.msra.mxu0 0.0
    %5402 = vmatprep.subr.mxu0 0.0
    %5403 = vmatpush1.msra.mxu0 0.0
    %5404 = vmatprep.subr.mxu0 0.0
    %5405 = vmatpush1.msra.mxu0 0.0
    %5406 = vmatprep.subr.mxu0 0.0
    %5407 = vmatpush1.msra.mxu0 0.0
    %5408 = vmatprep.subr.mxu0 0.0
    %5409 = vmatpush1.msra.mxu0 0.0
    %5410 = vmatprep.subr.mxu0 0.0
    %5411 = vmatpush1.msra.mxu0 0.0
    %5412 = vmatprep.subr.mxu0 0.0
    %5413 = vmatpush1.msra.mxu0 0.0
    %5414 = vmatprep.mubr.f32.mxu0 0.0
    %v5415 = vand.u32 %v4773, 4294901760
    %5416 = vmatmul.mubr.f32.gmra.mrb[0].mxu0 %v5415
    %v5417 = vpop.f32.mrb[0].mxu0
    %v5418 = vadd.f32 %v5330, %v5417
    %v5419 = vpop.f32.mrb[0].mxu0
    %v5420 = vadd.f32 %v5332, %v5419
    %5421 = vdwg.mxu0
    %v5422 = vxor.u32 %v5418, 2147483648
    %v5423 = vmul.f32 %v5422, 1.442695
    %v5424 = vpow.pop %v5423
    %v5425 = vadd.f32 %v5424, 1.0
    %v5426 = vrcp.pop %v5425
    %v5427 = vmul.f32 1.0, %v5426
    %v5428 = vtanh.pop %v5420
    %v5429 = vxor.u32 %v5420, 2147483648
    %v5430 = vmul.f32 %v5429, 1.442695
    %v5431 = vpow.pop %v5430
    %v5432 = vadd.f32 %v5431, 1.0
    %v5433 = vrcp.pop %v5432
    %v5434 = vmul.f32 1.0, %v5433
    %v5435 = vsel %vm663, %v5428, %v5434
    %v5436 = vmul.f32 %v5427, %v4763
    %v5437 = vmul.f32 %v5427, %v5435
    %5439 = vrot.lane.b32.xlu0 %v5437, 64
    %v5440 = vpop.permute.xlu0 %5439
    %v5442 = vadd.f32 %v5436, %v5440
    %v5443 = vtanh.pop %v5442
    %v5444 = vmul.f32 %v5435, %v5443
    %5446 = vrot.lane.b32.xlu0 %v5444, 64
    %v5447 = vpop.permute.xlu0 %5446
    %v5448 = vsel %vm696, %v5447, 0
    %v5450 = vand.u32 %v39, 4294901760
    %5451 = vmatprep.subr.mxu0 %v5450
    %v5452 = vand.u32 %v38, 4294901760
    %5453 = vmatpush1.msra.mxu0 %v5452
    %v5454 = vand.u32 %v41, 4294901760
    %5455 = vmatprep.subr.mxu0 %v5454
    %v5456 = vand.u32 %v40, 4294901760
    %5457 = vmatpush1.msra.mxu0 %v5456
    %v5458 = vand.u32 %v43, 4294901760
    %5459 = vmatprep.subr.mxu0 %v5458
    %v5460 = vand.u32 %v42, 4294901760
    %5461 = vmatpush1.msra.mxu0 %v5460
    %v5462 = vand.u32 %v45, 4294901760
    %5463 = vmatprep.subr.mxu0 %v5462
    %v5464 = vand.u32 %v44, 4294901760
    %5465 = vmatpush1.msra.mxu0 %v5464
    %v5466 = vand.u32 %v47, 4294901760
    %5467 = vmatprep.subr.mxu0 %v5466
    %v5468 = vand.u32 %v46, 4294901760
    %5469 = vmatpush1.msra.mxu0 %v5468
    %v5470 = vand.u32 %v49, 4294901760
    %5471 = vmatprep.subr.mxu0 %v5470
    %v5472 = vand.u32 %v48, 4294901760
    %5473 = vmatpush1.msra.mxu0 %v5472
    %v5474 = vand.u32 %v51, 4294901760
    %5475 = vmatprep.subr.mxu0 %v5474
    %v5476 = vand.u32 %v50, 4294901760
    %5477 = vmatpush1.msra.mxu0 %v5476
    %v5478 = vand.u32 %v53, 4294901760
    %5479 = vmatprep.subr.mxu0 %v5478
    %v5480 = vand.u32 %v52, 4294901760
    %5481 = vmatpush1.msra.mxu0 %v5480
    %5482 = vmatprep.subr.mxu0 0.0
    %5483 = vmatpush1.msra.mxu0 0.0
    %5484 = vmatprep.subr.mxu0 0.0
    %5485 = vmatpush1.msra.mxu0 0.0
    %5486 = vmatprep.subr.mxu0 0.0
    %5487 = vmatpush1.msra.mxu0 0.0
    %5488 = vmatprep.subr.mxu0 0.0
    %5489 = vmatpush1.msra.mxu0 0.0
    %5490 = vmatprep.subr.mxu0 0.0
    %5491 = vmatpush1.msra.mxu0 0.0
    %5492 = vmatprep.subr.mxu0 0.0
    %5493 = vmatpush1.msra.mxu0 0.0
    %5494 = vmatprep.subr.mxu0 0.0
    %5495 = vmatpush1.msra.mxu0 0.0
    %5496 = vmatprep.subr.mxu0 0.0
    %5497 = vmatpush1.msra.mxu0 0.0
    %5498 = vmatprep.subr.mxu0 0.0
    %5499 = vmatpush1.msra.mxu0 0.0
    %5500 = vmatprep.subr.mxu0 0.0
    %5501 = vmatpush1.msra.mxu0 0.0
    %5502 = vmatprep.subr.mxu0 0.0
    %5503 = vmatpush1.msra.mxu0 0.0
    %5504 = vmatprep.subr.mxu0 0.0
    %5505 = vmatpush1.msra.mxu0 0.0
    %5506 = vmatprep.subr.mxu0 0.0
    %5507 = vmatpush1.msra.mxu0 0.0
    %5508 = vmatprep.subr.mxu0 0.0
    %5509 = vmatpush1.msra.mxu0 0.0
    %5510 = vmatprep.subr.mxu0 0.0
    %5511 = vmatpush1.msra.mxu0 0.0
    %5512 = vmatprep.subr.mxu0 0.0
    %5513 = vmatpush1.msra.mxu0 0.0
    %5514 = vmatprep.subr.mxu0 0.0
    %5515 = vmatpush1.msra.mxu0 0.0
    %5516 = vmatprep.subr.mxu0 0.0
    %5517 = vmatpush1.msra.mxu0 0.0
    %5518 = vmatprep.subr.mxu0 0.0
    %5519 = vmatpush1.msra.mxu0 0.0
    %5520 = vmatprep.subr.mxu0 0.0
    %5521 = vmatpush1.msra.mxu0 0.0
    %5522 = vmatprep.subr.mxu0 0.0
    %5523 = vmatpush1.msra.mxu0 0.0
    %5524 = vmatprep.subr.mxu0 0.0
    %5525 = vmatpush1.msra.mxu0 0.0
    %5526 = vmatprep.subr.mxu0 0.0
    %5527 = vmatpush1.msra.mxu0 0.0
    %5528 = vmatprep.subr.mxu0 0.0
    %5529 = vmatpush1.msra.mxu0 0.0
    %5530 = vmatprep.mubr.f32.mxu0 0.0
    %v5531 = vand.u32 %v5448, 4294901760
    %v5532 = vsub.f32 %v5448, %v5531
    %v5533 = vand.u32 %v5532, 4294901760
    %v5534 = vsub.f32 %v5532, %v5533
    %v5535 = vand.u32 %v5534, 4294901760
    %5536 = vmatmul.mubr.f32.gmra.mrb[0].mxu0 %v5535
    %v5537 = vpop.f32.mrb[0].mxu0
    %v5538 = vadd.f32 %v657, %v5537
    %v5539 = vpop.f32.mrb[0].mxu0
    %v5540 = vadd.f32 %v659, %v5539
    %5541 = vdwg.mxu0
    %v5542 = vand.u32 %v39, 4294901760
    %v5543 = vsub.f32 %v39, %v5542
    %v5544 = vand.u32 %v5543, 4294901760
    %v5545 = vsub.f32 %v5543, %v5544
    %v5546 = vand.u32 %v5545, 4294901760
    %5547 = vmatprep.subr.mxu0 %v5546
    %v5548 = vand.u32 %v38, 4294901760
    %v5549 = vsub.f32 %v38, %v5548
    %v5550 = vand.u32 %v5549, 4294901760
    %v5551 = vsub.f32 %v5549, %v5550
    %v5552 = vand.u32 %v5551, 4294901760
    %5553 = vmatpush1.msra.mxu0 %v5552
    %v5554 = vand.u32 %v41, 4294901760
    %v5555 = vsub.f32 %v41, %v5554
    %v5556 = vand.u32 %v5555, 4294901760
    %v5557 = vsub.f32 %v5555, %v5556
    %v5558 = vand.u32 %v5557, 4294901760
    %5559 = vmatprep.subr.mxu0 %v5558
    %v5560 = vand.u32 %v40, 4294901760
    %v5561 = vsub.f32 %v40, %v5560
    %v5562 = vand.u32 %v5561, 4294901760
    %v5563 = vsub.f32 %v5561, %v5562
    %v5564 = vand.u32 %v5563, 4294901760
    %5565 = vmatpush1.msra.mxu0 %v5564
    %v5566 = vand.u32 %v43, 4294901760
    %v5567 = vsub.f32 %v43, %v5566
    %v5568 = vand.u32 %v5567, 4294901760
    %v5569 = vsub.f32 %v5567, %v5568
    %v5570 = vand.u32 %v5569, 4294901760
    %5571 = vmatprep.subr.mxu0 %v5570
    %v5572 = vand.u32 %v42, 4294901760
    %v5573 = vsub.f32 %v42, %v5572
    %v5574 = vand.u32 %v5573, 4294901760
    %v5575 = vsub.f32 %v5573, %v5574
    %v5576 = vand.u32 %v5575, 4294901760
    %5577 = vmatpush1.msra.mxu0 %v5576
    %v5578 = vand.u32 %v45, 4294901760
    %v5579 = vsub.f32 %v45, %v5578
    %v5580 = vand.u32 %v5579, 4294901760
    %v5581 = vsub.f32 %v5579, %v5580
    %v5582 = vand.u32 %v5581, 4294901760
    %5583 = vmatprep.subr.mxu0 %v5582
    %v5584 = vand.u32 %v44, 4294901760
    %v5585 = vsub.f32 %v44, %v5584
    %v5586 = vand.u32 %v5585, 4294901760
    %v5587 = vsub.f32 %v5585, %v5586
    %v5588 = vand.u32 %v5587, 4294901760
    %5589 = vmatpush1.msra.mxu0 %v5588
    %v5590 = vand.u32 %v47, 4294901760
    %v5591 = vsub.f32 %v47, %v5590
    %v5592 = vand.u32 %v5591, 4294901760
    %v5593 = vsub.f32 %v5591, %v5592
    %v5594 = vand.u32 %v5593, 4294901760
    %5595 = vmatprep.subr.mxu0 %v5594
    %v5596 = vand.u32 %v46, 4294901760
    %v5597 = vsub.f32 %v46, %v5596
    %v5598 = vand.u32 %v5597, 4294901760
    %v5599 = vsub.f32 %v5597, %v5598
    %v5600 = vand.u32 %v5599, 4294901760
    %5601 = vmatpush1.msra.mxu0 %v5600
    %v5602 = vand.u32 %v49, 4294901760
    %v5603 = vsub.f32 %v49, %v5602
    %v5604 = vand.u32 %v5603, 4294901760
    %v5605 = vsub.f32 %v5603, %v5604
    %v5606 = vand.u32 %v5605, 4294901760
    %5607 = vmatprep.subr.mxu0 %v5606
    %v5608 = vand.u32 %v48, 4294901760
    %v5609 = vsub.f32 %v48, %v5608
    %v5610 = vand.u32 %v5609, 4294901760
    %v5611 = vsub.f32 %v5609, %v5610
    %v5612 = vand.u32 %v5611, 4294901760
    %5613 = vmatpush1.msra.mxu0 %v5612
    %v5614 = vand.u32 %v51, 4294901760
    %v5615 = vsub.f32 %v51, %v5614
    %v5616 = vand.u32 %v5615, 4294901760
    %v5617 = vsub.f32 %v5615, %v5616
    %v5618 = vand.u32 %v5617, 4294901760
    %5619 = vmatprep.subr.mxu0 %v5618
    %v5620 = vand.u32 %v50, 4294901760
    %v5621 = vsub.f32 %v50, %v5620
    %v5622 = vand.u32 %v5621, 4294901760
    %v5623 = vsub.f32 %v5621, %v5622
    %v5624 = vand.u32 %v5623, 4294901760
    %5625 = vmatpush1.msra.mxu0 %v5624
    %v5626 = vand.u32 %v53, 4294901760
    %v5627 = vsub.f32 %v53, %v5626
    %v5628 = vand.u32 %v5627, 4294901760
    %v5629 = vsub.f32 %v5627, %v5628
    %v5630 = vand.u32 %v5629, 4294901760
    %5631 = vmatprep.subr.mxu0 %v5630
    %v5632 = vand.u32 %v52, 4294901760
    %v5633 = vsub.f32 %v52, %v5632
    %v5634 = vand.u32 %v5633, 4294901760
    %v5635 = vsub.f32 %v5633, %v5634
    %v5636 = vand.u32 %v5635, 4294901760
    %5637 = vmatpush1.msra.mxu0 %v5636
    %5638 = vmatprep.subr.mxu0 0.0
    %5639 = vmatpush1.msra.mxu0 0.0
    %5640 = vmatprep.subr.mxu0 0.0
    %5641 = vmatpush1.msra.mxu0 0.0
    %5642 = vmatprep.subr.mxu0 0.0
    %5643 = vmatpush1.msra.mxu0 0.0
    %5644 = vmatprep.subr.mxu0 0.0
    %5645 = vmatpush1.msra.mxu0 0.0
    %5646 = vmatprep.subr.mxu0 0.0
    %5647 = vmatpush1.msra.mxu0 0.0
    %5648 = vmatprep.subr.mxu0 0.0
    %5649 = vmatpush1.msra.mxu0 0.0
    %5650 = vmatprep.subr.mxu0 0.0
    %5651 = vmatpush1.msra.mxu0 0.0
    %5652 = vmatprep.subr.mxu0 0.0
    %5653 = vmatpush1.msra.mxu0 0.0
    %5654 = vmatprep.subr.mxu0 0.0
    %5655 = vmatpush1.msra.mxu0 0.0
    %5656 = vmatprep.subr.mxu0 0.0
    %5657 = vmatpush1.msra.mxu0 0.0
    %5658 = vmatprep.subr.mxu0 0.0
    %5659 = vmatpush1.msra.mxu0 0.0
    %5660 = vmatprep.subr.mxu0 0.0
    %5661 = vmatpush1.msra.mxu0 0.0
    %5662 = vmatprep.subr.mxu0 0.0
    %5663 = vmatpush1.msra.mxu0 0.0
    %5664 = vmatprep.subr.mxu0 0.0
    %5665 = vmatpush1.msra.mxu0 0.0
    %5666 = vmatprep.subr.mxu0 0.0
    %5667 = vmatpush1.msra.mxu0 0.0
    %5668 = vmatprep.subr.mxu0 0.0
    %5669 = vmatpush1.msra.mxu0 0.0
    %5670 = vmatprep.subr.mxu0 0.0
    %5671 = vmatpush1.msra.mxu0 0.0
    %5672 = vmatprep.subr.mxu0 0.0
    %5673 = vmatpush1.msra.mxu0 0.0
    %5674 = vmatprep.subr.mxu0 0.0
    %5675 = vmatpush1.msra.mxu0 0.0
    %5676 = vmatprep.subr.mxu0 0.0
    %5677 = vmatpush1.msra.mxu0 0.0
    %5678 = vmatprep.subr.mxu0 0.0
    %5679 = vmatpush1.msra.mxu0 0.0
    %5680 = vmatprep.subr.mxu0 0.0
    %5681 = vmatpush1.msra.mxu0 0.0
    %5682 = vmatprep.subr.mxu0 0.0
    %5683 = vmatpush1.msra.mxu0 0.0
    %5684 = vmatprep.subr.mxu0 0.0
    %5685 = vmatpush1.msra.mxu0 0.0
    %5686 = vmatprep.mubr.f32.mxu0 0.0
    %v5687 = vand.u32 %v5448, 4294901760
    %5688 = vmatmul.mubr.f32.gmra.mrb[0].mxu0 %v5687
    %v5689 = vpop.f32.mrb[0].mxu0
    %v5690 = vadd.f32 %v5538, %v5689
    %v5691 = vpop.f32.mrb[0].mxu0
    %v5692 = vadd.f32 %v5540, %v5691
    %5693 = vdwg.mxu0
    %v5694 = vand.u32 %v39, 4294901760
    %v5695 = vsub.f32 %v39, %v5694
    %5696 = vmatprep.subr.mxu0 %v5695
    %v5697 = vand.u32 %v38, 4294901760
    %v5698 = vsub.f32 %v38, %v5697
    %5699 = vmatpush1.msra.mxu0 %v5698
    %v5700 = vand.u32 %v41, 4294901760
    %v5701 = vsub.f32 %v41, %v5700
    %5702 = vmatprep.subr.mxu0 %v5701
    %v5703 = vand.u32 %v40, 4294901760
    %v5704 = vsub.f32 %v40, %v5703
    %5705 = vmatpush1.msra.mxu0 %v5704
    %v5706 = vand.u32 %v43, 4294901760
    %v5707 = vsub.f32 %v43, %v5706
    %5708 = vmatprep.subr.mxu0 %v5707
    %v5709 = vand.u32 %v42, 4294901760
    %v5710 = vsub.f32 %v42, %v5709
    %5711 = vmatpush1.msra.mxu0 %v5710
    %v5712 = vand.u32 %v45, 4294901760
    %v5713 = vsub.f32 %v45, %v5712
    %5714 = vmatprep.subr.mxu0 %v5713
    %v5715 = vand.u32 %v44, 4294901760
    %v5716 = vsub.f32 %v44, %v5715
    %5717 = vmatpush1.msra.mxu0 %v5716
    %v5718 = vand.u32 %v47, 4294901760
    %v5719 = vsub.f32 %v47, %v5718
    %5720 = vmatprep.subr.mxu0 %v5719
    %v5721 = vand.u32 %v46, 4294901760
    %v5722 = vsub.f32 %v46, %v5721
    %5723 = vmatpush1.msra.mxu0 %v5722
    %v5724 = vand.u32 %v49, 4294901760
    %v5725 = vsub.f32 %v49, %v5724
    %5726 = vmatprep.subr.mxu0 %v5725
    %v5727 = vand.u32 %v48, 4294901760
    %v5728 = vsub.f32 %v48, %v5727
    %5729 = vmatpush1.msra.mxu0 %v5728
    %v5730 = vand.u32 %v51, 4294901760
    %v5731 = vsub.f32 %v51, %v5730
    %5732 = vmatprep.subr.mxu0 %v5731
    %v5733 = vand.u32 %v50, 4294901760
    %v5734 = vsub.f32 %v50, %v5733
    %5735 = vmatpush1.msra.mxu0 %v5734
    %v5736 = vand.u32 %v53, 4294901760
    %v5737 = vsub.f32 %v53, %v5736
    %5738 = vmatprep.subr.mxu0 %v5737
    %v5739 = vand.u32 %v52, 4294901760
    %v5740 = vsub.f32 %v52, %v5739
    %5741 = vmatpush1.msra.mxu0 %v5740
    %5742 = vmatprep.subr.mxu0 0.0
    %5743 = vmatpush1.msra.mxu0 0.0
    %5744 = vmatprep.subr.mxu0 0.0
    %5745 = vmatpush1.msra.mxu0 0.0
    %5746 = vmatprep.subr.mxu0 0.0
    %5747 = vmatpush1.msra.mxu0 0.0
    %5748 = vmatprep.subr.mxu0 0.0
    %5749 = vmatpush1.msra.mxu0 0.0
    %5750 = vmatprep.subr.mxu0 0.0
    %5751 = vmatpush1.msra.mxu0 0.0
    %5752 = vmatprep.subr.mxu0 0.0
    %5753 = vmatpush1.msra.mxu0 0.0
    %5754 = vmatprep.subr.mxu0 0.0
    %5755 = vmatpush1.msra.mxu0 0.0
    %5756 = vmatprep.subr.mxu0 0.0
    %5757 = vmatpush1.msra.mxu0 0.0
    %5758 = vmatprep.subr.mxu0 0.0
    %5759 = vmatpush1.msra.mxu0 0.0
    %5760 = vmatprep.subr.mxu0 0.0
    %5761 = vmatpush1.msra.mxu0 0.0
    %5762 = vmatprep.subr.mxu0 0.0
    %5763 = vmatpush1.msra.mxu0 0.0
    %5764 = vmatprep.subr.mxu0 0.0
    %5765 = vmatpush1.msra.mxu0 0.0
    %5766 = vmatprep.subr.mxu0 0.0
    %5767 = vmatpush1.msra.mxu0 0.0
    %5768 = vmatprep.subr.mxu0 0.0
    %5769 = vmatpush1.msra.mxu0 0.0
    %5770 = vmatprep.subr.mxu0 0.0
    %5771 = vmatpush1.msra.mxu0 0.0
    %5772 = vmatprep.subr.mxu0 0.0
    %5773 = vmatpush1.msra.mxu0 0.0
    %5774 = vmatprep.subr.mxu0 0.0
    %5775 = vmatpush1.msra.mxu0 0.0
    %5776 = vmatprep.subr.mxu0 0.0
    %5777 = vmatpush1.msra.mxu0 0.0
    %5778 = vmatprep.subr.mxu0 0.0
    %5779 = vmatpush1.msra.mxu0 0.0
    %5780 = vmatprep.subr.mxu0 0.0
    %5781 = vmatpush1.msra.mxu0 0.0
    %5782 = vmatprep.subr.mxu0 0.0
    %5783 = vmatpush1.msra.mxu0 0.0
    %5784 = vmatprep.subr.mxu0 0.0
    %5785 = vmatpush1.msra.mxu0 0.0
    %5786 = vmatprep.subr.mxu0 0.0
    %5787 = vmatpush1.msra.mxu0 0.0
    %5788 = vmatprep.subr.mxu0 0.0
    %5789 = vmatpush1.msra.mxu0 0.0
    %5790 = vmatprep.mubr.f32.mxu0 0.0
    %v5791 = vand.u32 %v5448, 4294901760
    %v5792 = vsub.f32 %v5448, %v5791
    %5793 = vmatmul.mubr.f32.gmra.mrb[0].mxu0 %v5792
    %v5794 = vpop.f32.mrb[0].mxu0
    %v5795 = vadd.f32 %v5690, %v5794
    %v5796 = vpop.f32.mrb[0].mxu0
    %v5797 = vadd.f32 %v5692, %v5796
    %5798 = vdwg.mxu0
    %v5799 = vand.u32 %v39, 4294901760
    %5800 = vmatprep.subr.mxu0 %v5799
    %v5801 = vand.u32 %v38, 4294901760
    %5802 = vmatpush1.msra.mxu0 %v5801
    %v5803 = vand.u32 %v41, 4294901760
    %5804 = vmatprep.subr.mxu0 %v5803
    %v5805 = vand.u32 %v40, 4294901760
    %5806 = vmatpush1.msra.mxu0 %v5805
    %v5807 = vand.u32 %v43, 4294901760
    %5808 = vmatprep.subr.mxu0 %v5807
    %v5809 = vand.u32 %v42, 4294901760
    %5810 = vmatpush1.msra.mxu0 %v5809
    %v5811 = vand.u32 %v45, 4294901760
    %5812 = vmatprep.subr.mxu0 %v5811
    %v5813 = vand.u32 %v44, 4294901760
    %5814 = vmatpush1.msra.mxu0 %v5813
    %v5815 = vand.u32 %v47, 4294901760
    %5816 = vmatprep.subr.mxu0 %v5815
    %v5817 = vand.u32 %v46, 4294901760
    %5818 = vmatpush1.msra.mxu0 %v5817
    %v5819 = vand.u32 %v49, 4294901760
    %5820 = vmatprep.subr.mxu0 %v5819
    %v5821 = vand.u32 %v48, 4294901760
    %5822 = vmatpush1.msra.mxu0 %v5821
    %v5823 = vand.u32 %v51, 4294901760
    %5824 = vmatprep.subr.mxu0 %v5823
    %v5825 = vand.u32 %v50, 4294901760
    %5826 = vmatpush1.msra.mxu0 %v5825
    %v5827 = vand.u32 %v53, 4294901760
    %5828 = vmatprep.subr.mxu0 %v5827
    %v5829 = vand.u32 %v52, 4294901760
    %5830 = vmatpush1.msra.mxu0 %v5829
    %5831 = vmatprep.subr.mxu0 0.0
    %5832 = vmatpush1.msra.mxu0 0.0
    %5833 = vmatprep.subr.mxu0 0.0
    %5834 = vmatpush1.msra.mxu0 0.0
    %5835 = vmatprep.subr.mxu0 0.0
    %5836 = vmatpush1.msra.mxu0 0.0
    %5837 = vmatprep.subr.mxu0 0.0
    %5838 = vmatpush1.msra.mxu0 0.0
    %5839 = vmatprep.subr.mxu0 0.0
    %5840 = vmatpush1.msra.mxu0 0.0
    %5841 = vmatprep.subr.mxu0 0.0
    %5842 = vmatpush1.msra.mxu0 0.0
    %5843 = vmatprep.subr.mxu0 0.0
    %5844 = vmatpush1.msra.mxu0 0.0
    %5845 = vmatprep.subr.mxu0 0.0
    %5846 = vmatpush1.msra.mxu0 0.0
    %5847 = vmatprep.subr.mxu0 0.0
    %5848 = vmatpush1.msra.mxu0 0.0
    %5849 = vmatprep.subr.mxu0 0.0
    %5850 = vmatpush1.msra.mxu0 0.0
    %5851 = vmatprep.subr.mxu0 0.0
    %5852 = vmatpush1.msra.mxu0 0.0
    %5853 = vmatprep.subr.mxu0 0.0
    %5854 = vmatpush1.msra.mxu0 0.0
    %5855 = vmatprep.subr.mxu0 0.0
    %5856 = vmatpush1.msra.mxu0 0.0
    %5857 = vmatprep.subr.mxu0 0.0
    %5858 = vmatpush1.msra.mxu0 0.0
    %5859 = vmatprep.subr.mxu0 0.0
    %5860 = vmatpush1.msra.mxu0 0.0
    %5861 = vmatprep.subr.mxu0 0.0
    %5862 = vmatpush1.msra.mxu0 0.0
    %5863 = vmatprep.subr.mxu0 0.0
    %5864 = vmatpush1.msra.mxu0 0.0
    %5865 = vmatprep.subr.mxu0 0.0
    %5866 = vmatpush1.msra.mxu0 0.0
    %5867 = vmatprep.subr.mxu0 0.0
    %5868 = vmatpush1.msra.mxu0 0.0
    %5869 = vmatprep.subr.mxu0 0.0
    %5870 = vmatpush1.msra.mxu0 0.0
    %5871 = vmatprep.subr.mxu0 0.0
    %5872 = vmatpush1.msra.mxu0 0.0
    %5873 = vmatprep.subr.mxu0 0.0
    %5874 = vmatpush1.msra.mxu0 0.0
    %5875 = vmatprep.subr.mxu0 0.0
    %5876 = vmatpush1.msra.mxu0 0.0
    %5877 = vmatprep.subr.mxu0 0.0
    %5878 = vmatpush1.msra.mxu0 0.0
    %5879 = vmatprep.mubr.f32.mxu0 0.0
    %v5880 = vand.u32 %v5448, 4294901760
    %v5881 = vsub.f32 %v5448, %v5880
    %v5882 = vand.u32 %v5881, 4294901760
    %5883 = vmatmul.mubr.f32.gmra.mrb[0].mxu0 %v5882
    %v5884 = vpop.f32.mrb[0].mxu0
    %v5885 = vadd.f32 %v5795, %v5884
    %v5886 = vpop.f32.mrb[0].mxu0
    %v5887 = vadd.f32 %v5797, %v5886
    %5888 = vdwg.mxu0
    %v5889 = vand.u32 %v39, 4294901760
    %v5890 = vsub.f32 %v39, %v5889
    %v5891 = vand.u32 %v5890, 4294901760
    %5892 = vmatprep.subr.mxu0 %v5891
    %v5893 = vand.u32 %v38, 4294901760
    %v5894 = vsub.f32 %v38, %v5893
    %v5895 = vand.u32 %v5894, 4294901760
    %5896 = vmatpush1.msra.mxu0 %v5895
    %v5897 = vand.u32 %v41, 4294901760
    %v5898 = vsub.f32 %v41, %v5897
    %v5899 = vand.u32 %v5898, 4294901760
    %5900 = vmatprep.subr.mxu0 %v5899
    %v5901 = vand.u32 %v40, 4294901760
    %v5902 = vsub.f32 %v40, %v5901
    %v5903 = vand.u32 %v5902, 4294901760
    %5904 = vmatpush1.msra.mxu0 %v5903
    %v5905 = vand.u32 %v43, 4294901760
    %v5906 = vsub.f32 %v43, %v5905
    %v5907 = vand.u32 %v5906, 4294901760
    %5908 = vmatprep.subr.mxu0 %v5907
    %v5909 = vand.u32 %v42, 4294901760
    %v5910 = vsub.f32 %v42, %v5909
    %v5911 = vand.u32 %v5910, 4294901760
    %5912 = vmatpush1.msra.mxu0 %v5911
    %v5913 = vand.u32 %v45, 4294901760
    %v5914 = vsub.f32 %v45, %v5913
    %v5915 = vand.u32 %v5914, 4294901760
    %5916 = vmatprep.subr.mxu0 %v5915
    %v5917 = vand.u32 %v44, 4294901760
    %v5918 = vsub.f32 %v44, %v5917
    %v5919 = vand.u32 %v5918, 4294901760
    %5920 = vmatpush1.msra.mxu0 %v5919
    %v5921 = vand.u32 %v47, 4294901760
    %v5922 = vsub.f32 %v47, %v5921
    %v5923 = vand.u32 %v5922, 4294901760
    %5924 = vmatprep.subr.mxu0 %v5923
    %v5925 = vand.u32 %v46, 4294901760
    %v5926 = vsub.f32 %v46, %v5925
    %v5927 = vand.u32 %v5926, 4294901760
    %5928 = vmatpush1.msra.mxu0 %v5927
    %v5929 = vand.u32 %v49, 4294901760
    %v5930 = vsub.f32 %v49, %v5929
    %v5931 = vand.u32 %v5930, 4294901760
    %5932 = vmatprep.subr.mxu0 %v5931
    %v5933 = vand.u32 %v48, 4294901760
    %v5934 = vsub.f32 %v48, %v5933
    %v5935 = vand.u32 %v5934, 4294901760
    %5936 = vmatpush1.msra.mxu0 %v5935
    %v5937 = vand.u32 %v51, 4294901760
    %v5938 = vsub.f32 %v51, %v5937
    %v5939 = vand.u32 %v5938, 4294901760
    %5940 = vmatprep.subr.mxu0 %v5939
    %v5941 = vand.u32 %v50, 4294901760
    %v5942 = vsub.f32 %v50, %v5941
    %v5943 = vand.u32 %v5942, 4294901760
    %5944 = vmatpush1.msra.mxu0 %v5943
    %v5945 = vand.u32 %v53, 4294901760
    %v5946 = vsub.f32 %v53, %v5945
    %v5947 = vand.u32 %v5946, 4294901760
    %5948 = vmatprep.subr.mxu0 %v5947
    %v5949 = vand.u32 %v52, 4294901760
    %v5950 = vsub.f32 %v52, %v5949
    %v5951 = vand.u32 %v5950, 4294901760
    %5952 = vmatpush1.msra.mxu0 %v5951
    %5953 = vmatprep.subr.mxu0 0.0
    %5954 = vmatpush1.msra.mxu0 0.0
    %5955 = vmatprep.subr.mxu0 0.0
    %5956 = vmatpush1.msra.mxu0 0.0
    %5957 = vmatprep.subr.mxu0 0.0
    %5958 = vmatpush1.msra.mxu0 0.0
    %5959 = vmatprep.subr.mxu0 0.0
    %5960 = vmatpush1.msra.mxu0 0.0
    %5961 = vmatprep.subr.mxu0 0.0
    %5962 = vmatpush1.msra.mxu0 0.0
    %5963 = vmatprep.subr.mxu0 0.0
    %5964 = vmatpush1.msra.mxu0 0.0
    %5965 = vmatprep.subr.mxu0 0.0
    %5966 = vmatpush1.msra.mxu0 0.0
    %5967 = vmatprep.subr.mxu0 0.0
    %5968 = vmatpush1.msra.mxu0 0.0
    %5969 = vmatprep.subr.mxu0 0.0
    %5970 = vmatpush1.msra.mxu0 0.0
    %5971 = vmatprep.subr.mxu0 0.0
    %5972 = vmatpush1.msra.mxu0 0.0
    %5973 = vmatprep.subr.mxu0 0.0
    %5974 = vmatpush1.msra.mxu0 0.0
    %5975 = vmatprep.subr.mxu0 0.0
    %5976 = vmatpush1.msra.mxu0 0.0
    %5977 = vmatprep.subr.mxu0 0.0
    %5978 = vmatpush1.msra.mxu0 0.0
    %5979 = vmatprep.subr.mxu0 0.0
    %5980 = vmatpush1.msra.mxu0 0.0
    %5981 = vmatprep.subr.mxu0 0.0
    %5982 = vmatpush1.msra.mxu0 0.0
    %5983 = vmatprep.subr.mxu0 0.0
    %5984 = vmatpush1.msra.mxu0 0.0
    %5985 = vmatprep.subr.mxu0 0.0
    %5986 = vmatpush1.msra.mxu0 0.0
    %5987 = vmatprep.subr.mxu0 0.0
    %5988 = vmatpush1.msra.mxu0 0.0
    %5989 = vmatprep.subr.mxu0 0.0
    %5990 = vmatpush1.msra.mxu0 0.0
    %5991 = vmatprep.subr.mxu0 0.0
    %5992 = vmatpush1.msra.mxu0 0.0
    %5993 = vmatprep.subr.mxu0 0.0
    %5994 = vmatpush1.msra.mxu0 0.0
    %5995 = vmatprep.subr.mxu0 0.0
    %5996 = vmatpush1.msra.mxu0 0.0
    %5997 = vmatprep.subr.mxu0 0.0
    %5998 = vmatpush1.msra.mxu0 0.0
    %5999 = vmatprep.subr.mxu0 0.0
    %6000 = vmatpush1.msra.mxu0 0.0
    %6001 = vmatprep.mubr.f32.mxu0 0.0
    %v6002 = vand.u32 %v5448, 4294901760
    %6003 = vmatmul.mubr.f32.gmra.mrb[0].mxu0 %v6002
    %v6004 = vpop.f32.mrb[0].mxu0
    %v6005 = vadd.f32 %v5885, %v6004
    %v6006 = vpop.f32.mrb[0].mxu0
    %v6007 = vadd.f32 %v5887, %v6006
    %6008 = vdwg.mxu0
    %v6009 = vand.u32 %v39, 4294901760
    %6010 = vmatprep.subr.mxu0 %v6009
    %v6011 = vand.u32 %v38, 4294901760
    %6012 = vmatpush1.msra.mxu0 %v6011
    %v6013 = vand.u32 %v41, 4294901760
    %6014 = vmatprep.subr.mxu0 %v6013
    %v6015 = vand.u32 %v40, 4294901760
    %6016 = vmatpush1.msra.mxu0 %v6015
    %v6017 = vand.u32 %v43, 4294901760
    %6018 = vmatprep.subr.mxu0 %v6017
    %v6019 = vand.u32 %v42, 4294901760
    %6020 = vmatpush1.msra.mxu0 %v6019
    %v6021 = vand.u32 %v45, 4294901760
    %6022 = vmatprep.subr.mxu0 %v6021
    %v6023 = vand.u32 %v44, 4294901760
    %6024 = vmatpush1.msra.mxu0 %v6023
    %v6025 = vand.u32 %v47, 4294901760
    %6026 = vmatprep.subr.mxu0 %v6025
    %v6027 = vand.u32 %v46, 4294901760
    %6028 = vmatpush1.msra.mxu0 %v6027
    %v6029 = vand.u32 %v49, 4294901760
    %6030 = vmatprep.subr.mxu0 %v6029
    %v6031 = vand.u32 %v48, 4294901760
    %6032 = vmatpush1.msra.mxu0 %v6031
    %v6033 = vand.u32 %v51, 4294901760
    %6034 = vmatprep.subr.mxu0 %v6033
    %v6035 = vand.u32 %v50, 4294901760
    %6036 = vmatpush1.msra.mxu0 %v6035
    %v6037 = vand.u32 %v53, 4294901760
    %6038 = vmatprep.subr.mxu0 %v6037
    %v6039 = vand.u32 %v52, 4294901760
    %6040 = vmatpush1.msra.mxu0 %v6039
    %6041 = vmatprep.subr.mxu0 0.0
    %6042 = vmatpush1.msra.mxu0 0.0
    %6043 = vmatprep.subr.mxu0 0.0
    %6044 = vmatpush1.msra.mxu0 0.0
    %6045 = vmatprep.subr.mxu0 0.0
    %6046 = vmatpush1.msra.mxu0 0.0
    %6047 = vmatprep.subr.mxu0 0.0
    %6048 = vmatpush1.msra.mxu0 0.0
    %6049 = vmatprep.subr.mxu0 0.0
    %6050 = vmatpush1.msra.mxu0 0.0
    %6051 = vmatprep.subr.mxu0 0.0
    %6052 = vmatpush1.msra.mxu0 0.0
    %6053 = vmatprep.subr.mxu0 0.0
    %6054 = vmatpush1.msra.mxu0 0.0
    %6055 = vmatprep.subr.mxu0 0.0
    %6056 = vmatpush1.msra.mxu0 0.0
    %6057 = vmatprep.subr.mxu0 0.0
    %6058 = vmatpush1.msra.mxu0 0.0
    %6059 = vmatprep.subr.mxu0 0.0
    %6060 = vmatpush1.msra.mxu0 0.0
    %6061 = vmatprep.subr.mxu0 0.0
    %6062 = vmatpush1.msra.mxu0 0.0
    %6063 = vmatprep.subr.mxu0 0.0
    %6064 = vmatpush1.msra.mxu0 0.0
    %6065 = vmatprep.subr.mxu0 0.0
    %6066 = vmatpush1.msra.mxu0 0.0
    %6067 = vmatprep.subr.mxu0 0.0
    %6068 = vmatpush1.msra.mxu0 0.0
    %6069 = vmatprep.subr.mxu0 0.0
    %6070 = vmatpush1.msra.mxu0 0.0
    %6071 = vmatprep.subr.mxu0 0.0
    %6072 = vmatpush1.msra.mxu0 0.0
    %6073 = vmatprep.subr.mxu0 0.0
    %6074 = vmatpush1.msra.mxu0 0.0
    %6075 = vmatprep.subr.mxu0 0.0
    %6076 = vmatpush1.msra.mxu0 0.0
    %6077 = vmatprep.subr.mxu0 0.0
    %6078 = vmatpush1.msra.mxu0 0.0
    %6079 = vmatprep.subr.mxu0 0.0
    %6080 = vmatpush1.msra.mxu0 0.0
    %6081 = vmatprep.subr.mxu0 0.0
    %6082 = vmatpush1.msra.mxu0 0.0
    %6083 = vmatprep.subr.mxu0 0.0
    %6084 = vmatpush1.msra.mxu0 0.0
    %6085 = vmatprep.subr.mxu0 0.0
    %6086 = vmatpush1.msra.mxu0 0.0
    %6087 = vmatprep.subr.mxu0 0.0
    %6088 = vmatpush1.msra.mxu0 0.0
    %6089 = vmatprep.mubr.f32.mxu0 0.0
    %v6090 = vand.u32 %v5448, 4294901760
    %6091 = vmatmul.mubr.f32.gmra.mrb[0].mxu0 %v6090
    %v6092 = vpop.f32.mrb[0].mxu0
    %v6093 = vadd.f32 %v6005, %v6092
    %v6094 = vpop.f32.mrb[0].mxu0
    %v6095 = vadd.f32 %v6007, %v6094
    %6096 = vdwg.mxu0
    %v6097 = vxor.u32 %v6093, 2147483648
    %v6098 = vmul.f32 %v6097, 1.442695
    %v6099 = vpow.pop %v6098
    %v6100 = vadd.f32 %v6099, 1.0
    %v6101 = vrcp.pop %v6100
    %v6102 = vmul.f32 1.0, %v6101
    %v6103 = vtanh.pop %v6095
    %v6104 = vxor.u32 %v6095, 2147483648
    %v6105 = vmul.f32 %v6104, 1.442695
    %v6106 = vpow.pop %v6105
    %v6107 = vadd.f32 %v6106, 1.0
    %v6108 = vrcp.pop %v6107
    %v6109 = vmul.f32 1.0, %v6108
    %v6110 = vsel %vm663, %v6103, %v6109
    %v6111 = vmul.f32 %v6102, %v5442
    %v6112 = vmul.f32 %v6102, %v6110
    %6114 = vrot.lane.b32.xlu0 %v6112, 64
    %v6115 = vpop.permute.xlu0 %6114
    %v6117 = vadd.f32 %v6111, %v6115
    %v6118 = vtanh.pop %v6117
    %v6119 = vmul.f32 %v6110, %v6118
    %6121 = vrot.lane.b32.xlu0 %v6119, 32
    %v6122 = vpop.permute.xlu0 %6121
    %vm6123 = vcmask 261120
    %v6124 = vsel %vm6123, %v6122, 0
    %6126 = vmatprep.subr.mxu0 0.0
    %v6127 = vand.u32 %v54, 4294901760
    %6128 = vmatpush1.msra.mxu0 %v6127
    %6129 = vmatprep.subr.mxu0 0.0
    %v6130 = vand.u32 %v55, 4294901760
    %6131 = vmatpush1.msra.mxu0 %v6130
    %6132 = vmatprep.subr.mxu0 0.0
    %v6133 = vand.u32 %v56, 4294901760
    %6134 = vmatpush1.msra.mxu0 %v6133
    %6135 = vmatprep.subr.mxu0 0.0
    %v6136 = vand.u32 %v57, 4294901760
    %6137 = vmatpush1.msra.mxu0 %v6136
    %6138 = vmatprep.subr.mxu0 0.0
    %6139 = vmatpush1.msra.mxu0 0.0
    %6140 = vmatprep.subr.mxu0 0.0
    %6141 = vmatpush1.msra.mxu0 0.0
    %6142 = vmatprep.subr.mxu0 0.0
    %6143 = vmatpush1.msra.mxu0 0.0
    %6144 = vmatprep.subr.mxu0 0.0
    %6145 = vmatpush1.msra.mxu0 0.0
    %6146 = vmatprep.subr.mxu0 0.0
    %6147 = vmatpush1.msra.mxu0 0.0
    %6148 = vmatprep.subr.mxu0 0.0
    %6149 = vmatpush1.msra.mxu0 0.0
    %6150 = vmatprep.subr.mxu0 0.0
    %6151 = vmatpush1.msra.mxu0 0.0
    %6152 = vmatprep.subr.mxu0 0.0
    %6153 = vmatpush1.msra.mxu0 0.0
    %6154 = vmatprep.subr.mxu0 0.0
    %6155 = vmatpush1.msra.mxu0 0.0
    %6156 = vmatprep.subr.mxu0 0.0
    %6157 = vmatpush1.msra.mxu0 0.0
    %6158 = vmatprep.subr.mxu0 0.0
    %6159 = vmatpush1.msra.mxu0 0.0
    %6160 = vmatprep.subr.mxu0 0.0
    %6161 = vmatpush1.msra.mxu0 0.0
    %6162 = vmatprep.subr.mxu0 0.0
    %6163 = vmatpush1.msra.mxu0 0.0
    %6164 = vmatprep.subr.mxu0 0.0
    %6165 = vmatpush1.msra.mxu0 0.0
    %6166 = vmatprep.subr.mxu0 0.0
    %6167 = vmatpush1.msra.mxu0 0.0
    %6168 = vmatprep.subr.mxu0 0.0
    %6169 = vmatpush1.msra.mxu0 0.0
    %6170 = vmatprep.subr.mxu0 0.0
    %6171 = vmatpush1.msra.mxu0 0.0
    %6172 = vmatprep.subr.mxu0 0.0
    %6173 = vmatpush1.msra.mxu0 0.0
    %6174 = vmatprep.subr.mxu0 0.0
    %6175 = vmatpush1.msra.mxu0 0.0
    %6176 = vmatprep.subr.mxu0 0.0
    %6177 = vmatpush1.msra.mxu0 0.0
    %6178 = vmatprep.subr.mxu0 0.0
    %6179 = vmatpush1.msra.mxu0 0.0
    %6180 = vmatprep.subr.mxu0 0.0
    %6181 = vmatpush1.msra.mxu0 0.0
    %6182 = vmatprep.subr.mxu0 0.0
    %6183 = vmatpush1.msra.mxu0 0.0
    %6184 = vmatprep.subr.mxu0 0.0
    %6185 = vmatpush1.msra.mxu0 0.0
    %6186 = vmatprep.subr.mxu0 0.0
    %6187 = vmatpush1.msra.mxu0 0.0
    %6188 = vmatprep.subr.mxu0 0.0
    %6189 = vmatpush1.msra.mxu0 0.0
    %6190 = vmatprep.subr.mxu0 0.0
    %6191 = vmatpush1.msra.mxu0 0.0
    %6192 = vmatprep.subr.mxu0 0.0
    %6193 = vmatpush1.msra.mxu0 0.0
    %6194 = vmatprep.mubr.f32.mxu0 0.0
    %v6195 = vand.u32 %v6124, 4294901760
    %v6196 = vsub.f32 %v6124, %v6195
    %v6197 = vand.u32 %v6196, 4294901760
    %v6198 = vsub.f32 %v6196, %v6197
    %v6199 = vand.u32 %v6198, 4294901760
    %6200 = vmatmul.mubr.f32.gmra.mrb[0].mxu0 %v6199
    %v6201 = vpop.f32.mrb[0].mxu0
    %v6202 = vadd.f32 %v63, %v6201
    %v6203 = vpop.f32.mrb[0].mxu0
    %6204 = vdwg.mxu0
    %6205 = vmatprep.subr.mxu0 0.0
    %v6206 = vand.u32 %v54, 4294901760
    %v6207 = vsub.f32 %v54, %v6206
    %v6208 = vand.u32 %v6207, 4294901760
    %v6209 = vsub.f32 %v6207, %v6208
    %v6210 = vand.u32 %v6209, 4294901760
    %6211 = vmatpush1.msra.mxu0 %v6210
    %6212 = vmatprep.subr.mxu0 0.0
    %v6213 = vand.u32 %v55, 4294901760
    %v6214 = vsub.f32 %v55, %v6213
    %v6215 = vand.u32 %v6214, 4294901760
    %v6216 = vsub.f32 %v6214, %v6215
    %v6217 = vand.u32 %v6216, 4294901760
    %6218 = vmatpush1.msra.mxu0 %v6217
    %6219 = vmatprep.subr.mxu0 0.0
    %v6220 = vand.u32 %v56, 4294901760
    %v6221 = vsub.f32 %v56, %v6220
    %v6222 = vand.u32 %v6221, 4294901760
    %v6223 = vsub.f32 %v6221, %v6222
    %v6224 = vand.u32 %v6223, 4294901760
    %6225 = vmatpush1.msra.mxu0 %v6224
    %6226 = vmatprep.subr.mxu0 0.0
    %v6227 = vand.u32 %v57, 4294901760
    %v6228 = vsub.f32 %v57, %v6227
    %v6229 = vand.u32 %v6228, 4294901760
    %v6230 = vsub.f32 %v6228, %v6229
    %v6231 = vand.u32 %v6230, 4294901760
    %6232 = vmatpush1.msra.mxu0 %v6231
    %6233 = vmatprep.subr.mxu0 0.0
    %6234 = vmatpush1.msra.mxu0 0.0
    %6235 = vmatprep.subr.mxu0 0.0
    %6236 = vmatpush1.msra.mxu0 0.0
    %6237 = vmatprep.subr.mxu0 0.0
    %6238 = vmatpush1.msra.mxu0 0.0
    %6239 = vmatprep.subr.mxu0 0.0
    %6240 = vmatpush1.msra.mxu0 0.0
    %6241 = vmatprep.subr.mxu0 0.0
    %6242 = vmatpush1.msra.mxu0 0.0
    %6243 = vmatprep.subr.mxu0 0.0
    %6244 = vmatpush1.msra.mxu0 0.0
    %6245 = vmatprep.subr.mxu0 0.0
    %6246 = vmatpush1.msra.mxu0 0.0
    %6247 = vmatprep.subr.mxu0 0.0
    %6248 = vmatpush1.msra.mxu0 0.0
    %6249 = vmatprep.subr.mxu0 0.0
    %6250 = vmatpush1.msra.mxu0 0.0
    %6251 = vmatprep.subr.mxu0 0.0
    %6252 = vmatpush1.msra.mxu0 0.0
    %6253 = vmatprep.subr.mxu0 0.0
    %6254 = vmatpush1.msra.mxu0 0.0
    %6255 = vmatprep.subr.mxu0 0.0
    %6256 = vmatpush1.msra.mxu0 0.0
    %6257 = vmatprep.subr.mxu0 0.0
    %6258 = vmatpush1.msra.mxu0 0.0
    %6259 = vmatprep.subr.mxu0 0.0
    %6260 = vmatpush1.msra.mxu0 0.0
    %6261 = vmatprep.subr.mxu0 0.0
    %6262 = vmatpush1.msra.mxu0 0.0
    %6263 = vmatprep.subr.mxu0 0.0
    %6264 = vmatpush1.msra.mxu0 0.0
    %6265 = vmatprep.subr.mxu0 0.0
    %6266 = vmatpush1.msra.mxu0 0.0
    %6267 = vmatprep.subr.mxu0 0.0
    %6268 = vmatpush1.msra.mxu0 0.0
    %6269 = vmatprep.subr.mxu0 0.0
    %6270 = vmatpush1.msra.mxu0 0.0
    %6271 = vmatprep.subr.mxu0 0.0
    %6272 = vmatpush1.msra.mxu0 0.0
    %6273 = vmatprep.subr.mxu0 0.0
    %6274 = vmatpush1.msra.mxu0 0.0
    %6275 = vmatprep.subr.mxu0 0.0
    %6276 = vmatpush1.msra.mxu0 0.0
    %6277 = vmatprep.subr.mxu0 0.0
    %6278 = vmatpush1.msra.mxu0 0.0
    %6279 = vmatprep.subr.mxu0 0.0
    %6280 = vmatpush1.msra.mxu0 0.0
    %6281 = vmatprep.subr.mxu0 0.0
    %6282 = vmatpush1.msra.mxu0 0.0
    %6283 = vmatprep.subr.mxu0 0.0
    %6284 = vmatpush1.msra.mxu0 0.0
    %6285 = vmatprep.subr.mxu0 0.0
    %6286 = vmatpush1.msra.mxu0 0.0
    %6287 = vmatprep.subr.mxu0 0.0
    %6288 = vmatpush1.msra.mxu0 0.0
    %6289 = vmatprep.mubr.f32.mxu0 0.0
    %v6290 = vand.u32 %v6124, 4294901760
    %6291 = vmatmul.mubr.f32.gmra.mrb[0].mxu0 %v6290
    %v6292 = vpop.f32.mrb[0].mxu0
    %v6293 = vadd.f32 %v6202, %v6292
    %v6294 = vpop.f32.mrb[0].mxu0
    %6295 = vdwg.mxu0
    %6296 = vmatprep.subr.mxu0 0.0
    %v6297 = vand.u32 %v54, 4294901760
    %v6298 = vsub.f32 %v54, %v6297
    %6299 = vmatpush1.msra.mxu0 %v6298
    %6300 = vmatprep.subr.mxu0 0.0
    %v6301 = vand.u32 %v55, 4294901760
    %v6302 = vsub.f32 %v55, %v6301
    %6303 = vmatpush1.msra.mxu0 %v6302
    %6304 = vmatprep.subr.mxu0 0.0
    %v6305 = vand.u32 %v56, 4294901760
    %v6306 = vsub.f32 %v56, %v6305
    %6307 = vmatpush1.msra.mxu0 %v6306
    %6308 = vmatprep.subr.mxu0 0.0
    %v6309 = vand.u32 %v57, 4294901760
    %v6310 = vsub.f32 %v57, %v6309
    %6311 = vmatpush1.msra.mxu0 %v6310
    %6312 = vmatprep.subr.mxu0 0.0
    %6313 = vmatpush1.msra.mxu0 0.0
    %6314 = vmatprep.subr.mxu0 0.0
    %6315 = vmatpush1.msra.mxu0 0.0
    %6316 = vmatprep.subr.mxu0 0.0
    %6317 = vmatpush1.msra.mxu0 0.0
    %6318 = vmatprep.subr.mxu0 0.0
    %6319 = vmatpush1.msra.mxu0 0.0
    %6320 = vmatprep.subr.mxu0 0.0
    %6321 = vmatpush1.msra.mxu0 0.0
    %6322 = vmatprep.subr.mxu0 0.0
    %6323 = vmatpush1.msra.mxu0 0.0
    %6324 = vmatprep.subr.mxu0 0.0
    %6325 = vmatpush1.msra.mxu0 0.0
    %6326 = vmatprep.subr.mxu0 0.0
    %6327 = vmatpush1.msra.mxu0 0.0
    %6328 = vmatprep.subr.mxu0 0.0
    %6329 = vmatpush1.msra.mxu0 0.0
    %6330 = vmatprep.subr.mxu0 0.0
    %6331 = vmatpush1.msra.mxu0 0.0
    %6332 = vmatprep.subr.mxu0 0.0
    %6333 = vmatpush1.msra.mxu0 0.0
    %6334 = vmatprep.subr.mxu0 0.0
    %6335 = vmatpush1.msra.mxu0 0.0
    %6336 = vmatprep.subr.mxu0 0.0
    %6337 = vmatpush1.msra.mxu0 0.0
    %6338 = vmatprep.subr.mxu0 0.0
    %6339 = vmatpush1.msra.mxu0 0.0
    %6340 = vmatprep.subr.mxu0 0.0
    %6341 = vmatpush1.msra.mxu0 0.0
    %6342 = vmatprep.subr.mxu0 0.0
    %6343 = vmatpush1.msra.mxu0 0.0
    %6344 = vmatprep.subr.mxu0 0.0
    %6345 = vmatpush1.msra.mxu0 0.0
    %6346 = vmatprep.subr.mxu0 0.0
    %6347 = vmatpush1.msra.mxu0 0.0
    %6348 = vmatprep.subr.mxu0 0.0
    %6349 = vmatpush1.msra.mxu0 0.0
    %6350 = vmatprep.subr.mxu0 0.0
    %6351 = vmatpush1.msra.mxu0 0.0
    %6352 = vmatprep.subr.mxu0 0.0
    %6353 = vmatpush1.msra.mxu0 0.0
    %6354 = vmatprep.subr.mxu0 0.0
    %6355 = vmatpush1.msra.mxu0 0.0
    %6356 = vmatprep.subr.mxu0 0.0
    %6357 = vmatpush1.msra.mxu0 0.0
    %6358 = vmatprep.subr.mxu0 0.0
    %6359 = vmatpush1.msra.mxu0 0.0
    %6360 = vmatprep.subr.mxu0 0.0
    %6361 = vmatpush1.msra.mxu0 0.0
    %6362 = vmatprep.subr.mxu0 0.0
    %6363 = vmatpush1.msra.mxu0 0.0
    %6364 = vmatprep.subr.mxu0 0.0
    %6365 = vmatpush1.msra.mxu0 0.0
    %6366 = vmatprep.subr.mxu0 0.0
    %6367 = vmatpush1.msra.mxu0 0.0
    %6368 = vmatprep.mubr.f32.mxu0 0.0
    %v6369 = vand.u32 %v6124, 4294901760
    %v6370 = vsub.f32 %v6124, %v6369
    %6371 = vmatmul.mubr.f32.gmra.mrb[0].mxu0 %v6370
    %v6372 = vpop.f32.mrb[0].mxu0
    %v6373 = vadd.f32 %v6293, %v6372
    %v6374 = vpop.f32.mrb[0].mxu0
    %6375 = vdwg.mxu0
    %6376 = vmatprep.subr.mxu0 0.0
    %v6377 = vand.u32 %v54, 4294901760
    %6378 = vmatpush1.msra.mxu0 %v6377
    %6379 = vmatprep.subr.mxu0 0.0
    %v6380 = vand.u32 %v55, 4294901760
    %6381 = vmatpush1.msra.mxu0 %v6380
    %6382 = vmatprep.subr.mxu0 0.0
    %v6383 = vand.u32 %v56, 4294901760
    %6384 = vmatpush1.msra.mxu0 %v6383
    %6385 = vmatprep.subr.mxu0 0.0
    %v6386 = vand.u32 %v57, 4294901760
    %6387 = vmatpush1.msra.mxu0 %v6386
    %6388 = vmatprep.subr.mxu0 0.0
    %6389 = vmatpush1.msra.mxu0 0.0
    %6390 = vmatprep.subr.mxu0 0.0
    %6391 = vmatpush1.msra.mxu0 0.0
    %6392 = vmatprep.subr.mxu0 0.0
    %6393 = vmatpush1.msra.mxu0 0.0
    %6394 = vmatprep.subr.mxu0 0.0
    %6395 = vmatpush1.msra.mxu0 0.0
    %6396 = vmatprep.subr.mxu0 0.0
    %6397 = vmatpush1.msra.mxu0 0.0
    %6398 = vmatprep.subr.mxu0 0.0
    %6399 = vmatpush1.msra.mxu0 0.0
    %6400 = vmatprep.subr.mxu0 0.0
    %6401 = vmatpush1.msra.mxu0 0.0
    %6402 = vmatprep.subr.mxu0 0.0
    %6403 = vmatpush1.msra.mxu0 0.0
    %6404 = vmatprep.subr.mxu0 0.0
    %6405 = vmatpush1.msra.mxu0 0.0
    %6406 = vmatprep.subr.mxu0 0.0
    %6407 = vmatpush1.msra.mxu0 0.0
    %6408 = vmatprep.subr.mxu0 0.0
    %6409 = vmatpush1.msra.mxu0 0.0
    %6410 = vmatprep.subr.mxu0 0.0
    %6411 = vmatpush1.msra.mxu0 0.0
    %6412 = vmatprep.subr.mxu0 0.0
    %6413 = vmatpush1.msra.mxu0 0.0
    %6414 = vmatprep.subr.mxu0 0.0
    %6415 = vmatpush1.msra.mxu0 0.0
    %6416 = vmatprep.subr.mxu0 0.0
    %6417 = vmatpush1.msra.mxu0 0.0
    %6418 = vmatprep.subr.mxu0 0.0
    %6419 = vmatpush1.msra.mxu0 0.0
    %6420 = vmatprep.subr.mxu0 0.0
    %6421 = vmatpush1.msra.mxu0 0.0
    %6422 = vmatprep.subr.mxu0 0.0
    %6423 = vmatpush1.msra.mxu0 0.0
    %6424 = vmatprep.subr.mxu0 0.0
    %6425 = vmatpush1.msra.mxu0 0.0
    %6426 = vmatprep.subr.mxu0 0.0
    %6427 = vmatpush1.msra.mxu0 0.0
    %6428 = vmatprep.subr.mxu0 0.0
    %6429 = vmatpush1.msra.mxu0 0.0
    %6430 = vmatprep.subr.mxu0 0.0
    %6431 = vmatpush1.msra.mxu0 0.0
    %6432 = vmatprep.subr.mxu0 0.0
    %6433 = vmatpush1.msra.mxu0 0.0
    %6434 = vmatprep.subr.mxu0 0.0
    %6435 = vmatpush1.msra.mxu0 0.0
    %6436 = vmatprep.subr.mxu0 0.0
    %6437 = vmatpush1.msra.mxu0 0.0
    %6438 = vmatprep.subr.mxu0 0.0
    %6439 = vmatpush1.msra.mxu0 0.0
    %6440 = vmatprep.subr.mxu0 0.0
    %6441 = vmatpush1.msra.mxu0 0.0
    %6442 = vmatprep.subr.mxu0 0.0
    %6443 = vmatpush1.msra.mxu0 0.0
    %6444 = vmatprep.mubr.f32.mxu0 0.0
    %v6445 = vand.u32 %v6124, 4294901760
    %v6446 = vsub.f32 %v6124, %v6445
    %v6447 = vand.u32 %v6446, 4294901760
    %6448 = vmatmul.mubr.f32.gmra.mrb[0].mxu0 %v6447
    %v6449 = vpop.f32.mrb[0].mxu0
    %v6450 = vadd.f32 %v6373, %v6449
    %v6451 = vpop.f32.mrb[0].mxu0
    %6452 = vdwg.mxu0
    %6453 = vmatprep.subr.mxu0 0.0
    %v6454 = vand.u32 %v54, 4294901760
    %v6455 = vsub.f32 %v54, %v6454
    %v6456 = vand.u32 %v6455, 4294901760
    %6457 = vmatpush1.msra.mxu0 %v6456
    %6458 = vmatprep.subr.mxu0 0.0
    %v6459 = vand.u32 %v55, 4294901760
    %v6460 = vsub.f32 %v55, %v6459
    %v6461 = vand.u32 %v6460, 4294901760
    %6462 = vmatpush1.msra.mxu0 %v6461
    %6463 = vmatprep.subr.mxu0 0.0
    %v6464 = vand.u32 %v56, 4294901760
    %v6465 = vsub.f32 %v56, %v6464
    %v6466 = vand.u32 %v6465, 4294901760
    %6467 = vmatpush1.msra.mxu0 %v6466
    %6468 = vmatprep.subr.mxu0 0.0
    %v6469 = vand.u32 %v57, 4294901760
    %v6470 = vsub.f32 %v57, %v6469
    %v6471 = vand.u32 %v6470, 4294901760
    %6472 = vmatpush1.msra.mxu0 %v6471
    %6473 = vmatprep.subr.mxu0 0.0
    %6474 = vmatpush1.msra.mxu0 0.0
    %6475 = vmatprep.subr.mxu0 0.0
    %6476 = vmatpush1.msra.mxu0 0.0
    %6477 = vmatprep.subr.mxu0 0.0
    %6478 = vmatpush1.msra.mxu0 0.0
    %6479 = vmatprep.subr.mxu0 0.0
    %6480 = vmatpush1.msra.mxu0 0.0
    %6481 = vmatprep.subr.mxu0 0.0
    %6482 = vmatpush1.msra.mxu0 0.0
    %6483 = vmatprep.subr.mxu0 0.0
    %6484 = vmatpush1.msra.mxu0 0.0
    %6485 = vmatprep.subr.mxu0 0.0
    %6486 = vmatpush1.msra.mxu0 0.0
    %6487 = vmatprep.subr.mxu0 0.0
    %6488 = vmatpush1.msra.mxu0 0.0
    %6489 = vmatprep.subr.mxu0 0.0
    %6490 = vmatpush1.msra.mxu0 0.0
    %6491 = vmatprep.subr.mxu0 0.0
    %6492 = vmatpush1.msra.mxu0 0.0
    %6493 = vmatprep.subr.mxu0 0.0
    %6494 = vmatpush1.msra.mxu0 0.0
    %6495 = vmatprep.subr.mxu0 0.0
    %6496 = vmatpush1.msra.mxu0 0.0
    %6497 = vmatprep.subr.mxu0 0.0
    %6498 = vmatpush1.msra.mxu0 0.0
    %6499 = vmatprep.subr.mxu0 0.0
    %6500 = vmatpush1.msra.mxu0 0.0
    %6501 = vmatprep.subr.mxu0 0.0
    %6502 = vmatpush1.msra.mxu0 0.0
    %6503 = vmatprep.subr.mxu0 0.0
    %6504 = vmatpush1.msra.mxu0 0.0
    %6505 = vmatprep.subr.mxu0 0.0
    %6506 = vmatpush1.msra.mxu0 0.0
    %6507 = vmatprep.subr.mxu0 0.0
    %6508 = vmatpush1.msra.mxu0 0.0
    %6509 = vmatprep.subr.mxu0 0.0
    %6510 = vmatpush1.msra.mxu0 0.0
    %6511 = vmatprep.subr.mxu0 0.0
    %6512 = vmatpush1.msra.mxu0 0.0
    %6513 = vmatprep.subr.mxu0 0.0
    %6514 = vmatpush1.msra.mxu0 0.0
    %6515 = vmatprep.subr.mxu0 0.0
    %6516 = vmatpush1.msra.mxu0 0.0
    %6517 = vmatprep.subr.mxu0 0.0
    %6518 = vmatpush1.msra.mxu0 0.0
    %6519 = vmatprep.subr.mxu0 0.0
    %6520 = vmatpush1.msra.mxu0 0.0
    %6521 = vmatprep.subr.mxu0 0.0
    %6522 = vmatpush1.msra.mxu0 0.0
    %6523 = vmatprep.subr.mxu0 0.0
    %6524 = vmatpush1.msra.mxu0 0.0
    %6525 = vmatprep.subr.mxu0 0.0
    %6526 = vmatpush1.msra.mxu0 0.0
    %6527 = vmatprep.subr.mxu0 0.0
    %6528 = vmatpush1.msra.mxu0 0.0
    %6529 = vmatprep.mubr.f32.mxu0 0.0
    %v6530 = vand.u32 %v6124, 4294901760
    %6531 = vmatmul.mubr.f32.gmra.mrb[0].mxu0 %v6530
    %v6532 = vpop.f32.mrb[0].mxu0
    %v6533 = vadd.f32 %v6450, %v6532
    %v6534 = vpop.f32.mrb[0].mxu0
    %6535 = vdwg.mxu0
    %6536 = vmatprep.subr.mxu0 0.0
    %v6537 = vand.u32 %v54, 4294901760
    %6538 = vmatpush1.msra.mxu0 %v6537
    %6539 = vmatprep.subr.mxu0 0.0
    %v6540 = vand.u32 %v55, 4294901760
    %6541 = vmatpush1.msra.mxu0 %v6540
    %6542 = vmatprep.subr.mxu0 0.0
    %v6543 = vand.u32 %v56, 4294901760
    %6544 = vmatpush1.msra.mxu0 %v6543
    %6545 = vmatprep.subr.mxu0 0.0
    %v6546 = vand.u32 %v57, 4294901760
    %6547 = vmatpush1.msra.mxu0 %v6546
    %6548 = vmatprep.subr.mxu0 0.0
    %6549 = vmatpush1.msra.mxu0 0.0
    %6550 = vmatprep.subr.mxu0 0.0
    %6551 = vmatpush1.msra.mxu0 0.0
    %6552 = vmatprep.subr.mxu0 0.0
    %6553 = vmatpush1.msra.mxu0 0.0
    %6554 = vmatprep.subr.mxu0 0.0
    %6555 = vmatpush1.msra.mxu0 0.0
    %6556 = vmatprep.subr.mxu0 0.0
    %6557 = vmatpush1.msra.mxu0 0.0
    %6558 = vmatprep.subr.mxu0 0.0
    %6559 = vmatpush1.msra.mxu0 0.0
    %6560 = vmatprep.subr.mxu0 0.0
    %6561 = vmatpush1.msra.mxu0 0.0
    %6562 = vmatprep.subr.mxu0 0.0
    %6563 = vmatpush1.msra.mxu0 0.0
    %6564 = vmatprep.subr.mxu0 0.0
    %6565 = vmatpush1.msra.mxu0 0.0
    %6566 = vmatprep.subr.mxu0 0.0
    %6567 = vmatpush1.msra.mxu0 0.0
    %6568 = vmatprep.subr.mxu0 0.0
    %6569 = vmatpush1.msra.mxu0 0.0
    %6570 = vmatprep.subr.mxu0 0.0
    %6571 = vmatpush1.msra.mxu0 0.0
    %6572 = vmatprep.subr.mxu0 0.0
    %6573 = vmatpush1.msra.mxu0 0.0
    %6574 = vmatprep.subr.mxu0 0.0
    %6575 = vmatpush1.msra.mxu0 0.0
    %6576 = vmatprep.subr.mxu0 0.0
    %6577 = vmatpush1.msra.mxu0 0.0
    %6578 = vmatprep.subr.mxu0 0.0
    %6579 = vmatpush1.msra.mxu0 0.0
    %6580 = vmatprep.subr.mxu0 0.0
    %6581 = vmatpush1.msra.mxu0 0.0
    %6582 = vmatprep.subr.mxu0 0.0
    %6583 = vmatpush1.msra.mxu0 0.0
    %6584 = vmatprep.subr.mxu0 0.0
    %6585 = vmatpush1.msra.mxu0 0.0
    %6586 = vmatprep.subr.mxu0 0.0
    %6587 = vmatpush1.msra.mxu0 0.0
    %6588 = vmatprep.subr.mxu0 0.0
    %6589 = vmatpush1.msra.mxu0 0.0
    %6590 = vmatprep.subr.mxu0 0.0
    %6591 = vmatpush1.msra.mxu0 0.0
    %6592 = vmatprep.subr.mxu0 0.0
    %6593 = vmatpush1.msra.mxu0 0.0
    %6594 = vmatprep.subr.mxu0 0.0
    %6595 = vmatpush1.msra.mxu0 0.0
    %6596 = vmatprep.subr.mxu0 0.0
    %6597 = vmatpush1.msra.mxu0 0.0
    %6598 = vmatprep.subr.mxu0 0.0
    %6599 = vmatpush1.msra.mxu0 0.0
    %6600 = vmatprep.subr.mxu0 0.0
    %6601 = vmatpush1.msra.mxu0 0.0
    %6602 = vmatprep.subr.mxu0 0.0
    %6603 = vmatpush1.msra.mxu0 0.0
    %6604 = vmatprep.mubr.f32.mxu0 0.0
    %v6605 = vand.u32 %v6124, 4294901760
    %6606 = vmatmul.mubr.f32.gmra.mrb[0].mxu0 %v6605
    %v6607 = vpop.f32.mrb[0].mxu0
    %v6608 = vadd.f32 %v6533, %v6607
    %v6609 = vpop.f32.mrb[0].mxu0
    %6610 = vdwg.mxu0
    %6611 = vst [vmem:[#allocation5] sm:$0x3] %v6608
    // Predicated region
    $region30: #{tpu_custom_call.1} parent=1 // pred_check
      _
    $region31: #{tpu_custom_call.1} parent=1 // pred_check_branch
      %6613 = sbr.rel (0) target = $region33
    $region32: #{tpu_custom_call.1} parent=1 // pred_region
      %s6615 = ssub.s32 32, 32
      %6616 = vsyncadd [#allocation4], %s6615
      %s6618 = sshll.u32 [#allocation5], 4
      %s6619 = int_to_ptr.vmem [resolvable:$true] %s6618
      %6621 = dma.vmem_to_hbm [thread:$0]  %s6619, 32, %s6, [#allocation4]
    $region33: #{tpu_custom_call.1} parent=1 // pred_fallthru
      _
    // Predicated region
    $region34: #{tpu_custom_call.1} parent=1 // pred_check
      _
    $region35: #{tpu_custom_call.1} parent=1 // pred_check_branch
      %6623 = sbr.rel (0) target = $region37
    $region36: #{tpu_custom_call.1} parent=1 // pred_region
      %6624 = dma.done [#allocation4], 32
    $region37: #{tpu_custom_call.1} parent=1 // pred_fallthru
      _
    %6625 = vsyncpa [#allocation3], 1
    %6626 = vsyncpa [#allocation4], 1

</llo_original>
